<compile_context>
chip_gen: v7x
topology: tpu7x:2x2x1
jax: 0.10.0
libtpu: 0.0.40
codegen_flags: <defaults>
</compile_context>

<pallas_src>
import jax
import jax.numpy as jnp
from jax.experimental import pallas as pl
from jax.experimental.pallas import tpu as pltpu


def _vmem_limit_bytes():
    # Stay well inside v7x's 64 MiB physical VMEM; use more headroom on
    # v5e/v6e (128 MiB).  All blocks below are far smaller than this anyway.
    try:
        phys = pltpu.get_tpu_info().vmem_capacity_bytes
    except Exception:  # pragma: no cover - conservative fallback
        phys = 64 * 1024 * 1024
    return int(min(phys * 3 // 4, 96 * 1024 * 1024))


def _cparams(*dimension_semantics):
    return pltpu.CompilerParams(
        dimension_semantics=dimension_semantics,
        vmem_limit_bytes=_vmem_limit_bytes(),
    )


# ----------------------------------------------------------------------------
# Kernel 1: 3x3 "same" convolution (bias-free) + per-image BN statistics.
#   grid = (N,): one padded image per step, every input byte read once.
#   Width-wise im2col in VMEM -> 3 deep-K MXU matmuls with M = H*W.
# ----------------------------------------------------------------------------
def _conv3x3_stats_kernel(x_ref, w_ref, y_ref, sum_ref, ssq_ref):
    # x_ref : (Hp, Wp, Cin)     bf16   zero-padded input image
    # w_ref : (3, 3*Cin, Cout)  bf16   taps, layout (kh, (kw, ci), co)
    # y_ref : (H, W, Cout)      bf16   conv output image
    # sum_ref / ssq_ref : (1, Cout) f32  per-image channel sum / sum-of-squares
    hp, wp, cin = x_ref.shape
    h, w = hp - 2, wp - 2
    cout = y_ref.shape[-1]

    x = x_ref[...]
    # width-wise im2col (VMEM only): xw[i, j, kw*Cin + ci] = x[i, j + kw, ci]
    xw = jnp.concatenate([x[:, kw:kw + w, :] for kw in range(3)], axis=-1)

    acc = jnp.zeros((h * w, cout), jnp.float32)
    for kh in range(3):                                    # 3 deep-K MXU matmuls
        lhs = xw[kh:kh + h].reshape(h * w, 3 * cin)
        acc = acc + jnp.dot(lhs, w_ref[kh], preferred_element_type=jnp.float32)

    y_ref[...] = acc.reshape(h, w, cout).astype(y_ref.dtype)
    sum_ref[...] = jnp.sum(acc, axis=0, keepdims=True)
    ssq_ref[...] = jnp.sum(acc * acc, axis=0, keepdims=True)


def conv3x3_bn_stats(x_nhwc, w_oihw):
    """3x3 same conv (bias-free) + training-mode BatchNorm batch statistics.

    The conv bias is omitted: a per-channel constant added right before
    training-mode BatchNorm is cancelled exactly by the mean subtraction.
    """
    n, h, w, cin = x_nhwc.shape
    cout = w_oihw.shape[0]
    xp = jnp.pad(x_nhwc.astype(jnp.bfloat16), ((0, 0), (1, 1), (1, 1), (0, 0)))
    wk = (jnp.transpose(w_oihw, (2, 3, 1, 0))          # (kh, kw, ci, co)
          .reshape(3, 3 * cin, cout).astype(jnp.bfloat16))

    y, s, sq = pl.pallas_call(
        _conv3x3_stats_kernel,
        out_shape=(
            jax.ShapeDtypeStruct((n, h, w, cout), jnp.bfloat16),
            jax.ShapeDtypeStruct((n, 1, cout), jnp.float32),
            jax.ShapeDtypeStruct((n, 1, cout), jnp.float32),
        ),
        grid=(n,),
        in_specs=[
            pl.BlockSpec((None, h + 2, w + 2, cin), lambda ni: (ni, 0, 0, 0)),
            pl.BlockSpec((3, 3 * cin, cout), lambda ni: (0, 0, 0)),
        ],
        out_specs=(
            pl.BlockSpec((None, h, w, cout), lambda ni: (ni, 0, 0, 0)),
            pl.BlockSpec((None, 1, cout), lambda ni: (ni, 0, 0)),
            pl.BlockSpec((None, 1, cout), lambda ni: (ni, 0, 0)),
        ),
        compiler_params=_cparams("parallel"),
    )(xp, wk)

    cnt = float(n * h * w)
    mean = jnp.sum(s, axis=(0, 1)) / cnt
    ex2 = jnp.sum(sq, axis=(0, 1)) / cnt
    # TODO(synk): E[x^2]-E[x]^2 in f32 can lose precision for large-mean activations.
    var = jnp.maximum(ex2 - mean * mean, 0.0)              # biased (BN training mode)
    return y, mean, var


# ----------------------------------------------------------------------------
# Kernels 2a/2b: fused BN-affine + ReLU + separable x2 bilinear upsample.
#   2a: rows   -> (Ho, H) @ (H, W*C)   (C stays on lanes, lane-dense)
#   2b: columns-> per-row (Wo, W) @ (W, C) matmuls, no broadcast materialised.
#   Intermediate between the two passes is bf16.
# ----------------------------------------------------------------------------
def _affine_relu_rowresize_kernel(x_ref, r_ref, sc_ref, sh_ref, o_ref):
    # x_ref : (H, W*C) bf16 ; r_ref : (Ho, H) bf16 ; sc/sh : (1, W*C) f32
    x = x_ref[...].astype(jnp.float32) * sc_ref[...] + sh_ref[...]
    x = jnp.maximum(x, 0.0).astype(jnp.bfloat16)
    o_ref[...] = jnp.dot(r_ref[...], x,
                         preferred_element_type=jnp.float32).astype(o_ref.dtype)


def _colresize_kernel(x_ref, r_ref, o_ref):
    # x_ref : (Ho, W, C) bf16 ; r_ref : (Wo, W) bf16 ; o_ref : (Ho, Wo, C) bf16
    @pl.loop(0, x_ref.shape[0])
    def _(b):
        o_ref[b] = jnp.dot(r_ref[...], x_ref[b],
                           preferred_element_type=jnp.float32).astype(o_ref.dtype)


def _resize_matrix(in_size, out_size, dtype=jnp.float32):
    """(out, in) bilinear interpolation matrix, PyTorch align_corners=False."""
    i = jnp.arange(out_size, dtype=jnp.float32)
    src = (i + 0.5) * (float(in_size) / float(out_size)) - 0.5
    src = jnp.maximum(src, 0.0)                    # PyTorch clamps src index at 0
    x0 = jnp.floor(src)
    frac = src - x0
    x0i = jnp.clip(x0.astype(jnp.int32), 0, in_size - 1)
    x1i = jnp.clip(x0i + 1, 0, in_size - 1)
    eye = jnp.eye(in_size, dtype=jnp.float32)
    m = eye[x0i] * (1.0 - frac)[:, None] + eye[x1i] * frac[:, None]
    return m.astype(dtype)


def upsample_affine_relu(y_nhwc, out_size, scale, shift):
    """BN affine + ReLU fused into a separable bilinear resize to (out_size,)^2."""
    n, h, w, c = y_nhwc.shape
    rh = _resize_matrix(h, out_size, jnp.bfloat16)
    rw = _resize_matrix(w, out_size, jnp.bfloat16)
    sc = jnp.tile(scale.astype(jnp.float32), w).reshape(1, w * c)
    sh = jnp.tile(shift.astype(jnp.float32), w).reshape(1, w * c)

    t = pl.pallas_call(
        _affine_relu_rowresize_kernel,
        out_shape=jax.ShapeDtypeStruct((n, out_size, w * c), jnp.bfloat16),
        grid=(n,),
        in_specs=[
            pl.BlockSpec((None, h, w * c), lambda ni: (ni, 0, 0)),
            pl.BlockSpec((out_size, h), lambda ni: (0, 0)),
            pl.BlockSpec((1, w * c), lambda ni: (0, 0)),
            pl.BlockSpec((1, w * c), lambda ni: (0, 0)),
        ],
        out_specs=pl.BlockSpec((None, out_size, w * c), lambda ni: (ni, 0, 0)),
        compiler_params=_cparams("parallel"),
    )(y_nhwc.reshape(n, h, w * c), rh, sc, sh)

    # contiguity-preserving (free in HBM) reshape: (N, Ho, W*C) -> (N, Ho, W, C)
    t4 = t.reshape(n, out_size, w, c)
    return pl.pallas_call(
        _colresize_kernel,
        out_shape=jax.ShapeDtypeStruct((n, out_size, out_size, c), jnp.bfloat16),
        grid=(n,),
        in_specs=[
            pl.BlockSpec((None, out_size, w, c), lambda ni: (ni, 0, 0, 0)),
            pl.BlockSpec((out_size, w), lambda ni: (0, 0)),
        ],
        out_specs=pl.BlockSpec((None, out_size, out_size, c),
                               lambda ni: (ni, 0, 0, 0)),
        compiler_params=_cparams("parallel"),
    )(t4, rw)


# ----------------------------------------------------------------------------
# Kernel 3: 1x1 conv as a single-pass tiled matmul (K = Cin fits one block,
#   so no K grid axis, no accumulator scratch).  Cout stays at num_classes.
# ----------------------------------------------------------------------------
def _matmul_bias_kernel(a_ref, b_ref, bias_ref, o_ref):
    o_ref[...] = (jnp.dot(a_ref[...], b_ref[...],
                          preferred_element_type=jnp.float32)
                  + bias_ref[...]).astype(o_ref.dtype)


def conv1x1_bias(x_nhwc, w_oihw, bias, *, tm=1024):
    n, h, w, cin = x_nhwc.shape
    cout = w_oihw.shape[0]
    m = n * h * w
    tm = min(tm, m)
    a = x_nhwc.reshape(m, cin).astype(jnp.bfloat16)
    if m % tm:  # rare ragged case: pad M rather than shrinking tiles
        a = jnp.pad(a, ((0, tm - m % tm), (0, 0)))
    wm = w_oihw.reshape(cout, cin).T.astype(jnp.bfloat16)

    y = pl.pallas_call(
        _matmul_bias_kernel,
        out_shape=jax.ShapeDtypeStruct((a.shape[0], cout), jnp.float32),
        grid=(a.shape[0] // tm,),
        in_specs=[
            pl.BlockSpec((tm, cin), lambda i: (i, 0)),
            pl.BlockSpec((cin, cout), lambda i: (0, 0)),
            pl.BlockSpec((1, cout), lambda i: (0, 0)),
        ],
        out_specs=pl.BlockSpec((tm, cout), lambda i: (i, 0)),
        compiler_params=_cparams("parallel"),
    )(a, wm, bias.reshape(1, cout).astype(jnp.float32))
    return y[:m].reshape(n, h, w, cout)


# ----------------------------------------------------------------------------
# Kernel 4: final bilinear resize, channel-major, emits NCHW directly.
#   Per channel: (Ho, H) @ X_c @ (W, Wo)  -- both matmuls lane-dense on W/Wo.
# ----------------------------------------------------------------------------
def _resize_nchw_kernel(x_ref, rh_ref, rwt_ref, o_ref):
    # x_ref : (C, H, W) f32 ; rh_ref : (Ho, H) f32 ; rwt_ref : (W, Wo) f32
    for c in range(x_ref.shape[0]):                       # small static channel loop
        t = jnp.dot(rh_ref[...], x_ref[c], preferred_element_type=jnp.float32)
        o_ref[c] = jnp.dot(t, rwt_ref[...], preferred_element_type=jnp.float32)


def resize_to_nchw(x_nchw, out_h, out_w):
    n, c, h, w = x_nchw.shape
    rh = _resize_matrix(h, out_h, jnp.float32)
    rwt = _resize_matrix(w, out_w, jnp.float32).T
    return pl.pallas_call(
        _resize_nchw_kernel,
        out_shape=jax.ShapeDtypeStruct((n, c, out_h, out_w), jnp.float32),
        grid=(n,),
        in_specs=[
            pl.BlockSpec((None, c, h, w), lambda ni: (ni, 0, 0, 0)),
            pl.BlockSpec((out_h, h), lambda ni: (0, 0)),
            pl.BlockSpec((w, out_w), lambda ni: (0, 0)),
        ],
        out_specs=pl.BlockSpec((None, c, out_h, out_w), lambda ni: (ni, 0, 0, 0)),
        compiler_params=_cparams("parallel"),
    )(x_nchw.astype(jnp.float32), rh, rwt)


# --------------------------- full forward pass ------------------------------
def decoder_forward(x_nchw, params, image_size, eps=1e-5):
    x = jnp.transpose(x_nchw, (0, 2, 3, 1))                    # NCHW -> NHWC

    # stage 0: conv3x3 -> BN(train stats) -> ReLU -> bilinear x2
    y, mean, var = conv3x3_bn_stats(x, params["w0"])
    scale = params["g0"] / jnp.sqrt(var + eps)
    shift = params["be0"] - mean * scale
    x = upsample_affine_relu(y, 2 * y.shape[2], scale, shift)  # size = 2*W (PyTorch)

    # stage 1
    y, mean, var = conv3x3_bn_stats(x, params["w1"])
    scale = params["g1"] / jnp.sqrt(var + eps)
    shift = params["be1"] - mean * scale
    x = upsample_affine_relu(y, 2 * y.shape[2], scale, shift)

    # stage 2: 1x1 conv (Cout = num_classes, no lane padding carried forward),
    # tiny channel-major transpose, final resize emits NCHW directly.
    x = conv1x1_bias(x, params["w2"], params["b2"])
    x = jnp.transpose(x, (0, 3, 1, 2))                         # tiny (N, nc, h, w)
    return resize_to_nchw(x, image_size, image_size)


def init_params(key, d_encoder, hidden, num_classes):
    ks = jax.random.split(key, 6)
    return {
        "w0": jax.random.normal(ks[0], (hidden, d_encoder, 3, 3), jnp.float32) * 0.1,
        "b0": jax.random.normal(ks[1], (hidden,), jnp.float32) * 0.1,  # unused: cancelled by BN
        "w1": jax.random.normal(ks[2], (hidden, hidden, 3, 3), jnp.float32) * 0.05,
        "b1": jax.random.normal(ks[3], (hidden,), jnp.float32) * 0.1,  # unused: cancelled by BN
        "w2": jax.random.normal(ks[4], (num_classes, hidden, 1, 1), jnp.float32) * 0.1,
        "b2": jax.random.normal(ks[5], (num_classes,), jnp.float32) * 0.1,
        # BatchNorm affine params (PyTorch default init: weight=1, bias=0)
        "g0": jnp.ones((hidden,), jnp.float32),
        "be0": jnp.zeros((hidden,), jnp.float32),
        "g1": jnp.ones((hidden,), jnp.float32),
        "be1": jnp.zeros((hidden,), jnp.float32),
    }


if __name__ == "__main__":
    # Small, module-consistent shapes.
    d_encoder = 4
    hidden = 32          # hidden_layer_size (default 256 shrunk for the demo)
    num_classes = 5
    image_size = 40      # final interpolate target
    n, h, w = 2, 8, 8

    key = jax.random.PRNGKey(0)
    kx, kp = jax.random.split(key)
    x = jax.random.normal(kx, (n, d_encoder, h, w), jnp.float32)
    params = init_params(kp, d_encoder, hidden, num_classes)

    fwd = jax.jit(lambda inp: decoder_forward(inp, params, image_size))
    out = fwd(x)
    jax.block_until_ready(out)

    assert out.shape == (n, num_classes, image_size, image_size), out.shape
    assert bool(jnp.all(jnp.isfinite(out)))
    print("KERNEL_OK")
</pallas_src>

<mosaic_0001>
module attributes {stable_mosaic.version = 11 : i64} {
  func.func @_conv3x3_stats_kernel(%arg0: i32, %arg1: memref<1x10x10x4xbf16, #tpu.memory_space<vmem>>, %arg2: memref<3x12x32xbf16, #tpu.memory_space<vmem>>, %arg3: memref<1x8x8x32xbf16, #tpu.memory_space<vmem>>, %arg4: memref<1x1x32xf32, #tpu.memory_space<vmem>>, %arg5: memref<1x1x32xf32, #tpu.memory_space<vmem>>) attributes {dimension_semantics = [#tpu.dimension_semantics<parallel>], iteration_bounds = array<i64: 2>, scalar_prefetch = 0 : i64, scratch_operands = 0 : i64, tpu.core_type = #tpu.core_type<tc>, window_params = [{transform_indices = @transform_0, window_bounds = array<i64: 1, 10, 10, 4>}, {pipeline_mode = #tpu.pipeline_mode<synchronous>, transform_indices = @transform_1, window_bounds = array<i64: 3, 12, 32>}, {transform_indices = @transform_2, window_bounds = array<i64: 1, 8, 8, 32>}, {transform_indices = @transform_3, window_bounds = array<i64: 1, 1, 32>}, {transform_indices = @transform_4, window_bounds = array<i64: 1, 1, 32>}]} {
    %c0 = arith.constant 0 : index
    %c0_0 = arith.constant 0 : index
    %c0_1 = arith.constant 0 : index
    %c0_2 = arith.constant 0 : index
    %0 = vector.load %arg1[%c0, %c0_0, %c0_1, %c0_2] : memref<1x10x10x4xbf16, #tpu.memory_space<vmem>>, vector<1x10x10x4xbf16>
    %1 = vector.shape_cast %0 : vector<1x10x10x4xbf16> to vector<10x10x4xbf16>
    %2 = vector.extract_strided_slice %1 {offsets = [0, 0, 0], sizes = [10, 8, 4], strides = [1, 1, 1]} : vector<10x10x4xbf16> to vector<10x8x4xbf16>
    %3 = vector.extract_strided_slice %1 {offsets = [0, 1, 0], sizes = [10, 8, 4], strides = [1, 1, 1]} : vector<10x10x4xbf16> to vector<10x8x4xbf16>
    %4 = vector.extract_strided_slice %1 {offsets = [0, 2, 0], sizes = [10, 8, 4], strides = [1, 1, 1]} : vector<10x10x4xbf16> to vector<10x8x4xbf16>
    %5 = tpu.concatenate %2, %3, %4 in 2 : vector<10x8x4xbf16>, vector<10x8x4xbf16>, vector<10x8x4xbf16> -> vector<10x8x12xbf16>
    %cst = arith.constant 0.000000e+00 : f32
    %6 = vector.broadcast %cst : f32 to vector<64x32xf32>
    %7 = vector.extract_strided_slice %5 {offsets = [0, 0, 0], sizes = [8, 8, 12], strides = [1, 1, 1]} : vector<10x8x12xbf16> to vector<8x8x12xbf16>
    %8 = vector.shape_cast %7 : vector<8x8x12xbf16> to vector<64x12xbf16>
    %c0_3 = arith.constant 0 : index
    %c0_4 = arith.constant 0 : index
    %c0_5 = arith.constant 0 : index
    %9 = vector.load %arg2[%c0_3, %c0_4, %c0_5] : memref<3x12x32xbf16, #tpu.memory_space<vmem>>, vector<1x12x32xbf16>
    %10 = vector.shape_cast %9 : vector<1x12x32xbf16> to vector<12x32xbf16>
    %cst_6 = arith.constant dense<0.000000e+00> : vector<64x32xf32>
    %11 = tpu.matmul %8, %10, %cst_6 {dimension_numbers = #tpu.dot_dimension_numbers<[1], [0], [0], [1], [0, 0, 1, 1], [], []>} : vector<64x12xbf16>, vector<12x32xbf16>, vector<64x32xf32> -> vector<64x32xf32>
    %12 = arith.addf %6, %11 : vector<64x32xf32>
    %13 = vector.extract_strided_slice %5 {offsets = [1, 0, 0], sizes = [8, 8, 12], strides = [1, 1, 1]} : vector<10x8x12xbf16> to vector<8x8x12xbf16>
    %14 = vector.shape_cast %13 : vector<8x8x12xbf16> to vector<64x12xbf16>
    %c1 = arith.constant 1 : index
    %c0_7 = arith.constant 0 : index
    %c0_8 = arith.constant 0 : index
    %15 = vector.load %arg2[%c1, %c0_7, %c0_8] : memref<3x12x32xbf16, #tpu.memory_space<vmem>>, vector<1x12x32xbf16>
    %16 = vector.shape_cast %15 : vector<1x12x32xbf16> to vector<12x32xbf16>
    %cst_9 = arith.constant dense<0.000000e+00> : vector<64x32xf32>
    %17 = tpu.matmul %14, %16, %cst_9 {dimension_numbers = #tpu.dot_dimension_numbers<[1], [0], [0], [1], [0, 0, 1, 1], [], []>} : vector<64x12xbf16>, vector<12x32xbf16>, vector<64x32xf32> -> vector<64x32xf32>
    %18 = arith.addf %12, %17 : vector<64x32xf32>
    %19 = vector.extract_strided_slice %5 {offsets = [2, 0, 0], sizes = [8, 8, 12], strides = [1, 1, 1]} : vector<10x8x12xbf16> to vector<8x8x12xbf16>
    %20 = vector.shape_cast %19 : vector<8x8x12xbf16> to vector<64x12xbf16>
    %c2 = arith.constant 2 : index
    %c0_10 = arith.constant 0 : index
    %c0_11 = arith.constant 0 : index
    %21 = vector.load %arg2[%c2, %c0_10, %c0_11] : memref<3x12x32xbf16, #tpu.memory_space<vmem>>, vector<1x12x32xbf16>
    %22 = vector.shape_cast %21 : vector<1x12x32xbf16> to vector<12x32xbf16>
    %cst_12 = arith.constant dense<0.000000e+00> : vector<64x32xf32>
    %23 = tpu.matmul %20, %22, %cst_12 {dimension_numbers = #tpu.dot_dimension_numbers<[1], [0], [0], [1], [0, 0, 1, 1], [], []>} : vector<64x12xbf16>, vector<12x32xbf16>, vector<64x32xf32> -> vector<64x32xf32>
    %24 = arith.addf %18, %23 : vector<64x32xf32>
    %25 = vector.shape_cast %24 : vector<64x32xf32> to vector<8x8x32xf32>
    %26 = arith.truncf %25 : vector<8x8x32xf32> to vector<8x8x32xbf16>
    %c0_13 = arith.constant 0 : index
    %c0_14 = arith.constant 0 : index
    %c0_15 = arith.constant 0 : index
    %c0_16 = arith.constant 0 : index
    %27 = vector.load %arg3[%c0_13, %c0_14, %c0_15, %c0_16] : memref<1x8x8x32xbf16, #tpu.memory_space<vmem>>, vector<1x8x8x32xbf16>
    %28 = vector.shape_cast %27 : vector<1x8x8x32xbf16> to vector<8x8x32xbf16>
    %29 = vector.shape_cast %26 : vector<8x8x32xbf16> to vector<1x8x8x32xbf16>
    tpu.vector_store %arg3[%c0_13, %c0_14, %c0_15, %c0_16], %29 {strides = array<i32>} : memref<1x8x8x32xbf16, #tpu.memory_space<vmem>>, vector<1x8x8x32xbf16>,
    %cst_17 = arith.constant dense<0.000000e+00> : vector<32xf32>
    %30 = vector.multi_reduction <add>, %24, %cst_17 [0] : vector<64x32xf32> to vector<32xf32>
    %31 = vector.shape_cast %30 : vector<32xf32> to vector<1x32xf32>
    %c0_18 = arith.constant 0 : index
    %c0_19 = arith.constant 0 : index
    %c0_20 = arith.constant 0 : index
    %32 = vector.load %arg4[%c0_18, %c0_19, %c0_20] : memref<1x1x32xf32, #tpu.memory_space<vmem>>, vector<1x1x32xf32>
    %33 = vector.shape_cast %32 : vector<1x1x32xf32> to vector<1x32xf32>
    %34 = vector.shape_cast %31 : vector<1x32xf32> to vector<1x1x32xf32>
    tpu.vector_store %arg4[%c0_18, %c0_19, %c0_20], %34 {strides = array<i32>} : memref<1x1x32xf32, #tpu.memory_space<vmem>>, vector<1x1x32xf32>,
    %35 = arith.mulf %24, %24 : vector<64x32xf32>
    %cst_21 = arith.constant dense<0.000000e+00> : vector<32xf32>
    %36 = vector.multi_reduction <add>, %35, %cst_21 [0] : vector<64x32xf32> to vector<32xf32>
    %37 = vector.shape_cast %36 : vector<32xf32> to vector<1x32xf32>
    %c0_22 = arith.constant 0 : index
    %c0_23 = arith.constant 0 : index
    %c0_24 = arith.constant 0 : index
    %38 = vector.load %arg5[%c0_22, %c0_23, %c0_24] : memref<1x1x32xf32, #tpu.memory_space<vmem>>, vector<1x1x32xf32>
    %39 = vector.shape_cast %38 : vector<1x1x32xf32> to vector<1x32xf32>
    %40 = vector.shape_cast %37 : vector<1x32xf32> to vector<1x1x32xf32>
    tpu.vector_store %arg5[%c0_22, %c0_23, %c0_24], %40 {strides = array<i32>} : memref<1x1x32xf32, #tpu.memory_space<vmem>>, vector<1x1x32xf32>,
    return
  }
  func.func @transform_0(%arg0: i32) -> (i32, i32, i32, i32) {
    %c0_i32 = arith.constant 0 : i32
    %c0_i32_0 = arith.constant 0 : i32
    %c0_i32_1 = arith.constant 0 : i32
    %c0_i32_2 = arith.constant 0 : i32
    return %arg0, %c0_i32, %c0_i32_0, %c0_i32_1 : i32, i32, i32, i32
  }
  func.func @transform_1(%arg0: i32) -> (i32, i32, i32) {
    %c0_i32 = arith.constant 0 : i32
    %c0_i32_0 = arith.constant 0 : i32
    %c0_i32_1 = arith.constant 0 : i32
    %c0_i32_2 = arith.constant 0 : i32
    return %c0_i32, %c0_i32_0, %c0_i32_1 : i32, i32, i32
  }
  func.func @transform_2(%arg0: i32) -> (i32, i32, i32, i32) {
    %c0_i32 = arith.constant 0 : i32
    %c0_i32_0 = arith.constant 0 : i32
    %c0_i32_1 = arith.constant 0 : i32
    %c0_i32_2 = arith.constant 0 : i32
    return %arg0, %c0_i32, %c0_i32_0, %c0_i32_1 : i32, i32, i32, i32
  }
  func.func @transform_3(%arg0: i32) -> (i32, i32, i32) {
    %c0_i32 = arith.constant 0 : i32
    %c0_i32_0 = arith.constant 0 : i32
    %c0_i32_1 = arith.constant 0 : i32
    return %arg0, %c0_i32, %c0_i32_0 : i32, i32, i32
  }
  func.func @transform_4(%arg0: i32) -> (i32, i32, i32) {
    %c0_i32 = arith.constant 0 : i32
    %c0_i32_0 = arith.constant 0 : i32
    %c0_i32_1 = arith.constant 0 : i32
    return %arg0, %c0_i32, %c0_i32_0 : i32, i32, i32
  }
}

module attributes {stable_mosaic.version = 11 : i64} {
  func.func @_affine_relu_rowresize_kernel(%arg0: i32, %arg1: memref<1x8x256xbf16, #tpu.memory_space<vmem>>, %arg2: memref<16x8xbf16, #tpu.memory_space<vmem>>, %arg3: memref<1x256xf32, #tpu.memory_space<vmem>>, %arg4: memref<1x256xf32, #tpu.memory_space<vmem>>, %arg5: memref<1x16x256xbf16, #tpu.memory_space<vmem>>) attributes {dimension_semantics = [#tpu.dimension_semantics<parallel>], iteration_bounds = array<i64: 2>, scalar_prefetch = 0 : i64, scratch_operands = 0 : i64, tpu.core_type = #tpu.core_type<tc>, window_params = [{transform_indices = @transform_0, window_bounds = array<i64: 1, 8, 256>}, {pipeline_mode = #tpu.pipeline_mode<synchronous>, transform_indices = @transform_1, window_bounds = array<i64: 16, 8>}, {pipeline_mode = #tpu.pipeline_mode<synchronous>, transform_indices = @transform_2, window_bounds = array<i64: 1, 256>}, {pipeline_mode = #tpu.pipeline_mode<synchronous>, transform_indices = @transform_3, window_bounds = array<i64: 1, 256>}, {transform_indices = @transform_4, window_bounds = array<i64: 1, 16, 256>}]} {
    %c0 = arith.constant 0 : index
    %c0_0 = arith.constant 0 : index
    %c0_1 = arith.constant 0 : index
    %0 = vector.load %arg1[%c0, %c0_0, %c0_1] : memref<1x8x256xbf16, #tpu.memory_space<vmem>>, vector<1x8x256xbf16>
    %1 = vector.shape_cast %0 : vector<1x8x256xbf16> to vector<8x256xbf16>
    %2 = arith.extf %1 : vector<8x256xbf16> to vector<8x256xf32>
    %c0_2 = arith.constant 0 : index
    %c0_3 = arith.constant 0 : index
    %3 = vector.load %arg3[%c0_2, %c0_3] : memref<1x256xf32, #tpu.memory_space<vmem>>, vector<1x256xf32>
    %4 = vector.broadcast %3 : vector<1x256xf32> to vector<8x256xf32>
    %5 = arith.mulf %2, %4 : vector<8x256xf32>
    %c0_4 = arith.constant 0 : index
    %c0_5 = arith.constant 0 : index
    %6 = vector.load %arg4[%c0_4, %c0_5] : memref<1x256xf32, #tpu.memory_space<vmem>>, vector<1x256xf32>
    %7 = vector.broadcast %6 : vector<1x256xf32> to vector<8x256xf32>
    %8 = arith.addf %5, %7 : vector<8x256xf32>
    %cst = arith.constant 0.000000e+00 : f32
    %9 = vector.broadcast %cst : f32 to vector<8x256xf32>
    %10 = arith.maximumf %8, %9 : vector<8x256xf32>
    %11 = arith.truncf %10 : vector<8x256xf32> to vector<8x256xbf16>
    %c0_6 = arith.constant 0 : index
    %c0_7 = arith.constant 0 : index
    %12 = vector.load %arg2[%c0_6, %c0_7] : memref<16x8xbf16, #tpu.memory_space<vmem>>, vector<16x8xbf16>
    %cst_8 = arith.constant dense<0.000000e+00> : vector<16x256xf32>
    %13 = tpu.matmul %12, %11, %cst_8 {dimension_numbers = #tpu.dot_dimension_numbers<[1], [0], [0], [1], [0, 0, 1, 1], [], []>} : vector<16x8xbf16>, vector<8x256xbf16>, vector<16x256xf32> -> vector<16x256xf32>
    %14 = arith.truncf %13 : vector<16x256xf32> to vector<16x256xbf16>
    %c0_9 = arith.constant 0 : index
    %c0_10 = arith.constant 0 : index
    %c0_11 = arith.constant 0 : index
    %15 = vector.load %arg5[%c0_9, %c0_10, %c0_11] : memref<1x16x256xbf16, #tpu.memory_space<vmem>>, vector<1x16x256xbf16>
    %16 = vector.shape_cast %15 : vector<1x16x256xbf16> to vector<16x256xbf16>
    %17 = vector.shape_cast %14 : vector<16x256xbf16> to vector<1x16x256xbf16>
    tpu.vector_store %arg5[%c0_9, %c0_10, %c0_11], %17 {strides = array<i32>} : memref<1x16x256xbf16, #tpu.memory_space<vmem>>, vector<1x16x256xbf16>,
    return
  }
  func.func @transform_0(%arg0: i32) -> (i32, i32, i32) {
    %c0_i32 = arith.constant 0 : i32
    %c0_i32_0 = arith.constant 0 : i32
    %c0_i32_1 = arith.constant 0 : i32
    return %arg0, %c0_i32, %c0_i32_0 : i32, i32, i32
  }
  func.func @transform_1(%arg0: i32) -> (i32, i32) {
    %c0_i32 = arith.constant 0 : i32
    %c0_i32_0 = arith.constant 0 : i32
    %c0_i32_1 = arith.constant 0 : i32
    return %c0_i32, %c0_i32_0 : i32, i32
  }
  func.func @transform_2(%arg0: i32) -> (i32, i32) {
    %c0_i32 = arith.constant 0 : i32
    %c0_i32_0 = arith.constant 0 : i32
    %c0_i32_1 = arith.constant 0 : i32
    return %c0_i32, %c0_i32_0 : i32, i32
  }
  func.func @transform_3(%arg0: i32) -> (i32, i32) {
    %c0_i32 = arith.constant 0 : i32
    %c0_i32_0 = arith.constant 0 : i32
    %c0_i32_1 = arith.constant 0 : i32
    return %c0_i32, %c0_i32_0 : i32, i32
  }
  func.func @transform_4(%arg0: i32) -> (i32, i32, i32) {
    %c0_i32 = arith.constant 0 : i32
    %c0_i32_0 = arith.constant 0 : i32
    %c0_i32_1 = arith.constant 0 : i32
    return %arg0, %c0_i32, %c0_i32_0 : i32, i32, i32
  }
}

module attributes {stable_mosaic.version = 11 : i64} {
  func.func @_colresize_kernel(%arg0: i32, %arg1: memref<1x16x8x32xbf16, #tpu.memory_space<vmem>>, %arg2: memref<16x8xbf16, #tpu.memory_space<vmem>>, %arg3: memref<1x16x16x32xbf16, #tpu.memory_space<vmem>>) attributes {dimension_semantics = [#tpu.dimension_semantics<parallel>], iteration_bounds = array<i64: 2>, scalar_prefetch = 0 : i64, scratch_operands = 0 : i64, tpu.core_type = #tpu.core_type<tc>, window_params = [{transform_indices = @transform_0, window_bounds = array<i64: 1, 16, 8, 32>}, {pipeline_mode = #tpu.pipeline_mode<synchronous>, transform_indices = @transform_1, window_bounds = array<i64: 16, 8>}, {transform_indices = @transform_2, window_bounds = array<i64: 1, 16, 16, 32>}]} {
    %c0_i32 = arith.constant 0 : i32
    %c16_i32 = arith.constant 16 : i32
    %0 = arith.addi %c0_i32, %c16_i32 : i32
    %c1_i32 = arith.constant 1 : i32
    scf.for %arg4 = %c0_i32 to %0 step %c1_i32  : i32 {
      %c1_i32_1 = arith.constant 1 : i32
      %1 = arith.muli %arg4, %c1_i32_1 : i32
      %c0_i32_2 = arith.constant 0 : i32
      %2 = arith.addi %c0_i32_2, %1 : i32
      %c0 = arith.constant 0 : index
      %c0_3 = arith.constant 0 : index
      %3 = vector.load %arg2[%c0, %c0_3] : memref<16x8xbf16, #tpu.memory_space<vmem>>, vector<16x8xbf16>
      %c0_4 = arith.constant 0 : index
      %4 = arith.index_cast %2 : i32 to index
      %c0_5 = arith.constant 0 : index
      %c0_6 = arith.constant 0 : index
      %5 = vector.load %arg1[%c0_4, %4, %c0_5, %c0_6] : memref<1x16x8x32xbf16, #tpu.memory_space<vmem>>, vector<1x1x8x32xbf16>
      %6 = vector.shape_cast %5 : vector<1x1x8x32xbf16> to vector<8x32xbf16>
      %cst = arith.constant dense<0.000000e+00> : vector<16x32xf32>
      %7 = tpu.matmul %3, %6, %cst {dimension_numbers = #tpu.dot_dimension_numbers<[1], [0], [0], [1], [0, 0, 1, 1], [], []>} : vector<16x8xbf16>, vector<8x32xbf16>, vector<16x32xf32> -> vector<16x32xf32>
      %8 = arith.truncf %7 : vector<16x32xf32> to vector<16x32xbf16>
      %c0_7 = arith.constant 0 : index
      %9 = arith.index_cast %2 : i32 to index
      %c0_8 = arith.constant 0 : index
      %c0_9 = arith.constant 0 : index
      %10 = vector.load %arg3[%c0_7, %9, %c0_8, %c0_9] : memref<1x16x16x32xbf16, #tpu.memory_space<vmem>>, vector<1x1x16x32xbf16>
      %11 = vector.shape_cast %10 : vector<1x1x16x32xbf16> to vector<16x32xbf16>
      %12 = vector.shape_cast %8 : vector<16x32xbf16> to vector<1x1x16x32xbf16>
      tpu.vector_store %arg3[%c0_7, %9, %c0_8, %c0_9], %12 {strides = array<i32>} : memref<1x16x16x32xbf16, #tpu.memory_space<vmem>>, vector<1x1x16x32xbf16>,
    }
    %c16_i32_0 = arith.constant 16 : i32
    return
  }
  func.func @transform_0(%arg0: i32) -> (i32, i32, i32, i32) {
    %c0_i32 = arith.constant 0 : i32
    %c0_i32_0 = arith.constant 0 : i32
    %c0_i32_1 = arith.constant 0 : i32
    %c0_i32_2 = arith.constant 0 : i32
    return %arg0, %c0_i32, %c0_i32_0, %c0_i32_1 : i32, i32, i32, i32
  }
  func.func @transform_1(%arg0: i32) -> (i32, i32) {
    %c0_i32 = arith.constant 0 : i32
    %c0_i32_0 = arith.constant 0 : i32
    %c0_i32_1 = arith.constant 0 : i32
    return %c0_i32, %c0_i32_0 : i32, i32
  }
  func.func @transform_2(%arg0: i32) -> (i32, i32, i32, i32) {
    %c0_i32 = arith.constant 0 : i32
    %c0_i32_0 = arith.constant 0 : i32
    %c0_i32_1 = arith.constant 0 : i32
    %c0_i32_2 = arith.constant 0 : i32
    return %arg0, %c0_i32, %c0_i32_0, %c0_i32_1 : i32, i32, i32, i32
  }
}

module attributes {stable_mosaic.version = 11 : i64} {
  func.func @_conv3x3_stats_kernel(%arg0: i32, %arg1: memref<1x18x18x32xbf16, #tpu.memory_space<vmem>>, %arg2: memref<3x96x32xbf16, #tpu.memory_space<vmem>>, %arg3: memref<1x16x16x32xbf16, #tpu.memory_space<vmem>>, %arg4: memref<1x1x32xf32, #tpu.memory_space<vmem>>, %arg5: memref<1x1x32xf32, #tpu.memory_space<vmem>>) attributes {dimension_semantics = [#tpu.dimension_semantics<parallel>], iteration_bounds = array<i64: 2>, scalar_prefetch = 0 : i64, scratch_operands = 0 : i64, tpu.core_type = #tpu.core_type<tc>, window_params = [{transform_indices = @transform_0, window_bounds = array<i64: 1, 18, 18, 32>}, {pipeline_mode = #tpu.pipeline_mode<synchronous>, transform_indices = @transform_1, window_bounds = array<i64: 3, 96, 32>}, {transform_indices = @transform_2, window_bounds = array<i64: 1, 16, 16, 32>}, {transform_indices = @transform_3, window_bounds = array<i64: 1, 1, 32>}, {transform_indices = @transform_4, window_bounds = array<i64: 1, 1, 32>}]} {
    %c0 = arith.constant 0 : index
    %c0_0 = arith.constant 0 : index
    %c0_1 = arith.constant 0 : index
    %c0_2 = arith.constant 0 : index
    %0 = vector.load %arg1[%c0, %c0_0, %c0_1, %c0_2] : memref<1x18x18x32xbf16, #tpu.memory_space<vmem>>, vector<1x18x18x32xbf16>
    %1 = vector.shape_cast %0 : vector<1x18x18x32xbf16> to vector<18x18x32xbf16>
    %2 = vector.extract_strided_slice %1 {offsets = [0, 0, 0], sizes = [18, 16, 32], strides = [1, 1, 1]} : vector<18x18x32xbf16> to vector<18x16x32xbf16>
    %3 = vector.extract_strided_slice %1 {offsets = [0, 1, 0], sizes = [18, 16, 32], strides = [1, 1, 1]} : vector<18x18x32xbf16> to vector<18x16x32xbf16>
    %4 = vector.extract_strided_slice %1 {offsets = [0, 2, 0], sizes = [18, 16, 32], strides = [1, 1, 1]} : vector<18x18x32xbf16> to vector<18x16x32xbf16>
    %5 = tpu.concatenate %2, %3, %4 in 2 : vector<18x16x32xbf16>, vector<18x16x32xbf16>, vector<18x16x32xbf16> -> vector<18x16x96xbf16>
    %cst = arith.constant 0.000000e+00 : f32
    %6 = vector.broadcast %cst : f32 to vector<256x32xf32>
    %7 = vector.extract_strided_slice %5 {offsets = [0, 0, 0], sizes = [16, 16, 96], strides = [1, 1, 1]} : vector<18x16x96xbf16> to vector<16x16x96xbf16>
    %8 = vector.shape_cast %7 : vector<16x16x96xbf16> to vector<256x96xbf16>
    %c0_3 = arith.constant 0 : index
    %c0_4 = arith.constant 0 : index
    %c0_5 = arith.constant 0 : index
    %9 = vector.load %arg2[%c0_3, %c0_4, %c0_5] : memref<3x96x32xbf16, #tpu.memory_space<vmem>>, vector<1x96x32xbf16>
    %10 = vector.shape_cast %9 : vector<1x96x32xbf16> to vector<96x32xbf16>
    %cst_6 = arith.constant dense<0.000000e+00> : vector<256x32xf32>
    %11 = tpu.matmul %8, %10, %cst_6 {dimension_numbers = #tpu.dot_dimension_numbers<[1], [0], [0], [1], [0, 0, 1, 1], [], []>} : vector<256x96xbf16>, vector<96x32xbf16>, vector<256x32xf32> -> vector<256x32xf32>
    %12 = arith.addf %6, %11 : vector<256x32xf32>
    %13 = vector.extract_strided_slice %5 {offsets = [1, 0, 0], sizes = [16, 16, 96], strides = [1, 1, 1]} : vector<18x16x96xbf16> to vector<16x16x96xbf16>
    %14 = vector.shape_cast %13 : vector<16x16x96xbf16> to vector<256x96xbf16>
    %c1 = arith.constant 1 : index
    %c0_7 = arith.constant 0 : index
    %c0_8 = arith.constant 0 : index
    %15 = vector.load %arg2[%c1, %c0_7, %c0_8] : memref<3x96x32xbf16, #tpu.memory_space<vmem>>, vector<1x96x32xbf16>
    %16 = vector.shape_cast %15 : vector<1x96x32xbf16> to vector<96x32xbf16>
    %cst_9 = arith.constant dense<0.000000e+00> : vector<256x32xf32>
    %17 = tpu.matmul %14, %16, %cst_9 {dimension_numbers = #tpu.dot_dimension_numbers<[1], [0], [0], [1], [0, 0, 1, 1], [], []>} : vector<256x96xbf16>, vector<96x32xbf16>, vector<256x32xf32> -> vector<256x32xf32>
    %18 = arith.addf %12, %17 : vector<256x32xf32>
    %19 = vector.extract_strided_slice %5 {offsets = [2, 0, 0], sizes = [16, 16, 96], strides = [1, 1, 1]} : vector<18x16x96xbf16> to vector<16x16x96xbf16>
    %20 = vector.shape_cast %19 : vector<16x16x96xbf16> to vector<256x96xbf16>
    %c2 = arith.constant 2 : index
    %c0_10 = arith.constant 0 : index
    %c0_11 = arith.constant 0 : index
    %21 = vector.load %arg2[%c2, %c0_10, %c0_11] : memref<3x96x32xbf16, #tpu.memory_space<vmem>>, vector<1x96x32xbf16>
    %22 = vector.shape_cast %21 : vector<1x96x32xbf16> to vector<96x32xbf16>
    %cst_12 = arith.constant dense<0.000000e+00> : vector<256x32xf32>
    %23 = tpu.matmul %20, %22, %cst_12 {dimension_numbers = #tpu.dot_dimension_numbers<[1], [0], [0], [1], [0, 0, 1, 1], [], []>} : vector<256x96xbf16>, vector<96x32xbf16>, vector<256x32xf32> -> vector<256x32xf32>
    %24 = arith.addf %18, %23 : vector<256x32xf32>
    %25 = vector.shape_cast %24 : vector<256x32xf32> to vector<16x16x32xf32>
    %26 = arith.truncf %25 : vector<16x16x32xf32> to vector<16x16x32xbf16>
    %c0_13 = arith.constant 0 : index
    %c0_14 = arith.constant 0 : index
    %c0_15 = arith.constant 0 : index
    %c0_16 = arith.constant 0 : index
    %27 = vector.load %arg3[%c0_13, %c0_14, %c0_15, %c0_16] : memref<1x16x16x32xbf16, #tpu.memory_space<vmem>>, vector<1x16x16x32xbf16>
    %28 = vector.shape_cast %27 : vector<1x16x16x32xbf16> to vector<16x16x32xbf16>
    %29 = vector.shape_cast %26 : vector<16x16x32xbf16> to vector<1x16x16x32xbf16>
    tpu.vector_store %arg3[%c0_13, %c0_14, %c0_15, %c0_16], %29 {strides = array<i32>} : memref<1x16x16x32xbf16, #tpu.memory_space<vmem>>, vector<1x16x16x32xbf16>,
    %cst_17 = arith.constant dense<0.000000e+00> : vector<32xf32>
    %30 = vector.multi_reduction <add>, %24, %cst_17 [0] : vector<256x32xf32> to vector<32xf32>
    %31 = vector.shape_cast %30 : vector<32xf32> to vector<1x32xf32>
    %c0_18 = arith.constant 0 : index
    %c0_19 = arith.constant 0 : index
    %c0_20 = arith.constant 0 : index
    %32 = vector.load %arg4[%c0_18, %c0_19, %c0_20] : memref<1x1x32xf32, #tpu.memory_space<vmem>>, vector<1x1x32xf32>
    %33 = vector.shape_cast %32 : vector<1x1x32xf32> to vector<1x32xf32>
    %34 = vector.shape_cast %31 : vector<1x32xf32> to vector<1x1x32xf32>
    tpu.vector_store %arg4[%c0_18, %c0_19, %c0_20], %34 {strides = array<i32>} : memref<1x1x32xf32, #tpu.memory_space<vmem>>, vector<1x1x32xf32>,
    %35 = arith.mulf %24, %24 : vector<256x32xf32>
    %cst_21 = arith.constant dense<0.000000e+00> : vector<32xf32>
    %36 = vector.multi_reduction <add>, %35, %cst_21 [0] : vector<256x32xf32> to vector<32xf32>
    %37 = vector.shape_cast %36 : vector<32xf32> to vector<1x32xf32>
    %c0_22 = arith.constant 0 : index
    %c0_23 = arith.constant 0 : index
    %c0_24 = arith.constant 0 : index
    %38 = vector.load %arg5[%c0_22, %c0_23, %c0_24] : memref<1x1x32xf32, #tpu.memory_space<vmem>>, vector<1x1x32xf32>
    %39 = vector.shape_cast %38 : vector<1x1x32xf32> to vector<1x32xf32>
    %40 = vector.shape_cast %37 : vector<1x32xf32> to vector<1x1x32xf32>
    tpu.vector_store %arg5[%c0_22, %c0_23, %c0_24], %40 {strides = array<i32>} : memref<1x1x32xf32, #tpu.memory_space<vmem>>, vector<1x1x32xf32>,
    return
  }
  func.func @transform_0(%arg0: i32) -> (i32, i32, i32, i32) {
    %c0_i32 = arith.constant 0 : i32
    %c0_i32_0 = arith.constant 0 : i32
    %c0_i32_1 = arith.constant 0 : i32
    %c0_i32_2 = arith.constant 0 : i32
    return %arg0, %c0_i32, %c0_i32_0, %c0_i32_1 : i32, i32, i32, i32
  }
  func.func @transform_1(%arg0: i32) -> (i32, i32, i32) {
    %c0_i32 = arith.constant 0 : i32
    %c0_i32_0 = arith.constant 0 : i32
    %c0_i32_1 = arith.constant 0 : i32
    %c0_i32_2 = arith.constant 0 : i32
    return %c0_i32, %c0_i32_0, %c0_i32_1 : i32, i32, i32
  }
  func.func @transform_2(%arg0: i32) -> (i32, i32, i32, i32) {
    %c0_i32 = arith.constant 0 : i32
    %c0_i32_0 = arith.constant 0 : i32
    %c0_i32_1 = arith.constant 0 : i32
    %c0_i32_2 = arith.constant 0 : i32
    return %arg0, %c0_i32, %c0_i32_0, %c0_i32_1 : i32, i32, i32, i32
  }
  func.func @transform_3(%arg0: i32) -> (i32, i32, i32) {
    %c0_i32 = arith.constant 0 : i32
    %c0_i32_0 = arith.constant 0 : i32
    %c0_i32_1 = arith.constant 0 : i32
    return %arg0, %c0_i32, %c0_i32_0 : i32, i32, i32
  }
  func.func @transform_4(%arg0: i32) -> (i32, i32, i32) {
    %c0_i32 = arith.constant 0 : i32
    %c0_i32_0 = arith.constant 0 : i32
    %c0_i32_1 = arith.constant 0 : i32
    return %arg0, %c0_i32, %c0_i32_0 : i32, i32, i32
  }
}

module attributes {stable_mosaic.version = 11 : i64} {
  func.func @_affine_relu_rowresize_kernel(%arg0: i32, %arg1: memref<1x16x512xbf16, #tpu.memory_space<vmem>>, %arg2: memref<32x16xbf16, #tpu.memory_space<vmem>>, %arg3: memref<1x512xf32, #tpu.memory_space<vmem>>, %arg4: memref<1x512xf32, #tpu.memory_space<vmem>>, %arg5: memref<1x32x512xbf16, #tpu.memory_space<vmem>>) attributes {dimension_semantics = [#tpu.dimension_semantics<parallel>], iteration_bounds = array<i64: 2>, scalar_prefetch = 0 : i64, scratch_operands = 0 : i64, tpu.core_type = #tpu.core_type<tc>, window_params = [{transform_indices = @transform_0, window_bounds = array<i64: 1, 16, 512>}, {pipeline_mode = #tpu.pipeline_mode<synchronous>, transform_indices = @transform_1, window_bounds = array<i64: 32, 16>}, {pipeline_mode = #tpu.pipeline_mode<synchronous>, transform_indices = @transform_2, window_bounds = array<i64: 1, 512>}, {pipeline_mode = #tpu.pipeline_mode<synchronous>, transform_indices = @transform_3, window_bounds = array<i64: 1, 512>}, {transform_indices = @transform_4, window_bounds = array<i64: 1, 32, 512>}]} {
    %c0 = arith.constant 0 : index
    %c0_0 = arith.constant 0 : index
    %c0_1 = arith.constant 0 : index
    %0 = vector.load %arg1[%c0, %c0_0, %c0_1] : memref<1x16x512xbf16, #tpu.memory_space<vmem>>, vector<1x16x512xbf16>
    %1 = vector.shape_cast %0 : vector<1x16x512xbf16> to vector<16x512xbf16>
    %2 = arith.extf %1 : vector<16x512xbf16> to vector<16x512xf32>
    %c0_2 = arith.constant 0 : index
    %c0_3 = arith.constant 0 : index
    %3 = vector.load %arg3[%c0_2, %c0_3] : memref<1x512xf32, #tpu.memory_space<vmem>>, vector<1x512xf32>
    %4 = vector.broadcast %3 : vector<1x512xf32> to vector<16x512xf32>
    %5 = arith.mulf %2, %4 : vector<16x512xf32>
    %c0_4 = arith.constant 0 : index
    %c0_5 = arith.constant 0 : index
    %6 = vector.load %arg4[%c0_4, %c0_5] : memref<1x512xf32, #tpu.memory_space<vmem>>, vector<1x512xf32>
    %7 = vector.broadcast %6 : vector<1x512xf32> to vector<16x512xf32>
    %8 = arith.addf %5, %7 : vector<16x512xf32>
    %cst = arith.constant 0.000000e+00 : f32
    %9 = vector.broadcast %cst : f32 to vector<16x512xf32>
    %10 = arith.maximumf %8, %9 : vector<16x512xf32>
    %11 = arith.truncf %10 : vector<16x512xf32> to vector<16x512xbf16>
    %c0_6 = arith.constant 0 : index
    %c0_7 = arith.constant 0 : index
    %12 = vector.load %arg2[%c0_6, %c0_7] : memref<32x16xbf16, #tpu.memory_space<vmem>>, vector<32x16xbf16>
    %cst_8 = arith.constant dense<0.000000e+00> : vector<32x512xf32>
    %13 = tpu.matmul %12, %11, %cst_8 {dimension_numbers = #tpu.dot_dimension_numbers<[1], [0], [0], [1], [0, 0, 1, 1], [], []>} : vector<32x16xbf16>, vector<16x512xbf16>, vector<32x512xf32> -> vector<32x512xf32>
    %14 = arith.truncf %13 : vector<32x512xf32> to vector<32x512xbf16>
    %c0_9 = arith.constant 0 : index
    %c0_10 = arith.constant 0 : index
    %c0_11 = arith.constant 0 : index
    %15 = vector.load %arg5[%c0_9, %c0_10, %c0_11] : memref<1x32x512xbf16, #tpu.memory_space<vmem>>, vector<1x32x512xbf16>
    %16 = vector.shape_cast %15 : vector<1x32x512xbf16> to vector<32x512xbf16>
    %17 = vector.shape_cast %14 : vector<32x512xbf16> to vector<1x32x512xbf16>
    tpu.vector_store %arg5[%c0_9, %c0_10, %c0_11], %17 {strides = array<i32>} : memref<1x32x512xbf16, #tpu.memory_space<vmem>>, vector<1x32x512xbf16>,
    return
  }
  func.func @transform_0(%arg0: i32) -> (i32, i32, i32) {
    %c0_i32 = arith.constant 0 : i32
    %c0_i32_0 = arith.constant 0 : i32
    %c0_i32_1 = arith.constant 0 : i32
    return %arg0, %c0_i32, %c0_i32_0 : i32, i32, i32
  }
  func.func @transform_1(%arg0: i32) -> (i32, i32) {
    %c0_i32 = arith.constant 0 : i32
    %c0_i32_0 = arith.constant 0 : i32
    %c0_i32_1 = arith.constant 0 : i32
    return %c0_i32, %c0_i32_0 : i32, i32
  }
  func.func @transform_2(%arg0: i32) -> (i32, i32) {
    %c0_i32 = arith.constant 0 : i32
    %c0_i32_0 = arith.constant 0 : i32
    %c0_i32_1 = arith.constant 0 : i32
    return %c0_i32, %c0_i32_0 : i32, i32
  }
  func.func @transform_3(%arg0: i32) -> (i32, i32) {
    %c0_i32 = arith.constant 0 : i32
    %c0_i32_0 = arith.constant 0 : i32
    %c0_i32_1 = arith.constant 0 : i32
    return %c0_i32, %c0_i32_0 : i32, i32
  }
  func.func @transform_4(%arg0: i32) -> (i32, i32, i32) {
    %c0_i32 = arith.constant 0 : i32
    %c0_i32_0 = arith.constant 0 : i32
    %c0_i32_1 = arith.constant 0 : i32
    return %arg0, %c0_i32, %c0_i32_0 : i32, i32, i32
  }
}

module attributes {stable_mosaic.version = 11 : i64} {
  func.func @_colresize_kernel(%arg0: i32, %arg1: memref<1x32x16x32xbf16, #tpu.memory_space<vmem>>, %arg2: memref<32x16xbf16, #tpu.memory_space<vmem>>, %arg3: memref<1x32x32x32xbf16, #tpu.memory_space<vmem>>) attributes {dimension_semantics = [#tpu.dimension_semantics<parallel>], iteration_bounds = array<i64: 2>, scalar_prefetch = 0 : i64, scratch_operands = 0 : i64, tpu.core_type = #tpu.core_type<tc>, window_params = [{transform_indices = @transform_0, window_bounds = array<i64: 1, 32, 16, 32>}, {pipeline_mode = #tpu.pipeline_mode<synchronous>, transform_indices = @transform_1, window_bounds = array<i64: 32, 16>}, {transform_indices = @transform_2, window_bounds = array<i64: 1, 32, 32, 32>}]} {
    %c0_i32 = arith.constant 0 : i32
    %c32_i32 = arith.constant 32 : i32
    %0 = arith.addi %c0_i32, %c32_i32 : i32
    %c1_i32 = arith.constant 1 : i32
    scf.for %arg4 = %c0_i32 to %0 step %c1_i32  : i32 {
      %c1_i32_1 = arith.constant 1 : i32
      %1 = arith.muli %arg4, %c1_i32_1 : i32
      %c0_i32_2 = arith.constant 0 : i32
      %2 = arith.addi %c0_i32_2, %1 : i32
      %c0 = arith.constant 0 : index
      %c0_3 = arith.constant 0 : index
      %3 = vector.load %arg2[%c0, %c0_3] : memref<32x16xbf16, #tpu.memory_space<vmem>>, vector<32x16xbf16>
      %c0_4 = arith.constant 0 : index
      %4 = arith.index_cast %2 : i32 to index
      %c0_5 = arith.constant 0 : index
      %c0_6 = arith.constant 0 : index
      %5 = vector.load %arg1[%c0_4, %4, %c0_5, %c0_6] : memref<1x32x16x32xbf16, #tpu.memory_space<vmem>>, vector<1x1x16x32xbf16>
      %6 = vector.shape_cast %5 : vector<1x1x16x32xbf16> to vector<16x32xbf16>
      %cst = arith.constant dense<0.000000e+00> : vector<32x32xf32>
      %7 = tpu.matmul %3, %6, %cst {dimension_numbers = #tpu.dot_dimension_numbers<[1], [0], [0], [1], [0, 0, 1, 1], [], []>} : vector<32x16xbf16>, vector<16x32xbf16>, vector<32x32xf32> -> vector<32x32xf32>
      %8 = arith.truncf %7 : vector<32x32xf32> to vector<32x32xbf16>
      %c0_7 = arith.constant 0 : index
      %9 = arith.index_cast %2 : i32 to index
      %c0_8 = arith.constant 0 : index
      %c0_9 = arith.constant 0 : index
      %10 = vector.load %arg3[%c0_7, %9, %c0_8, %c0_9] : memref<1x32x32x32xbf16, #tpu.memory_space<vmem>>, vector<1x1x32x32xbf16>
      %11 = vector.shape_cast %10 : vector<1x1x32x32xbf16> to vector<32x32xbf16>
      %12 = vector.shape_cast %8 : vector<32x32xbf16> to vector<1x1x32x32xbf16>
      tpu.vector_store %arg3[%c0_7, %9, %c0_8, %c0_9], %12 {strides = array<i32>} : memref<1x32x32x32xbf16, #tpu.memory_space<vmem>>, vector<1x1x32x32xbf16>,
    }
    %c32_i32_0 = arith.constant 32 : i32
    return
  }
  func.func @transform_0(%arg0: i32) -> (i32, i32, i32, i32) {
    %c0_i32 = arith.constant 0 : i32
    %c0_i32_0 = arith.constant 0 : i32
    %c0_i32_1 = arith.constant 0 : i32
    %c0_i32_2 = arith.constant 0 : i32
    return %arg0, %c0_i32, %c0_i32_0, %c0_i32_1 : i32, i32, i32, i32
  }
  func.func @transform_1(%arg0: i32) -> (i32, i32) {
    %c0_i32 = arith.constant 0 : i32
    %c0_i32_0 = arith.constant 0 : i32
    %c0_i32_1 = arith.constant 0 : i32
    return %c0_i32, %c0_i32_0 : i32, i32
  }
  func.func @transform_2(%arg0: i32) -> (i32, i32, i32, i32) {
    %c0_i32 = arith.constant 0 : i32
    %c0_i32_0 = arith.constant 0 : i32
    %c0_i32_1 = arith.constant 0 : i32
    %c0_i32_2 = arith.constant 0 : i32
    return %arg0, %c0_i32, %c0_i32_0, %c0_i32_1 : i32, i32, i32, i32
  }
}

module attributes {stable_mosaic.version = 11 : i64} {
  func.func @_matmul_bias_kernel(%arg0: i32, %arg1: memref<1024x32xbf16, #tpu.memory_space<vmem>>, %arg2: memref<32x5xbf16, #tpu.memory_space<vmem>>, %arg3: memref<1x5xf32, #tpu.memory_space<vmem>>, %arg4: memref<1024x5xf32, #tpu.memory_space<vmem>>) attributes {dimension_semantics = [#tpu.dimension_semantics<parallel>], iteration_bounds = array<i64: 2>, scalar_prefetch = 0 : i64, scratch_operands = 0 : i64, tpu.core_type = #tpu.core_type<tc>, window_params = [{transform_indices = @transform_0, window_bounds = array<i64: 1024, 32>}, {pipeline_mode = #tpu.pipeline_mode<synchronous>, transform_indices = @transform_1, window_bounds = array<i64: 32, 5>}, {pipeline_mode = #tpu.pipeline_mode<synchronous>, transform_indices = @transform_2, window_bounds = array<i64: 1, 5>}, {transform_indices = @transform_3, window_bounds = array<i64: 1024, 5>}]} {
    %c0 = arith.constant 0 : index
    %c0_0 = arith.constant 0 : index
    %0 = vector.load %arg1[%c0, %c0_0] : memref<1024x32xbf16, #tpu.memory_space<vmem>>, vector<1024x32xbf16>
    %c0_1 = arith.constant 0 : index
    %c0_2 = arith.constant 0 : index
    %1 = vector.load %arg2[%c0_1, %c0_2] : memref<32x5xbf16, #tpu.memory_space<vmem>>, vector<32x5xbf16>
    %cst = arith.constant dense<0.000000e+00> : vector<1024x5xf32>
    %2 = tpu.matmul %0, %1, %cst {dimension_numbers = #tpu.dot_dimension_numbers<[1], [0], [0], [1], [0, 0, 1, 1], [], []>} : vector<1024x32xbf16>, vector<32x5xbf16>, vector<1024x5xf32> -> vector<1024x5xf32>
    %c0_3 = arith.constant 0 : index
    %c0_4 = arith.constant 0 : index
    %3 = vector.load %arg3[%c0_3, %c0_4] : memref<1x5xf32, #tpu.memory_space<vmem>>, vector<1x5xf32>
    %4 = vector.broadcast %3 : vector<1x5xf32> to vector<1024x5xf32>
    %5 = arith.addf %2, %4 : vector<1024x5xf32>
    %c0_5 = arith.constant 0 : index
    %c0_6 = arith.constant 0 : index
    %6 = vector.load %arg4[%c0_5, %c0_6] : memref<1024x5xf32, #tpu.memory_space<vmem>>, vector<1024x5xf32>
    tpu.vector_store %arg4[%c0_5, %c0_6], %5 {strides = array<i32>} : memref<1024x5xf32, #tpu.memory_space<vmem>>, vector<1024x5xf32>,
    return
  }
  func.func @transform_0(%arg0: i32) -> (i32, i32) {
    %c0_i32 = arith.constant 0 : i32
    %c0_i32_0 = arith.constant 0 : i32
    return %arg0, %c0_i32 : i32, i32
  }
  func.func @transform_1(%arg0: i32) -> (i32, i32) {
    %c0_i32 = arith.constant 0 : i32
    %c0_i32_0 = arith.constant 0 : i32
    %c0_i32_1 = arith.constant 0 : i32
    return %c0_i32, %c0_i32_0 : i32, i32
  }
  func.func @transform_2(%arg0: i32) -> (i32, i32) {
    %c0_i32 = arith.constant 0 : i32
    %c0_i32_0 = arith.constant 0 : i32
    %c0_i32_1 = arith.constant 0 : i32
    return %c0_i32, %c0_i32_0 : i32, i32
  }
  func.func @transform_3(%arg0: i32) -> (i32, i32) {
    %c0_i32 = arith.constant 0 : i32
    %c0_i32_0 = arith.constant 0 : i32
    return %arg0, %c0_i32 : i32, i32
  }
}

module attributes {stable_mosaic.version = 11 : i64} {
  func.func @_resize_nchw_kernel(%arg0: i32, %arg1: memref<1x5x32x32xf32, #tpu.memory_space<vmem>>, %arg2: memref<40x32xf32, #tpu.memory_space<vmem>>, %arg3: memref<32x40xf32, #tpu.memory_space<vmem>>, %arg4: memref<1x5x40x40xf32, #tpu.memory_space<vmem>>) attributes {dimension_semantics = [#tpu.dimension_semantics<parallel>], iteration_bounds = array<i64: 2>, scalar_prefetch = 0 : i64, scratch_operands = 0 : i64, tpu.core_type = #tpu.core_type<tc>, window_params = [{transform_indices = @transform_0, window_bounds = array<i64: 1, 5, 32, 32>}, {pipeline_mode = #tpu.pipeline_mode<synchronous>, transform_indices = @transform_1, window_bounds = array<i64: 40, 32>}, {pipeline_mode = #tpu.pipeline_mode<synchronous>, transform_indices = @transform_2, window_bounds = array<i64: 32, 40>}, {transform_indices = @transform_3, window_bounds = array<i64: 1, 5, 40, 40>}]} {
    %c0 = arith.constant 0 : index
    %c0_0 = arith.constant 0 : index
    %0 = vector.load %arg2[%c0, %c0_0] : memref<40x32xf32, #tpu.memory_space<vmem>>, vector<40x32xf32>
    %c0_1 = arith.constant 0 : index
    %c0_2 = arith.constant 0 : index
    %c0_3 = arith.constant 0 : index
    %c0_4 = arith.constant 0 : index
    %1 = vector.load %arg1[%c0_1, %c0_2, %c0_3, %c0_4] : memref<1x5x32x32xf32, #tpu.memory_space<vmem>>, vector<1x1x32x32xf32>
    %2 = vector.shape_cast %1 : vector<1x1x32x32xf32> to vector<32x32xf32>
    %cst = arith.constant dense<0.000000e+00> : vector<40x32xf32>
    %3 = tpu.matmul %0, %2, %cst {dimension_numbers = #tpu.dot_dimension_numbers<[1], [0], [0], [1], [0, 0, 1, 1], [], []>} : vector<40x32xf32>, vector<32x32xf32>, vector<40x32xf32> -> vector<40x32xf32>
    %c0_5 = arith.constant 0 : index
    %c0_6 = arith.constant 0 : index
    %4 = vector.load %arg3[%c0_5, %c0_6] : memref<32x40xf32, #tpu.memory_space<vmem>>, vector<32x40xf32>
    %cst_7 = arith.constant dense<0.000000e+00> : vector<40x40xf32>
    %5 = tpu.matmul %3, %4, %cst_7 {dimension_numbers = #tpu.dot_dimension_numbers<[1], [0], [0], [1], [0, 0, 1, 1], [], []>} : vector<40x32xf32>, vector<32x40xf32>, vector<40x40xf32> -> vector<40x40xf32>
    %c0_8 = arith.constant 0 : index
    %c0_9 = arith.constant 0 : index
    %c0_10 = arith.constant 0 : index
    %c0_11 = arith.constant 0 : index
    %6 = vector.load %arg4[%c0_8, %c0_9, %c0_10, %c0_11] : memref<1x5x40x40xf32, #tpu.memory_space<vmem>>, vector<1x1x40x40xf32>
    %7 = vector.shape_cast %6 : vector<1x1x40x40xf32> to vector<40x40xf32>
    %8 = vector.shape_cast %5 : vector<40x40xf32> to vector<1x1x40x40xf32>
    tpu.vector_store %arg4[%c0_8, %c0_9, %c0_10, %c0_11], %8 {strides = array<i32>} : memref<1x5x40x40xf32, #tpu.memory_space<vmem>>, vector<1x1x40x40xf32>,
    %c0_12 = arith.constant 0 : index
    %c0_13 = arith.constant 0 : index
    %9 = vector.load %arg2[%c0_12, %c0_13] : memref<40x32xf32, #tpu.memory_space<vmem>>, vector<40x32xf32>
    %c0_14 = arith.constant 0 : index
    %c1 = arith.constant 1 : index
    %c0_15 = arith.constant 0 : index
    %c0_16 = arith.constant 0 : index
    %10 = vector.load %arg1[%c0_14, %c1, %c0_15, %c0_16] : memref<1x5x32x32xf32, #tpu.memory_space<vmem>>, vector<1x1x32x32xf32>
    %11 = vector.shape_cast %10 : vector<1x1x32x32xf32> to vector<32x32xf32>
    %cst_17 = arith.constant dense<0.000000e+00> : vector<40x32xf32>
    %12 = tpu.matmul %9, %11, %cst_17 {dimension_numbers = #tpu.dot_dimension_numbers<[1], [0], [0], [1], [0, 0, 1, 1], [], []>} : vector<40x32xf32>, vector<32x32xf32>, vector<40x32xf32> -> vector<40x32xf32>
    %c0_18 = arith.constant 0 : index
    %c0_19 = arith.constant 0 : index
    %13 = vector.load %arg3[%c0_18, %c0_19] : memref<32x40xf32, #tpu.memory_space<vmem>>, vector<32x40xf32>
    %cst_20 = arith.constant dense<0.000000e+00> : vector<40x40xf32>
    %14 = tpu.matmul %12, %13, %cst_20 {dimension_numbers = #tpu.dot_dimension_numbers<[1], [0], [0], [1], [0, 0, 1, 1], [], []>} : vector<40x32xf32>, vector<32x40xf32>, vector<40x40xf32> -> vector<40x40xf32>
    %c0_21 = arith.constant 0 : index
    %c1_22 = arith.constant 1 : index
    %c0_23 = arith.constant 0 : index
    %c0_24 = arith.constant 0 : index
    %15 = vector.load %arg4[%c0_21, %c1_22, %c0_23, %c0_24] : memref<1x5x40x40xf32, #tpu.memory_space<vmem>>, vector<1x1x40x40xf32>
    %16 = vector.shape_cast %15 : vector<1x1x40x40xf32> to vector<40x40xf32>
    %17 = vector.shape_cast %14 : vector<40x40xf32> to vector<1x1x40x40xf32>
    tpu.vector_store %arg4[%c0_21, %c1_22, %c0_23, %c0_24], %17 {strides = array<i32>} : memref<1x5x40x40xf32, #tpu.memory_space<vmem>>, vector<1x1x40x40xf32>,
    %c0_25 = arith.constant 0 : index
    %c0_26 = arith.constant 0 : index
    %18 = vector.load %arg2[%c0_25, %c0_26] : memref<40x32xf32, #tpu.memory_space<vmem>>, vector<40x32xf32>
    %c0_27 = arith.constant 0 : index
    %c2 = arith.constant 2 : index
    %c0_28 = arith.constant 0 : index
    %c0_29 = arith.constant 0 : index
    %19 = vector.load %arg1[%c0_27, %c2, %c0_28, %c0_29] : memref<1x5x32x32xf32, #tpu.memory_space<vmem>>, vector<1x1x32x32xf32>
    %20 = vector.shape_cast %19 : vector<1x1x32x32xf32> to vector<32x32xf32>
    %cst_30 = arith.constant dense<0.000000e+00> : vector<40x32xf32>
    %21 = tpu.matmul %18, %20, %cst_30 {dimension_numbers = #tpu.dot_dimension_numbers<[1], [0], [0], [1], [0, 0, 1, 1], [], []>} : vector<40x32xf32>, vector<32x32xf32>, vector<40x32xf32> -> vector<40x32xf32>
    %c0_31 = arith.constant 0 : index
    %c0_32 = arith.constant 0 : index
    %22 = vector.load %arg3[%c0_31, %c0_32] : memref<32x40xf32, #tpu.memory_space<vmem>>, vector<32x40xf32>
    %cst_33 = arith.constant dense<0.000000e+00> : vector<40x40xf32>
    %23 = tpu.matmul %21, %22, %cst_33 {dimension_numbers = #tpu.dot_dimension_numbers<[1], [0], [0], [1], [0, 0, 1, 1], [], []>} : vector<40x32xf32>, vector<32x40xf32>, vector<40x40xf32> -> vector<40x40xf32>
    %c0_34 = arith.constant 0 : index
    %c2_35 = arith.constant 2 : index
    %c0_36 = arith.constant 0 : index
    %c0_37 = arith.constant 0 : index
    %24 = vector.load %arg4[%c0_34, %c2_35, %c0_36, %c0_37] : memref<1x5x40x40xf32, #tpu.memory_space<vmem>>, vector<1x1x40x40xf32>
    %25 = vector.shape_cast %24 : vector<1x1x40x40xf32> to vector<40x40xf32>
    %26 = vector.shape_cast %23 : vector<40x40xf32> to vector<1x1x40x40xf32>
    tpu.vector_store %arg4[%c0_34, %c2_35, %c0_36, %c0_37], %26 {strides = array<i32>} : memref<1x5x40x40xf32, #tpu.memory_space<vmem>>, vector<1x1x40x40xf32>,
    %c0_38 = arith.constant 0 : index
    %c0_39 = arith.constant 0 : index
    %27 = vector.load %arg2[%c0_38, %c0_39] : memref<40x32xf32, #tpu.memory_space<vmem>>, vector<40x32xf32>
    %c0_40 = arith.constant 0 : index
    %c3 = arith.constant 3 : index
    %c0_41 = arith.constant 0 : index
    %c0_42 = arith.constant 0 : index
    %28 = vector.load %arg1[%c0_40, %c3, %c0_41, %c0_42] : memref<1x5x32x32xf32, #tpu.memory_space<vmem>>, vector<1x1x32x32xf32>
    %29 = vector.shape_cast %28 : vector<1x1x32x32xf32> to vector<32x32xf32>
    %cst_43 = arith.constant dense<0.000000e+00> : vector<40x32xf32>
    %30 = tpu.matmul %27, %29, %cst_43 {dimension_numbers = #tpu.dot_dimension_numbers<[1], [0], [0], [1], [0, 0, 1, 1], [], []>} : vector<40x32xf32>, vector<32x32xf32>, vector<40x32xf32> -> vector<40x32xf32>
    %c0_44 = arith.constant 0 : index
    %c0_45 = arith.constant 0 : index
    %31 = vector.load %arg3[%c0_44, %c0_45] : memref<32x40xf32, #tpu.memory_space<vmem>>, vector<32x40xf32>
    %cst_46 = arith.constant dense<0.000000e+00> : vector<40x40xf32>
    %32 = tpu.matmul %30, %31, %cst_46 {dimension_numbers = #tpu.dot_dimension_numbers<[1], [0], [0], [1], [0, 0, 1, 1], [], []>} : vector<40x32xf32>, vector<32x40xf32>, vector<40x40xf32> -> vector<40x40xf32>
    %c0_47 = arith.constant 0 : index
    %c3_48 = arith.constant 3 : index
    %c0_49 = arith.constant 0 : index
    %c0_50 = arith.constant 0 : index
    %33 = vector.load %arg4[%c0_47, %c3_48, %c0_49, %c0_50] : memref<1x5x40x40xf32, #tpu.memory_space<vmem>>, vector<1x1x40x40xf32>
    %34 = vector.shape_cast %33 : vector<1x1x40x40xf32> to vector<40x40xf32>
    %35 = vector.shape_cast %32 : vector<40x40xf32> to vector<1x1x40x40xf32>
    tpu.vector_store %arg4[%c0_47, %c3_48, %c0_49, %c0_50], %35 {strides = array<i32>} : memref<1x5x40x40xf32, #tpu.memory_space<vmem>>, vector<1x1x40x40xf32>,
    %c0_51 = arith.constant 0 : index
    %c0_52 = arith.constant 0 : index
    %36 = vector.load %arg2[%c0_51, %c0_52] : memref<40x32xf32, #tpu.memory_space<vmem>>, vector<40x32xf32>
    %c0_53 = arith.constant 0 : index
    %c4 = arith.constant 4 : index
    %c0_54 = arith.constant 0 : index
    %c0_55 = arith.constant 0 : index
    %37 = vector.load %arg1[%c0_53, %c4, %c0_54, %c0_55] : memref<1x5x32x32xf32, #tpu.memory_space<vmem>>, vector<1x1x32x32xf32>
    %38 = vector.shape_cast %37 : vector<1x1x32x32xf32> to vector<32x32xf32>
    %cst_56 = arith.constant dense<0.000000e+00> : vector<40x32xf32>
    %39 = tpu.matmul %36, %38, %cst_56 {dimension_numbers = #tpu.dot_dimension_numbers<[1], [0], [0], [1], [0, 0, 1, 1], [], []>} : vector<40x32xf32>, vector<32x32xf32>, vector<40x32xf32> -> vector<40x32xf32>
    %c0_57 = arith.constant 0 : index
    %c0_58 = arith.constant 0 : index
    %40 = vector.load %arg3[%c0_57, %c0_58] : memref<32x40xf32, #tpu.memory_space<vmem>>, vector<32x40xf32>
    %cst_59 = arith.constant dense<0.000000e+00> : vector<40x40xf32>
    %41 = tpu.matmul %39, %40, %cst_59 {dimension_numbers = #tpu.dot_dimension_numbers<[1], [0], [0], [1], [0, 0, 1, 1], [], []>} : vector<40x32xf32>, vector<32x40xf32>, vector<40x40xf32> -> vector<40x40xf32>
    %c0_60 = arith.constant 0 : index
    %c4_61 = arith.constant 4 : index
    %c0_62 = arith.constant 0 : index
    %c0_63 = arith.constant 0 : index
    %42 = vector.load %arg4[%c0_60, %c4_61, %c0_62, %c0_63] : memref<1x5x40x40xf32, #tpu.memory_space<vmem>>, vector<1x1x40x40xf32>
    %43 = vector.shape_cast %42 : vector<1x1x40x40xf32> to vector<40x40xf32>
    %44 = vector.shape_cast %41 : vector<40x40xf32> to vector<1x1x40x40xf32>
    tpu.vector_store %arg4[%c0_60, %c4_61, %c0_62, %c0_63], %44 {strides = array<i32>} : memref<1x5x40x40xf32, #tpu.memory_space<vmem>>, vector<1x1x40x40xf32>,
    return
  }
  func.func @transform_0(%arg0: i32) -> (i32, i32, i32, i32) {
    %c0_i32 = arith.constant 0 : i32
    %c0_i32_0 = arith.constant 0 : i32
    %c0_i32_1 = arith.constant 0 : i32
    %c0_i32_2 = arith.constant 0 : i32
    return %arg0, %c0_i32, %c0_i32_0, %c0_i32_1 : i32, i32, i32, i32
  }
  func.func @transform_1(%arg0: i32) -> (i32, i32) {
    %c0_i32 = arith.constant 0 : i32
    %c0_i32_0 = arith.constant 0 : i32
    %c0_i32_1 = arith.constant 0 : i32
    return %c0_i32, %c0_i32_0 : i32, i32
  }
  func.func @transform_2(%arg0: i32) -> (i32, i32) {
    %c0_i32 = arith.constant 0 : i32
    %c0_i32_0 = arith.constant 0 : i32
    %c0_i32_1 = arith.constant 0 : i32
    return %c0_i32, %c0_i32_0 : i32, i32
  }
  func.func @transform_3(%arg0: i32) -> (i32, i32, i32, i32) {
    %c0_i32 = arith.constant 0 : i32
    %c0_i32_0 = arith.constant 0 : i32
    %c0_i32_1 = arith.constant 0 : i32
    %c0_i32_2 = arith.constant 0 : i32
    return %arg0, %c0_i32, %c0_i32_0, %c0_i32_1 : i32, i32, i32, i32
  }
}

</mosaic_0001>

<llo_original>
// kernel: tile.23
$region0: #{tile.23}
  #allocation0 [shape = 's32[1]{0}', space=sflag, size = 0x4, scoped, tag = 'scoped memory for tile.23']
  %s0 = inlined_call_operand.vmem [shape: f32[32], index: 0, kind: input, shape index: {}]
  %s1 = inlined_call_operand.vmem [shape: f32[8,32], index: 1, kind: output, shape index: {}]
  // Predicated region
  $region2: #{tile.23} parent=0 // pred_check
    _
  $region3: #{tile.23} parent=0 // pred_check_branch
    %3 = sbr.rel (0) target = $region5
  $region4: #{tile.23} parent=0 // pred_region
    _
  $region5: #{tile.23} parent=0 // pred_fallthru
    _
  %v4 = vld [vmem:[%s0] ss:$0 sm:$0xff]
  %5 = vst [vmem:[%s1] sm:$0xff] %v4

// kernel: tile.24
$region0: #{tile.24}
  %s0 = inlined_call_operand.vmem [shape: f32[8,32], index: 0, kind: input, shape index: {}]
  %s1 = inlined_call_operand.vmem [shape: f32[1,256], index: 1, kind: output, shape index: {}]
  $region1: #{tile.24} parent=0
    #allocation0 [shape = 'u8[8192]{0}', space=vmem, size = 0x2000, scoped, tag = 'scoped mem for output reshape']
    %s2 = smov 3
    %v3 = vld [vmem:[%s0] ss:$4 sm:%s2]
    %vm4 = vcmask 261120
    %5 = vst.msk [vmem:[#allocation0] ss:$8 sm:$0x3] %vm4, %v3
    %s6 = scalar_lea.vmem %s0, 3
    %s7 = smov 3
    %v8 = vld [vmem:[%s6] ss:$4 sm:%s7]
    %9 = vrot.lane.b32.xlu0 %v8, 96
    %v10 = vpop.permute.xlu0 %9
    %vm11 = vcmask 1048320
    %12 = vst.msk [vmem:[#allocation0] ss:$8 sm:$0x3] %vm11, %v10
    %s13 = scalar_lea.vmem %s0, 2
    %s14 = smov 3
    %v15 = vld [vmem:[%s13] ss:$4 sm:%s14]
    %16 = vrot.lane.b32.xlu0 %v15, 64
    %v17 = vpop.permute.xlu0 %16
    %vm18 = vcmask 785920
    %19 = vst.msk [vmem:[#allocation0] ss:$8 sm:$0x3] %vm18, %v17
    %s20 = scalar_lea.vmem %s0, 1
    %s21 = smov 3
    %v22 = vld [vmem:[%s20] ss:$4 sm:%s21]
    %23 = vrot.lane.b32.xlu0 %v22, 32
    %v24 = vpop.permute.xlu0 %23
    %vm25 = vcmask 523520
    %26 = vst.msk [vmem:[#allocation0] ss:$8 sm:$0x3] %vm25, %v24
    %s28 = sshllo.u32 0, 1
    %v30 = vld [vmem:[#allocation0] sm:%s28]
    %s31 = sshllo.u32 0, 1
    %32 = vst [vmem:[%s1] sm:%s31] %v30
    %s33 = scalar_lea.vmem [#allocation0], 8
    %v34 = vld [vmem:[%s33] sm:%s28]
    %s35 = sshllo.u32 0, 1
    %s36 = scalar_lea.vmem %s1, 1
    %37 = vst [vmem:[%s36] sm:%s35] %v34

// kernel: _lambda_.9
$region0: #{_lambda_.9}
  #allocation0 [shape = 'u32[]', space=smem, size = 0x4, offset = 0x4, fixed_abs, tag = 'smem constant byte address 0x4 - core index']
  #allocation1 [shape = 'u32[144,128]{1,0:T(1,128)}', space=vmem, size = 0x12000, scoped, tag = 'internal scratch']
  %s0 = inlined_call_operand.vmem [shape: bf16[2,8,256], index: 0, kind: input, shape index: {}]
  %s1 = inlined_call_operand.vmem [shape: bf16[16,8], index: 1, kind: input, shape index: {}]
  %s2 = inlined_call_operand.vmem [shape: f32[1,256], index: 2, kind: input, shape index: {}]
  %s3 = inlined_call_operand.vmem [shape: f32[1,256], index: 3, kind: input, shape index: {}]
  %s4 = inlined_call_operand.vmem [shape: bf16[2,16,256], index: 4, kind: output, shape index: {}]
  %s5 = sld [smem:[#allocation0]]
  $region49: #{_lambda_.9} parent=0
    _
  %s7 = ssub.s32 1, %s5
  %s8 = scalar_select 0, %s7, %s5
  loop: start=0, step=1, limit=4
  $region2: #{_lambda_.9} parent=0 // loop_pre_header
    _
  $region3: #{_lambda_.9} parent=0 // loop_header
    %s10 = sphi 0, %s14
    %p11 = scmp.ge.s32.totalorder %s10, 4
    %s20 = sphi 0, %s22
    %s23 = sphi 0, %s20
    %s24 = sphi 0, %s23
    %s40 = sphi 0, %s24
    %s44 = sphi 0, %s44
    %s46 = sphi 0, %s44
    %s47 = sphi 0, %s46
    %s61 = sphi 0, %s47
    %s65 = sphi 0, %s65
    %s67 = sphi 0, %s65
    %s68 = sphi 0, %s67
    %s82 = sphi 0, %s68
    %s86 = sphi 0, %s86
    %s88 = sphi 0, %s86
    %s89 = sphi 0, %s88
    %s103 = sphi 0, %s89
    %s109 = sphi 0, %s111
    %s112 = sphi 0, %s109
    %s113 = sphi 0, %s112
    %s129 = sphi 0, %s113
  $region4: #{_lambda_.9} parent=0 // loop_header_branch
    %13 = sbr.rel (%p11) target = $region8
  $region5: #{_lambda_.9} parent=0 // loop_body
    %s15 = ssub.s32 %s10, 1
    %s16 = ssub.s32 %s10, 2
    %s17 = sadd.s32 %s10, 1
    %s18 = ssub.s32 %s10, %s17
    %p19 = scmp.eq.s32.totalorder %s18, 0
    %s21 = sadd.s32 %s20, 1
    %s22 = scalar_select %p19, %s20, %s21
    %p25 = pneg %p19
    %p26 = scmp.eq.s32.totalorder %s10, 1
    %p27 = por %p25, %p26
    %p28 = scmp.ne.s32.totalorder %s20, %s23
    %p29 = scmp.eq.s32.totalorder %s10, 0
    %p30 = por %p28, %p29
    %p31 = scmp.ne.s32.totalorder %s20, %s23
    %p32 = scmp.eq.s32.totalorder %s15, 1
    %p33 = por %p31, %p32
    %p34 = scmp.ne.s32.totalorder %s23, %s24
    %p35 = scmp.eq.s32.totalorder %s15, 0
    %p36 = por %p34, %p35
    %p37 = scmp.ne.s32.totalorder %s23, %s24
    %p38 = scmp.eq.s32.totalorder %s16, 1
    %p39 = por %p37, %p38
    %p41 = scmp.ne.s32.totalorder %s24, %s40
    %p42 = scmp.eq.s32.totalorder %s16, 0
    %p43 = por %p41, %p42
    %s45 = sadd.s32 %s44, 1
    %p48 = scmp.eq.s32.totalorder %s10, 1
    %p49 = scmp.ne.s32.totalorder %s44, %s46
    %p50 = scmp.eq.s32.totalorder %s10, 0
    %p51 = por %p49, %p50
    %p52 = scmp.ne.s32.totalorder %s44, %s46
    %p53 = scmp.eq.s32.totalorder %s15, 1
    %p54 = por %p52, %p53
    %p55 = scmp.ne.s32.totalorder %s46, %s47
    %p56 = scmp.eq.s32.totalorder %s15, 0
    %p57 = por %p55, %p56
    %p58 = scmp.ne.s32.totalorder %s46, %s47
    %p59 = scmp.eq.s32.totalorder %s16, 1
    %p60 = por %p58, %p59
    %p62 = scmp.ne.s32.totalorder %s47, %s61
    %p63 = scmp.eq.s32.totalorder %s16, 0
    %p64 = por %p62, %p63
    %s66 = sadd.s32 %s65, 1
    %p69 = scmp.eq.s32.totalorder %s10, 1
    %p70 = scmp.ne.s32.totalorder %s65, %s67
    %p71 = scmp.eq.s32.totalorder %s10, 0
    %p72 = por %p70, %p71
    %p73 = scmp.ne.s32.totalorder %s65, %s67
    %p74 = scmp.eq.s32.totalorder %s15, 1
    %p75 = por %p73, %p74
    %p76 = scmp.ne.s32.totalorder %s67, %s68
    %p77 = scmp.eq.s32.totalorder %s15, 0
    %p78 = por %p76, %p77
    %p79 = scmp.ne.s32.totalorder %s67, %s68
    %p80 = scmp.eq.s32.totalorder %s16, 1
    %p81 = por %p79, %p80
    %p83 = scmp.ne.s32.totalorder %s68, %s82
    %p84 = scmp.eq.s32.totalorder %s16, 0
    %p85 = por %p83, %p84
    %s87 = sadd.s32 %s86, 1
    %p90 = scmp.eq.s32.totalorder %s10, 1
    %p91 = scmp.ne.s32.totalorder %s86, %s88
    %p92 = scmp.eq.s32.totalorder %s10, 0
    %p93 = por %p91, %p92
    %p94 = scmp.ne.s32.totalorder %s86, %s88
    %p95 = scmp.eq.s32.totalorder %s15, 1
    %p96 = por %p94, %p95
    %p97 = scmp.ne.s32.totalorder %s88, %s89
    %p98 = scmp.eq.s32.totalorder %s15, 0
    %p99 = por %p97, %p98
    %p100 = scmp.ne.s32.totalorder %s88, %s89
    %p101 = scmp.eq.s32.totalorder %s16, 1
    %p102 = por %p100, %p101
    %p104 = scmp.ne.s32.totalorder %s89, %s103
    %p105 = scmp.eq.s32.totalorder %s16, 0
    %p106 = por %p104, %p105
    %s107 = ssub.s32 %s10, %s17
    %p108 = scmp.eq.s32.totalorder %s107, 0
    %s110 = sadd.s32 %s109, 1
    %s111 = scalar_select %p108, %s109, %s110
    %p114 = pneg %p108
    %p115 = scmp.eq.s32.totalorder %s10, 1
    %p116 = por %p114, %p115
    %p117 = scmp.ne.s32.totalorder %s109, %s112
    %p118 = scmp.eq.s32.totalorder %s10, 0
    %p119 = por %p117, %p118
    %p120 = scmp.ne.s32.totalorder %s109, %s112
    %p121 = scmp.eq.s32.totalorder %s15, 1
    %p122 = por %p120, %p121
    %p123 = scmp.ne.s32.totalorder %s112, %s113
    %p124 = scmp.eq.s32.totalorder %s15, 0
    %p125 = por %p123, %p124
    %p126 = scmp.ne.s32.totalorder %s112, %s113
    %p127 = scmp.eq.s32.totalorder %s16, 1
    %p128 = por %p126, %p127
    %p130 = scmp.ne.s32.totalorder %s113, %s129
    %p131 = scmp.eq.s32.totalorder %s16, 0
    %p132 = por %p130, %p131
    %p133 = scmp.le.s32.totalorder 1, %s10
    %p134 = scmp.lt.s32.totalorder %s10, 3
    %p135 = pnand %p133, %p134
    %p136 = pneg %p135
    // Predicated region
    $region9: #{_lambda_.9} parent=5 // pred_check
      _
    $region10: #{_lambda_.9} parent=5 // pred_check_branch
      %138 = sbr.rel (%p135) target = $region12
    $region11: #{_lambda_.9} parent=5 // pred_region
      %s139 = ssub.s32 %s10, 1
      // Predicated region
      $region13: #{_lambda_.9} parent=11 // pred_check
        %p140 = pneg %p57
      $region14: #{_lambda_.9} parent=11 // pred_check_branch
        %142 = sbr.rel (%p140) target = $region16
      $region15: #{_lambda_.9} parent=11 // pred_region
        _
      $region16: #{_lambda_.9} parent=11 // pred_fallthru
        _
      // Predicated region
      $region17: #{_lambda_.9} parent=11 // pred_check
        %p143 = pneg %p78
      $region18: #{_lambda_.9} parent=11 // pred_check_branch
        %145 = sbr.rel (%p143) target = $region20
      $region19: #{_lambda_.9} parent=11 // pred_region
        _
      $region20: #{_lambda_.9} parent=11 // pred_fallthru
        _
      // Predicated region
      $region21: #{_lambda_.9} parent=11 // pred_check
        %p146 = pneg %p99
      $region22: #{_lambda_.9} parent=11 // pred_check_branch
        %148 = sbr.rel (%p146) target = $region24
      $region23: #{_lambda_.9} parent=11 // pred_region
        _
      $region24: #{_lambda_.9} parent=11 // pred_fallthru
        _
    $region12: #{_lambda_.9} parent=5 // pred_fallthru
      _
    %p149 = scmp.lt.s32.totalorder %s10, 2
    // Predicated region
    $region25: #{_lambda_.9} parent=5 // pred_check
      %p150 = pneg %p149
    $region26: #{_lambda_.9} parent=5 // pred_check_branch
      %152 = sbr.rel (%p150) target = $region28
    $region27: #{_lambda_.9} parent=5 // pred_region
      // Predicated region
      $region29: #{_lambda_.9} parent=27 // pred_check
        %p153 = pneg %p30
      $region30: #{_lambda_.9} parent=27 // pred_check_branch
        %155 = sbr.rel (%p153) target = $region32
      $region31: #{_lambda_.9} parent=27 // pred_region
        %p156 = scmp.lt.s32.totalorder %s10, 1
        %s157 = scalar_select %p156, %s10, 1
        %s158 = smul.addr %s157, 2
        %s159 = smul.addr %s158, 4
        %s160 = scalar_lea.vmem %s0, %s159
      $region32: #{_lambda_.9} parent=27 // pred_fallthru
        _
    $region28: #{_lambda_.9} parent=5 // pred_fallthru
      _
    %p161 = scmp.le.s32.totalorder 1, %s10
    %p162 = scmp.lt.s32.totalorder %s10, 3
    %p163 = pnand %p161, %p162
    %p164 = pneg %p163
    // Predicated region
    $region33: #{_lambda_.9} parent=5 // pred_check
      _
    $region34: #{_lambda_.9} parent=5 // pred_check_branch
      %166 = sbr.rel (%p163) target = $region36
    $region35: #{_lambda_.9} parent=5 // pred_region
      %s167 = ssub.s32 %s10, 1
      %p168 = scmp.lt.s32.totalorder %s15, 1
      %s169 = scalar_select %p168, %s15, 1
      %s170 = smul.addr %s169, 2
      %s171 = smul.addr %s170, 4
      %s172 = scalar_lea.vmem %s0, %s171
      %p173 = pneg %p36
      %p174 = pneg %p33
      %p175 = pneg %p57
      %p176 = pneg %p54
      %p177 = pneg %p78
      %p178 = pneg %p75
      %p179 = pneg %p99
      %p180 = pneg %p96
      %p181 = pneg %p125
      %p182 = pneg %p122
      %p183 = scmp.lt.s32.totalorder %s15, 1
      %s184 = scalar_select %p183, %s15, 1
      %s185 = smul.addr %s184, 4
      %s186 = smul.addr %s185, 4
      %s187 = scalar_lea.vmem %s4, %s186
      %p188 = scmp.lt.s32.totalorder %s15, 1
      %s189 = scalar_select %p188, %s15, 1
      %s190 = smul.addr %s189, 2
      %s191 = smul.addr %s190, 4
      %s192 = scalar_lea.vmem %s0, %s191
      %p193 = scmp.lt.s32.totalorder %s15, 1
      %s194 = scalar_select %p193, %s15, 1
      %s195 = smul.addr %s194, 4
      %s196 = smul.addr %s195, 4
      %s197 = scalar_lea.vmem %s4, %s196
      %v199 = vld [vmem:[%s192] sm:$0xff]
      %v200 = vunpack.c.l.bf16 %v199
      %v201 = vunpack.c.h.bf16 %v199
      %v202 = vld [vmem:[%s2] sm:$0x3]
      %v204 = vlaneseq
      %v205 = vshrl.u32 %v204, 7
      %v206 = vsub.s32 0, %v205
      %v207 = vrot.slane %v202, %v206
      %v208 = vlaneseq
      %v209 = vshrl.u32 %v208, 7
      %v210 = vsub.s32 1, %v209
      %v211 = vrot.slane %v202, %v210
      %v214 = vmul.f32 %v200, %v207
      %v215 = vmul.f32 %v201, %v211
      %v216 = vld [vmem:[%s3] sm:$0x3]
      %v218 = vlaneseq
      %v219 = vshrl.u32 %v218, 7
      %v220 = vsub.s32 0, %v219
      %v221 = vrot.slane %v216, %v220
      %v222 = vlaneseq
      %v223 = vshrl.u32 %v222, 7
      %v224 = vsub.s32 1, %v223
      %v225 = vrot.slane %v216, %v224
      %v228 = vadd.f32 %v214, %v221
      %v229 = vadd.f32 %v215, %v225
      %v230 = vmax.f32 %v228, 0.0
      %v231 = vmax.f32 %v229, 0.0
      %v232 = vpack.c.bf16 %v230, %v230
      %v233 = vpack.c.bf16 %v231, %v231
      %v234 = vld [vmem:[%s1] sm:$0xf]
      %v235 = vld [vmem:[%s1 + $0x4] sm:$0xf]
      %v238 = vunpack.c.l.b16 %v234
      %v239 = vunpack.c.l.b16 %v235
      %v240 = vpack.c.b16 %v239, %v238
      %vm241 = vcmask 64512
      %v243 = vsel %vm241, %v240, 0
      %vm245 = vcmask 1043456
      %v247 = vsel %vm245, %v232, 0
      %v250 = vsel %vm245, %v233, 0
      %252 = vmatprep.subr.bf16.mxu0 %v250
      %253 = vmatpush1.bf16.msra.mxu0 %v247
      %254 = vmatprep.subr.bf16.mxu0 0
      %255 = vmatpush1.bf16.msra.mxu0 0
      %256 = vmatprep.subr.bf16.mxu0 0
      %257 = vmatpush1.bf16.msra.mxu0 0
      %258 = vmatprep.subr.bf16.mxu0 0
      %259 = vmatpush1.bf16.msra.mxu0 0
      %260 = vmatprep.subr.bf16.mxu0 0
      %261 = vmatpush1.bf16.msra.mxu0 0
      %262 = vmatprep.subr.bf16.mxu0 0
      %263 = vmatpush1.bf16.msra.mxu0 0
      %264 = vmatprep.subr.bf16.mxu0 0
      %265 = vmatpush1.bf16.msra.mxu0 0
      %266 = vmatprep.subr.bf16.mxu0 0
      %267 = vmatpush1.bf16.msra.mxu0 0
      %268 = vmatprep.subr.bf16.mxu0 0
      %269 = vmatpush1.bf16.msra.mxu0 0
      %270 = vmatprep.subr.bf16.mxu0 0
      %271 = vmatpush1.bf16.msra.mxu0 0
      %272 = vmatprep.subr.bf16.mxu0 0
      %273 = vmatpush1.bf16.msra.mxu0 0
      %274 = vmatprep.subr.bf16.mxu0 0
      %275 = vmatpush1.bf16.msra.mxu0 0
      %276 = vmatprep.subr.bf16.mxu0 0
      %277 = vmatpush1.bf16.msra.mxu0 0
      %278 = vmatprep.subr.bf16.mxu0 0
      %279 = vmatpush1.bf16.msra.mxu0 0
      %280 = vmatprep.subr.bf16.mxu0 0
      %281 = vmatpush1.bf16.msra.mxu0 0
      %282 = vmatprep.subr.bf16.mxu0 0
      %283 = vmatpush1.bf16.msra.mxu0 0
      %284 = vmatprep.mubr.bf16.mxu0 0
      %285 = vmatmul.mubr.bf16.gmra.mrb[0].mxu0 %v243
      %v286 = vpop.f32.mrb[0].mxu0
      %v287 = vadd.f32 0.0, %v286
      %v288 = vpop.f32.mrb[0].mxu0
      %v289 = vadd.f32 0.0, %v288
      %v290 = vpop.f32.mrb[0].mxu0
      %v291 = vadd.f32 0.0, %v290
      %v292 = vpop.f32.mrb[0].mxu0
      %v293 = vadd.f32 0.0, %v292
      %294 = vdwg.mxu0
      %v295 = vpack.c.bf16 %v291, %v287
      %v296 = vpack.c.bf16 %v293, %v289
      %v299 = vunpack.c.l.b16 %v295
      %v300 = vunpack.c.l.b16 %v296
      %v301 = vunpack.c.h.b16 %v295
      %v302 = vunpack.c.h.b16 %v296
      %v303 = vpack.c.b16 %v300, %v299
      %v304 = vpack.c.b16 %v302, %v301
      %307 = vst [vmem:[%s197] sm:$0xff] %v303
      %308 = vst [vmem:[%s197 + $0x8] sm:$0xff] %v304
      %p309 = scmp.lt.s32.totalorder %s15, 1
      %s310 = scalar_select %p309, %s15, 1
      %s311 = smul.addr %s310, 4
      %s312 = smul.addr %s311, 4
      %s313 = scalar_lea.vmem %s4, %s312
      // Predicated region
      $region37: #{_lambda_.9} parent=35 // pred_check
        %p314 = pneg %p122
      $region38: #{_lambda_.9} parent=35 // pred_check_branch
        %316 = sbr.rel (%p314) target = $region40
      $region39: #{_lambda_.9} parent=35 // pred_region
        _
      $region40: #{_lambda_.9} parent=35 // pred_fallthru
        _
    $region36: #{_lambda_.9} parent=5 // pred_fallthru
      _
    %p317 = scmp.le.s32.totalorder 2, %s10
    // Predicated region
    $region41: #{_lambda_.9} parent=5 // pred_check
      %p318 = pneg %p317
    $region42: #{_lambda_.9} parent=5 // pred_check_branch
      %320 = sbr.rel (%p318) target = $region44
    $region43: #{_lambda_.9} parent=5 // pred_region
      %s321 = ssub.s32 %s10, 2
      // Predicated region
      $region45: #{_lambda_.9} parent=43 // pred_check
        %p322 = pneg %p128
      $region46: #{_lambda_.9} parent=43 // pred_check_branch
        %324 = sbr.rel (%p322) target = $region48
      $region47: #{_lambda_.9} parent=43 // pred_region
        %p325 = scmp.lt.s32.totalorder %s16, 1
        %s326 = scalar_select %p325, %s16, 1
        %s327 = smul.addr %s326, 4
        %s328 = smul.addr %s327, 4
        %s329 = scalar_lea.vmem %s4, %s328
      $region48: #{_lambda_.9} parent=43 // pred_fallthru
        _
    $region44: #{_lambda_.9} parent=5 // pred_fallthru
      _
  $region6: #{_lambda_.9} parent=0 // loop_footer
    %s14 = sadd.s32 1, %s10
  $region7: #{_lambda_.9} parent=0 // loop_footer_branch
    %9 = sbr.rel target = $region3
  $region8: #{_lambda_.9} parent=0 // loop_exit
    _

// kernel: _lambda_.8
$region0: #{_lambda_.8}
  #allocation0 [shape = 'u32[]', space=smem, size = 0x4, offset = 0x4, fixed_abs, tag = 'smem constant byte address 0x4 - core index']
  #allocation1 [shape = 'u32[144,128]{1,0:T(1,128)}', space=vmem, size = 0x12000, scoped, tag = 'internal scratch']
  %s0 = inlined_call_operand.vmem [shape: bf16[2,10,10,4], index: 0, kind: input, shape index: {}]
  %s1 = inlined_call_operand.vmem [shape: bf16[3,12,32], index: 1, kind: input, shape index: {}]
  %s2 = inlined_call_operand.vmem [shape: bf16[2,8,8,32], index: 2, kind: output, shape index: {0}]
  %s3 = inlined_call_operand.vmem [shape: f32[2,1,32], index: 3, kind: output, shape index: {1}]
  %s4 = inlined_call_operand.vmem [shape: f32[2,1,32], index: 4, kind: output, shape index: {2}]
  %5 = xla_tuple %s2, %s3, %s4
  %s6 = sld [smem:[#allocation0]]
  $region57: #{_lambda_.8} parent=0
    _
  %s8 = ssub.s32 1, %s6
  %s9 = scalar_select 0, %s8, %s6
  loop: start=0, step=1, limit=4
  $region2: #{_lambda_.8} parent=0 // loop_pre_header
    _
  $region3: #{_lambda_.8} parent=0 // loop_header
    %s11 = sphi 0, %s15
    %p12 = scmp.ge.s32.totalorder %s11, 4
    %s21 = sphi 0, %s23
    %s24 = sphi 0, %s21
    %s25 = sphi 0, %s24
    %s41 = sphi 0, %s25
    %s45 = sphi 0, %s45
    %s47 = sphi 0, %s45
    %s48 = sphi 0, %s47
    %s62 = sphi 0, %s48
    %s68 = sphi 0, %s70
    %s71 = sphi 0, %s68
    %s72 = sphi 0, %s71
    %s88 = sphi 0, %s72
    %s94 = sphi 0, %s96
    %s97 = sphi 0, %s94
    %s98 = sphi 0, %s97
    %s114 = sphi 0, %s98
    %s120 = sphi 0, %s122
    %s123 = sphi 0, %s120
    %s124 = sphi 0, %s123
    %s140 = sphi 0, %s124
  $region4: #{_lambda_.8} parent=0 // loop_header_branch
    %14 = sbr.rel (%p12) target = $region8
  $region5: #{_lambda_.8} parent=0 // loop_body
    %s16 = ssub.s32 %s11, 1
    %s17 = ssub.s32 %s11, 2
    %s18 = sadd.s32 %s11, 1
    %s19 = ssub.s32 %s11, %s18
    %p20 = scmp.eq.s32.totalorder %s19, 0
    %s22 = sadd.s32 %s21, 1
    %s23 = scalar_select %p20, %s21, %s22
    %p26 = pneg %p20
    %p27 = scmp.eq.s32.totalorder %s11, 1
    %p28 = por %p26, %p27
    %p29 = scmp.ne.s32.totalorder %s21, %s24
    %p30 = scmp.eq.s32.totalorder %s11, 0
    %p31 = por %p29, %p30
    %p32 = scmp.ne.s32.totalorder %s21, %s24
    %p33 = scmp.eq.s32.totalorder %s16, 1
    %p34 = por %p32, %p33
    %p35 = scmp.ne.s32.totalorder %s24, %s25
    %p36 = scmp.eq.s32.totalorder %s16, 0
    %p37 = por %p35, %p36
    %p38 = scmp.ne.s32.totalorder %s24, %s25
    %p39 = scmp.eq.s32.totalorder %s17, 1
    %p40 = por %p38, %p39
    %p42 = scmp.ne.s32.totalorder %s25, %s41
    %p43 = scmp.eq.s32.totalorder %s17, 0
    %p44 = por %p42, %p43
    %s46 = sadd.s32 %s45, 1
    %p49 = scmp.eq.s32.totalorder %s11, 1
    %p50 = scmp.ne.s32.totalorder %s45, %s47
    %p51 = scmp.eq.s32.totalorder %s11, 0
    %p52 = por %p50, %p51
    %p53 = scmp.ne.s32.totalorder %s45, %s47
    %p54 = scmp.eq.s32.totalorder %s16, 1
    %p55 = por %p53, %p54
    %p56 = scmp.ne.s32.totalorder %s47, %s48
    %p57 = scmp.eq.s32.totalorder %s16, 0
    %p58 = por %p56, %p57
    %p59 = scmp.ne.s32.totalorder %s47, %s48
    %p60 = scmp.eq.s32.totalorder %s17, 1
    %p61 = por %p59, %p60
    %p63 = scmp.ne.s32.totalorder %s48, %s62
    %p64 = scmp.eq.s32.totalorder %s17, 0
    %p65 = por %p63, %p64
    %s66 = ssub.s32 %s11, %s18
    %p67 = scmp.eq.s32.totalorder %s66, 0
    %s69 = sadd.s32 %s68, 1
    %s70 = scalar_select %p67, %s68, %s69
    %p73 = pneg %p67
    %p74 = scmp.eq.s32.totalorder %s11, 1
    %p75 = por %p73, %p74
    %p76 = scmp.ne.s32.totalorder %s68, %s71
    %p77 = scmp.eq.s32.totalorder %s11, 0
    %p78 = por %p76, %p77
    %p79 = scmp.ne.s32.totalorder %s68, %s71
    %p80 = scmp.eq.s32.totalorder %s16, 1
    %p81 = por %p79, %p80
    %p82 = scmp.ne.s32.totalorder %s71, %s72
    %p83 = scmp.eq.s32.totalorder %s16, 0
    %p84 = por %p82, %p83
    %p85 = scmp.ne.s32.totalorder %s71, %s72
    %p86 = scmp.eq.s32.totalorder %s17, 1
    %p87 = por %p85, %p86
    %p89 = scmp.ne.s32.totalorder %s72, %s88
    %p90 = scmp.eq.s32.totalorder %s17, 0
    %p91 = por %p89, %p90
    %s92 = ssub.s32 %s11, %s18
    %p93 = scmp.eq.s32.totalorder %s92, 0
    %s95 = sadd.s32 %s94, 1
    %s96 = scalar_select %p93, %s94, %s95
    %p99 = pneg %p93
    %p100 = scmp.eq.s32.totalorder %s11, 1
    %p101 = por %p99, %p100
    %p102 = scmp.ne.s32.totalorder %s94, %s97
    %p103 = scmp.eq.s32.totalorder %s11, 0
    %p104 = por %p102, %p103
    %p105 = scmp.ne.s32.totalorder %s94, %s97
    %p106 = scmp.eq.s32.totalorder %s16, 1
    %p107 = por %p105, %p106
    %p108 = scmp.ne.s32.totalorder %s97, %s98
    %p109 = scmp.eq.s32.totalorder %s16, 0
    %p110 = por %p108, %p109
    %p111 = scmp.ne.s32.totalorder %s97, %s98
    %p112 = scmp.eq.s32.totalorder %s17, 1
    %p113 = por %p111, %p112
    %p115 = scmp.ne.s32.totalorder %s98, %s114
    %p116 = scmp.eq.s32.totalorder %s17, 0
    %p117 = por %p115, %p116
    %s118 = ssub.s32 %s11, %s18
    %p119 = scmp.eq.s32.totalorder %s118, 0
    %s121 = sadd.s32 %s120, 1
    %s122 = scalar_select %p119, %s120, %s121
    %p125 = pneg %p119
    %p126 = scmp.eq.s32.totalorder %s11, 1
    %p127 = por %p125, %p126
    %p128 = scmp.ne.s32.totalorder %s120, %s123
    %p129 = scmp.eq.s32.totalorder %s11, 0
    %p130 = por %p128, %p129
    %p131 = scmp.ne.s32.totalorder %s120, %s123
    %p132 = scmp.eq.s32.totalorder %s16, 1
    %p133 = por %p131, %p132
    %p134 = scmp.ne.s32.totalorder %s123, %s124
    %p135 = scmp.eq.s32.totalorder %s16, 0
    %p136 = por %p134, %p135
    %p137 = scmp.ne.s32.totalorder %s123, %s124
    %p138 = scmp.eq.s32.totalorder %s17, 1
    %p139 = por %p137, %p138
    %p141 = scmp.ne.s32.totalorder %s124, %s140
    %p142 = scmp.eq.s32.totalorder %s17, 0
    %p143 = por %p141, %p142
    %p144 = scmp.le.s32.totalorder 1, %s11
    %p145 = scmp.lt.s32.totalorder %s11, 3
    %p146 = pnand %p144, %p145
    %p147 = pneg %p146
    // Predicated region
    $region9: #{_lambda_.8} parent=5 // pred_check
      _
    $region10: #{_lambda_.8} parent=5 // pred_check_branch
      %149 = sbr.rel (%p146) target = $region12
    $region11: #{_lambda_.8} parent=5 // pred_region
      %s150 = ssub.s32 %s11, 1
      // Predicated region
      $region13: #{_lambda_.8} parent=11 // pred_check
        %p151 = pneg %p58
      $region14: #{_lambda_.8} parent=11 // pred_check_branch
        %153 = sbr.rel (%p151) target = $region16
      $region15: #{_lambda_.8} parent=11 // pred_region
        _
      $region16: #{_lambda_.8} parent=11 // pred_fallthru
        _
    $region12: #{_lambda_.8} parent=5 // pred_fallthru
      _
    %p154 = scmp.lt.s32.totalorder %s11, 2
    // Predicated region
    $region17: #{_lambda_.8} parent=5 // pred_check
      %p155 = pneg %p154
    $region18: #{_lambda_.8} parent=5 // pred_check_branch
      %157 = sbr.rel (%p155) target = $region20
    $region19: #{_lambda_.8} parent=5 // pred_region
      // Predicated region
      $region21: #{_lambda_.8} parent=19 // pred_check
        %p158 = pneg %p31
      $region22: #{_lambda_.8} parent=19 // pred_check_branch
        %160 = sbr.rel (%p158) target = $region24
      $region23: #{_lambda_.8} parent=19 // pred_region
        %p161 = scmp.lt.s32.totalorder %s11, 1
        %s162 = scalar_select %p161, %s11, 1
        %s163 = smul.addr %s162, 20
        %s164 = smul.addr %s163, 4
        %s165 = scalar_lea.vmem %s0, %s164
      $region24: #{_lambda_.8} parent=19 // pred_fallthru
        _
    $region20: #{_lambda_.8} parent=5 // pred_fallthru
      _
    %p166 = scmp.le.s32.totalorder 1, %s11
    %p167 = scmp.lt.s32.totalorder %s11, 3
    %p168 = pnand %p166, %p167
    %p169 = pneg %p168
    // Predicated region
    $region25: #{_lambda_.8} parent=5 // pred_check
      _
    $region26: #{_lambda_.8} parent=5 // pred_check_branch
      %171 = sbr.rel (%p168) target = $region28
    $region27: #{_lambda_.8} parent=5 // pred_region
      %s172 = ssub.s32 %s11, 1
      %p173 = scmp.lt.s32.totalorder %s16, 1
      %s174 = scalar_select %p173, %s16, 1
      %s175 = smul.addr %s174, 20
      %s176 = smul.addr %s175, 4
      %s177 = scalar_lea.vmem %s0, %s176
      %p178 = pneg %p37
      %p179 = pneg %p34
      %p180 = pneg %p58
      %p181 = pneg %p55
      %p182 = pneg %p84
      %p183 = pneg %p81
      %p184 = scmp.lt.s32.totalorder %s16, 1
      %s185 = scalar_select %p184, %s16, 1
      %s186 = smul.addr %s185, 8
      %s187 = smul.addr %s186, 4
      %s188 = scalar_lea.vmem %s2, %s187
      %p189 = pneg %p110
      %p190 = pneg %p107
      %p191 = scmp.lt.s32.totalorder %s16, 1
      %s192 = scalar_select %p191, %s16, 1
      %s193 = scalar_lea.vmem %s3, %s192
      %p194 = pneg %p136
      %p195 = pneg %p133
      %p196 = scmp.lt.s32.totalorder %s16, 1
      %s197 = scalar_select %p196, %s16, 1
      %s198 = scalar_lea.vmem %s4, %s197
      %p199 = scmp.lt.s32.totalorder %s16, 1
      %s200 = scalar_select %p199, %s16, 1
      %s201 = smul.addr %s200, 20
      %s202 = smul.addr %s201, 4
      %s203 = scalar_lea.vmem %s0, %s202
      %p204 = scmp.lt.s32.totalorder %s16, 1
      %s205 = scalar_select %p204, %s16, 1
      %s206 = smul.addr %s205, 8
      %s207 = smul.addr %s206, 4
      %s208 = scalar_lea.vmem %s2, %s207
      %p209 = scmp.lt.s32.totalorder %s16, 1
      %s210 = scalar_select %p209, %s16, 1
      %s211 = scalar_lea.vmem %s3, %s210
      %p212 = scmp.lt.s32.totalorder %s16, 1
      %s213 = scalar_select %p212, %s16, 1
      %s214 = scalar_lea.vmem %s4, %s213
      %v216 = vld [vmem:[%s203] sm:$0xf]
      %v217 = vld [vmem:[%s203 + $0x4] sm:$0x1]
      %v218 = vld [vmem:[%s203 + $0x8] sm:$0xf]
      %v219 = vld [vmem:[%s203 + $0xc] sm:$0x1]
      %v220 = vld [vmem:[%s203 + $0x10] sm:$0xf]
      %v221 = vld [vmem:[%s203 + $0x14] sm:$0x1]
      %v222 = vld [vmem:[%s203 + $0x18] sm:$0xf]
      %v223 = vld [vmem:[%s203 + $0x1c] sm:$0x1]
      %v224 = vld [vmem:[%s203 + $0x20] sm:$0xf]
      %v225 = vld [vmem:[%s203 + $0x24] sm:$0x1]
      %v226 = vld [vmem:[%s203 + $0x28] sm:$0xf]
      %v227 = vld [vmem:[%s203 + $0x2c] sm:$0x1]
      %v228 = vld [vmem:[%s203 + $0x30] sm:$0xf]
      %v229 = vld [vmem:[%s203 + $0x34] sm:$0x1]
      %v230 = vld [vmem:[%s203 + $0x38] sm:$0xf]
      %v231 = vld [vmem:[%s203 + $0x3c] sm:$0x1]
      %v232 = vld [vmem:[%s203 + $0x40] sm:$0xf]
      %v233 = vld [vmem:[%s203 + $0x44] sm:$0x1]
      %v234 = vld [vmem:[%s203 + $0x48] sm:$0xf]
      %v235 = vld [vmem:[%s203 + $0x4c] sm:$0x1]
      %v256 = vunpack.c.l.b16 %v216
      %v257 = vunpack.c.l.b16 %v217
      %v258 = vunpack.c.l.b16 %v218
      %v259 = vunpack.c.l.b16 %v219
      %v260 = vunpack.c.l.b16 %v220
      %v261 = vunpack.c.l.b16 %v221
      %v262 = vunpack.c.l.b16 %v222
      %v263 = vunpack.c.l.b16 %v223
      %v264 = vunpack.c.l.b16 %v224
      %v265 = vunpack.c.l.b16 %v225
      %v266 = vunpack.c.l.b16 %v226
      %v267 = vunpack.c.l.b16 %v227
      %v268 = vunpack.c.l.b16 %v228
      %v269 = vunpack.c.l.b16 %v229
      %v270 = vunpack.c.l.b16 %v230
      %v271 = vunpack.c.l.b16 %v231
      %v272 = vunpack.c.l.b16 %v232
      %v273 = vunpack.c.l.b16 %v233
      %v274 = vunpack.c.l.b16 %v234
      %v275 = vunpack.c.l.b16 %v235
      %v276 = vpack.c.b16 %v257, %v256
      %v277 = vpack.c.b16 %v259, %v258
      %v278 = vpack.c.b16 %v261, %v260
      %v279 = vpack.c.b16 %v263, %v262
      %v280 = vpack.c.b16 %v265, %v264
      %v281 = vpack.c.b16 %v267, %v266
      %v282 = vpack.c.b16 %v269, %v268
      %v283 = vpack.c.b16 %v271, %v270
      %v284 = vpack.c.b16 %v273, %v272
      %v285 = vpack.c.b16 %v275, %v274
      %v287 = vshrl.u32 %v276, 16
      %v289 = vshll.u32 %v276, 16
      %v291 = vrot.slane %v289, 1
      %v292 = vor.u32 %v287, %v291
      %v294 = vshrl.u32 %v277, 16
      %v296 = vshll.u32 %v277, 16
      %v298 = vrot.slane %v296, 1
      %v299 = vor.u32 %v294, %v298
      %v301 = vshrl.u32 %v278, 16
      %v303 = vshll.u32 %v278, 16
      %v305 = vrot.slane %v303, 1
      %v306 = vor.u32 %v301, %v305
      %v308 = vshrl.u32 %v279, 16
      %v310 = vshll.u32 %v279, 16
      %v312 = vrot.slane %v310, 1
      %v313 = vor.u32 %v308, %v312
      %v315 = vshrl.u32 %v280, 16
      %v317 = vshll.u32 %v280, 16
      %v319 = vrot.slane %v317, 1
      %v320 = vor.u32 %v315, %v319
      %v322 = vshrl.u32 %v281, 16
      %v324 = vshll.u32 %v281, 16
      %v326 = vrot.slane %v324, 1
      %v327 = vor.u32 %v322, %v326
      %v329 = vshrl.u32 %v282, 16
      %v331 = vshll.u32 %v282, 16
      %v333 = vrot.slane %v331, 1
      %v334 = vor.u32 %v329, %v333
      %v336 = vshrl.u32 %v283, 16
      %v338 = vshll.u32 %v283, 16
      %v340 = vrot.slane %v338, 1
      %v341 = vor.u32 %v336, %v340
      %v343 = vshrl.u32 %v284, 16
      %v345 = vshll.u32 %v284, 16
      %v347 = vrot.slane %v345, 1
      %v348 = vor.u32 %v343, %v347
      %v350 = vshrl.u32 %v285, 16
      %v352 = vshll.u32 %v285, 16
      %v354 = vrot.slane %v352, 1
      %v355 = vor.u32 %v350, %v354
      %356 = vrot.lane.b32.xlu0 %v292, 4
      %v357 = vpop.permute.xlu0 %356
      %358 = vrot.lane.b32.xlu0 %v299, 4
      %v359 = vpop.permute.xlu0 %358
      %360 = vrot.lane.b32.xlu0 %v306, 4
      %v361 = vpop.permute.xlu0 %360
      %362 = vrot.lane.b32.xlu0 %v313, 4
      %v363 = vpop.permute.xlu0 %362
      %364 = vrot.lane.b32.xlu0 %v320, 4
      %v365 = vpop.permute.xlu0 %364
      %366 = vrot.lane.b32.xlu0 %v327, 4
      %v367 = vpop.permute.xlu0 %366
      %368 = vrot.lane.b32.xlu0 %v334, 4
      %v369 = vpop.permute.xlu0 %368
      %370 = vrot.lane.b32.xlu0 %v341, 4
      %v371 = vpop.permute.xlu0 %370
      %372 = vrot.lane.b32.xlu0 %v348, 4
      %v373 = vpop.permute.xlu0 %372
      %374 = vrot.lane.b32.xlu0 %v355, 4
      %v375 = vpop.permute.xlu0 %374
      %v376 = vrot.slane %v276, 1
      %v377 = vrot.slane %v277, 1
      %v378 = vrot.slane %v278, 1
      %v379 = vrot.slane %v279, 1
      %v380 = vrot.slane %v280, 1
      %v381 = vrot.slane %v281, 1
      %v382 = vrot.slane %v282, 1
      %v383 = vrot.slane %v283, 1
      %v384 = vrot.slane %v284, 1
      %v385 = vrot.slane %v285, 1
      %386 = vrot.lane.b32.xlu0 %v376, 8
      %v387 = vpop.permute.xlu0 %386
      %388 = vrot.lane.b32.xlu0 %v377, 8
      %v389 = vpop.permute.xlu0 %388
      %390 = vrot.lane.b32.xlu0 %v378, 8
      %v391 = vpop.permute.xlu0 %390
      %392 = vrot.lane.b32.xlu0 %v379, 8
      %v393 = vpop.permute.xlu0 %392
      %394 = vrot.lane.b32.xlu0 %v380, 8
      %v395 = vpop.permute.xlu0 %394
      %396 = vrot.lane.b32.xlu0 %v381, 8
      %v397 = vpop.permute.xlu0 %396
      %398 = vrot.lane.b32.xlu0 %v382, 8
      %v399 = vpop.permute.xlu0 %398
      %400 = vrot.lane.b32.xlu0 %v383, 8
      %v401 = vpop.permute.xlu0 %400
      %402 = vrot.lane.b32.xlu0 %v384, 8
      %v403 = vpop.permute.xlu0 %402
      %404 = vrot.lane.b32.xlu0 %v385, 8
      %v405 = vpop.permute.xlu0 %404
      %vm406 = vcmask 31744
      %v409 = vsel %vm406, %v216, %v357
      %v412 = vsel %vm406, %v218, %v359
      %v415 = vsel %vm406, %v220, %v361
      %v418 = vsel %vm406, %v222, %v363
      %v421 = vsel %vm406, %v224, %v365
      %v424 = vsel %vm406, %v226, %v367
      %v427 = vsel %vm406, %v228, %v369
      %v430 = vsel %vm406, %v230, %v371
      %v433 = vsel %vm406, %v232, %v373
      %v436 = vsel %vm406, %v234, %v375
      %vm437 = vcmask 64512
      %v439 = vsel %vm437, %v409, %v387
      %v441 = vsel %vm437, %v412, %v389
      %v443 = vsel %vm437, %v415, %v391
      %v445 = vsel %vm437, %v418, %v393
      %v447 = vsel %vm437, %v421, %v395
      %v449 = vsel %vm437, %v424, %v397
      %v451 = vsel %vm437, %v427, %v399
      %v453 = vsel %vm437, %v430, %v401
      %v455 = vsel %vm437, %v433, %v403
      %v457 = vsel %vm437, %v436, %v405
      %v458 = vld [vmem:[%s1] sm:$0xf]
      %v459 = vld [vmem:[%s1 + $0x4] sm:$0x3]
      %s460 = scalar_lea.vmem %s1, 8
      %v461 = vld [vmem:[%s460] sm:$0xf]
      %v462 = vld [vmem:[%s460 + $0x4] sm:$0x3]
      %v471 = vunpack.c.l.b16 %v441
      %v472 = vunpack.c.l.b16 %v443
      %v473 = vunpack.c.l.b16 %v445
      %v474 = vunpack.c.l.b16 %v447
      %v475 = vunpack.c.l.b16 %v449
      %v476 = vunpack.c.l.b16 %v451
      %v477 = vunpack.c.l.b16 %v453
      %v478 = vunpack.c.l.b16 %v455
      %v479 = vpack.c.b16 %v472, %v471
      %v480 = vpack.c.b16 %v474, %v473
      %v481 = vpack.c.b16 %v476, %v475
      %v482 = vpack.c.b16 %v478, %v477
      %v485 = vunpack.c.l.b16 %v461
      %v486 = vunpack.c.l.b16 %v462
      %v487 = vpack.c.b16 %v486, %v485
      %vm488 = vcmask 97280
      %v490 = vsel %vm488, %v479, 0
      %v493 = vsel %vm488, %v480, 0
      %v496 = vsel %vm488, %v481, 0
      %v499 = vsel %vm488, %v482, 0
      %vm501 = vcmask 1045504
      %v503 = vsel %vm501, %v487, 0
      %505 = vmatprep.subr.bf16.mxu0 0
      %506 = vmatpush1.bf16.msra.mxu0 %v503
      %507 = vmatprep.subr.bf16.mxu0 0
      %508 = vmatpush1.bf16.msra.mxu0 0
      %509 = vmatprep.subr.bf16.mxu0 0
      %510 = vmatpush1.bf16.msra.mxu0 0
      %511 = vmatprep.subr.bf16.mxu0 0
      %512 = vmatpush1.bf16.msra.mxu0 0
      %513 = vmatprep.subr.bf16.mxu0 0
      %514 = vmatpush1.bf16.msra.mxu0 0
      %515 = vmatprep.subr.bf16.mxu0 0
      %516 = vmatpush1.bf16.msra.mxu0 0
      %517 = vmatprep.subr.bf16.mxu0 0
      %518 = vmatpush1.bf16.msra.mxu0 0
      %519 = vmatprep.subr.bf16.mxu0 0
      %520 = vmatpush1.bf16.msra.mxu0 0
      %521 = vmatprep.subr.bf16.mxu0 0
      %522 = vmatpush1.bf16.msra.mxu0 0
      %523 = vmatprep.subr.bf16.mxu0 0
      %524 = vmatpush1.bf16.msra.mxu0 0
      %525 = vmatprep.subr.bf16.mxu0 0
      %526 = vmatpush1.bf16.msra.mxu0 0
      %527 = vmatprep.subr.bf16.mxu0 0
      %528 = vmatpush1.bf16.msra.mxu0 0
      %529 = vmatprep.subr.bf16.mxu0 0
      %530 = vmatpush1.bf16.msra.mxu0 0
      %531 = vmatprep.subr.bf16.mxu0 0
      %532 = vmatpush1.bf16.msra.mxu0 0
      %533 = vmatprep.subr.bf16.mxu0 0
      %534 = vmatpush1.bf16.msra.mxu0 0
      %535 = vmatprep.subr.bf16.mxu0 0
      %536 = vmatpush1.bf16.msra.mxu0 0
      %537 = vmatprep.mubr.bf16.mxu0 0
      %538 = vmatmul.mubr.bf16.gmra.mrb[0].mxu0 %v490
      %v539 = vpop.f32.mrb[0].mxu0
      %v540 = vadd.f32 0.0, %v539
      %v541 = vpop.f32.mrb[0].mxu0
      %v542 = vpop.f32.mrb[0].mxu0
      %v543 = vadd.f32 0.0, %v542
      %v544 = vpop.f32.mrb[0].mxu0
      %545 = vmatprep.mubr.bf16.mxu0 0
      %546 = vmatmul.mubr.bf16.gmra.mrb[0].mxu0 %v493
      %v547 = vpop.f32.mrb[0].mxu0
      %v548 = vadd.f32 0.0, %v547
      %v549 = vpop.f32.mrb[0].mxu0
      %v550 = vpop.f32.mrb[0].mxu0
      %v551 = vadd.f32 0.0, %v550
      %v552 = vpop.f32.mrb[0].mxu0
      %553 = vmatprep.mubr.bf16.mxu0 0
      %554 = vmatmul.mubr.bf16.gmra.mrb[0].mxu0 %v496
      %v555 = vpop.f32.mrb[0].mxu0
      %v556 = vadd.f32 0.0, %v555
      %v557 = vpop.f32.mrb[0].mxu0
      %v558 = vpop.f32.mrb[0].mxu0
      %v559 = vadd.f32 0.0, %v558
      %v560 = vpop.f32.mrb[0].mxu0
      %561 = vmatprep.mubr.bf16.mxu0 0
      %562 = vmatmul.mubr.bf16.gmra.mrb[0].mxu0 %v499
      %v563 = vpop.f32.mrb[0].mxu0
      %v564 = vadd.f32 0.0, %v563
      %v565 = vpop.f32.mrb[0].mxu0
      %v566 = vpop.f32.mrb[0].mxu0
      %v567 = vadd.f32 0.0, %v566
      %v568 = vpop.f32.mrb[0].mxu0
      %569 = vdwg.mxu0
      %v571 = vunpack.c.l.b16 %v439
      %v572 = vpack.c.b16 %v471, %v571
      %v573 = vpack.c.b16 %v473, %v472
      %v574 = vpack.c.b16 %v475, %v474
      %v575 = vpack.c.b16 %v477, %v476
      %v578 = vunpack.c.l.b16 %v458
      %v579 = vunpack.c.l.b16 %v459
      %v580 = vpack.c.b16 %v579, %v578
      %v582 = vsel %vm488, %v572, 0
      %v585 = vsel %vm488, %v573, 0
      %v588 = vsel %vm488, %v574, 0
      %v591 = vsel %vm488, %v575, 0
      %v594 = vsel %vm501, %v580, 0
      %596 = vmatprep.subr.bf16.mxu0 0
      %597 = vmatpush1.bf16.msra.mxu0 %v594
      %598 = vmatprep.subr.bf16.mxu0 0
      %599 = vmatpush1.bf16.msra.mxu0 0
      %600 = vmatprep.subr.bf16.mxu0 0
      %601 = vmatpush1.bf16.msra.mxu0 0
      %602 = vmatprep.subr.bf16.mxu0 0
      %603 = vmatpush1.bf16.msra.mxu0 0
      %604 = vmatprep.subr.bf16.mxu0 0
      %605 = vmatpush1.bf16.msra.mxu0 0
      %606 = vmatprep.subr.bf16.mxu0 0
      %607 = vmatpush1.bf16.msra.mxu0 0
      %608 = vmatprep.subr.bf16.mxu0 0
      %609 = vmatpush1.bf16.msra.mxu0 0
      %610 = vmatprep.subr.bf16.mxu0 0
      %611 = vmatpush1.bf16.msra.mxu0 0
      %612 = vmatprep.subr.bf16.mxu0 0
      %613 = vmatpush1.bf16.msra.mxu0 0
      %614 = vmatprep.subr.bf16.mxu0 0
      %615 = vmatpush1.bf16.msra.mxu0 0
      %616 = vmatprep.subr.bf16.mxu0 0
      %617 = vmatpush1.bf16.msra.mxu0 0
      %618 = vmatprep.subr.bf16.mxu0 0
      %619 = vmatpush1.bf16.msra.mxu0 0
      %620 = vmatprep.subr.bf16.mxu0 0
      %621 = vmatpush1.bf16.msra.mxu0 0
      %622 = vmatprep.subr.bf16.mxu0 0
      %623 = vmatpush1.bf16.msra.mxu0 0
      %624 = vmatprep.subr.bf16.mxu0 0
      %625 = vmatpush1.bf16.msra.mxu0 0
      %626 = vmatprep.subr.bf16.mxu0 0
      %627 = vmatpush1.bf16.msra.mxu0 0
      %628 = vmatprep.mubr.bf16.mxu0 0
      %629 = vmatmul.mubr.bf16.gmra.mrb[0].mxu0 %v582
      %v630 = vpop.f32.mrb[0].mxu0
      %v631 = vadd.f32 %v540, %v630
      %v632 = vpop.f32.mrb[0].mxu0
      %v633 = vpop.f32.mrb[0].mxu0
      %v634 = vadd.f32 %v543, %v633
      %v635 = vpop.f32.mrb[0].mxu0
      %636 = vmatprep.mubr.bf16.mxu0 0
      %637 = vmatmul.mubr.bf16.gmra.mrb[0].mxu0 %v585
      %v638 = vpop.f32.mrb[0].mxu0
      %v639 = vadd.f32 %v548, %v638
      %v640 = vpop.f32.mrb[0].mxu0
      %v641 = vpop.f32.mrb[0].mxu0
      %v642 = vadd.f32 %v551, %v641
      %v643 = vpop.f32.mrb[0].mxu0
      %644 = vmatprep.mubr.bf16.mxu0 0
      %645 = vmatmul.mubr.bf16.gmra.mrb[0].mxu0 %v588
      %v646 = vpop.f32.mrb[0].mxu0
      %v647 = vadd.f32 %v556, %v646
      %v648 = vpop.f32.mrb[0].mxu0
      %v649 = vpop.f32.mrb[0].mxu0
      %v650 = vadd.f32 %v559, %v649
      %v651 = vpop.f32.mrb[0].mxu0
      %652 = vmatprep.mubr.bf16.mxu0 0
      %653 = vmatmul.mubr.bf16.gmra.mrb[0].mxu0 %v591
      %v654 = vpop.f32.mrb[0].mxu0
      %v655 = vadd.f32 %v564, %v654
      %v656 = vpop.f32.mrb[0].mxu0
      %v657 = vpop.f32.mrb[0].mxu0
      %v658 = vadd.f32 %v567, %v657
      %v659 = vpop.f32.mrb[0].mxu0
      %660 = vdwg.mxu0
      %s661 = scalar_lea.vmem %s1, 16
      %v662 = vld [vmem:[%s661] sm:$0xf]
      %v663 = vld [vmem:[%s661 + $0x4] sm:$0x3]
      %v665 = vunpack.c.l.b16 %v457
      %v666 = vpack.c.b16 %v665, %v478
      %v669 = vunpack.c.l.b16 %v662
      %v670 = vunpack.c.l.b16 %v663
      %v671 = vpack.c.b16 %v670, %v669
      %v673 = vsel %vm488, %v666, 0
      %v676 = vsel %vm501, %v671, 0
      %678 = vmatprep.subr.bf16.mxu0 0
      %679 = vmatpush1.bf16.msra.mxu0 %v676
      %680 = vmatprep.subr.bf16.mxu0 0
      %681 = vmatpush1.bf16.msra.mxu0 0
      %682 = vmatprep.subr.bf16.mxu0 0
      %683 = vmatpush1.bf16.msra.mxu0 0
      %684 = vmatprep.subr.bf16.mxu0 0
      %685 = vmatpush1.bf16.msra.mxu0 0
      %686 = vmatprep.subr.bf16.mxu0 0
      %687 = vmatpush1.bf16.msra.mxu0 0
      %688 = vmatprep.subr.bf16.mxu0 0
      %689 = vmatpush1.bf16.msra.mxu0 0
      %690 = vmatprep.subr.bf16.mxu0 0
      %691 = vmatpush1.bf16.msra.mxu0 0
      %692 = vmatprep.subr.bf16.mxu0 0
      %693 = vmatpush1.bf16.msra.mxu0 0
      %694 = vmatprep.subr.bf16.mxu0 0
      %695 = vmatpush1.bf16.msra.mxu0 0
      %696 = vmatprep.subr.bf16.mxu0 0
      %697 = vmatpush1.bf16.msra.mxu0 0
      %698 = vmatprep.subr.bf16.mxu0 0
      %699 = vmatpush1.bf16.msra.mxu0 0
      %700 = vmatprep.subr.bf16.mxu0 0
      %701 = vmatpush1.bf16.msra.mxu0 0
      %702 = vmatprep.subr.bf16.mxu0 0
      %703 = vmatpush1.bf16.msra.mxu0 0
      %704 = vmatprep.subr.bf16.mxu0 0
      %705 = vmatpush1.bf16.msra.mxu0 0
      %706 = vmatprep.subr.bf16.mxu0 0
      %707 = vmatpush1.bf16.msra.mxu0 0
      %708 = vmatprep.subr.bf16.mxu0 0
      %709 = vmatpush1.bf16.msra.mxu0 0
      %710 = vmatprep.mubr.bf16.mxu0 0
      %711 = vmatmul.mubr.bf16.gmra.mrb[0].mxu0 %v585
      %v712 = vpop.f32.mrb[0].mxu0
      %v713 = vadd.f32 0.0, %v712
      %v714 = vpop.f32.mrb[0].mxu0
      %v715 = vpop.f32.mrb[0].mxu0
      %v716 = vadd.f32 0.0, %v715
      %v717 = vpop.f32.mrb[0].mxu0
      %718 = vmatprep.mubr.bf16.mxu0 0
      %719 = vmatmul.mubr.bf16.gmra.mrb[0].mxu0 %v588
      %v720 = vpop.f32.mrb[0].mxu0
      %v721 = vadd.f32 0.0, %v720
      %v722 = vpop.f32.mrb[0].mxu0
      %v723 = vpop.f32.mrb[0].mxu0
      %v724 = vadd.f32 0.0, %v723
      %v725 = vpop.f32.mrb[0].mxu0
      %726 = vmatprep.mubr.bf16.mxu0 0
      %727 = vmatmul.mubr.bf16.gmra.mrb[0].mxu0 %v591
      %v728 = vpop.f32.mrb[0].mxu0
      %v729 = vadd.f32 0.0, %v728
      %v730 = vpop.f32.mrb[0].mxu0
      %v731 = vpop.f32.mrb[0].mxu0
      %v732 = vadd.f32 0.0, %v731
      %v733 = vpop.f32.mrb[0].mxu0
      %734 = vmatprep.mubr.bf16.mxu0 0
      %735 = vmatmul.mubr.bf16.gmra.mrb[0].mxu0 %v673
      %v736 = vpop.f32.mrb[0].mxu0
      %v737 = vadd.f32 0.0, %v736
      %v738 = vpop.f32.mrb[0].mxu0
      %v739 = vpop.f32.mrb[0].mxu0
      %v740 = vadd.f32 0.0, %v739
      %v741 = vpop.f32.mrb[0].mxu0
      %742 = vdwg.mxu0
      %v743 = vadd.f32 %v631, %v713
      %v744 = vadd.f32 %v634, %v716
      %v745 = vadd.f32 %v639, %v721
      %v746 = vadd.f32 %v642, %v724
      %v747 = vadd.f32 %v647, %v729
      %v748 = vadd.f32 %v650, %v732
      %v749 = vadd.f32 %v655, %v737
      %v750 = vadd.f32 %v658, %v740
      %v751 = vpack.c.bf16 %v743, %v743
      %v752 = vpack.c.bf16 %v744, %v744
      %v753 = vpack.c.bf16 %v745, %v745
      %v754 = vpack.c.bf16 %v746, %v746
      %v755 = vpack.c.bf16 %v747, %v747
      %v756 = vpack.c.bf16 %v748, %v748
      %v757 = vpack.c.bf16 %v749, %v749
      %v758 = vpack.c.bf16 %v750, %v750
      %vm759 = vcmask 257024
      %760 = vst.msk [vmem:[%s208] sm:$0xf] %vm759, %v751
      %761 = vst.msk [vmem:[%s208 + $0x4] sm:$0xf] %vm759, %v752
      %762 = vst.msk [vmem:[%s208 + $0x8] sm:$0xf] %vm759, %v753
      %763 = vst.msk [vmem:[%s208 + $0xc] sm:$0xf] %vm759, %v754
      %764 = vst.msk [vmem:[%s208 + $0x10] sm:$0xf] %vm759, %v755
      %765 = vst.msk [vmem:[%s208 + $0x14] sm:$0xf] %vm759, %v756
      %766 = vst.msk [vmem:[%s208 + $0x18] sm:$0xf] %vm759, %v757
      %767 = vst.msk [vmem:[%s208 + $0x1c] sm:$0xf] %vm759, %v758
      %vm768 = vcmask 261120
      %v769 = vsel %vm768, %v743, 0.0
      %v770 = vsel %vm768, %v744, 0.0
      %v771 = vadd.f32 %v769, %v770
      %v772 = vsel %vm768, %v745, 0.0
      %v773 = vadd.f32 %v771, %v772
      %v774 = vsel %vm768, %v746, 0.0
      %v775 = vadd.f32 %v773, %v774
      %v776 = vsel %vm768, %v747, 0.0
      %v777 = vadd.f32 %v775, %v776
      %v778 = vsel %vm768, %v748, 0.0
      %v779 = vadd.f32 %v777, %v778
      %v780 = vsel %vm768, %v749, 0.0
      %v781 = vadd.f32 %v779, %v780
      %v782 = vsel %vm768, %v750, 0.0
      %v783 = vadd.f32 %v781, %v782
      %v784 = vrot.slane %v783, 4
      %v785 = vadd.f32 %v783, %v784
      %v786 = vrot.slane %v785, 2
      %v787 = vadd.f32 %v785, %v786
      %v788 = vrot.slane %v787, 1
      %v789 = vadd.f32 %v787, %v788
      %vm790 = vcmask 253952
      %791 = vst.msk [vmem:[%s211] sm:$0x1] %vm790, %v789
      %v792 = vmul.f32 %v743, %v743
      %v793 = vmul.f32 %v744, %v744
      %v794 = vmul.f32 %v745, %v745
      %v795 = vmul.f32 %v746, %v746
      %v796 = vmul.f32 %v747, %v747
      %v797 = vmul.f32 %v748, %v748
      %v798 = vmul.f32 %v749, %v749
      %v799 = vmul.f32 %v750, %v750
      %v800 = vsel %vm768, %v792, 0.0
      %v801 = vsel %vm768, %v793, 0.0
      %v802 = vadd.f32 %v800, %v801
      %v803 = vsel %vm768, %v794, 0.0
      %v804 = vadd.f32 %v802, %v803
      %v805 = vsel %vm768, %v795, 0.0
      %v806 = vadd.f32 %v804, %v805
      %v807 = vsel %vm768, %v796, 0.0
      %v808 = vadd.f32 %v806, %v807
      %v809 = vsel %vm768, %v797, 0.0
      %v810 = vadd.f32 %v808, %v809
      %v811 = vsel %vm768, %v798, 0.0
      %v812 = vadd.f32 %v810, %v811
      %v813 = vsel %vm768, %v799, 0.0
      %v814 = vadd.f32 %v812, %v813
      %v815 = vrot.slane %v814, 4
      %v816 = vadd.f32 %v814, %v815
      %v817 = vrot.slane %v816, 2
      %v818 = vadd.f32 %v816, %v817
      %v819 = vrot.slane %v818, 1
      %v820 = vadd.f32 %v818, %v819
      %821 = vst.msk [vmem:[%s214] sm:$0x1] %vm790, %v820
      %p822 = scmp.lt.s32.totalorder %s16, 1
      %s823 = scalar_select %p822, %s16, 1
      %s824 = smul.addr %s823, 8
      %s825 = smul.addr %s824, 4
      %s826 = scalar_lea.vmem %s2, %s825
      %p827 = scmp.lt.s32.totalorder %s16, 1
      %s828 = scalar_select %p827, %s16, 1
      %s829 = scalar_lea.vmem %s3, %s828
      %p830 = scmp.lt.s32.totalorder %s16, 1
      %s831 = scalar_select %p830, %s16, 1
      %s832 = scalar_lea.vmem %s4, %s831
      // Predicated region
      $region29: #{_lambda_.8} parent=27 // pred_check
        %p833 = pneg %p81
      $region30: #{_lambda_.8} parent=27 // pred_check_branch
        %835 = sbr.rel (%p833) target = $region32
      $region31: #{_lambda_.8} parent=27 // pred_region
        _
      $region32: #{_lambda_.8} parent=27 // pred_fallthru
        _
      // Predicated region
      $region33: #{_lambda_.8} parent=27 // pred_check
        %p836 = pneg %p107
      $region34: #{_lambda_.8} parent=27 // pred_check_branch
        %838 = sbr.rel (%p836) target = $region36
      $region35: #{_lambda_.8} parent=27 // pred_region
        _
      $region36: #{_lambda_.8} parent=27 // pred_fallthru
        _
      // Predicated region
      $region37: #{_lambda_.8} parent=27 // pred_check
        %p839 = pneg %p133
      $region38: #{_lambda_.8} parent=27 // pred_check_branch
        %841 = sbr.rel (%p839) target = $region40
      $region39: #{_lambda_.8} parent=27 // pred_region
        _
      $region40: #{_lambda_.8} parent=27 // pred_fallthru
        _
    $region28: #{_lambda_.8} parent=5 // pred_fallthru
      _
    %p842 = scmp.le.s32.totalorder 2, %s11
    // Predicated region
    $region41: #{_lambda_.8} parent=5 // pred_check
      %p843 = pneg %p842
    $region42: #{_lambda_.8} parent=5 // pred_check_branch
      %845 = sbr.rel (%p843) target = $region44
    $region43: #{_lambda_.8} parent=5 // pred_region
      %s846 = ssub.s32 %s11, 2
      // Predicated region
      $region45: #{_lambda_.8} parent=43 // pred_check
        %p847 = pneg %p87
      $region46: #{_lambda_.8} parent=43 // pred_check_branch
        %849 = sbr.rel (%p847) target = $region48
      $region47: #{_lambda_.8} parent=43 // pred_region
        %p850 = scmp.lt.s32.totalorder %s17, 1
        %s851 = scalar_select %p850, %s17, 1
        %s852 = smul.addr %s851, 8
        %s853 = smul.addr %s852, 4
        %s854 = scalar_lea.vmem %s2, %s853
      $region48: #{_lambda_.8} parent=43 // pred_fallthru
        _
      // Predicated region
      $region49: #{_lambda_.8} parent=43 // pred_check
        %p855 = pneg %p113
      $region50: #{_lambda_.8} parent=43 // pred_check_branch
        %857 = sbr.rel (%p855) target = $region52
      $region51: #{_lambda_.8} parent=43 // pred_region
        %p858 = scmp.lt.s32.totalorder %s17, 1
        %s859 = scalar_select %p858, %s17, 1
        %s860 = scalar_lea.vmem %s3, %s859
      $region52: #{_lambda_.8} parent=43 // pred_fallthru
        _
      // Predicated region
      $region53: #{_lambda_.8} parent=43 // pred_check
        %p861 = pneg %p139
      $region54: #{_lambda_.8} parent=43 // pred_check_branch
        %863 = sbr.rel (%p861) target = $region56
      $region55: #{_lambda_.8} parent=43 // pred_region
        %p864 = scmp.lt.s32.totalorder %s17, 1
        %s865 = scalar_select %p864, %s17, 1
        %s866 = scalar_lea.vmem %s4, %s865
      $region56: #{_lambda_.8} parent=43 // pred_fallthru
        _
    $region44: #{_lambda_.8} parent=5 // pred_fallthru
      _
  $region6: #{_lambda_.8} parent=0 // loop_footer
    %s15 = sadd.s32 1, %s11
  $region7: #{_lambda_.8} parent=0 // loop_footer_branch
    %10 = sbr.rel target = $region3
  $region8: #{_lambda_.8} parent=0 // loop_exit
    _

// kernel: tile.33
$region0: #{tile.33}
  #allocation0 [shape = 's32[1]{0}', space=sflag, size = 0x4, scoped, tag = 'scoped memory for tile.33']
  %s0 = inlined_call_operand.vmem [shape: f32[32], index: 0, kind: input, shape index: {}]
  %s1 = inlined_call_operand.vmem [shape: f32[16,32], index: 1, kind: output, shape index: {}]
  // Predicated region
  $region2: #{tile.33} parent=0 // pred_check
    _
  $region3: #{tile.33} parent=0 // pred_check_branch
    %3 = sbr.rel (0) target = $region5
  $region4: #{tile.33} parent=0 // pred_region
    _
  $region5: #{tile.33} parent=0 // pred_fallthru
    _
  %v4 = vld [vmem:[%s0] ss:$0 sm:$0xff]
  %5 = vst [vmem:[%s1] sm:$0xff] %v4
  %s6 = scalar_lea.vmem %s1, 8
  %7 = vst [vmem:[%s6] sm:$0xff] %v4

// kernel: tile.34
$region0: #{tile.34}
  %s0 = inlined_call_operand.vmem [shape: f32[16,32], index: 0, kind: input, shape index: {}]
  %s1 = inlined_call_operand.vmem [shape: f32[1,512], index: 1, kind: output, shape index: {}]
  $region1: #{tile.34} parent=0
    #allocation0 [shape = 'u8[16384]{0}', space=vmem, size = 0x4000, scoped, tag = 'scoped mem for output reshape']
    %v2 = vld [vmem:[%s0] ss:$4 sm:$0xf]
    %vm3 = vcmask 261120
    %4 = vst.msk [vmem:[#allocation0] ss:$8 sm:$0xf] %vm3, %v2
    %s5 = scalar_lea.vmem %s0, 3
    %v6 = vld [vmem:[%s5] ss:$4 sm:$0xf]
    %7 = vrot.lane.b32.xlu0 %v6, 96
    %v8 = vpop.permute.xlu0 %7
    %vm9 = vcmask 1048320
    %10 = vst.msk [vmem:[#allocation0] ss:$8 sm:$0xf] %vm9, %v8
    %s11 = scalar_lea.vmem %s0, 2
    %v12 = vld [vmem:[%s11] ss:$4 sm:$0xf]
    %13 = vrot.lane.b32.xlu0 %v12, 64
    %v14 = vpop.permute.xlu0 %13
    %vm15 = vcmask 785920
    %16 = vst.msk [vmem:[#allocation0] ss:$8 sm:$0xf] %vm15, %v14
    %s17 = scalar_lea.vmem %s0, 1
    %v18 = vld [vmem:[%s17] ss:$4 sm:$0xf]
    %19 = vrot.lane.b32.xlu0 %v18, 32
    %v20 = vpop.permute.xlu0 %19
    %vm21 = vcmask 523520
    %22 = vst.msk [vmem:[#allocation0] ss:$8 sm:$0xf] %vm21, %v20
    %s24 = sshllo.u32 0, 1
    %v26 = vld [vmem:[#allocation0] sm:%s24]
    %s27 = sshllo.u32 0, 1
    %28 = vst [vmem:[%s1] sm:%s27] %v26
    %s29 = scalar_lea.vmem [#allocation0], 8
    %v30 = vld [vmem:[%s29] sm:%s24]
    %s31 = sshllo.u32 0, 1
    %s32 = scalar_lea.vmem %s1, 1
    %33 = vst [vmem:[%s32] sm:%s31] %v30
    %s34 = scalar_lea.vmem [#allocation0], 16
    %v35 = vld [vmem:[%s34] sm:%s24]
    %s36 = sshllo.u32 0, 1
    %s37 = smul.addr 1, 2
    %s38 = scalar_lea.vmem %s1, %s37
    %39 = vst [vmem:[%s38] sm:%s36] %v35
    %s40 = scalar_lea.vmem [#allocation0], 24
    %v41 = vld [vmem:[%s40] sm:%s24]
    %s42 = sshllo.u32 0, 1
    %s43 = smul.addr 1, 3
    %s44 = scalar_lea.vmem %s1, %s43
    %45 = vst [vmem:[%s44] sm:%s42] %v41

// kernel: _lambda_.10
$region0: #{_lambda_.10}
  #allocation0 [shape = 'u32[]', space=smem, size = 0x4, offset = 0x4, fixed_abs, tag = 'smem constant byte address 0x4 - core index']
  #allocation1 [shape = 'u32[144,128]{1,0:T(1,128)}', space=vmem, size = 0x12000, scoped, tag = 'internal scratch']
  %s0 = inlined_call_operand.vmem [shape: bf16[2,16,8,32], index: 0, kind: input, shape index: {}]
  %s1 = inlined_call_operand.vmem [shape: bf16[16,8], index: 1, kind: input, shape index: {}]
  %s2 = inlined_call_operand.vmem [shape: bf16[2,16,16,32], index: 2, kind: output, shape index: {}]
  %s3 = sld [smem:[#allocation0]]
  $region48: #{_lambda_.10} parent=0
    _
  %s5 = ssub.s32 1, %s3
  %s6 = scalar_select 0, %s5, %s3
  loop: start=0, step=1, limit=4
  $region2: #{_lambda_.10} parent=0 // loop_pre_header
    _
  $region3: #{_lambda_.10} parent=0 // loop_header
    %s8 = sphi 0, %s12
    %p9 = scmp.ge.s32.totalorder %s8, 4
    %s18 = sphi 0, %s20
    %s21 = sphi 0, %s18
    %s22 = sphi 0, %s21
    %s38 = sphi 0, %s22
    %s42 = sphi 0, %s42
    %s44 = sphi 0, %s42
    %s45 = sphi 0, %s44
    %s59 = sphi 0, %s45
    %s65 = sphi 0, %s67
    %s68 = sphi 0, %s65
    %s69 = sphi 0, %s68
    %s85 = sphi 0, %s69
  $region4: #{_lambda_.10} parent=0 // loop_header_branch
    %11 = sbr.rel (%p9) target = $region8
  $region5: #{_lambda_.10} parent=0 // loop_body
    %s13 = ssub.s32 %s8, 1
    %s14 = ssub.s32 %s8, 2
    %s15 = sadd.s32 %s8, 1
    %s16 = ssub.s32 %s8, %s15
    %p17 = scmp.eq.s32.totalorder %s16, 0
    %s19 = sadd.s32 %s18, 1
    %s20 = scalar_select %p17, %s18, %s19
    %p23 = pneg %p17
    %p24 = scmp.eq.s32.totalorder %s8, 1
    %p25 = por %p23, %p24
    %p26 = scmp.ne.s32.totalorder %s18, %s21
    %p27 = scmp.eq.s32.totalorder %s8, 0
    %p28 = por %p26, %p27
    %p29 = scmp.ne.s32.totalorder %s18, %s21
    %p30 = scmp.eq.s32.totalorder %s13, 1
    %p31 = por %p29, %p30
    %p32 = scmp.ne.s32.totalorder %s21, %s22
    %p33 = scmp.eq.s32.totalorder %s13, 0
    %p34 = por %p32, %p33
    %p35 = scmp.ne.s32.totalorder %s21, %s22
    %p36 = scmp.eq.s32.totalorder %s14, 1
    %p37 = por %p35, %p36
    %p39 = scmp.ne.s32.totalorder %s22, %s38
    %p40 = scmp.eq.s32.totalorder %s14, 0
    %p41 = por %p39, %p40
    %s43 = sadd.s32 %s42, 1
    %p46 = scmp.eq.s32.totalorder %s8, 1
    %p47 = scmp.ne.s32.totalorder %s42, %s44
    %p48 = scmp.eq.s32.totalorder %s8, 0
    %p49 = por %p47, %p48
    %p50 = scmp.ne.s32.totalorder %s42, %s44
    %p51 = scmp.eq.s32.totalorder %s13, 1
    %p52 = por %p50, %p51
    %p53 = scmp.ne.s32.totalorder %s44, %s45
    %p54 = scmp.eq.s32.totalorder %s13, 0
    %p55 = por %p53, %p54
    %p56 = scmp.ne.s32.totalorder %s44, %s45
    %p57 = scmp.eq.s32.totalorder %s14, 1
    %p58 = por %p56, %p57
    %p60 = scmp.ne.s32.totalorder %s45, %s59
    %p61 = scmp.eq.s32.totalorder %s14, 0
    %p62 = por %p60, %p61
    %s63 = ssub.s32 %s8, %s15
    %p64 = scmp.eq.s32.totalorder %s63, 0
    %s66 = sadd.s32 %s65, 1
    %s67 = scalar_select %p64, %s65, %s66
    %p70 = pneg %p64
    %p71 = scmp.eq.s32.totalorder %s8, 1
    %p72 = por %p70, %p71
    %p73 = scmp.ne.s32.totalorder %s65, %s68
    %p74 = scmp.eq.s32.totalorder %s8, 0
    %p75 = por %p73, %p74
    %p76 = scmp.ne.s32.totalorder %s65, %s68
    %p77 = scmp.eq.s32.totalorder %s13, 1
    %p78 = por %p76, %p77
    %p79 = scmp.ne.s32.totalorder %s68, %s69
    %p80 = scmp.eq.s32.totalorder %s13, 0
    %p81 = por %p79, %p80
    %p82 = scmp.ne.s32.totalorder %s68, %s69
    %p83 = scmp.eq.s32.totalorder %s14, 1
    %p84 = por %p82, %p83
    %p86 = scmp.ne.s32.totalorder %s69, %s85
    %p87 = scmp.eq.s32.totalorder %s14, 0
    %p88 = por %p86, %p87
    %p89 = scmp.le.s32.totalorder 1, %s8
    %p90 = scmp.lt.s32.totalorder %s8, 3
    %p91 = pnand %p89, %p90
    %p92 = pneg %p91
    // Predicated region
    $region9: #{_lambda_.10} parent=5 // pred_check
      _
    $region10: #{_lambda_.10} parent=5 // pred_check_branch
      %94 = sbr.rel (%p91) target = $region12
    $region11: #{_lambda_.10} parent=5 // pred_region
      %s95 = ssub.s32 %s8, 1
      // Predicated region
      $region13: #{_lambda_.10} parent=11 // pred_check
        %p96 = pneg %p55
      $region14: #{_lambda_.10} parent=11 // pred_check_branch
        %98 = sbr.rel (%p96) target = $region16
      $region15: #{_lambda_.10} parent=11 // pred_region
        _
      $region16: #{_lambda_.10} parent=11 // pred_fallthru
        _
    $region12: #{_lambda_.10} parent=5 // pred_fallthru
      _
    %p99 = scmp.lt.s32.totalorder %s8, 2
    // Predicated region
    $region17: #{_lambda_.10} parent=5 // pred_check
      %p100 = pneg %p99
    $region18: #{_lambda_.10} parent=5 // pred_check_branch
      %102 = sbr.rel (%p100) target = $region20
    $region19: #{_lambda_.10} parent=5 // pred_region
      // Predicated region
      $region21: #{_lambda_.10} parent=19 // pred_check
        %p103 = pneg %p28
      $region22: #{_lambda_.10} parent=19 // pred_check_branch
        %105 = sbr.rel (%p103) target = $region24
      $region23: #{_lambda_.10} parent=19 // pred_region
        %p106 = scmp.lt.s32.totalorder %s8, 1
        %s107 = scalar_select %p106, %s8, 1
        %s108 = smul.addr %s107, 16
        %s109 = smul.addr %s108, 4
        %s110 = scalar_lea.vmem %s0, %s109
      $region24: #{_lambda_.10} parent=19 // pred_fallthru
        _
    $region20: #{_lambda_.10} parent=5 // pred_fallthru
      _
    %p111 = scmp.le.s32.totalorder 1, %s8
    %p112 = scmp.lt.s32.totalorder %s8, 3
    %p113 = pnand %p111, %p112
    %p114 = pneg %p113
    // Predicated region
    $region25: #{_lambda_.10} parent=5 // pred_check
      _
    $region26: #{_lambda_.10} parent=5 // pred_check_branch
      %116 = sbr.rel (%p113) target = $region28
    $region27: #{_lambda_.10} parent=5 // pred_region
      %s117 = ssub.s32 %s8, 1
      %p118 = scmp.lt.s32.totalorder %s13, 1
      %s119 = scalar_select %p118, %s13, 1
      %s120 = smul.addr %s119, 16
      %s121 = smul.addr %s120, 4
      %s122 = scalar_lea.vmem %s0, %s121
      %p123 = pneg %p34
      %p124 = pneg %p31
      %p125 = pneg %p55
      %p126 = pneg %p52
      %p127 = pneg %p81
      %p128 = pneg %p78
      %p129 = scmp.lt.s32.totalorder %s13, 1
      %s130 = scalar_select %p129, %s13, 1
      %s131 = smul.addr %s130, 32
      %s132 = smul.addr %s131, 4
      %s133 = scalar_lea.vmem %s2, %s132
      %p134 = scmp.lt.s32.totalorder %s13, 1
      %s135 = scalar_select %p134, %s13, 1
      %s136 = smul.addr %s135, 16
      %s137 = smul.addr %s136, 4
      %s138 = scalar_lea.vmem %s0, %s137
      %p139 = scmp.lt.s32.totalorder %s13, 1
      %s140 = scalar_select %p139, %s13, 1
      %s141 = smul.addr %s140, 32
      %s142 = smul.addr %s141, 4
      %s143 = scalar_lea.vmem %s2, %s142
      loop: start=0, step=1, limit=16
      $region29: #{_lambda_.10} parent=27 // loop_pre_header
        _
      $region30: #{_lambda_.10} parent=27 // loop_header
        %s146 = sphi 0, %s150
        %p147 = scmp.ge.s32.totalorder %s146, 16
      $region31: #{_lambda_.10} parent=27 // loop_header_branch
        %149 = sbr.rel (%p147) target = $region35
      $region32: #{_lambda_.10} parent=27 // loop_body
        %v151 = vld [vmem:[%s1] sm:$0xf]
        %v152 = vld [vmem:[%s1 + $0x4] sm:$0xf]
        %s153 = smul.addr %s146, 4
        %s154 = scalar_lea.vmem %s138, %s153
        %v155 = vld [vmem:[%s154] sm:$0xf]
        %v158 = vunpack.c.l.b16 %v151
        %v159 = vunpack.c.l.b16 %v152
        %v160 = vpack.c.b16 %v159, %v158
        %vm161 = vcmask 64512
        %v163 = vsel %vm161, %v160, 0
        %vm165 = vcmask 1043456
        %v167 = vsel %vm165, %v155, 0
        %169 = vmatprep.subr.bf16.mxu0 0
        %170 = vmatpush1.bf16.msra.mxu0 %v167
        %171 = vmatprep.subr.bf16.mxu0 0
        %172 = vmatpush1.bf16.msra.mxu0 0
        %173 = vmatprep.subr.bf16.mxu0 0
        %174 = vmatpush1.bf16.msra.mxu0 0
        %175 = vmatprep.subr.bf16.mxu0 0
        %176 = vmatpush1.bf16.msra.mxu0 0
        %177 = vmatprep.subr.bf16.mxu0 0
        %178 = vmatpush1.bf16.msra.mxu0 0
        %179 = vmatprep.subr.bf16.mxu0 0
        %180 = vmatpush1.bf16.msra.mxu0 0
        %181 = vmatprep.subr.bf16.mxu0 0
        %182 = vmatpush1.bf16.msra.mxu0 0
        %183 = vmatprep.subr.bf16.mxu0 0
        %184 = vmatpush1.bf16.msra.mxu0 0
        %185 = vmatprep.subr.bf16.mxu0 0
        %186 = vmatpush1.bf16.msra.mxu0 0
        %187 = vmatprep.subr.bf16.mxu0 0
        %188 = vmatpush1.bf16.msra.mxu0 0
        %189 = vmatprep.subr.bf16.mxu0 0
        %190 = vmatpush1.bf16.msra.mxu0 0
        %191 = vmatprep.subr.bf16.mxu0 0
        %192 = vmatpush1.bf16.msra.mxu0 0
        %193 = vmatprep.subr.bf16.mxu0 0
        %194 = vmatpush1.bf16.msra.mxu0 0
        %195 = vmatprep.subr.bf16.mxu0 0
        %196 = vmatpush1.bf16.msra.mxu0 0
        %197 = vmatprep.subr.bf16.mxu0 0
        %198 = vmatpush1.bf16.msra.mxu0 0
        %199 = vmatprep.subr.bf16.mxu0 0
        %200 = vmatpush1.bf16.msra.mxu0 0
        %201 = vmatprep.mubr.bf16.mxu0 0
        %202 = vmatmul.mubr.bf16.gmra.mrb[0].mxu0 %v163
        %v203 = vpop.f32.mrb[0].mxu0
        %v204 = vadd.f32 0.0, %v203
        %v205 = vpop.f32.mrb[0].mxu0
        %v206 = vpop.f32.mrb[0].mxu0
        %v207 = vadd.f32 0.0, %v206
        %v208 = vpop.f32.mrb[0].mxu0
        %209 = vdwg.mxu0
        %v210 = vpack.c.bf16 %v207, %v204
        %v212 = vunpack.c.l.b16 %v210
        %v213 = vunpack.c.h.b16 %v210
        %v214 = vpack.c.b16 %v212, %v212
        %v215 = vpack.c.b16 %v213, %v213
        %s218 = smul.u32 %s146, 2
        %s219 = smul.addr %s218, 4
        %s220 = scalar_lea.vmem %s143, %s219
        %vm221 = vcmask 257024
        %222 = vst.msk [vmem:[%s220] sm:$0xf] %vm221, %v214
        %223 = vst.msk [vmem:[%s220 + $0x4] sm:$0xf] %vm221, %v215
      $region33: #{_lambda_.10} parent=27 // loop_footer
        %s150 = sadd.s32 1, %s146
      $region34: #{_lambda_.10} parent=27 // loop_footer_branch
        %145 = sbr.rel target = $region30
      $region35: #{_lambda_.10} parent=27 // loop_exit
        _
      %p224 = scmp.lt.s32.totalorder %s13, 1
      %s225 = scalar_select %p224, %s13, 1
      %s226 = smul.addr %s225, 32
      %s227 = smul.addr %s226, 4
      %s228 = scalar_lea.vmem %s2, %s227
      // Predicated region
      $region36: #{_lambda_.10} parent=27 // pred_check
        %p229 = pneg %p78
      $region37: #{_lambda_.10} parent=27 // pred_check_branch
        %231 = sbr.rel (%p229) target = $region39
      $region38: #{_lambda_.10} parent=27 // pred_region
        _
      $region39: #{_lambda_.10} parent=27 // pred_fallthru
        _
    $region28: #{_lambda_.10} parent=5 // pred_fallthru
      _
    %p232 = scmp.le.s32.totalorder 2, %s8
    // Predicated region
    $region40: #{_lambda_.10} parent=5 // pred_check
      %p233 = pneg %p232
    $region41: #{_lambda_.10} parent=5 // pred_check_branch
      %235 = sbr.rel (%p233) target = $region43
    $region42: #{_lambda_.10} parent=5 // pred_region
      %s236 = ssub.s32 %s8, 2
      // Predicated region
      $region44: #{_lambda_.10} parent=42 // pred_check
        %p237 = pneg %p84
      $region45: #{_lambda_.10} parent=42 // pred_check_branch
        %239 = sbr.rel (%p237) target = $region47
      $region46: #{_lambda_.10} parent=42 // pred_region
        %p240 = scmp.lt.s32.totalorder %s14, 1
        %s241 = scalar_select %p240, %s14, 1
        %s242 = smul.addr %s241, 32
        %s243 = smul.addr %s242, 4
        %s244 = scalar_lea.vmem %s2, %s243
      $region47: #{_lambda_.10} parent=42 // pred_fallthru
        _
    $region43: #{_lambda_.10} parent=5 // pred_fallthru
      _
  $region6: #{_lambda_.10} parent=0 // loop_footer
    %s12 = sadd.s32 1, %s8
  $region7: #{_lambda_.10} parent=0 // loop_footer_branch
    %7 = sbr.rel target = $region3
  $region8: #{_lambda_.10} parent=0 // loop_exit
    _

// kernel: _lambda_.12
$region0: #{_lambda_.12}
  #allocation0 [shape = 'u32[]', space=smem, size = 0x4, offset = 0x4, fixed_abs, tag = 'smem constant byte address 0x4 - core index']
  #allocation1 [shape = 'u32[144,128]{1,0:T(1,128)}', space=vmem, size = 0x12000, scoped, tag = 'internal scratch']
  %s0 = inlined_call_operand.vmem [shape: bf16[2,16,512], index: 0, kind: input, shape index: {}]
  %s1 = inlined_call_operand.vmem [shape: bf16[32,16], index: 1, kind: input, shape index: {}]
  %s2 = inlined_call_operand.vmem [shape: f32[1,512], index: 2, kind: input, shape index: {}]
  %s3 = inlined_call_operand.vmem [shape: f32[1,512], index: 3, kind: input, shape index: {}]
  %s4 = inlined_call_operand.vmem [shape: bf16[2,32,512], index: 4, kind: output, shape index: {}]
  %s5 = sld [smem:[#allocation0]]
  $region49: #{_lambda_.12} parent=0
    _
  %s7 = ssub.s32 1, %s5
  %s8 = scalar_select 0, %s7, %s5
  loop: start=0, step=1, limit=4
  $region2: #{_lambda_.12} parent=0 // loop_pre_header
    _
  $region3: #{_lambda_.12} parent=0 // loop_header
    %s10 = sphi 0, %s14
    %p11 = scmp.ge.s32.totalorder %s10, 4
    %s20 = sphi 0, %s22
    %s23 = sphi 0, %s20
    %s24 = sphi 0, %s23
    %s40 = sphi 0, %s24
    %s44 = sphi 0, %s44
    %s46 = sphi 0, %s44
    %s47 = sphi 0, %s46
    %s61 = sphi 0, %s47
    %s65 = sphi 0, %s65
    %s67 = sphi 0, %s65
    %s68 = sphi 0, %s67
    %s82 = sphi 0, %s68
    %s86 = sphi 0, %s86
    %s88 = sphi 0, %s86
    %s89 = sphi 0, %s88
    %s103 = sphi 0, %s89
    %s109 = sphi 0, %s111
    %s112 = sphi 0, %s109
    %s113 = sphi 0, %s112
    %s129 = sphi 0, %s113
  $region4: #{_lambda_.12} parent=0 // loop_header_branch
    %13 = sbr.rel (%p11) target = $region8
  $region5: #{_lambda_.12} parent=0 // loop_body
    %s15 = ssub.s32 %s10, 1
    %s16 = ssub.s32 %s10, 2
    %s17 = sadd.s32 %s10, 1
    %s18 = ssub.s32 %s10, %s17
    %p19 = scmp.eq.s32.totalorder %s18, 0
    %s21 = sadd.s32 %s20, 1
    %s22 = scalar_select %p19, %s20, %s21
    %p25 = pneg %p19
    %p26 = scmp.eq.s32.totalorder %s10, 1
    %p27 = por %p25, %p26
    %p28 = scmp.ne.s32.totalorder %s20, %s23
    %p29 = scmp.eq.s32.totalorder %s10, 0
    %p30 = por %p28, %p29
    %p31 = scmp.ne.s32.totalorder %s20, %s23
    %p32 = scmp.eq.s32.totalorder %s15, 1
    %p33 = por %p31, %p32
    %p34 = scmp.ne.s32.totalorder %s23, %s24
    %p35 = scmp.eq.s32.totalorder %s15, 0
    %p36 = por %p34, %p35
    %p37 = scmp.ne.s32.totalorder %s23, %s24
    %p38 = scmp.eq.s32.totalorder %s16, 1
    %p39 = por %p37, %p38
    %p41 = scmp.ne.s32.totalorder %s24, %s40
    %p42 = scmp.eq.s32.totalorder %s16, 0
    %p43 = por %p41, %p42
    %s45 = sadd.s32 %s44, 1
    %p48 = scmp.eq.s32.totalorder %s10, 1
    %p49 = scmp.ne.s32.totalorder %s44, %s46
    %p50 = scmp.eq.s32.totalorder %s10, 0
    %p51 = por %p49, %p50
    %p52 = scmp.ne.s32.totalorder %s44, %s46
    %p53 = scmp.eq.s32.totalorder %s15, 1
    %p54 = por %p52, %p53
    %p55 = scmp.ne.s32.totalorder %s46, %s47
    %p56 = scmp.eq.s32.totalorder %s15, 0
    %p57 = por %p55, %p56
    %p58 = scmp.ne.s32.totalorder %s46, %s47
    %p59 = scmp.eq.s32.totalorder %s16, 1
    %p60 = por %p58, %p59
    %p62 = scmp.ne.s32.totalorder %s47, %s61
    %p63 = scmp.eq.s32.totalorder %s16, 0
    %p64 = por %p62, %p63
    %s66 = sadd.s32 %s65, 1
    %p69 = scmp.eq.s32.totalorder %s10, 1
    %p70 = scmp.ne.s32.totalorder %s65, %s67
    %p71 = scmp.eq.s32.totalorder %s10, 0
    %p72 = por %p70, %p71
    %p73 = scmp.ne.s32.totalorder %s65, %s67
    %p74 = scmp.eq.s32.totalorder %s15, 1
    %p75 = por %p73, %p74
    %p76 = scmp.ne.s32.totalorder %s67, %s68
    %p77 = scmp.eq.s32.totalorder %s15, 0
    %p78 = por %p76, %p77
    %p79 = scmp.ne.s32.totalorder %s67, %s68
    %p80 = scmp.eq.s32.totalorder %s16, 1
    %p81 = por %p79, %p80
    %p83 = scmp.ne.s32.totalorder %s68, %s82
    %p84 = scmp.eq.s32.totalorder %s16, 0
    %p85 = por %p83, %p84
    %s87 = sadd.s32 %s86, 1
    %p90 = scmp.eq.s32.totalorder %s10, 1
    %p91 = scmp.ne.s32.totalorder %s86, %s88
    %p92 = scmp.eq.s32.totalorder %s10, 0
    %p93 = por %p91, %p92
    %p94 = scmp.ne.s32.totalorder %s86, %s88
    %p95 = scmp.eq.s32.totalorder %s15, 1
    %p96 = por %p94, %p95
    %p97 = scmp.ne.s32.totalorder %s88, %s89
    %p98 = scmp.eq.s32.totalorder %s15, 0
    %p99 = por %p97, %p98
    %p100 = scmp.ne.s32.totalorder %s88, %s89
    %p101 = scmp.eq.s32.totalorder %s16, 1
    %p102 = por %p100, %p101
    %p104 = scmp.ne.s32.totalorder %s89, %s103
    %p105 = scmp.eq.s32.totalorder %s16, 0
    %p106 = por %p104, %p105
    %s107 = ssub.s32 %s10, %s17
    %p108 = scmp.eq.s32.totalorder %s107, 0
    %s110 = sadd.s32 %s109, 1
    %s111 = scalar_select %p108, %s109, %s110
    %p114 = pneg %p108
    %p115 = scmp.eq.s32.totalorder %s10, 1
    %p116 = por %p114, %p115
    %p117 = scmp.ne.s32.totalorder %s109, %s112
    %p118 = scmp.eq.s32.totalorder %s10, 0
    %p119 = por %p117, %p118
    %p120 = scmp.ne.s32.totalorder %s109, %s112
    %p121 = scmp.eq.s32.totalorder %s15, 1
    %p122 = por %p120, %p121
    %p123 = scmp.ne.s32.totalorder %s112, %s113
    %p124 = scmp.eq.s32.totalorder %s15, 0
    %p125 = por %p123, %p124
    %p126 = scmp.ne.s32.totalorder %s112, %s113
    %p127 = scmp.eq.s32.totalorder %s16, 1
    %p128 = por %p126, %p127
    %p130 = scmp.ne.s32.totalorder %s113, %s129
    %p131 = scmp.eq.s32.totalorder %s16, 0
    %p132 = por %p130, %p131
    %p133 = scmp.le.s32.totalorder 1, %s10
    %p134 = scmp.lt.s32.totalorder %s10, 3
    %p135 = pnand %p133, %p134
    %p136 = pneg %p135
    // Predicated region
    $region9: #{_lambda_.12} parent=5 // pred_check
      _
    $region10: #{_lambda_.12} parent=5 // pred_check_branch
      %138 = sbr.rel (%p135) target = $region12
    $region11: #{_lambda_.12} parent=5 // pred_region
      %s139 = ssub.s32 %s10, 1
      // Predicated region
      $region13: #{_lambda_.12} parent=11 // pred_check
        %p140 = pneg %p57
      $region14: #{_lambda_.12} parent=11 // pred_check_branch
        %142 = sbr.rel (%p140) target = $region16
      $region15: #{_lambda_.12} parent=11 // pred_region
        _
      $region16: #{_lambda_.12} parent=11 // pred_fallthru
        _
      // Predicated region
      $region17: #{_lambda_.12} parent=11 // pred_check
        %p143 = pneg %p78
      $region18: #{_lambda_.12} parent=11 // pred_check_branch
        %145 = sbr.rel (%p143) target = $region20
      $region19: #{_lambda_.12} parent=11 // pred_region
        _
      $region20: #{_lambda_.12} parent=11 // pred_fallthru
        _
      // Predicated region
      $region21: #{_lambda_.12} parent=11 // pred_check
        %p146 = pneg %p99
      $region22: #{_lambda_.12} parent=11 // pred_check_branch
        %148 = sbr.rel (%p146) target = $region24
      $region23: #{_lambda_.12} parent=11 // pred_region
        _
      $region24: #{_lambda_.12} parent=11 // pred_fallthru
        _
    $region12: #{_lambda_.12} parent=5 // pred_fallthru
      _
    %p149 = scmp.lt.s32.totalorder %s10, 2
    // Predicated region
    $region25: #{_lambda_.12} parent=5 // pred_check
      %p150 = pneg %p149
    $region26: #{_lambda_.12} parent=5 // pred_check_branch
      %152 = sbr.rel (%p150) target = $region28
    $region27: #{_lambda_.12} parent=5 // pred_region
      // Predicated region
      $region29: #{_lambda_.12} parent=27 // pred_check
        %p153 = pneg %p30
      $region30: #{_lambda_.12} parent=27 // pred_check_branch
        %155 = sbr.rel (%p153) target = $region32
      $region31: #{_lambda_.12} parent=27 // pred_region
        %p156 = scmp.lt.s32.totalorder %s10, 1
        %s157 = scalar_select %p156, %s10, 1
        %s158 = smul.addr %s157, 8
        %s159 = smul.addr %s158, 4
        %s160 = scalar_lea.vmem %s0, %s159
      $region32: #{_lambda_.12} parent=27 // pred_fallthru
        _
    $region28: #{_lambda_.12} parent=5 // pred_fallthru
      _
    %p161 = scmp.le.s32.totalorder 1, %s10
    %p162 = scmp.lt.s32.totalorder %s10, 3
    %p163 = pnand %p161, %p162
    %p164 = pneg %p163
    // Predicated region
    $region33: #{_lambda_.12} parent=5 // pred_check
      _
    $region34: #{_lambda_.12} parent=5 // pred_check_branch
      %166 = sbr.rel (%p163) target = $region36
    $region35: #{_lambda_.12} parent=5 // pred_region
      %s167 = ssub.s32 %s10, 1
      %p168 = scmp.lt.s32.totalorder %s15, 1
      %s169 = scalar_select %p168, %s15, 1
      %s170 = smul.addr %s169, 8
      %s171 = smul.addr %s170, 4
      %s172 = scalar_lea.vmem %s0, %s171
      %p173 = pneg %p36
      %p174 = pneg %p33
      %p175 = pneg %p57
      %p176 = pneg %p54
      %p177 = pneg %p78
      %p178 = pneg %p75
      %p179 = pneg %p99
      %p180 = pneg %p96
      %p181 = pneg %p125
      %p182 = pneg %p122
      %p183 = scmp.lt.s32.totalorder %s15, 1
      %s184 = scalar_select %p183, %s15, 1
      %s185 = smul.addr %s184, 16
      %s186 = smul.addr %s185, 4
      %s187 = scalar_lea.vmem %s4, %s186
      %p188 = scmp.lt.s32.totalorder %s15, 1
      %s189 = scalar_select %p188, %s15, 1
      %s190 = smul.addr %s189, 8
      %s191 = smul.addr %s190, 4
      %s192 = scalar_lea.vmem %s0, %s191
      %p193 = scmp.lt.s32.totalorder %s15, 1
      %s194 = scalar_select %p193, %s15, 1
      %s195 = smul.addr %s194, 16
      %s196 = smul.addr %s195, 4
      %s197 = scalar_lea.vmem %s4, %s196
      %v199 = vld [vmem:[%s192] sm:$0xff]
      %v200 = vld [vmem:[%s192 + $0x8] sm:$0xff]
      %v201 = vld [vmem:[%s192 + $0x10] sm:$0xff]
      %v202 = vld [vmem:[%s192 + $0x18] sm:$0xff]
      %v203 = vunpack.c.l.bf16 %v199
      %v204 = vunpack.c.h.bf16 %v199
      %v205 = vunpack.c.l.bf16 %v200
      %v206 = vunpack.c.h.bf16 %v200
      %v207 = vunpack.c.l.bf16 %v201
      %v208 = vunpack.c.h.bf16 %v201
      %v209 = vunpack.c.l.bf16 %v202
      %v210 = vunpack.c.h.bf16 %v202
      %v211 = vld [vmem:[%s2] sm:$0xf]
      %v213 = vlaneseq
      %v214 = vshrl.u32 %v213, 7
      %v215 = vsub.s32 0, %v214
      %v216 = vrot.slane %v211, %v215
      %v217 = vlaneseq
      %v218 = vshrl.u32 %v217, 7
      %v219 = vsub.s32 1, %v218
      %v220 = vrot.slane %v211, %v219
      %v221 = vlaneseq
      %v222 = vshrl.u32 %v221, 7
      %v223 = vsub.s32 2, %v222
      %v224 = vrot.slane %v211, %v223
      %v225 = vlaneseq
      %v226 = vshrl.u32 %v225, 7
      %v227 = vsub.s32 3, %v226
      %v228 = vrot.slane %v211, %v227
      %v233 = vmul.f32 %v203, %v216
      %v234 = vmul.f32 %v204, %v220
      %v235 = vmul.f32 %v205, %v224
      %v236 = vmul.f32 %v206, %v228
      %v237 = vmul.f32 %v207, %v216
      %v238 = vmul.f32 %v208, %v220
      %v239 = vmul.f32 %v209, %v224
      %v240 = vmul.f32 %v210, %v228
      %v241 = vld [vmem:[%s3] sm:$0xf]
      %v243 = vlaneseq
      %v244 = vshrl.u32 %v243, 7
      %v245 = vsub.s32 0, %v244
      %v246 = vrot.slane %v241, %v245
      %v247 = vlaneseq
      %v248 = vshrl.u32 %v247, 7
      %v249 = vsub.s32 1, %v248
      %v250 = vrot.slane %v241, %v249
      %v251 = vlaneseq
      %v252 = vshrl.u32 %v251, 7
      %v253 = vsub.s32 2, %v252
      %v254 = vrot.slane %v241, %v253
      %v255 = vlaneseq
      %v256 = vshrl.u32 %v255, 7
      %v257 = vsub.s32 3, %v256
      %v258 = vrot.slane %v241, %v257
      %v263 = vadd.f32 %v233, %v246
      %v264 = vadd.f32 %v234, %v250
      %v265 = vadd.f32 %v235, %v254
      %v266 = vadd.f32 %v236, %v258
      %v267 = vadd.f32 %v237, %v246
      %v268 = vadd.f32 %v238, %v250
      %v269 = vadd.f32 %v239, %v254
      %v270 = vadd.f32 %v240, %v258
      %v271 = vmax.f32 %v263, 0.0
      %v272 = vmax.f32 %v264, 0.0
      %v273 = vmax.f32 %v265, 0.0
      %v274 = vmax.f32 %v266, 0.0
      %v275 = vmax.f32 %v267, 0.0
      %v276 = vmax.f32 %v268, 0.0
      %v277 = vmax.f32 %v269, 0.0
      %v278 = vmax.f32 %v270, 0.0
      %v279 = vpack.c.bf16 %v275, %v271
      %v280 = vpack.c.bf16 %v276, %v272
      %v281 = vpack.c.bf16 %v277, %v273
      %v282 = vpack.c.bf16 %v278, %v274
      %v283 = vld [vmem:[%s1] sm:$0xf]
      %v284 = vld [vmem:[%s1 + $0x4] sm:$0xf]
      %v285 = vld [vmem:[%s1 + $0x8] sm:$0xf]
      %v286 = vld [vmem:[%s1 + $0xc] sm:$0xf]
      %v291 = vunpack.c.l.b16 %v283
      %v292 = vunpack.c.l.b16 %v284
      %v293 = vunpack.c.l.b16 %v285
      %v294 = vunpack.c.l.b16 %v286
      %v295 = vpack.c.b16 %v292, %v291
      %v296 = vpack.c.b16 %v294, %v293
      %vm297 = vcmask 130048
      %v299 = vsel %vm297, %v295, 0
      %v302 = vsel %vm297, %v296, 0
      %304 = vmatprep.subr.bf16.mxu0 %v280
      %305 = vmatpush1.bf16.msra.mxu0 %v279
      %306 = vmatprep.subr.bf16.mxu0 0
      %307 = vmatpush1.bf16.msra.mxu0 0
      %308 = vmatprep.subr.bf16.mxu0 0
      %309 = vmatpush1.bf16.msra.mxu0 0
      %310 = vmatprep.subr.bf16.mxu0 0
      %311 = vmatpush1.bf16.msra.mxu0 0
      %312 = vmatprep.subr.bf16.mxu0 0
      %313 = vmatpush1.bf16.msra.mxu0 0
      %314 = vmatprep.subr.bf16.mxu0 0
      %315 = vmatpush1.bf16.msra.mxu0 0
      %316 = vmatprep.subr.bf16.mxu0 0
      %317 = vmatpush1.bf16.msra.mxu0 0
      %318 = vmatprep.subr.bf16.mxu0 0
      %319 = vmatpush1.bf16.msra.mxu0 0
      %320 = vmatprep.subr.bf16.mxu0 0
      %321 = vmatpush1.bf16.msra.mxu0 0
      %322 = vmatprep.subr.bf16.mxu0 0
      %323 = vmatpush1.bf16.msra.mxu0 0
      %324 = vmatprep.subr.bf16.mxu0 0
      %325 = vmatpush1.bf16.msra.mxu0 0
      %326 = vmatprep.subr.bf16.mxu0 0
      %327 = vmatpush1.bf16.msra.mxu0 0
      %328 = vmatprep.subr.bf16.mxu0 0
      %329 = vmatpush1.bf16.msra.mxu0 0
      %330 = vmatprep.subr.bf16.mxu0 0
      %331 = vmatpush1.bf16.msra.mxu0 0
      %332 = vmatprep.subr.bf16.mxu0 0
      %333 = vmatpush1.bf16.msra.mxu0 0
      %334 = vmatprep.subr.bf16.mxu0 0
      %335 = vmatpush1.bf16.msra.mxu0 0
      %336 = vmatprep.mubr.bf16.mxu0 0
      %337 = vmatmul.mubr.bf16.gmra.mrb[0].mxu0 %v299
      %v338 = vpop.f32.mrb[0].mxu0
      %v339 = vadd.f32 0.0, %v338
      %v340 = vpop.f32.mrb[0].mxu0
      %v341 = vadd.f32 0.0, %v340
      %v342 = vpop.f32.mrb[0].mxu0
      %v343 = vadd.f32 0.0, %v342
      %v344 = vpop.f32.mrb[0].mxu0
      %v345 = vadd.f32 0.0, %v344
      %346 = vmatprep.mubr.bf16.mxu0 0
      %347 = vmatmul.mubr.bf16.gmra.mrb[0].mxu0 %v302
      %v348 = vpop.f32.mrb[0].mxu0
      %v349 = vadd.f32 0.0, %v348
      %v350 = vpop.f32.mrb[0].mxu0
      %v351 = vadd.f32 0.0, %v350
      %v352 = vpop.f32.mrb[0].mxu0
      %v353 = vadd.f32 0.0, %v352
      %v354 = vpop.f32.mrb[0].mxu0
      %v355 = vadd.f32 0.0, %v354
      %356 = vdwg.mxu0
      %357 = vmatprep.subr.bf16.mxu0 %v282
      %358 = vmatpush1.bf16.msra.mxu0 %v281
      %359 = vmatprep.subr.bf16.mxu0 0
      %360 = vmatpush1.bf16.msra.mxu0 0
      %361 = vmatprep.subr.bf16.mxu0 0
      %362 = vmatpush1.bf16.msra.mxu0 0
      %363 = vmatprep.subr.bf16.mxu0 0
      %364 = vmatpush1.bf16.msra.mxu0 0
      %365 = vmatprep.subr.bf16.mxu0 0
      %366 = vmatpush1.bf16.msra.mxu0 0
      %367 = vmatprep.subr.bf16.mxu0 0
      %368 = vmatpush1.bf16.msra.mxu0 0
      %369 = vmatprep.subr.bf16.mxu0 0
      %370 = vmatpush1.bf16.msra.mxu0 0
      %371 = vmatprep.subr.bf16.mxu0 0
      %372 = vmatpush1.bf16.msra.mxu0 0
      %373 = vmatprep.subr.bf16.mxu0 0
      %374 = vmatpush1.bf16.msra.mxu0 0
      %375 = vmatprep.subr.bf16.mxu0 0
      %376 = vmatpush1.bf16.msra.mxu0 0
      %377 = vmatprep.subr.bf16.mxu0 0
      %378 = vmatpush1.bf16.msra.mxu0 0
      %379 = vmatprep.subr.bf16.mxu0 0
      %380 = vmatpush1.bf16.msra.mxu0 0
      %381 = vmatprep.subr.bf16.mxu0 0
      %382 = vmatpush1.bf16.msra.mxu0 0
      %383 = vmatprep.subr.bf16.mxu0 0
      %384 = vmatpush1.bf16.msra.mxu0 0
      %385 = vmatprep.subr.bf16.mxu0 0
      %386 = vmatpush1.bf16.msra.mxu0 0
      %387 = vmatprep.subr.bf16.mxu0 0
      %388 = vmatpush1.bf16.msra.mxu0 0
      %389 = vmatprep.mubr.bf16.mxu0 0
      %390 = vmatmul.mubr.bf16.gmra.mrb[0].mxu0 %v299
      %v391 = vpop.f32.mrb[0].mxu0
      %v392 = vadd.f32 0.0, %v391
      %v393 = vpop.f32.mrb[0].mxu0
      %v394 = vadd.f32 0.0, %v393
      %v395 = vpop.f32.mrb[0].mxu0
      %v396 = vadd.f32 0.0, %v395
      %v397 = vpop.f32.mrb[0].mxu0
      %v398 = vadd.f32 0.0, %v397
      %399 = vmatprep.mubr.bf16.mxu0 0
      %400 = vmatmul.mubr.bf16.gmra.mrb[0].mxu0 %v302
      %v401 = vpop.f32.mrb[0].mxu0
      %v402 = vadd.f32 0.0, %v401
      %v403 = vpop.f32.mrb[0].mxu0
      %v404 = vadd.f32 0.0, %v403
      %v405 = vpop.f32.mrb[0].mxu0
      %v406 = vadd.f32 0.0, %v405
      %v407 = vpop.f32.mrb[0].mxu0
      %v408 = vadd.f32 0.0, %v407
      %409 = vdwg.mxu0
      %v410 = vpack.c.bf16 %v343, %v339
      %v411 = vpack.c.bf16 %v345, %v341
      %v412 = vpack.c.bf16 %v396, %v392
      %v413 = vpack.c.bf16 %v398, %v394
      %v414 = vpack.c.bf16 %v353, %v349
      %v415 = vpack.c.bf16 %v355, %v351
      %v416 = vpack.c.bf16 %v406, %v402
      %v417 = vpack.c.bf16 %v408, %v404
      %v426 = vunpack.c.l.b16 %v410
      %v427 = vunpack.c.l.b16 %v411
      %v428 = vunpack.c.l.b16 %v412
      %v429 = vunpack.c.l.b16 %v413
      %v430 = vunpack.c.h.b16 %v410
      %v431 = vunpack.c.h.b16 %v411
      %v432 = vunpack.c.h.b16 %v412
      %v433 = vunpack.c.h.b16 %v413
      %v434 = vunpack.c.l.b16 %v414
      %v435 = vunpack.c.l.b16 %v415
      %v436 = vunpack.c.l.b16 %v416
      %v437 = vunpack.c.l.b16 %v417
      %v438 = vunpack.c.h.b16 %v414
      %v439 = vunpack.c.h.b16 %v415
      %v440 = vunpack.c.h.b16 %v416
      %v441 = vunpack.c.h.b16 %v417
      %v442 = vpack.c.b16 %v427, %v426
      %v443 = vpack.c.b16 %v429, %v428
      %v444 = vpack.c.b16 %v431, %v430
      %v445 = vpack.c.b16 %v433, %v432
      %v446 = vpack.c.b16 %v435, %v434
      %v447 = vpack.c.b16 %v437, %v436
      %v448 = vpack.c.b16 %v439, %v438
      %v449 = vpack.c.b16 %v441, %v440
      %458 = vst [vmem:[%s197] sm:$0xff] %v442
      %459 = vst [vmem:[%s197 + $0x8] sm:$0xff] %v443
      %460 = vst [vmem:[%s197 + $0x10] sm:$0xff] %v444
      %461 = vst [vmem:[%s197 + $0x18] sm:$0xff] %v445
      %462 = vst [vmem:[%s197 + $0x20] sm:$0xff] %v446
      %463 = vst [vmem:[%s197 + $0x28] sm:$0xff] %v447
      %464 = vst [vmem:[%s197 + $0x30] sm:$0xff] %v448
      %465 = vst [vmem:[%s197 + $0x38] sm:$0xff] %v449
      %p466 = scmp.lt.s32.totalorder %s15, 1
      %s467 = scalar_select %p466, %s15, 1
      %s468 = smul.addr %s467, 16
      %s469 = smul.addr %s468, 4
      %s470 = scalar_lea.vmem %s4, %s469
      // Predicated region
      $region37: #{_lambda_.12} parent=35 // pred_check
        %p471 = pneg %p122
      $region38: #{_lambda_.12} parent=35 // pred_check_branch
        %473 = sbr.rel (%p471) target = $region40
      $region39: #{_lambda_.12} parent=35 // pred_region
        _
      $region40: #{_lambda_.12} parent=35 // pred_fallthru
        _
    $region36: #{_lambda_.12} parent=5 // pred_fallthru
      _
    %p474 = scmp.le.s32.totalorder 2, %s10
    // Predicated region
    $region41: #{_lambda_.12} parent=5 // pred_check
      %p475 = pneg %p474
    $region42: #{_lambda_.12} parent=5 // pred_check_branch
      %477 = sbr.rel (%p475) target = $region44
    $region43: #{_lambda_.12} parent=5 // pred_region
      %s478 = ssub.s32 %s10, 2
      // Predicated region
      $region45: #{_lambda_.12} parent=43 // pred_check
        %p479 = pneg %p128
      $region46: #{_lambda_.12} parent=43 // pred_check_branch
        %481 = sbr.rel (%p479) target = $region48
      $region47: #{_lambda_.12} parent=43 // pred_region
        %p482 = scmp.lt.s32.totalorder %s16, 1
        %s483 = scalar_select %p482, %s16, 1
        %s484 = smul.addr %s483, 16
        %s485 = smul.addr %s484, 4
        %s486 = scalar_lea.vmem %s4, %s485
      $region48: #{_lambda_.12} parent=43 // pred_fallthru
        _
    $region44: #{_lambda_.12} parent=5 // pred_fallthru
      _
  $region6: #{_lambda_.12} parent=0 // loop_footer
    %s14 = sadd.s32 1, %s10
  $region7: #{_lambda_.12} parent=0 // loop_footer_branch
    %9 = sbr.rel target = $region3
  $region8: #{_lambda_.12} parent=0 // loop_exit
    _

// kernel: _lambda_.13
$region0: #{_lambda_.13}
  #allocation0 [shape = 'u32[]', space=smem, size = 0x4, offset = 0x4, fixed_abs, tag = 'smem constant byte address 0x4 - core index']
  #allocation1 [shape = 'u32[144,128]{1,0:T(1,128)}', space=vmem, size = 0x12000, scoped, tag = 'internal scratch']
  %s0 = inlined_call_operand.vmem [shape: bf16[2,32,16,32], index: 0, kind: input, shape index: {}]
  %s1 = inlined_call_operand.vmem [shape: bf16[32,16], index: 1, kind: input, shape index: {}]
  %s2 = inlined_call_operand.vmem [shape: bf16[2,32,32,32], index: 2, kind: output, shape index: {}]
  %s3 = sld [smem:[#allocation0]]
  $region48: #{_lambda_.13} parent=0
    _
  %s5 = ssub.s32 1, %s3
  %s6 = scalar_select 0, %s5, %s3
  loop: start=0, step=1, limit=4
  $region2: #{_lambda_.13} parent=0 // loop_pre_header
    _
  $region3: #{_lambda_.13} parent=0 // loop_header
    %s8 = sphi 0, %s12
    %p9 = scmp.ge.s32.totalorder %s8, 4
    %s18 = sphi 0, %s20
    %s21 = sphi 0, %s18
    %s22 = sphi 0, %s21
    %s38 = sphi 0, %s22
    %s42 = sphi 0, %s42
    %s44 = sphi 0, %s42
    %s45 = sphi 0, %s44
    %s59 = sphi 0, %s45
    %s65 = sphi 0, %s67
    %s68 = sphi 0, %s65
    %s69 = sphi 0, %s68
    %s85 = sphi 0, %s69
  $region4: #{_lambda_.13} parent=0 // loop_header_branch
    %11 = sbr.rel (%p9) target = $region8
  $region5: #{_lambda_.13} parent=0 // loop_body
    %s13 = ssub.s32 %s8, 1
    %s14 = ssub.s32 %s8, 2
    %s15 = sadd.s32 %s8, 1
    %s16 = ssub.s32 %s8, %s15
    %p17 = scmp.eq.s32.totalorder %s16, 0
    %s19 = sadd.s32 %s18, 1
    %s20 = scalar_select %p17, %s18, %s19
    %p23 = pneg %p17
    %p24 = scmp.eq.s32.totalorder %s8, 1
    %p25 = por %p23, %p24
    %p26 = scmp.ne.s32.totalorder %s18, %s21
    %p27 = scmp.eq.s32.totalorder %s8, 0
    %p28 = por %p26, %p27
    %p29 = scmp.ne.s32.totalorder %s18, %s21
    %p30 = scmp.eq.s32.totalorder %s13, 1
    %p31 = por %p29, %p30
    %p32 = scmp.ne.s32.totalorder %s21, %s22
    %p33 = scmp.eq.s32.totalorder %s13, 0
    %p34 = por %p32, %p33
    %p35 = scmp.ne.s32.totalorder %s21, %s22
    %p36 = scmp.eq.s32.totalorder %s14, 1
    %p37 = por %p35, %p36
    %p39 = scmp.ne.s32.totalorder %s22, %s38
    %p40 = scmp.eq.s32.totalorder %s14, 0
    %p41 = por %p39, %p40
    %s43 = sadd.s32 %s42, 1
    %p46 = scmp.eq.s32.totalorder %s8, 1
    %p47 = scmp.ne.s32.totalorder %s42, %s44
    %p48 = scmp.eq.s32.totalorder %s8, 0
    %p49 = por %p47, %p48
    %p50 = scmp.ne.s32.totalorder %s42, %s44
    %p51 = scmp.eq.s32.totalorder %s13, 1
    %p52 = por %p50, %p51
    %p53 = scmp.ne.s32.totalorder %s44, %s45
    %p54 = scmp.eq.s32.totalorder %s13, 0
    %p55 = por %p53, %p54
    %p56 = scmp.ne.s32.totalorder %s44, %s45
    %p57 = scmp.eq.s32.totalorder %s14, 1
    %p58 = por %p56, %p57
    %p60 = scmp.ne.s32.totalorder %s45, %s59
    %p61 = scmp.eq.s32.totalorder %s14, 0
    %p62 = por %p60, %p61
    %s63 = ssub.s32 %s8, %s15
    %p64 = scmp.eq.s32.totalorder %s63, 0
    %s66 = sadd.s32 %s65, 1
    %s67 = scalar_select %p64, %s65, %s66
    %p70 = pneg %p64
    %p71 = scmp.eq.s32.totalorder %s8, 1
    %p72 = por %p70, %p71
    %p73 = scmp.ne.s32.totalorder %s65, %s68
    %p74 = scmp.eq.s32.totalorder %s8, 0
    %p75 = por %p73, %p74
    %p76 = scmp.ne.s32.totalorder %s65, %s68
    %p77 = scmp.eq.s32.totalorder %s13, 1
    %p78 = por %p76, %p77
    %p79 = scmp.ne.s32.totalorder %s68, %s69
    %p80 = scmp.eq.s32.totalorder %s13, 0
    %p81 = por %p79, %p80
    %p82 = scmp.ne.s32.totalorder %s68, %s69
    %p83 = scmp.eq.s32.totalorder %s14, 1
    %p84 = por %p82, %p83
    %p86 = scmp.ne.s32.totalorder %s69, %s85
    %p87 = scmp.eq.s32.totalorder %s14, 0
    %p88 = por %p86, %p87
    %p89 = scmp.le.s32.totalorder 1, %s8
    %p90 = scmp.lt.s32.totalorder %s8, 3
    %p91 = pnand %p89, %p90
    %p92 = pneg %p91
    // Predicated region
    $region9: #{_lambda_.13} parent=5 // pred_check
      _
    $region10: #{_lambda_.13} parent=5 // pred_check_branch
      %94 = sbr.rel (%p91) target = $region12
    $region11: #{_lambda_.13} parent=5 // pred_region
      %s95 = ssub.s32 %s8, 1
      // Predicated region
      $region13: #{_lambda_.13} parent=11 // pred_check
        %p96 = pneg %p55
      $region14: #{_lambda_.13} parent=11 // pred_check_branch
        %98 = sbr.rel (%p96) target = $region16
      $region15: #{_lambda_.13} parent=11 // pred_region
        _
      $region16: #{_lambda_.13} parent=11 // pred_fallthru
        _
    $region12: #{_lambda_.13} parent=5 // pred_fallthru
      _
    %p99 = scmp.lt.s32.totalorder %s8, 2
    // Predicated region
    $region17: #{_lambda_.13} parent=5 // pred_check
      %p100 = pneg %p99
    $region18: #{_lambda_.13} parent=5 // pred_check_branch
      %102 = sbr.rel (%p100) target = $region20
    $region19: #{_lambda_.13} parent=5 // pred_region
      // Predicated region
      $region21: #{_lambda_.13} parent=19 // pred_check
        %p103 = pneg %p28
      $region22: #{_lambda_.13} parent=19 // pred_check_branch
        %105 = sbr.rel (%p103) target = $region24
      $region23: #{_lambda_.13} parent=19 // pred_region
        %p106 = scmp.lt.s32.totalorder %s8, 1
        %s107 = scalar_select %p106, %s8, 1
        %s108 = smul.addr %s107, 64
        %s109 = smul.addr %s108, 4
        %s110 = scalar_lea.vmem %s0, %s109
      $region24: #{_lambda_.13} parent=19 // pred_fallthru
        _
    $region20: #{_lambda_.13} parent=5 // pred_fallthru
      _
    %p111 = scmp.le.s32.totalorder 1, %s8
    %p112 = scmp.lt.s32.totalorder %s8, 3
    %p113 = pnand %p111, %p112
    %p114 = pneg %p113
    // Predicated region
    $region25: #{_lambda_.13} parent=5 // pred_check
      _
    $region26: #{_lambda_.13} parent=5 // pred_check_branch
      %116 = sbr.rel (%p113) target = $region28
    $region27: #{_lambda_.13} parent=5 // pred_region
      %s117 = ssub.s32 %s8, 1
      %p118 = scmp.lt.s32.totalorder %s13, 1
      %s119 = scalar_select %p118, %s13, 1
      %s120 = smul.addr %s119, 64
      %s121 = smul.addr %s120, 4
      %s122 = scalar_lea.vmem %s0, %s121
      %p123 = pneg %p34
      %p124 = pneg %p31
      %p125 = pneg %p55
      %p126 = pneg %p52
      %p127 = pneg %p81
      %p128 = pneg %p78
      %p129 = scmp.lt.s32.totalorder %s13, 1
      %s130 = scalar_select %p129, %s13, 1
      %s131 = smul.addr %s130, 128
      %s132 = smul.addr %s131, 4
      %s133 = scalar_lea.vmem %s2, %s132
      %p134 = scmp.lt.s32.totalorder %s13, 1
      %s135 = scalar_select %p134, %s13, 1
      %s136 = smul.addr %s135, 64
      %s137 = smul.addr %s136, 4
      %s138 = scalar_lea.vmem %s0, %s137
      %p139 = scmp.lt.s32.totalorder %s13, 1
      %s140 = scalar_select %p139, %s13, 1
      %s141 = smul.addr %s140, 128
      %s142 = smul.addr %s141, 4
      %s143 = scalar_lea.vmem %s2, %s142
      loop: start=0, step=1, limit=32
      $region29: #{_lambda_.13} parent=27 // loop_pre_header
        _
      $region30: #{_lambda_.13} parent=27 // loop_header
        %s146 = sphi 0, %s150
        %p147 = scmp.ge.s32.totalorder %s146, 32
      $region31: #{_lambda_.13} parent=27 // loop_header_branch
        %149 = sbr.rel (%p147) target = $region35
      $region32: #{_lambda_.13} parent=27 // loop_body
        %v151 = vld [vmem:[%s1] sm:$0xf]
        %v152 = vld [vmem:[%s1 + $0x4] sm:$0xf]
        %v153 = vld [vmem:[%s1 + $0x8] sm:$0xf]
        %v154 = vld [vmem:[%s1 + $0xc] sm:$0xf]
        %s155 = smul.u32 %s146, 2
        %s156 = smul.addr %s155, 4
        %s157 = scalar_lea.vmem %s138, %s156
        %v158 = vld [vmem:[%s157] sm:$0xf]
        %v159 = vld [vmem:[%s157 + $0x4] sm:$0xf]
        %v164 = vunpack.c.l.b16 %v151
        %v165 = vunpack.c.l.b16 %v152
        %v166 = vunpack.c.l.b16 %v153
        %v167 = vunpack.c.l.b16 %v154
        %v168 = vpack.c.b16 %v165, %v164
        %v169 = vpack.c.b16 %v167, %v166
        %v172 = vunpack.c.l.b16 %v158
        %v173 = vunpack.c.l.b16 %v159
        %v174 = vpack.c.b16 %v173, %v172
        %vm176 = vcmask 130048
        %v178 = vsel %vm176, %v168, 0
        %v181 = vsel %vm176, %v169, 0
        %183 = vmatprep.subr.bf16.mxu0 0
        %184 = vmatpush1.bf16.msra.mxu0 %v174
        %185 = vmatprep.subr.bf16.mxu0 0
        %186 = vmatpush1.bf16.msra.mxu0 0
        %187 = vmatprep.subr.bf16.mxu0 0
        %188 = vmatpush1.bf16.msra.mxu0 0
        %189 = vmatprep.subr.bf16.mxu0 0
        %190 = vmatpush1.bf16.msra.mxu0 0
        %191 = vmatprep.subr.bf16.mxu0 0
        %192 = vmatpush1.bf16.msra.mxu0 0
        %193 = vmatprep.subr.bf16.mxu0 0
        %194 = vmatpush1.bf16.msra.mxu0 0
        %195 = vmatprep.subr.bf16.mxu0 0
        %196 = vmatpush1.bf16.msra.mxu0 0
        %197 = vmatprep.subr.bf16.mxu0 0
        %198 = vmatpush1.bf16.msra.mxu0 0
        %199 = vmatprep.subr.bf16.mxu0 0
        %200 = vmatpush1.bf16.msra.mxu0 0
        %201 = vmatprep.subr.bf16.mxu0 0
        %202 = vmatpush1.bf16.msra.mxu0 0
        %203 = vmatprep.subr.bf16.mxu0 0
        %204 = vmatpush1.bf16.msra.mxu0 0
        %205 = vmatprep.subr.bf16.mxu0 0
        %206 = vmatpush1.bf16.msra.mxu0 0
        %207 = vmatprep.subr.bf16.mxu0 0
        %208 = vmatpush1.bf16.msra.mxu0 0
        %209 = vmatprep.subr.bf16.mxu0 0
        %210 = vmatpush1.bf16.msra.mxu0 0
        %211 = vmatprep.subr.bf16.mxu0 0
        %212 = vmatpush1.bf16.msra.mxu0 0
        %213 = vmatprep.subr.bf16.mxu0 0
        %214 = vmatpush1.bf16.msra.mxu0 0
        %215 = vmatprep.mubr.bf16.mxu0 0
        %216 = vmatmul.mubr.bf16.gmra.mrb[0].mxu0 %v178
        %v217 = vpop.f32.mrb[0].mxu0
        %v218 = vadd.f32 0.0, %v217
        %v219 = vpop.f32.mrb[0].mxu0
        %v220 = vpop.f32.mrb[0].mxu0
        %v221 = vadd.f32 0.0, %v220
        %v222 = vpop.f32.mrb[0].mxu0
        %223 = vmatprep.mubr.bf16.mxu0 0
        %224 = vmatmul.mubr.bf16.gmra.mrb[0].mxu0 %v181
        %v225 = vpop.f32.mrb[0].mxu0
        %v226 = vadd.f32 0.0, %v225
        %v227 = vpop.f32.mrb[0].mxu0
        %v228 = vpop.f32.mrb[0].mxu0
        %v229 = vadd.f32 0.0, %v228
        %v230 = vpop.f32.mrb[0].mxu0
        %231 = vdwg.mxu0
        %v232 = vpack.c.bf16 %v221, %v218
        %v233 = vpack.c.bf16 %v229, %v226
        %v236 = vunpack.c.l.b16 %v232
        %v237 = vunpack.c.h.b16 %v232
        %v238 = vunpack.c.l.b16 %v233
        %v239 = vunpack.c.h.b16 %v233
        %v240 = vpack.c.b16 %v236, %v236
        %v241 = vpack.c.b16 %v237, %v237
        %v242 = vpack.c.b16 %v238, %v238
        %v243 = vpack.c.b16 %v239, %v239
        %s248 = smul.u32 %s146, 4
        %s249 = smul.addr %s248, 4
        %s250 = scalar_lea.vmem %s143, %s249
        %vm251 = vcmask 257024
        %252 = vst.msk [vmem:[%s250] sm:$0xf] %vm251, %v240
        %253 = vst.msk [vmem:[%s250 + $0x4] sm:$0xf] %vm251, %v241
        %254 = vst.msk [vmem:[%s250 + $0x8] sm:$0xf] %vm251, %v242
        %255 = vst.msk [vmem:[%s250 + $0xc] sm:$0xf] %vm251, %v243
      $region33: #{_lambda_.13} parent=27 // loop_footer
        %s150 = sadd.s32 1, %s146
      $region34: #{_lambda_.13} parent=27 // loop_footer_branch
        %145 = sbr.rel target = $region30
      $region35: #{_lambda_.13} parent=27 // loop_exit
        _
      %p256 = scmp.lt.s32.totalorder %s13, 1
      %s257 = scalar_select %p256, %s13, 1
      %s258 = smul.addr %s257, 128
      %s259 = smul.addr %s258, 4
      %s260 = scalar_lea.vmem %s2, %s259
      // Predicated region
      $region36: #{_lambda_.13} parent=27 // pred_check
        %p261 = pneg %p78
      $region37: #{_lambda_.13} parent=27 // pred_check_branch
        %263 = sbr.rel (%p261) target = $region39
      $region38: #{_lambda_.13} parent=27 // pred_region
        _
      $region39: #{_lambda_.13} parent=27 // pred_fallthru
        _
    $region28: #{_lambda_.13} parent=5 // pred_fallthru
      _
    %p264 = scmp.le.s32.totalorder 2, %s8
    // Predicated region
    $region40: #{_lambda_.13} parent=5 // pred_check
      %p265 = pneg %p264
    $region41: #{_lambda_.13} parent=5 // pred_check_branch
      %267 = sbr.rel (%p265) target = $region43
    $region42: #{_lambda_.13} parent=5 // pred_region
      %s268 = ssub.s32 %s8, 2
      // Predicated region
      $region44: #{_lambda_.13} parent=42 // pred_check
        %p269 = pneg %p84
      $region45: #{_lambda_.13} parent=42 // pred_check_branch
        %271 = sbr.rel (%p269) target = $region47
      $region46: #{_lambda_.13} parent=42 // pred_region
        %p272 = scmp.lt.s32.totalorder %s14, 1
        %s273 = scalar_select %p272, %s14, 1
        %s274 = smul.addr %s273, 128
        %s275 = smul.addr %s274, 4
        %s276 = scalar_lea.vmem %s2, %s275
      $region47: #{_lambda_.13} parent=42 // pred_fallthru
        _
    $region43: #{_lambda_.13} parent=5 // pred_fallthru
      _
  $region6: #{_lambda_.13} parent=0 // loop_footer
    %s12 = sadd.s32 1, %s8
  $region7: #{_lambda_.13} parent=0 // loop_footer_branch
    %7 = sbr.rel target = $region3
  $region8: #{_lambda_.13} parent=0 // loop_exit
    _

// kernel: _lambda_.11
$region0: #{_lambda_.11}
  #allocation0 [shape = 'u32[]', space=smem, size = 0x4, offset = 0x4, fixed_abs, tag = 'smem constant byte address 0x4 - core index']
  #allocation1 [shape = 'u32[144,128]{1,0:T(1,128)}', space=vmem, size = 0x12000, scoped, tag = 'internal scratch']
  %s0 = inlined_call_operand.vmem [shape: bf16[2,18,18,32], index: 0, kind: input, shape index: {}]
  %s1 = inlined_call_operand.vmem [shape: bf16[3,96,32], index: 1, kind: input, shape index: {}]
  %s2 = inlined_call_operand.vmem [shape: bf16[2,16,16,32], index: 2, kind: output, shape index: {0}]
  %s3 = inlined_call_operand.vmem [shape: f32[2,1,32], index: 3, kind: output, shape index: {1}]
  %s4 = inlined_call_operand.vmem [shape: f32[2,1,32], index: 4, kind: output, shape index: {2}]
  %5 = xla_tuple %s2, %s3, %s4
  %s6 = sld [smem:[#allocation0]]
  $region57: #{_lambda_.11} parent=0
    _
  %s8 = ssub.s32 1, %s6
  %s9 = scalar_select 0, %s8, %s6
  loop: start=0, step=1, limit=4
  $region2: #{_lambda_.11} parent=0 // loop_pre_header
    _
  $region3: #{_lambda_.11} parent=0 // loop_header
    %s11 = sphi 0, %s15
    %p12 = scmp.ge.s32.totalorder %s11, 4
    %s21 = sphi 0, %s23
    %s24 = sphi 0, %s21
    %s25 = sphi 0, %s24
    %s41 = sphi 0, %s25
    %s45 = sphi 0, %s45
    %s47 = sphi 0, %s45
    %s48 = sphi 0, %s47
    %s62 = sphi 0, %s48
    %s68 = sphi 0, %s70
    %s71 = sphi 0, %s68
    %s72 = sphi 0, %s71
    %s88 = sphi 0, %s72
    %s94 = sphi 0, %s96
    %s97 = sphi 0, %s94
    %s98 = sphi 0, %s97
    %s114 = sphi 0, %s98
    %s120 = sphi 0, %s122
    %s123 = sphi 0, %s120
    %s124 = sphi 0, %s123
    %s140 = sphi 0, %s124
  $region4: #{_lambda_.11} parent=0 // loop_header_branch
    %14 = sbr.rel (%p12) target = $region8
  $region5: #{_lambda_.11} parent=0 // loop_body
    %s16 = ssub.s32 %s11, 1
    %s17 = ssub.s32 %s11, 2
    %s18 = sadd.s32 %s11, 1
    %s19 = ssub.s32 %s11, %s18
    %p20 = scmp.eq.s32.totalorder %s19, 0
    %s22 = sadd.s32 %s21, 1
    %s23 = scalar_select %p20, %s21, %s22
    %p26 = pneg %p20
    %p27 = scmp.eq.s32.totalorder %s11, 1
    %p28 = por %p26, %p27
    %p29 = scmp.ne.s32.totalorder %s21, %s24
    %p30 = scmp.eq.s32.totalorder %s11, 0
    %p31 = por %p29, %p30
    %p32 = scmp.ne.s32.totalorder %s21, %s24
    %p33 = scmp.eq.s32.totalorder %s16, 1
    %p34 = por %p32, %p33
    %p35 = scmp.ne.s32.totalorder %s24, %s25
    %p36 = scmp.eq.s32.totalorder %s16, 0
    %p37 = por %p35, %p36
    %p38 = scmp.ne.s32.totalorder %s24, %s25
    %p39 = scmp.eq.s32.totalorder %s17, 1
    %p40 = por %p38, %p39
    %p42 = scmp.ne.s32.totalorder %s25, %s41
    %p43 = scmp.eq.s32.totalorder %s17, 0
    %p44 = por %p42, %p43
    %s46 = sadd.s32 %s45, 1
    %p49 = scmp.eq.s32.totalorder %s11, 1
    %p50 = scmp.ne.s32.totalorder %s45, %s47
    %p51 = scmp.eq.s32.totalorder %s11, 0
    %p52 = por %p50, %p51
    %p53 = scmp.ne.s32.totalorder %s45, %s47
    %p54 = scmp.eq.s32.totalorder %s16, 1
    %p55 = por %p53, %p54
    %p56 = scmp.ne.s32.totalorder %s47, %s48
    %p57 = scmp.eq.s32.totalorder %s16, 0
    %p58 = por %p56, %p57
    %p59 = scmp.ne.s32.totalorder %s47, %s48
    %p60 = scmp.eq.s32.totalorder %s17, 1
    %p61 = por %p59, %p60
    %p63 = scmp.ne.s32.totalorder %s48, %s62
    %p64 = scmp.eq.s32.totalorder %s17, 0
    %p65 = por %p63, %p64
    %s66 = ssub.s32 %s11, %s18
    %p67 = scmp.eq.s32.totalorder %s66, 0
    %s69 = sadd.s32 %s68, 1
    %s70 = scalar_select %p67, %s68, %s69
    %p73 = pneg %p67
    %p74 = scmp.eq.s32.totalorder %s11, 1
    %p75 = por %p73, %p74
    %p76 = scmp.ne.s32.totalorder %s68, %s71
    %p77 = scmp.eq.s32.totalorder %s11, 0
    %p78 = por %p76, %p77
    %p79 = scmp.ne.s32.totalorder %s68, %s71
    %p80 = scmp.eq.s32.totalorder %s16, 1
    %p81 = por %p79, %p80
    %p82 = scmp.ne.s32.totalorder %s71, %s72
    %p83 = scmp.eq.s32.totalorder %s16, 0
    %p84 = por %p82, %p83
    %p85 = scmp.ne.s32.totalorder %s71, %s72
    %p86 = scmp.eq.s32.totalorder %s17, 1
    %p87 = por %p85, %p86
    %p89 = scmp.ne.s32.totalorder %s72, %s88
    %p90 = scmp.eq.s32.totalorder %s17, 0
    %p91 = por %p89, %p90
    %s92 = ssub.s32 %s11, %s18
    %p93 = scmp.eq.s32.totalorder %s92, 0
    %s95 = sadd.s32 %s94, 1
    %s96 = scalar_select %p93, %s94, %s95
    %p99 = pneg %p93
    %p100 = scmp.eq.s32.totalorder %s11, 1
    %p101 = por %p99, %p100
    %p102 = scmp.ne.s32.totalorder %s94, %s97
    %p103 = scmp.eq.s32.totalorder %s11, 0
    %p104 = por %p102, %p103
    %p105 = scmp.ne.s32.totalorder %s94, %s97
    %p106 = scmp.eq.s32.totalorder %s16, 1
    %p107 = por %p105, %p106
    %p108 = scmp.ne.s32.totalorder %s97, %s98
    %p109 = scmp.eq.s32.totalorder %s16, 0
    %p110 = por %p108, %p109
    %p111 = scmp.ne.s32.totalorder %s97, %s98
    %p112 = scmp.eq.s32.totalorder %s17, 1
    %p113 = por %p111, %p112
    %p115 = scmp.ne.s32.totalorder %s98, %s114
    %p116 = scmp.eq.s32.totalorder %s17, 0
    %p117 = por %p115, %p116
    %s118 = ssub.s32 %s11, %s18
    %p119 = scmp.eq.s32.totalorder %s118, 0
    %s121 = sadd.s32 %s120, 1
    %s122 = scalar_select %p119, %s120, %s121
    %p125 = pneg %p119
    %p126 = scmp.eq.s32.totalorder %s11, 1
    %p127 = por %p125, %p126
    %p128 = scmp.ne.s32.totalorder %s120, %s123
    %p129 = scmp.eq.s32.totalorder %s11, 0
    %p130 = por %p128, %p129
    %p131 = scmp.ne.s32.totalorder %s120, %s123
    %p132 = scmp.eq.s32.totalorder %s16, 1
    %p133 = por %p131, %p132
    %p134 = scmp.ne.s32.totalorder %s123, %s124
    %p135 = scmp.eq.s32.totalorder %s16, 0
    %p136 = por %p134, %p135
    %p137 = scmp.ne.s32.totalorder %s123, %s124
    %p138 = scmp.eq.s32.totalorder %s17, 1
    %p139 = por %p137, %p138
    %p141 = scmp.ne.s32.totalorder %s124, %s140
    %p142 = scmp.eq.s32.totalorder %s17, 0
    %p143 = por %p141, %p142
    %p144 = scmp.le.s32.totalorder 1, %s11
    %p145 = scmp.lt.s32.totalorder %s11, 3
    %p146 = pnand %p144, %p145
    %p147 = pneg %p146
    // Predicated region
    $region9: #{_lambda_.11} parent=5 // pred_check
      _
    $region10: #{_lambda_.11} parent=5 // pred_check_branch
      %149 = sbr.rel (%p146) target = $region12
    $region11: #{_lambda_.11} parent=5 // pred_region
      %s150 = ssub.s32 %s11, 1
      // Predicated region
      $region13: #{_lambda_.11} parent=11 // pred_check
        %p151 = pneg %p58
      $region14: #{_lambda_.11} parent=11 // pred_check_branch
        %153 = sbr.rel (%p151) target = $region16
      $region15: #{_lambda_.11} parent=11 // pred_region
        _
      $region16: #{_lambda_.11} parent=11 // pred_fallthru
        _
    $region12: #{_lambda_.11} parent=5 // pred_fallthru
      _
    %p154 = scmp.lt.s32.totalorder %s11, 2
    // Predicated region
    $region17: #{_lambda_.11} parent=5 // pred_check
      %p155 = pneg %p154
    $region18: #{_lambda_.11} parent=5 // pred_check_branch
      %157 = sbr.rel (%p155) target = $region20
    $region19: #{_lambda_.11} parent=5 // pred_region
      // Predicated region
      $region21: #{_lambda_.11} parent=19 // pred_check
        %p158 = pneg %p31
      $region22: #{_lambda_.11} parent=19 // pred_check_branch
        %160 = sbr.rel (%p158) target = $region24
      $region23: #{_lambda_.11} parent=19 // pred_region
        %p161 = scmp.lt.s32.totalorder %s11, 1
        %s162 = scalar_select %p161, %s11, 1
        %s163 = smul.addr %s162, 54
        %s164 = smul.addr %s163, 4
        %s165 = scalar_lea.vmem %s0, %s164
      $region24: #{_lambda_.11} parent=19 // pred_fallthru
        _
    $region20: #{_lambda_.11} parent=5 // pred_fallthru
      _
    %p166 = scmp.le.s32.totalorder 1, %s11
    %p167 = scmp.lt.s32.totalorder %s11, 3
    %p168 = pnand %p166, %p167
    %p169 = pneg %p168
    // Predicated region
    $region25: #{_lambda_.11} parent=5 // pred_check
      _
    $region26: #{_lambda_.11} parent=5 // pred_check_branch
      %171 = sbr.rel (%p168) target = $region28
    $region27: #{_lambda_.11} parent=5 // pred_region
      %s172 = ssub.s32 %s11, 1
      %p173 = scmp.lt.s32.totalorder %s16, 1
      %s174 = scalar_select %p173, %s16, 1
      %s175 = smul.addr %s174, 54
      %s176 = smul.addr %s175, 4
      %s177 = scalar_lea.vmem %s0, %s176
      %p178 = pneg %p37
      %p179 = pneg %p34
      %p180 = pneg %p58
      %p181 = pneg %p55
      %p182 = pneg %p84
      %p183 = pneg %p81
      %p184 = scmp.lt.s32.totalorder %s16, 1
      %s185 = scalar_select %p184, %s16, 1
      %s186 = smul.addr %s185, 32
      %s187 = smul.addr %s186, 4
      %s188 = scalar_lea.vmem %s2, %s187
      %p189 = pneg %p110
      %p190 = pneg %p107
      %p191 = scmp.lt.s32.totalorder %s16, 1
      %s192 = scalar_select %p191, %s16, 1
      %s193 = scalar_lea.vmem %s3, %s192
      %p194 = pneg %p136
      %p195 = pneg %p133
      %p196 = scmp.lt.s32.totalorder %s16, 1
      %s197 = scalar_select %p196, %s16, 1
      %s198 = scalar_lea.vmem %s4, %s197
      %p199 = scmp.lt.s32.totalorder %s16, 1
      %s200 = scalar_select %p199, %s16, 1
      %s201 = smul.addr %s200, 54
      %s202 = smul.addr %s201, 4
      %s203 = scalar_lea.vmem %s0, %s202
      %p204 = scmp.lt.s32.totalorder %s16, 1
      %s205 = scalar_select %p204, %s16, 1
      %s206 = smul.addr %s205, 32
      %s207 = smul.addr %s206, 4
      %s208 = scalar_lea.vmem %s2, %s207
      %p209 = scmp.lt.s32.totalorder %s16, 1
      %s210 = scalar_select %p209, %s16, 1
      %s211 = scalar_lea.vmem %s3, %s210
      %p212 = scmp.lt.s32.totalorder %s16, 1
      %s213 = scalar_select %p212, %s16, 1
      %s214 = scalar_lea.vmem %s4, %s213
      %v216 = vld [vmem:[%s203] sm:$0xf]
      %v217 = vld [vmem:[%s203 + $0x4] sm:$0xf]
      %v218 = vld [vmem:[%s203 + $0x8] sm:$0x1]
      %v219 = vld [vmem:[%s203 + $0xc] sm:$0xf]
      %v220 = vld [vmem:[%s203 + $0x10] sm:$0xf]
      %v221 = vld [vmem:[%s203 + $0x14] sm:$0x1]
      %v222 = vld [vmem:[%s203 + $0x18] sm:$0xf]
      %v223 = vld [vmem:[%s203 + $0x1c] sm:$0xf]
      %v224 = vld [vmem:[%s203 + $0x20] sm:$0x1]
      %v225 = vld [vmem:[%s203 + $0x24] sm:$0xf]
      %v226 = vld [vmem:[%s203 + $0x28] sm:$0xf]
      %v227 = vld [vmem:[%s203 + $0x2c] sm:$0x1]
      %v228 = vld [vmem:[%s203 + $0x30] sm:$0xf]
      %v229 = vld [vmem:[%s203 + $0x34] sm:$0xf]
      %v230 = vld [vmem:[%s203 + $0x38] sm:$0x1]
      %v231 = vld [vmem:[%s203 + $0x3c] sm:$0xf]
      %v232 = vld [vmem:[%s203 + $0x40] sm:$0xf]
      %v233 = vld [vmem:[%s203 + $0x44] sm:$0x1]
      %v234 = vld [vmem:[%s203 + $0x48] sm:$0xf]
      %v235 = vld [vmem:[%s203 + $0x4c] sm:$0xf]
      %v236 = vld [vmem:[%s203 + $0x50] sm:$0x1]
      %v237 = vld [vmem:[%s203 + $0x54] sm:$0xf]
      %v238 = vld [vmem:[%s203 + $0x58] sm:$0xf]
      %v239 = vld [vmem:[%s203 + $0x5c] sm:$0x1]
      %v240 = vld [vmem:[%s203 + $0x60] sm:$0xf]
      %v241 = vld [vmem:[%s203 + $0x64] sm:$0xf]
      %v242 = vld [vmem:[%s203 + $0x68] sm:$0x1]
      %v243 = vld [vmem:[%s203 + $0x6c] sm:$0xf]
      %v244 = vld [vmem:[%s203 + $0x70] sm:$0xf]
      %v245 = vld [vmem:[%s203 + $0x74] sm:$0x1]
      %v246 = vld [vmem:[%s203 + $0x78] sm:$0xf]
      %v247 = vld [vmem:[%s203 + $0x7c] sm:$0xf]
      %v248 = vld [vmem:[%s203 + $0x80] sm:$0x1]
      %v249 = vld [vmem:[%s203 + $0x84] sm:$0xf]
      %v250 = vld [vmem:[%s203 + $0x88] sm:$0xf]
      %v251 = vld [vmem:[%s203 + $0x8c] sm:$0x1]
      %v252 = vld [vmem:[%s203 + $0x90] sm:$0xf]
      %v253 = vld [vmem:[%s203 + $0x94] sm:$0xf]
      %v254 = vld [vmem:[%s203 + $0x98] sm:$0x1]
      %v255 = vld [vmem:[%s203 + $0x9c] sm:$0xf]
      %v256 = vld [vmem:[%s203 + $0xa0] sm:$0xf]
      %v257 = vld [vmem:[%s203 + $0xa4] sm:$0x1]
      %v258 = vld [vmem:[%s203 + $0xa8] sm:$0xf]
      %v259 = vld [vmem:[%s203 + $0xac] sm:$0xf]
      %v260 = vld [vmem:[%s203 + $0xb0] sm:$0x1]
      %v261 = vld [vmem:[%s203 + $0xb4] sm:$0xf]
      %v262 = vld [vmem:[%s203 + $0xb8] sm:$0xf]
      %v263 = vld [vmem:[%s203 + $0xbc] sm:$0x1]
      %v264 = vld [vmem:[%s203 + $0xc0] sm:$0xf]
      %v265 = vld [vmem:[%s203 + $0xc4] sm:$0xf]
      %v266 = vld [vmem:[%s203 + $0xc8] sm:$0x1]
      %v267 = vld [vmem:[%s203 + $0xcc] sm:$0xf]
      %v268 = vld [vmem:[%s203 + $0xd0] sm:$0xf]
      %v269 = vld [vmem:[%s203 + $0xd4] sm:$0x1]
      %v306 = vunpack.c.l.b16 %v216
      %v307 = vunpack.c.l.b16 %v217
      %v308 = vunpack.c.l.b16 %v219
      %v309 = vunpack.c.l.b16 %v220
      %v310 = vunpack.c.l.b16 %v222
      %v311 = vunpack.c.l.b16 %v223
      %v312 = vunpack.c.l.b16 %v225
      %v313 = vunpack.c.l.b16 %v226
      %v314 = vunpack.c.l.b16 %v228
      %v315 = vunpack.c.l.b16 %v229
      %v316 = vunpack.c.l.b16 %v231
      %v317 = vunpack.c.l.b16 %v232
      %v318 = vunpack.c.l.b16 %v234
      %v319 = vunpack.c.l.b16 %v235
      %v320 = vunpack.c.l.b16 %v237
      %v321 = vunpack.c.l.b16 %v238
      %v322 = vunpack.c.l.b16 %v240
      %v323 = vunpack.c.l.b16 %v241
      %v324 = vunpack.c.l.b16 %v243
      %v325 = vunpack.c.l.b16 %v244
      %v326 = vunpack.c.l.b16 %v246
      %v327 = vunpack.c.l.b16 %v247
      %v328 = vunpack.c.l.b16 %v249
      %v329 = vunpack.c.l.b16 %v250
      %v330 = vunpack.c.l.b16 %v252
      %v331 = vunpack.c.l.b16 %v253
      %v332 = vunpack.c.l.b16 %v255
      %v333 = vunpack.c.l.b16 %v256
      %v334 = vunpack.c.l.b16 %v258
      %v335 = vunpack.c.l.b16 %v259
      %v336 = vunpack.c.l.b16 %v261
      %v337 = vunpack.c.l.b16 %v262
      %v338 = vunpack.c.l.b16 %v264
      %v339 = vunpack.c.l.b16 %v265
      %v340 = vunpack.c.l.b16 %v267
      %v341 = vunpack.c.l.b16 %v268
      %v342 = vpack.c.b16 %v307, %v306
      %v343 = vpack.c.b16 %v309, %v308
      %v344 = vpack.c.b16 %v311, %v310
      %v345 = vpack.c.b16 %v313, %v312
      %v346 = vpack.c.b16 %v315, %v314
      %v347 = vpack.c.b16 %v317, %v316
      %v348 = vpack.c.b16 %v319, %v318
      %v349 = vpack.c.b16 %v321, %v320
      %v350 = vpack.c.b16 %v323, %v322
      %v351 = vpack.c.b16 %v325, %v324
      %v352 = vpack.c.b16 %v327, %v326
      %v353 = vpack.c.b16 %v329, %v328
      %v354 = vpack.c.b16 %v331, %v330
      %v355 = vpack.c.b16 %v333, %v332
      %v356 = vpack.c.b16 %v335, %v334
      %v357 = vpack.c.b16 %v337, %v336
      %v358 = vpack.c.b16 %v339, %v338
      %v359 = vpack.c.b16 %v341, %v340
      %v378 = vunpack.c.l.b16 %v218
      %v379 = vunpack.c.l.b16 %v221
      %v380 = vunpack.c.l.b16 %v224
      %v381 = vunpack.c.l.b16 %v227
      %v382 = vunpack.c.l.b16 %v230
      %v383 = vunpack.c.l.b16 %v233
      %v384 = vunpack.c.l.b16 %v236
      %v385 = vunpack.c.l.b16 %v239
      %v386 = vunpack.c.l.b16 %v242
      %v387 = vunpack.c.l.b16 %v245
      %v388 = vunpack.c.l.b16 %v248
      %v389 = vunpack.c.l.b16 %v251
      %v390 = vunpack.c.l.b16 %v254
      %v391 = vunpack.c.l.b16 %v257
      %v392 = vunpack.c.l.b16 %v260
      %v393 = vunpack.c.l.b16 %v263
      %v394 = vunpack.c.l.b16 %v266
      %v395 = vunpack.c.l.b16 %v269
      %v396 = vpack.c.b16 %v378, %v378
      %v397 = vpack.c.b16 %v379, %v379
      %v398 = vpack.c.b16 %v380, %v380
      %v399 = vpack.c.b16 %v381, %v381
      %v400 = vpack.c.b16 %v382, %v382
      %v401 = vpack.c.b16 %v383, %v383
      %v402 = vpack.c.b16 %v384, %v384
      %v403 = vpack.c.b16 %v385, %v385
      %v404 = vpack.c.b16 %v386, %v386
      %v405 = vpack.c.b16 %v387, %v387
      %v406 = vpack.c.b16 %v388, %v388
      %v407 = vpack.c.b16 %v389, %v389
      %v408 = vpack.c.b16 %v390, %v390
      %v409 = vpack.c.b16 %v391, %v391
      %v410 = vpack.c.b16 %v392, %v392
      %v411 = vpack.c.b16 %v393, %v393
      %v412 = vpack.c.b16 %v394, %v394
      %v413 = vpack.c.b16 %v395, %v395
      %vm414 = vsmask.f32 7424
      %v416 = vshrl.u32 %v342, 16
      %v418 = vshll.u32 %v342, 16
      %v420 = vrot.slane %v418, 1
      %v421 = vor.u32 %v416, %v420
      %v423 = vshll.u32 %v396, 16
      %v425 = vrot.slane %v423, 1
      %v426 = vsel %vm414, %v421, %v425
      %v428 = vshrl.u32 %v343, 16
      %v430 = vshll.u32 %v343, 16
      %v432 = vrot.slane %v430, 1
      %v433 = vor.u32 %v428, %v432
      %v435 = vshll.u32 %v397, 16
      %v437 = vrot.slane %v435, 1
      %v438 = vsel %vm414, %v433, %v437
      %v440 = vshrl.u32 %v344, 16
      %v442 = vshll.u32 %v344, 16
      %v444 = vrot.slane %v442, 1
      %v445 = vor.u32 %v440, %v444
      %v447 = vshll.u32 %v398, 16
      %v449 = vrot.slane %v447, 1
      %v450 = vsel %vm414, %v445, %v449
      %v452 = vshrl.u32 %v345, 16
      %v454 = vshll.u32 %v345, 16
      %v456 = vrot.slane %v454, 1
      %v457 = vor.u32 %v452, %v456
      %v459 = vshll.u32 %v399, 16
      %v461 = vrot.slane %v459, 1
      %v462 = vsel %vm414, %v457, %v461
      %v464 = vshrl.u32 %v346, 16
      %v466 = vshll.u32 %v346, 16
      %v468 = vrot.slane %v466, 1
      %v469 = vor.u32 %v464, %v468
      %v471 = vshll.u32 %v400, 16
      %v473 = vrot.slane %v471, 1
      %v474 = vsel %vm414, %v469, %v473
      %v476 = vshrl.u32 %v347, 16
      %v478 = vshll.u32 %v347, 16
      %v480 = vrot.slane %v478, 1
      %v481 = vor.u32 %v476, %v480
      %v483 = vshll.u32 %v401, 16
      %v485 = vrot.slane %v483, 1
      %v486 = vsel %vm414, %v481, %v485
      %v488 = vshrl.u32 %v348, 16
      %v490 = vshll.u32 %v348, 16
      %v492 = vrot.slane %v490, 1
      %v493 = vor.u32 %v488, %v492
      %v495 = vshll.u32 %v402, 16
      %v497 = vrot.slane %v495, 1
      %v498 = vsel %vm414, %v493, %v497
      %v500 = vshrl.u32 %v349, 16
      %v502 = vshll.u32 %v349, 16
      %v504 = vrot.slane %v502, 1
      %v505 = vor.u32 %v500, %v504
      %v507 = vshll.u32 %v403, 16
      %v509 = vrot.slane %v507, 1
      %v510 = vsel %vm414, %v505, %v509
      %v512 = vshrl.u32 %v350, 16
      %v514 = vshll.u32 %v350, 16
      %v516 = vrot.slane %v514, 1
      %v517 = vor.u32 %v512, %v516
      %v519 = vshll.u32 %v404, 16
      %v521 = vrot.slane %v519, 1
      %v522 = vsel %vm414, %v517, %v521
      %v524 = vshrl.u32 %v351, 16
      %v526 = vshll.u32 %v351, 16
      %v528 = vrot.slane %v526, 1
      %v529 = vor.u32 %v524, %v528
      %v531 = vshll.u32 %v405, 16
      %v533 = vrot.slane %v531, 1
      %v534 = vsel %vm414, %v529, %v533
      %v536 = vshrl.u32 %v352, 16
      %v538 = vshll.u32 %v352, 16
      %v540 = vrot.slane %v538, 1
      %v541 = vor.u32 %v536, %v540
      %v543 = vshll.u32 %v406, 16
      %v545 = vrot.slane %v543, 1
      %v546 = vsel %vm414, %v541, %v545
      %v548 = vshrl.u32 %v353, 16
      %v550 = vshll.u32 %v353, 16
      %v552 = vrot.slane %v550, 1
      %v553 = vor.u32 %v548, %v552
      %v555 = vshll.u32 %v407, 16
      %v557 = vrot.slane %v555, 1
      %v558 = vsel %vm414, %v553, %v557
      %v560 = vshrl.u32 %v354, 16
      %v562 = vshll.u32 %v354, 16
      %v564 = vrot.slane %v562, 1
      %v565 = vor.u32 %v560, %v564
      %v567 = vshll.u32 %v408, 16
      %v569 = vrot.slane %v567, 1
      %v570 = vsel %vm414, %v565, %v569
      %v572 = vshrl.u32 %v355, 16
      %v574 = vshll.u32 %v355, 16
      %v576 = vrot.slane %v574, 1
      %v577 = vor.u32 %v572, %v576
      %v579 = vshll.u32 %v409, 16
      %v581 = vrot.slane %v579, 1
      %v582 = vsel %vm414, %v577, %v581
      %v584 = vshrl.u32 %v356, 16
      %v586 = vshll.u32 %v356, 16
      %v588 = vrot.slane %v586, 1
      %v589 = vor.u32 %v584, %v588
      %v591 = vshll.u32 %v410, 16
      %v593 = vrot.slane %v591, 1
      %v594 = vsel %vm414, %v589, %v593
      %v596 = vshrl.u32 %v357, 16
      %v598 = vshll.u32 %v357, 16
      %v600 = vrot.slane %v598, 1
      %v601 = vor.u32 %v596, %v600
      %v603 = vshll.u32 %v411, 16
      %v605 = vrot.slane %v603, 1
      %v606 = vsel %vm414, %v601, %v605
      %v608 = vshrl.u32 %v358, 16
      %v610 = vshll.u32 %v358, 16
      %v612 = vrot.slane %v610, 1
      %v613 = vor.u32 %v608, %v612
      %v615 = vshll.u32 %v412, 16
      %v617 = vrot.slane %v615, 1
      %v618 = vsel %vm414, %v613, %v617
      %v620 = vshrl.u32 %v359, 16
      %v622 = vshll.u32 %v359, 16
      %v624 = vrot.slane %v622, 1
      %v625 = vor.u32 %v620, %v624
      %v627 = vshll.u32 %v413, 16
      %v629 = vrot.slane %v627, 1
      %v630 = vsel %vm414, %v625, %v629
      %631 = vrot.lane.b32.xlu0 %v426, 32
      %v632 = vpop.permute.xlu0 %631
      %633 = vrot.lane.b32.xlu0 %v438, 32
      %v634 = vpop.permute.xlu0 %633
      %635 = vrot.lane.b32.xlu0 %v450, 32
      %v636 = vpop.permute.xlu0 %635
      %637 = vrot.lane.b32.xlu0 %v462, 32
      %v638 = vpop.permute.xlu0 %637
      %639 = vrot.lane.b32.xlu0 %v474, 32
      %v640 = vpop.permute.xlu0 %639
      %641 = vrot.lane.b32.xlu0 %v486, 32
      %v642 = vpop.permute.xlu0 %641
      %643 = vrot.lane.b32.xlu0 %v498, 32
      %v644 = vpop.permute.xlu0 %643
      %645 = vrot.lane.b32.xlu0 %v510, 32
      %v646 = vpop.permute.xlu0 %645
      %647 = vrot.lane.b32.xlu0 %v522, 32
      %v648 = vpop.permute.xlu0 %647
      %649 = vrot.lane.b32.xlu0 %v534, 32
      %v650 = vpop.permute.xlu0 %649
      %651 = vrot.lane.b32.xlu0 %v546, 32
      %v652 = vpop.permute.xlu0 %651
      %653 = vrot.lane.b32.xlu0 %v558, 32
      %v654 = vpop.permute.xlu0 %653
      %655 = vrot.lane.b32.xlu0 %v570, 32
      %v656 = vpop.permute.xlu0 %655
      %657 = vrot.lane.b32.xlu0 %v582, 32
      %v658 = vpop.permute.xlu0 %657
      %659 = vrot.lane.b32.xlu0 %v594, 32
      %v660 = vpop.permute.xlu0 %659
      %661 = vrot.lane.b32.xlu0 %v606, 32
      %v662 = vpop.permute.xlu0 %661
      %663 = vrot.lane.b32.xlu0 %v618, 32
      %v664 = vpop.permute.xlu0 %663
      %665 = vrot.lane.b32.xlu0 %v630, 32
      %v666 = vpop.permute.xlu0 %665
      %vm667 = vcmask 1046528
      %v668 = vrot.slane %v342, 1
      %v669 = vrot.slane %v396, 1
      %v670 = vsel %vm667, %v668, %v669
      %v671 = vrot.slane %v343, 1
      %v672 = vrot.slane %v397, 1
      %v673 = vsel %vm667, %v671, %v672
      %v674 = vrot.slane %v344, 1
      %v675 = vrot.slane %v398, 1
      %v676 = vsel %vm667, %v674, %v675
      %v677 = vrot.slane %v345, 1
      %v678 = vrot.slane %v399, 1
      %v679 = vsel %vm667, %v677, %v678
      %v680 = vrot.slane %v346, 1
      %v681 = vrot.slane %v400, 1
      %v682 = vsel %vm667, %v680, %v681
      %v683 = vrot.slane %v347, 1
      %v684 = vrot.slane %v401, 1
      %v685 = vsel %vm667, %v683, %v684
      %v686 = vrot.slane %v348, 1
      %v687 = vrot.slane %v402, 1
      %v688 = vsel %vm667, %v686, %v687
      %v689 = vrot.slane %v349, 1
      %v690 = vrot.slane %v403, 1
      %v691 = vsel %vm667, %v689, %v690
      %v692 = vrot.slane %v350, 1
      %v693 = vrot.slane %v404, 1
      %v694 = vsel %vm667, %v692, %v693
      %v695 = vrot.slane %v351, 1
      %v696 = vrot.slane %v405, 1
      %v697 = vsel %vm667, %v695, %v696
      %v698 = vrot.slane %v352, 1
      %v699 = vrot.slane %v406, 1
      %v700 = vsel %vm667, %v698, %v699
      %v701 = vrot.slane %v353, 1
      %v702 = vrot.slane %v407, 1
      %v703 = vsel %vm667, %v701, %v702
      %v704 = vrot.slane %v354, 1
      %v705 = vrot.slane %v408, 1
      %v706 = vsel %vm667, %v704, %v705
      %v707 = vrot.slane %v355, 1
      %v708 = vrot.slane %v409, 1
      %v709 = vsel %vm667, %v707, %v708
      %v710 = vrot.slane %v356, 1
      %v711 = vrot.slane %v410, 1
      %v712 = vsel %vm667, %v710, %v711
      %v713 = vrot.slane %v357, 1
      %v714 = vrot.slane %v411, 1
      %v715 = vsel %vm667, %v713, %v714
      %v716 = vrot.slane %v358, 1
      %v717 = vrot.slane %v412, 1
      %v718 = vsel %vm667, %v716, %v717
      %v719 = vrot.slane %v359, 1
      %v720 = vrot.slane %v413, 1
      %v721 = vsel %vm667, %v719, %v720
      %722 = vrot.lane.b32.xlu0 %v670, 64
      %v723 = vpop.permute.xlu0 %722
      %724 = vrot.lane.b32.xlu0 %v673, 64
      %v725 = vpop.permute.xlu0 %724
      %726 = vrot.lane.b32.xlu0 %v676, 64
      %v727 = vpop.permute.xlu0 %726
      %728 = vrot.lane.b32.xlu0 %v679, 64
      %v729 = vpop.permute.xlu0 %728
      %730 = vrot.lane.b32.xlu0 %v682, 64
      %v731 = vpop.permute.xlu0 %730
      %732 = vrot.lane.b32.xlu0 %v685, 64
      %v733 = vpop.permute.xlu0 %732
      %734 = vrot.lane.b32.xlu0 %v688, 64
      %v735 = vpop.permute.xlu0 %734
      %736 = vrot.lane.b32.xlu0 %v691, 64
      %v737 = vpop.permute.xlu0 %736
      %738 = vrot.lane.b32.xlu0 %v694, 64
      %v739 = vpop.permute.xlu0 %738
      %740 = vrot.lane.b32.xlu0 %v697, 64
      %v741 = vpop.permute.xlu0 %740
      %742 = vrot.lane.b32.xlu0 %v700, 64
      %v743 = vpop.permute.xlu0 %742
      %744 = vrot.lane.b32.xlu0 %v703, 64
      %v745 = vpop.permute.xlu0 %744
      %746 = vrot.lane.b32.xlu0 %v706, 64
      %v747 = vpop.permute.xlu0 %746
      %748 = vrot.lane.b32.xlu0 %v709, 64
      %v749 = vpop.permute.xlu0 %748
      %750 = vrot.lane.b32.xlu0 %v712, 64
      %v751 = vpop.permute.xlu0 %750
      %752 = vrot.lane.b32.xlu0 %v715, 64
      %v753 = vpop.permute.xlu0 %752
      %754 = vrot.lane.b32.xlu0 %v718, 64
      %v755 = vpop.permute.xlu0 %754
      %756 = vrot.lane.b32.xlu0 %v721, 64
      %v757 = vpop.permute.xlu0 %756
      %vm758 = vcmask 261120
      %v760 = vsel %vm758, %v342, %v632
      %v762 = vsel %vm758, %v343, %v634
      %v764 = vsel %vm758, %v344, %v636
      %v766 = vsel %vm758, %v345, %v638
      %v768 = vsel %vm758, %v346, %v640
      %v770 = vsel %vm758, %v347, %v642
      %v772 = vsel %vm758, %v348, %v644
      %v774 = vsel %vm758, %v349, %v646
      %v776 = vsel %vm758, %v350, %v648
      %v778 = vsel %vm758, %v351, %v650
      %v780 = vsel %vm758, %v352, %v652
      %v782 = vsel %vm758, %v353, %v654
      %v784 = vsel %vm758, %v354, %v656
      %v786 = vsel %vm758, %v355, %v658
      %v788 = vsel %vm758, %v356, %v660
      %v790 = vsel %vm758, %v357, %v662
      %v792 = vsel %vm758, %v358, %v664
      %v794 = vsel %vm758, %v359, %v666
      %vm795 = vcmask 523264
      %v797 = vsel %vm795, %v760, %v723
      %v799 = vsel %vm795, %v762, %v725
      %v801 = vsel %vm795, %v764, %v727
      %v803 = vsel %vm795, %v766, %v729
      %v805 = vsel %vm795, %v768, %v731
      %v807 = vsel %vm795, %v770, %v733
      %v809 = vsel %vm795, %v772, %v735
      %v811 = vsel %vm795, %v774, %v737
      %v813 = vsel %vm795, %v776, %v739
      %v815 = vsel %vm795, %v778, %v741
      %v817 = vsel %vm795, %v780, %v743
      %v819 = vsel %vm795, %v782, %v745
      %v821 = vsel %vm795, %v784, %v747
      %v823 = vsel %vm795, %v786, %v749
      %v825 = vsel %vm795, %v788, %v751
      %v827 = vsel %vm795, %v790, %v753
      %v829 = vsel %vm795, %v792, %v755
      %v831 = vsel %vm795, %v794, %v757
      %v832 = vld [vmem:[%s1] sm:$0xf]
      %v833 = vld [vmem:[%s1 + $0x4] sm:$0xf]
      %v834 = vld [vmem:[%s1 + $0x8] sm:$0xf]
      %v835 = vld [vmem:[%s1 + $0xc] sm:$0xf]
      %v836 = vld [vmem:[%s1 + $0x10] sm:$0xf]
      %v837 = vld [vmem:[%s1 + $0x14] sm:$0xf]
      %v838 = vld [vmem:[%s1 + $0x18] sm:$0xf]
      %v839 = vld [vmem:[%s1 + $0x1c] sm:$0xf]
      %v840 = vld [vmem:[%s1 + $0x20] sm:$0xf]
      %v841 = vld [vmem:[%s1 + $0x24] sm:$0xf]
      %v842 = vld [vmem:[%s1 + $0x28] sm:$0xf]
      %v843 = vld [vmem:[%s1 + $0x2c] sm:$0xf]
      %s844 = scalar_lea.vmem %s1, 48
      %v845 = vld [vmem:[%s844] sm:$0xf]
      %v846 = vld [vmem:[%s844 + $0x4] sm:$0xf]
      %v847 = vld [vmem:[%s844 + $0x8] sm:$0xf]
      %v848 = vld [vmem:[%s844 + $0xc] sm:$0xf]
      %v849 = vld [vmem:[%s844 + $0x10] sm:$0xf]
      %v850 = vld [vmem:[%s844 + $0x14] sm:$0xf]
      %v851 = vld [vmem:[%s844 + $0x18] sm:$0xf]
      %v852 = vld [vmem:[%s844 + $0x1c] sm:$0xf]
      %v853 = vld [vmem:[%s844 + $0x20] sm:$0xf]
      %v854 = vld [vmem:[%s844 + $0x24] sm:$0xf]
      %v855 = vld [vmem:[%s844 + $0x28] sm:$0xf]
      %v856 = vld [vmem:[%s844 + $0x2c] sm:$0xf]
      %v869 = vunpack.c.l.b16 %v845
      %v870 = vunpack.c.l.b16 %v846
      %v871 = vunpack.c.l.b16 %v847
      %v872 = vunpack.c.l.b16 %v848
      %v873 = vunpack.c.l.b16 %v849
      %v874 = vunpack.c.l.b16 %v850
      %v875 = vunpack.c.l.b16 %v851
      %v876 = vunpack.c.l.b16 %v852
      %v877 = vunpack.c.l.b16 %v853
      %v878 = vunpack.c.l.b16 %v854
      %v879 = vunpack.c.l.b16 %v855
      %v880 = vunpack.c.l.b16 %v856
      %v881 = vpack.c.b16 %v870, %v869
      %v882 = vpack.c.b16 %v872, %v871
      %v883 = vpack.c.b16 %v874, %v873
      %v884 = vpack.c.b16 %v876, %v875
      %v885 = vpack.c.b16 %v878, %v877
      %v886 = vpack.c.b16 %v880, %v879
      %vm893 = vcmask 785408
      %v894 = vsel %vm893, %v799, 0
      %v896 = vsel %vm893, %v801, 0
      %v898 = vsel %vm893, %v803, 0
      %v900 = vsel %vm893, %v805, 0
      %v902 = vsel %vm893, %v807, 0
      %v904 = vsel %vm893, %v809, 0
      %v906 = vsel %vm893, %v811, 0
      %v908 = vsel %vm893, %v813, 0
      %v910 = vsel %vm893, %v815, 0
      %v912 = vsel %vm893, %v817, 0
      %v914 = vsel %vm893, %v819, 0
      %v916 = vsel %vm893, %v821, 0
      %v918 = vsel %vm893, %v823, 0
      %v920 = vsel %vm893, %v825, 0
      %v922 = vsel %vm893, %v827, 0
      %v924 = vsel %vm893, %v829, 0
      %926 = vmatprep.subr.bf16.mxu0 0
      %927 = vmatpush1.bf16.msra.mxu0 %v881
      %928 = vmatprep.subr.bf16.mxu0 0
      %929 = vmatpush1.bf16.msra.mxu0 %v882
      %930 = vmatprep.subr.bf16.mxu0 0
      %931 = vmatpush1.bf16.msra.mxu0 %v883
      %932 = vmatprep.subr.bf16.mxu0 0
      %933 = vmatpush1.bf16.msra.mxu0 %v884
      %934 = vmatprep.subr.bf16.mxu0 0
      %935 = vmatpush1.bf16.msra.mxu0 %v885
      %936 = vmatprep.subr.bf16.mxu0 0
      %937 = vmatpush1.bf16.msra.mxu0 %v886
      %938 = vmatprep.subr.bf16.mxu0 0
      %939 = vmatpush1.bf16.msra.mxu0 0
      %940 = vmatprep.subr.bf16.mxu0 0
      %941 = vmatpush1.bf16.msra.mxu0 0
      %942 = vmatprep.subr.bf16.mxu0 0
      %943 = vmatpush1.bf16.msra.mxu0 0
      %944 = vmatprep.subr.bf16.mxu0 0
      %945 = vmatpush1.bf16.msra.mxu0 0
      %946 = vmatprep.subr.bf16.mxu0 0
      %947 = vmatpush1.bf16.msra.mxu0 0
      %948 = vmatprep.subr.bf16.mxu0 0
      %949 = vmatpush1.bf16.msra.mxu0 0
      %950 = vmatprep.subr.bf16.mxu0 0
      %951 = vmatpush1.bf16.msra.mxu0 0
      %952 = vmatprep.subr.bf16.mxu0 0
      %953 = vmatpush1.bf16.msra.mxu0 0
      %954 = vmatprep.subr.bf16.mxu0 0
      %955 = vmatpush1.bf16.msra.mxu0 0
      %956 = vmatprep.subr.bf16.mxu0 0
      %957 = vmatpush1.bf16.msra.mxu0 0
      %958 = vmatprep.mubr.bf16.mxu0 0
      %959 = vmatmul.mubr.bf16.gmra.mrb[0].mxu0 %v894
      %v960 = vpop.f32.mrb[0].mxu0
      %v961 = vadd.f32 0.0, %v960
      %v962 = vpop.f32.mrb[0].mxu0
      %v963 = vpop.f32.mrb[0].mxu0
      %v964 = vadd.f32 0.0, %v963
      %v965 = vpop.f32.mrb[0].mxu0
      %966 = vmatprep.mubr.bf16.mxu0 0
      %967 = vmatmul.mubr.bf16.gmra.mrb[0].mxu0 %v896
      %v968 = vpop.f32.mrb[0].mxu0
      %v969 = vadd.f32 0.0, %v968
      %v970 = vpop.f32.mrb[0].mxu0
      %v971 = vpop.f32.mrb[0].mxu0
      %v972 = vadd.f32 0.0, %v971
      %v973 = vpop.f32.mrb[0].mxu0
      %974 = vmatprep.mubr.bf16.mxu0 0
      %975 = vmatmul.mubr.bf16.gmra.mrb[0].mxu0 %v898
      %v976 = vpop.f32.mrb[0].mxu0
      %v977 = vadd.f32 0.0, %v976
      %v978 = vpop.f32.mrb[0].mxu0
      %v979 = vpop.f32.mrb[0].mxu0
      %v980 = vadd.f32 0.0, %v979
      %v981 = vpop.f32.mrb[0].mxu0
      %982 = vmatprep.mubr.bf16.mxu0 0
      %983 = vmatmul.mubr.bf16.gmra.mrb[0].mxu0 %v900
      %v984 = vpop.f32.mrb[0].mxu0
      %v985 = vadd.f32 0.0, %v984
      %v986 = vpop.f32.mrb[0].mxu0
      %v987 = vpop.f32.mrb[0].mxu0
      %v988 = vadd.f32 0.0, %v987
      %v989 = vpop.f32.mrb[0].mxu0
      %990 = vmatprep.mubr.bf16.mxu0 0
      %991 = vmatmul.mubr.bf16.gmra.mrb[0].mxu0 %v902
      %v992 = vpop.f32.mrb[0].mxu0
      %v993 = vadd.f32 0.0, %v992
      %v994 = vpop.f32.mrb[0].mxu0
      %v995 = vpop.f32.mrb[0].mxu0
      %v996 = vadd.f32 0.0, %v995
      %v997 = vpop.f32.mrb[0].mxu0
      %998 = vmatprep.mubr.bf16.mxu0 0
      %999 = vmatmul.mubr.bf16.gmra.mrb[0].mxu0 %v904
      %v1000 = vpop.f32.mrb[0].mxu0
      %v1001 = vadd.f32 0.0, %v1000
      %v1002 = vpop.f32.mrb[0].mxu0
      %v1003 = vpop.f32.mrb[0].mxu0
      %v1004 = vadd.f32 0.0, %v1003
      %v1005 = vpop.f32.mrb[0].mxu0
      %1006 = vmatprep.mubr.bf16.mxu0 0
      %1007 = vmatmul.mubr.bf16.gmra.mrb[0].mxu0 %v906
      %v1008 = vpop.f32.mrb[0].mxu0
      %v1009 = vadd.f32 0.0, %v1008
      %v1010 = vpop.f32.mrb[0].mxu0
      %v1011 = vpop.f32.mrb[0].mxu0
      %v1012 = vadd.f32 0.0, %v1011
      %v1013 = vpop.f32.mrb[0].mxu0
      %1014 = vmatprep.mubr.bf16.mxu0 0
      %1015 = vmatmul.mubr.bf16.gmra.mrb[0].mxu0 %v908
      %v1016 = vpop.f32.mrb[0].mxu0
      %v1017 = vadd.f32 0.0, %v1016
      %v1018 = vpop.f32.mrb[0].mxu0
      %v1019 = vpop.f32.mrb[0].mxu0
      %v1020 = vadd.f32 0.0, %v1019
      %v1021 = vpop.f32.mrb[0].mxu0
      %1022 = vmatprep.mubr.bf16.mxu0 0
      %1023 = vmatmul.mubr.bf16.gmra.mrb[0].mxu0 %v910
      %v1024 = vpop.f32.mrb[0].mxu0
      %v1025 = vadd.f32 0.0, %v1024
      %v1026 = vpop.f32.mrb[0].mxu0
      %v1027 = vpop.f32.mrb[0].mxu0
      %v1028 = vadd.f32 0.0, %v1027
      %v1029 = vpop.f32.mrb[0].mxu0
      %1030 = vmatprep.mubr.bf16.mxu0 0
      %1031 = vmatmul.mubr.bf16.gmra.mrb[0].mxu0 %v912
      %v1032 = vpop.f32.mrb[0].mxu0
      %v1033 = vadd.f32 0.0, %v1032
      %v1034 = vpop.f32.mrb[0].mxu0
      %v1035 = vpop.f32.mrb[0].mxu0
      %v1036 = vadd.f32 0.0, %v1035
      %v1037 = vpop.f32.mrb[0].mxu0
      %1038 = vmatprep.mubr.bf16.mxu0 0
      %1039 = vmatmul.mubr.bf16.gmra.mrb[0].mxu0 %v914
      %v1040 = vpop.f32.mrb[0].mxu0
      %v1041 = vadd.f32 0.0, %v1040
      %v1042 = vpop.f32.mrb[0].mxu0
      %v1043 = vpop.f32.mrb[0].mxu0
      %v1044 = vadd.f32 0.0, %v1043
      %v1045 = vpop.f32.mrb[0].mxu0
      %1046 = vmatprep.mubr.bf16.mxu0 0
      %1047 = vmatmul.mubr.bf16.gmra.mrb[0].mxu0 %v916
      %v1048 = vpop.f32.mrb[0].mxu0
      %v1049 = vadd.f32 0.0, %v1048
      %v1050 = vpop.f32.mrb[0].mxu0
      %v1051 = vpop.f32.mrb[0].mxu0
      %v1052 = vadd.f32 0.0, %v1051
      %v1053 = vpop.f32.mrb[0].mxu0
      %1054 = vmatprep.mubr.bf16.mxu0 0
      %1055 = vmatmul.mubr.bf16.gmra.mrb[0].mxu0 %v918
      %v1056 = vpop.f32.mrb[0].mxu0
      %v1057 = vadd.f32 0.0, %v1056
      %v1058 = vpop.f32.mrb[0].mxu0
      %v1059 = vpop.f32.mrb[0].mxu0
      %v1060 = vadd.f32 0.0, %v1059
      %v1061 = vpop.f32.mrb[0].mxu0
      %1062 = vmatprep.mubr.bf16.mxu0 0
      %1063 = vmatmul.mubr.bf16.gmra.mrb[0].mxu0 %v920
      %v1064 = vpop.f32.mrb[0].mxu0
      %v1065 = vadd.f32 0.0, %v1064
      %v1066 = vpop.f32.mrb[0].mxu0
      %v1067 = vpop.f32.mrb[0].mxu0
      %v1068 = vadd.f32 0.0, %v1067
      %v1069 = vpop.f32.mrb[0].mxu0
      %1070 = vmatprep.mubr.bf16.mxu0 0
      %1071 = vmatmul.mubr.bf16.gmra.mrb[0].mxu0 %v922
      %v1072 = vpop.f32.mrb[0].mxu0
      %v1073 = vadd.f32 0.0, %v1072
      %v1074 = vpop.f32.mrb[0].mxu0
      %v1075 = vpop.f32.mrb[0].mxu0
      %v1076 = vadd.f32 0.0, %v1075
      %v1077 = vpop.f32.mrb[0].mxu0
      %1078 = vmatprep.mubr.bf16.mxu0 0
      %1079 = vmatmul.mubr.bf16.gmra.mrb[0].mxu0 %v924
      %v1080 = vpop.f32.mrb[0].mxu0
      %v1081 = vadd.f32 0.0, %v1080
      %v1082 = vpop.f32.mrb[0].mxu0
      %v1083 = vpop.f32.mrb[0].mxu0
      %v1084 = vadd.f32 0.0, %v1083
      %v1085 = vpop.f32.mrb[0].mxu0
      %1086 = vdwg.mxu0
      %v1099 = vunpack.c.l.b16 %v832
      %v1100 = vunpack.c.l.b16 %v833
      %v1101 = vunpack.c.l.b16 %v834
      %v1102 = vunpack.c.l.b16 %v835
      %v1103 = vunpack.c.l.b16 %v836
      %v1104 = vunpack.c.l.b16 %v837
      %v1105 = vunpack.c.l.b16 %v838
      %v1106 = vunpack.c.l.b16 %v839
      %v1107 = vunpack.c.l.b16 %v840
      %v1108 = vunpack.c.l.b16 %v841
      %v1109 = vunpack.c.l.b16 %v842
      %v1110 = vunpack.c.l.b16 %v843
      %v1111 = vpack.c.b16 %v1100, %v1099
      %v1112 = vpack.c.b16 %v1102, %v1101
      %v1113 = vpack.c.b16 %v1104, %v1103
      %v1114 = vpack.c.b16 %v1106, %v1105
      %v1115 = vpack.c.b16 %v1108, %v1107
      %v1116 = vpack.c.b16 %v1110, %v1109
      %v1123 = vsel %vm893, %v797, 0
      %1125 = vmatprep.subr.bf16.mxu0 0
      %1126 = vmatpush1.bf16.msra.mxu0 %v1111
      %1127 = vmatprep.subr.bf16.mxu0 0
      %1128 = vmatpush1.bf16.msra.mxu0 %v1112
      %1129 = vmatprep.subr.bf16.mxu0 0
      %1130 = vmatpush1.bf16.msra.mxu0 %v1113
      %1131 = vmatprep.subr.bf16.mxu0 0
      %1132 = vmatpush1.bf16.msra.mxu0 %v1114
      %1133 = vmatprep.subr.bf16.mxu0 0
      %1134 = vmatpush1.bf16.msra.mxu0 %v1115
      %1135 = vmatprep.subr.bf16.mxu0 0
      %1136 = vmatpush1.bf16.msra.mxu0 %v1116
      %1137 = vmatprep.subr.bf16.mxu0 0
      %1138 = vmatpush1.bf16.msra.mxu0 0
      %1139 = vmatprep.subr.bf16.mxu0 0
      %1140 = vmatpush1.bf16.msra.mxu0 0
      %1141 = vmatprep.subr.bf16.mxu0 0
      %1142 = vmatpush1.bf16.msra.mxu0 0
      %1143 = vmatprep.subr.bf16.mxu0 0
      %1144 = vmatpush1.bf16.msra.mxu0 0
      %1145 = vmatprep.subr.bf16.mxu0 0
      %1146 = vmatpush1.bf16.msra.mxu0 0
      %1147 = vmatprep.subr.bf16.mxu0 0
      %1148 = vmatpush1.bf16.msra.mxu0 0
      %1149 = vmatprep.subr.bf16.mxu0 0
      %1150 = vmatpush1.bf16.msra.mxu0 0
      %1151 = vmatprep.subr.bf16.mxu0 0
      %1152 = vmatpush1.bf16.msra.mxu0 0
      %1153 = vmatprep.subr.bf16.mxu0 0
      %1154 = vmatpush1.bf16.msra.mxu0 0
      %1155 = vmatprep.subr.bf16.mxu0 0
      %1156 = vmatpush1.bf16.msra.mxu0 0
      %1157 = vmatprep.mubr.bf16.mxu0 0
      %1158 = vmatmul.mubr.bf16.gmra.mrb[0].mxu0 %v1123
      %v1159 = vpop.f32.mrb[0].mxu0
      %v1160 = vadd.f32 %v961, %v1159
      %v1161 = vpop.f32.mrb[0].mxu0
      %v1162 = vpop.f32.mrb[0].mxu0
      %v1163 = vadd.f32 %v964, %v1162
      %v1164 = vpop.f32.mrb[0].mxu0
      %1165 = vmatprep.mubr.bf16.mxu0 0
      %1166 = vmatmul.mubr.bf16.gmra.mrb[0].mxu0 %v894
      %v1167 = vpop.f32.mrb[0].mxu0
      %v1168 = vadd.f32 %v969, %v1167
      %v1169 = vpop.f32.mrb[0].mxu0
      %v1170 = vpop.f32.mrb[0].mxu0
      %v1171 = vadd.f32 %v972, %v1170
      %v1172 = vpop.f32.mrb[0].mxu0
      %1173 = vmatprep.mubr.bf16.mxu0 0
      %1174 = vmatmul.mubr.bf16.gmra.mrb[0].mxu0 %v896
      %v1175 = vpop.f32.mrb[0].mxu0
      %v1176 = vadd.f32 %v977, %v1175
      %v1177 = vpop.f32.mrb[0].mxu0
      %v1178 = vpop.f32.mrb[0].mxu0
      %v1179 = vadd.f32 %v980, %v1178
      %v1180 = vpop.f32.mrb[0].mxu0
      %1181 = vmatprep.mubr.bf16.mxu0 0
      %1182 = vmatmul.mubr.bf16.gmra.mrb[0].mxu0 %v898
      %v1183 = vpop.f32.mrb[0].mxu0
      %v1184 = vadd.f32 %v985, %v1183
      %v1185 = vpop.f32.mrb[0].mxu0
      %v1186 = vpop.f32.mrb[0].mxu0
      %v1187 = vadd.f32 %v988, %v1186
      %v1188 = vpop.f32.mrb[0].mxu0
      %1189 = vmatprep.mubr.bf16.mxu0 0
      %1190 = vmatmul.mubr.bf16.gmra.mrb[0].mxu0 %v900
      %v1191 = vpop.f32.mrb[0].mxu0
      %v1192 = vadd.f32 %v993, %v1191
      %v1193 = vpop.f32.mrb[0].mxu0
      %v1194 = vpop.f32.mrb[0].mxu0
      %v1195 = vadd.f32 %v996, %v1194
      %v1196 = vpop.f32.mrb[0].mxu0
      %1197 = vmatprep.mubr.bf16.mxu0 0
      %1198 = vmatmul.mubr.bf16.gmra.mrb[0].mxu0 %v902
      %v1199 = vpop.f32.mrb[0].mxu0
      %v1200 = vadd.f32 %v1001, %v1199
      %v1201 = vpop.f32.mrb[0].mxu0
      %v1202 = vpop.f32.mrb[0].mxu0
      %v1203 = vadd.f32 %v1004, %v1202
      %v1204 = vpop.f32.mrb[0].mxu0
      %1205 = vmatprep.mubr.bf16.mxu0 0
      %1206 = vmatmul.mubr.bf16.gmra.mrb[0].mxu0 %v904
      %v1207 = vpop.f32.mrb[0].mxu0
      %v1208 = vadd.f32 %v1009, %v1207
      %v1209 = vpop.f32.mrb[0].mxu0
      %v1210 = vpop.f32.mrb[0].mxu0
      %v1211 = vadd.f32 %v1012, %v1210
      %v1212 = vpop.f32.mrb[0].mxu0
      %1213 = vmatprep.mubr.bf16.mxu0 0
      %1214 = vmatmul.mubr.bf16.gmra.mrb[0].mxu0 %v906
      %v1215 = vpop.f32.mrb[0].mxu0
      %v1216 = vadd.f32 %v1017, %v1215
      %v1217 = vpop.f32.mrb[0].mxu0
      %v1218 = vpop.f32.mrb[0].mxu0
      %v1219 = vadd.f32 %v1020, %v1218
      %v1220 = vpop.f32.mrb[0].mxu0
      %1221 = vmatprep.mubr.bf16.mxu0 0
      %1222 = vmatmul.mubr.bf16.gmra.mrb[0].mxu0 %v908
      %v1223 = vpop.f32.mrb[0].mxu0
      %v1224 = vadd.f32 %v1025, %v1223
      %v1225 = vpop.f32.mrb[0].mxu0
      %v1226 = vpop.f32.mrb[0].mxu0
      %v1227 = vadd.f32 %v1028, %v1226
      %v1228 = vpop.f32.mrb[0].mxu0
      %1229 = vmatprep.mubr.bf16.mxu0 0
      %1230 = vmatmul.mubr.bf16.gmra.mrb[0].mxu0 %v910
      %v1231 = vpop.f32.mrb[0].mxu0
      %v1232 = vadd.f32 %v1033, %v1231
      %v1233 = vpop.f32.mrb[0].mxu0
      %v1234 = vpop.f32.mrb[0].mxu0
      %v1235 = vadd.f32 %v1036, %v1234
      %v1236 = vpop.f32.mrb[0].mxu0
      %1237 = vmatprep.mubr.bf16.mxu0 0
      %1238 = vmatmul.mubr.bf16.gmra.mrb[0].mxu0 %v912
      %v1239 = vpop.f32.mrb[0].mxu0
      %v1240 = vadd.f32 %v1041, %v1239
      %v1241 = vpop.f32.mrb[0].mxu0
      %v1242 = vpop.f32.mrb[0].mxu0
      %v1243 = vadd.f32 %v1044, %v1242
      %v1244 = vpop.f32.mrb[0].mxu0
      %1245 = vmatprep.mubr.bf16.mxu0 0
      %1246 = vmatmul.mubr.bf16.gmra.mrb[0].mxu0 %v914
      %v1247 = vpop.f32.mrb[0].mxu0
      %v1248 = vadd.f32 %v1049, %v1247
      %v1249 = vpop.f32.mrb[0].mxu0
      %v1250 = vpop.f32.mrb[0].mxu0
      %v1251 = vadd.f32 %v1052, %v1250
      %v1252 = vpop.f32.mrb[0].mxu0
      %1253 = vmatprep.mubr.bf16.mxu0 0
      %1254 = vmatmul.mubr.bf16.gmra.mrb[0].mxu0 %v916
      %v1255 = vpop.f32.mrb[0].mxu0
      %v1256 = vadd.f32 %v1057, %v1255
      %v1257 = vpop.f32.mrb[0].mxu0
      %v1258 = vpop.f32.mrb[0].mxu0
      %v1259 = vadd.f32 %v1060, %v1258
      %v1260 = vpop.f32.mrb[0].mxu0
      %1261 = vmatprep.mubr.bf16.mxu0 0
      %1262 = vmatmul.mubr.bf16.gmra.mrb[0].mxu0 %v918
      %v1263 = vpop.f32.mrb[0].mxu0
      %v1264 = vadd.f32 %v1065, %v1263
      %v1265 = vpop.f32.mrb[0].mxu0
      %v1266 = vpop.f32.mrb[0].mxu0
      %v1267 = vadd.f32 %v1068, %v1266
      %v1268 = vpop.f32.mrb[0].mxu0
      %1269 = vmatprep.mubr.bf16.mxu0 0
      %1270 = vmatmul.mubr.bf16.gmra.mrb[0].mxu0 %v920
      %v1271 = vpop.f32.mrb[0].mxu0
      %v1272 = vadd.f32 %v1073, %v1271
      %v1273 = vpop.f32.mrb[0].mxu0
      %v1274 = vpop.f32.mrb[0].mxu0
      %v1275 = vadd.f32 %v1076, %v1274
      %v1276 = vpop.f32.mrb[0].mxu0
      %1277 = vmatprep.mubr.bf16.mxu0 0
      %1278 = vmatmul.mubr.bf16.gmra.mrb[0].mxu0 %v922
      %v1279 = vpop.f32.mrb[0].mxu0
      %v1280 = vadd.f32 %v1081, %v1279
      %v1281 = vpop.f32.mrb[0].mxu0
      %v1282 = vpop.f32.mrb[0].mxu0
      %v1283 = vadd.f32 %v1084, %v1282
      %v1284 = vpop.f32.mrb[0].mxu0
      %1285 = vdwg.mxu0
      %s1286 = scalar_lea.vmem %s1, 96
      %v1287 = vld [vmem:[%s1286] sm:$0xf]
      %v1288 = vld [vmem:[%s1286 + $0x4] sm:$0xf]
      %v1289 = vld [vmem:[%s1286 + $0x8] sm:$0xf]
      %v1290 = vld [vmem:[%s1286 + $0xc] sm:$0xf]
      %v1291 = vld [vmem:[%s1286 + $0x10] sm:$0xf]
      %v1292 = vld [vmem:[%s1286 + $0x14] sm:$0xf]
      %v1293 = vld [vmem:[%s1286 + $0x18] sm:$0xf]
      %v1294 = vld [vmem:[%s1286 + $0x1c] sm:$0xf]
      %v1295 = vld [vmem:[%s1286 + $0x20] sm:$0xf]
      %v1296 = vld [vmem:[%s1286 + $0x24] sm:$0xf]
      %v1297 = vld [vmem:[%s1286 + $0x28] sm:$0xf]
      %v1298 = vld [vmem:[%s1286 + $0x2c] sm:$0xf]
      %v1311 = vunpack.c.l.b16 %v1287
      %v1312 = vunpack.c.l.b16 %v1288
      %v1313 = vunpack.c.l.b16 %v1289
      %v1314 = vunpack.c.l.b16 %v1290
      %v1315 = vunpack.c.l.b16 %v1291
      %v1316 = vunpack.c.l.b16 %v1292
      %v1317 = vunpack.c.l.b16 %v1293
      %v1318 = vunpack.c.l.b16 %v1294
      %v1319 = vunpack.c.l.b16 %v1295
      %v1320 = vunpack.c.l.b16 %v1296
      %v1321 = vunpack.c.l.b16 %v1297
      %v1322 = vunpack.c.l.b16 %v1298
      %v1323 = vpack.c.b16 %v1312, %v1311
      %v1324 = vpack.c.b16 %v1314, %v1313
      %v1325 = vpack.c.b16 %v1316, %v1315
      %v1326 = vpack.c.b16 %v1318, %v1317
      %v1327 = vpack.c.b16 %v1320, %v1319
      %v1328 = vpack.c.b16 %v1322, %v1321
      %v1335 = vsel %vm893, %v831, 0
      %1337 = vmatprep.subr.bf16.mxu0 0
      %1338 = vmatpush1.bf16.msra.mxu0 %v1323
      %1339 = vmatprep.subr.bf16.mxu0 0
      %1340 = vmatpush1.bf16.msra.mxu0 %v1324
      %1341 = vmatprep.subr.bf16.mxu0 0
      %1342 = vmatpush1.bf16.msra.mxu0 %v1325
      %1343 = vmatprep.subr.bf16.mxu0 0
      %1344 = vmatpush1.bf16.msra.mxu0 %v1326
      %1345 = vmatprep.subr.bf16.mxu0 0
      %1346 = vmatpush1.bf16.msra.mxu0 %v1327
      %1347 = vmatprep.subr.bf16.mxu0 0
      %1348 = vmatpush1.bf16.msra.mxu0 %v1328
      %1349 = vmatprep.subr.bf16.mxu0 0
      %1350 = vmatpush1.bf16.msra.mxu0 0
      %1351 = vmatprep.subr.bf16.mxu0 0
      %1352 = vmatpush1.bf16.msra.mxu0 0
      %1353 = vmatprep.subr.bf16.mxu0 0
      %1354 = vmatpush1.bf16.msra.mxu0 0
      %1355 = vmatprep.subr.bf16.mxu0 0
      %1356 = vmatpush1.bf16.msra.mxu0 0
      %1357 = vmatprep.subr.bf16.mxu0 0
      %1358 = vmatpush1.bf16.msra.mxu0 0
      %1359 = vmatprep.subr.bf16.mxu0 0
      %1360 = vmatpush1.bf16.msra.mxu0 0
      %1361 = vmatprep.subr.bf16.mxu0 0
      %1362 = vmatpush1.bf16.msra.mxu0 0
      %1363 = vmatprep.subr.bf16.mxu0 0
      %1364 = vmatpush1.bf16.msra.mxu0 0
      %1365 = vmatprep.subr.bf16.mxu0 0
      %1366 = vmatpush1.bf16.msra.mxu0 0
      %1367 = vmatprep.subr.bf16.mxu0 0
      %1368 = vmatpush1.bf16.msra.mxu0 0
      %1369 = vmatprep.mubr.bf16.mxu0 0
      %1370 = vmatmul.mubr.bf16.gmra.mrb[0].mxu0 %v896
      %v1371 = vpop.f32.mrb[0].mxu0
      %v1372 = vadd.f32 0.0, %v1371
      %v1373 = vpop.f32.mrb[0].mxu0
      %v1374 = vpop.f32.mrb[0].mxu0
      %v1375 = vadd.f32 0.0, %v1374
      %v1376 = vpop.f32.mrb[0].mxu0
      %1377 = vmatprep.mubr.bf16.mxu0 0
      %1378 = vmatmul.mubr.bf16.gmra.mrb[0].mxu0 %v898
      %v1379 = vpop.f32.mrb[0].mxu0
      %v1380 = vadd.f32 0.0, %v1379
      %v1381 = vpop.f32.mrb[0].mxu0
      %v1382 = vpop.f32.mrb[0].mxu0
      %v1383 = vadd.f32 0.0, %v1382
      %v1384 = vpop.f32.mrb[0].mxu0
      %1385 = vmatprep.mubr.bf16.mxu0 0
      %1386 = vmatmul.mubr.bf16.gmra.mrb[0].mxu0 %v900
      %v1387 = vpop.f32.mrb[0].mxu0
      %v1388 = vadd.f32 0.0, %v1387
      %v1389 = vpop.f32.mrb[0].mxu0
      %v1390 = vpop.f32.mrb[0].mxu0
      %v1391 = vadd.f32 0.0, %v1390
      %v1392 = vpop.f32.mrb[0].mxu0
      %1393 = vmatprep.mubr.bf16.mxu0 0
      %1394 = vmatmul.mubr.bf16.gmra.mrb[0].mxu0 %v902
      %v1395 = vpop.f32.mrb[0].mxu0
      %v1396 = vadd.f32 0.0, %v1395
      %v1397 = vpop.f32.mrb[0].mxu0
      %v1398 = vpop.f32.mrb[0].mxu0
      %v1399 = vadd.f32 0.0, %v1398
      %v1400 = vpop.f32.mrb[0].mxu0
      %1401 = vmatprep.mubr.bf16.mxu0 0
      %1402 = vmatmul.mubr.bf16.gmra.mrb[0].mxu0 %v904
      %v1403 = vpop.f32.mrb[0].mxu0
      %v1404 = vadd.f32 0.0, %v1403
      %v1405 = vpop.f32.mrb[0].mxu0
      %v1406 = vpop.f32.mrb[0].mxu0
      %v1407 = vadd.f32 0.0, %v1406
      %v1408 = vpop.f32.mrb[0].mxu0
      %1409 = vmatprep.mubr.bf16.mxu0 0
      %1410 = vmatmul.mubr.bf16.gmra.mrb[0].mxu0 %v906
      %v1411 = vpop.f32.mrb[0].mxu0
      %v1412 = vadd.f32 0.0, %v1411
      %v1413 = vpop.f32.mrb[0].mxu0
      %v1414 = vpop.f32.mrb[0].mxu0
      %v1415 = vadd.f32 0.0, %v1414
      %v1416 = vpop.f32.mrb[0].mxu0
      %1417 = vmatprep.mubr.bf16.mxu0 0
      %1418 = vmatmul.mubr.bf16.gmra.mrb[0].mxu0 %v908
      %v1419 = vpop.f32.mrb[0].mxu0
      %v1420 = vadd.f32 0.0, %v1419
      %v1421 = vpop.f32.mrb[0].mxu0
      %v1422 = vpop.f32.mrb[0].mxu0
      %v1423 = vadd.f32 0.0, %v1422
      %v1424 = vpop.f32.mrb[0].mxu0
      %1425 = vmatprep.mubr.bf16.mxu0 0
      %1426 = vmatmul.mubr.bf16.gmra.mrb[0].mxu0 %v910
      %v1427 = vpop.f32.mrb[0].mxu0
      %v1428 = vadd.f32 0.0, %v1427
      %v1429 = vpop.f32.mrb[0].mxu0
      %v1430 = vpop.f32.mrb[0].mxu0
      %v1431 = vadd.f32 0.0, %v1430
      %v1432 = vpop.f32.mrb[0].mxu0
      %1433 = vmatprep.mubr.bf16.mxu0 0
      %1434 = vmatmul.mubr.bf16.gmra.mrb[0].mxu0 %v912
      %v1435 = vpop.f32.mrb[0].mxu0
      %v1436 = vadd.f32 0.0, %v1435
      %v1437 = vpop.f32.mrb[0].mxu0
      %v1438 = vpop.f32.mrb[0].mxu0
      %v1439 = vadd.f32 0.0, %v1438
      %v1440 = vpop.f32.mrb[0].mxu0
      %1441 = vmatprep.mubr.bf16.mxu0 0
      %1442 = vmatmul.mubr.bf16.gmra.mrb[0].mxu0 %v914
      %v1443 = vpop.f32.mrb[0].mxu0
      %v1444 = vadd.f32 0.0, %v1443
      %v1445 = vpop.f32.mrb[0].mxu0
      %v1446 = vpop.f32.mrb[0].mxu0
      %v1447 = vadd.f32 0.0, %v1446
      %v1448 = vpop.f32.mrb[0].mxu0
      %1449 = vmatprep.mubr.bf16.mxu0 0
      %1450 = vmatmul.mubr.bf16.gmra.mrb[0].mxu0 %v916
      %v1451 = vpop.f32.mrb[0].mxu0
      %v1452 = vadd.f32 0.0, %v1451
      %v1453 = vpop.f32.mrb[0].mxu0
      %v1454 = vpop.f32.mrb[0].mxu0
      %v1455 = vadd.f32 0.0, %v1454
      %v1456 = vpop.f32.mrb[0].mxu0
      %1457 = vmatprep.mubr.bf16.mxu0 0
      %1458 = vmatmul.mubr.bf16.gmra.mrb[0].mxu0 %v918
      %v1459 = vpop.f32.mrb[0].mxu0
      %v1460 = vadd.f32 0.0, %v1459
      %v1461 = vpop.f32.mrb[0].mxu0
      %v1462 = vpop.f32.mrb[0].mxu0
      %v1463 = vadd.f32 0.0, %v1462
      %v1464 = vpop.f32.mrb[0].mxu0
      %1465 = vmatprep.mubr.bf16.mxu0 0
      %1466 = vmatmul.mubr.bf16.gmra.mrb[0].mxu0 %v920
      %v1467 = vpop.f32.mrb[0].mxu0
      %v1468 = vadd.f32 0.0, %v1467
      %v1469 = vpop.f32.mrb[0].mxu0
      %v1470 = vpop.f32.mrb[0].mxu0
      %v1471 = vadd.f32 0.0, %v1470
      %v1472 = vpop.f32.mrb[0].mxu0
      %1473 = vmatprep.mubr.bf16.mxu0 0
      %1474 = vmatmul.mubr.bf16.gmra.mrb[0].mxu0 %v922
      %v1475 = vpop.f32.mrb[0].mxu0
      %v1476 = vadd.f32 0.0, %v1475
      %v1477 = vpop.f32.mrb[0].mxu0
      %v1478 = vpop.f32.mrb[0].mxu0
      %v1479 = vadd.f32 0.0, %v1478
      %v1480 = vpop.f32.mrb[0].mxu0
      %1481 = vmatprep.mubr.bf16.mxu0 0
      %1482 = vmatmul.mubr.bf16.gmra.mrb[0].mxu0 %v924
      %v1483 = vpop.f32.mrb[0].mxu0
      %v1484 = vadd.f32 0.0, %v1483
      %v1485 = vpop.f32.mrb[0].mxu0
      %v1486 = vpop.f32.mrb[0].mxu0
      %v1487 = vadd.f32 0.0, %v1486
      %v1488 = vpop.f32.mrb[0].mxu0
      %1489 = vmatprep.mubr.bf16.mxu0 0
      %1490 = vmatmul.mubr.bf16.gmra.mrb[0].mxu0 %v1335
      %v1491 = vpop.f32.mrb[0].mxu0
      %v1492 = vadd.f32 0.0, %v1491
      %v1493 = vpop.f32.mrb[0].mxu0
      %v1494 = vpop.f32.mrb[0].mxu0
      %v1495 = vadd.f32 0.0, %v1494
      %v1496 = vpop.f32.mrb[0].mxu0
      %1497 = vdwg.mxu0
      %v1498 = vadd.f32 %v1160, %v1372
      %v1499 = vadd.f32 %v1163, %v1375
      %v1500 = vadd.f32 %v1168, %v1380
      %v1501 = vadd.f32 %v1171, %v1383
      %v1502 = vadd.f32 %v1176, %v1388
      %v1503 = vadd.f32 %v1179, %v1391
      %v1504 = vadd.f32 %v1184, %v1396
      %v1505 = vadd.f32 %v1187, %v1399
      %v1506 = vadd.f32 %v1192, %v1404
      %v1507 = vadd.f32 %v1195, %v1407
      %v1508 = vadd.f32 %v1200, %v1412
      %v1509 = vadd.f32 %v1203, %v1415
      %v1510 = vadd.f32 %v1208, %v1420
      %v1511 = vadd.f32 %v1211, %v1423
      %v1512 = vadd.f32 %v1216, %v1428
      %v1513 = vadd.f32 %v1219, %v1431
      %v1514 = vadd.f32 %v1224, %v1436
      %v1515 = vadd.f32 %v1227, %v1439
      %v1516 = vadd.f32 %v1232, %v1444
      %v1517 = vadd.f32 %v1235, %v1447
      %v1518 = vadd.f32 %v1240, %v1452
      %v1519 = vadd.f32 %v1243, %v1455
      %v1520 = vadd.f32 %v1248, %v1460
      %v1521 = vadd.f32 %v1251, %v1463
      %v1522 = vadd.f32 %v1256, %v1468
      %v1523 = vadd.f32 %v1259, %v1471
      %v1524 = vadd.f32 %v1264, %v1476
      %v1525 = vadd.f32 %v1267, %v1479
      %v1526 = vadd.f32 %v1272, %v1484
      %v1527 = vadd.f32 %v1275, %v1487
      %v1528 = vadd.f32 %v1280, %v1492
      %v1529 = vadd.f32 %v1283, %v1495
      %v1530 = vpack.c.bf16 %v1499, %v1498
      %v1531 = vpack.c.bf16 %v1501, %v1500
      %v1532 = vpack.c.bf16 %v1503, %v1502
      %v1533 = vpack.c.bf16 %v1505, %v1504
      %v1534 = vpack.c.bf16 %v1507, %v1506
      %v1535 = vpack.c.bf16 %v1509, %v1508
      %v1536 = vpack.c.bf16 %v1511, %v1510
      %v1537 = vpack.c.bf16 %v1513, %v1512
      %v1538 = vpack.c.bf16 %v1515, %v1514
      %v1539 = vpack.c.bf16 %v1517, %v1516
      %v1540 = vpack.c.bf16 %v1519, %v1518
      %v1541 = vpack.c.bf16 %v1521, %v1520
      %v1542 = vpack.c.bf16 %v1523, %v1522
      %v1543 = vpack.c.bf16 %v1525, %v1524
      %v1544 = vpack.c.bf16 %v1527, %v1526
      %v1545 = vpack.c.bf16 %v1529, %v1528
      %v1562 = vunpack.c.l.b16 %v1530
      %v1563 = vunpack.c.h.b16 %v1530
      %v1564 = vunpack.c.l.b16 %v1531
      %v1565 = vunpack.c.h.b16 %v1531
      %v1566 = vunpack.c.l.b16 %v1532
      %v1567 = vunpack.c.h.b16 %v1532
      %v1568 = vunpack.c.l.b16 %v1533
      %v1569 = vunpack.c.h.b16 %v1533
      %v1570 = vunpack.c.l.b16 %v1534
      %v1571 = vunpack.c.h.b16 %v1534
      %v1572 = vunpack.c.l.b16 %v1535
      %v1573 = vunpack.c.h.b16 %v1535
      %v1574 = vunpack.c.l.b16 %v1536
      %v1575 = vunpack.c.h.b16 %v1536
      %v1576 = vunpack.c.l.b16 %v1537
      %v1577 = vunpack.c.h.b16 %v1537
      %v1578 = vunpack.c.l.b16 %v1538
      %v1579 = vunpack.c.h.b16 %v1538
      %v1580 = vunpack.c.l.b16 %v1539
      %v1581 = vunpack.c.h.b16 %v1539
      %v1582 = vunpack.c.l.b16 %v1540
      %v1583 = vunpack.c.h.b16 %v1540
      %v1584 = vunpack.c.l.b16 %v1541
      %v1585 = vunpack.c.h.b16 %v1541
      %v1586 = vunpack.c.l.b16 %v1542
      %v1587 = vunpack.c.h.b16 %v1542
      %v1588 = vunpack.c.l.b16 %v1543
      %v1589 = vunpack.c.h.b16 %v1543
      %v1590 = vunpack.c.l.b16 %v1544
      %v1591 = vunpack.c.h.b16 %v1544
      %v1592 = vunpack.c.l.b16 %v1545
      %v1593 = vunpack.c.h.b16 %v1545
      %v1594 = vpack.c.b16 %v1562, %v1562
      %v1595 = vpack.c.b16 %v1563, %v1563
      %v1596 = vpack.c.b16 %v1564, %v1564
      %v1597 = vpack.c.b16 %v1565, %v1565
      %v1598 = vpack.c.b16 %v1566, %v1566
      %v1599 = vpack.c.b16 %v1567, %v1567
      %v1600 = vpack.c.b16 %v1568, %v1568
      %v1601 = vpack.c.b16 %v1569, %v1569
      %v1602 = vpack.c.b16 %v1570, %v1570
      %v1603 = vpack.c.b16 %v1571, %v1571
      %v1604 = vpack.c.b16 %v1572, %v1572
      %v1605 = vpack.c.b16 %v1573, %v1573
      %v1606 = vpack.c.b16 %v1574, %v1574
      %v1607 = vpack.c.b16 %v1575, %v1575
      %v1608 = vpack.c.b16 %v1576, %v1576
      %v1609 = vpack.c.b16 %v1577, %v1577
      %v1610 = vpack.c.b16 %v1578, %v1578
      %v1611 = vpack.c.b16 %v1579, %v1579
      %v1612 = vpack.c.b16 %v1580, %v1580
      %v1613 = vpack.c.b16 %v1581, %v1581
      %v1614 = vpack.c.b16 %v1582, %v1582
      %v1615 = vpack.c.b16 %v1583, %v1583
      %v1616 = vpack.c.b16 %v1584, %v1584
      %v1617 = vpack.c.b16 %v1585, %v1585
      %v1618 = vpack.c.b16 %v1586, %v1586
      %v1619 = vpack.c.b16 %v1587, %v1587
      %v1620 = vpack.c.b16 %v1588, %v1588
      %v1621 = vpack.c.b16 %v1589, %v1589
      %v1622 = vpack.c.b16 %v1590, %v1590
      %v1623 = vpack.c.b16 %v1591, %v1591
      %v1624 = vpack.c.b16 %v1592, %v1592
      %v1625 = vpack.c.b16 %v1593, %v1593
      %vm1658 = vcmask 257024
      %1659 = vst.msk [vmem:[%s208] sm:$0xf] %vm1658, %v1594
      %1660 = vst.msk [vmem:[%s208 + $0x4] sm:$0xf] %vm1658, %v1595
      %1661 = vst.msk [vmem:[%s208 + $0x8] sm:$0xf] %vm1658, %v1596
      %1662 = vst.msk [vmem:[%s208 + $0xc] sm:$0xf] %vm1658, %v1597
      %1663 = vst.msk [vmem:[%s208 + $0x10] sm:$0xf] %vm1658, %v1598
      %1664 = vst.msk [vmem:[%s208 + $0x14] sm:$0xf] %vm1658, %v1599
      %1665 = vst.msk [vmem:[%s208 + $0x18] sm:$0xf] %vm1658, %v1600
      %1666 = vst.msk [vmem:[%s208 + $0x1c] sm:$0xf] %vm1658, %v1601
      %1667 = vst.msk [vmem:[%s208 + $0x20] sm:$0xf] %vm1658, %v1602
      %1668 = vst.msk [vmem:[%s208 + $0x24] sm:$0xf] %vm1658, %v1603
      %1669 = vst.msk [vmem:[%s208 + $0x28] sm:$0xf] %vm1658, %v1604
      %1670 = vst.msk [vmem:[%s208 + $0x2c] sm:$0xf] %vm1658, %v1605
      %1671 = vst.msk [vmem:[%s208 + $0x30] sm:$0xf] %vm1658, %v1606
      %1672 = vst.msk [vmem:[%s208 + $0x34] sm:$0xf] %vm1658, %v1607
      %1673 = vst.msk [vmem:[%s208 + $0x38] sm:$0xf] %vm1658, %v1608
      %1674 = vst.msk [vmem:[%s208 + $0x3c] sm:$0xf] %vm1658, %v1609
      %1675 = vst.msk [vmem:[%s208 + $0x40] sm:$0xf] %vm1658, %v1610
      %1676 = vst.msk [vmem:[%s208 + $0x44] sm:$0xf] %vm1658, %v1611
      %1677 = vst.msk [vmem:[%s208 + $0x48] sm:$0xf] %vm1658, %v1612
      %1678 = vst.msk [vmem:[%s208 + $0x4c] sm:$0xf] %vm1658, %v1613
      %1679 = vst.msk [vmem:[%s208 + $0x50] sm:$0xf] %vm1658, %v1614
      %1680 = vst.msk [vmem:[%s208 + $0x54] sm:$0xf] %vm1658, %v1615
      %1681 = vst.msk [vmem:[%s208 + $0x58] sm:$0xf] %vm1658, %v1616
      %1682 = vst.msk [vmem:[%s208 + $0x5c] sm:$0xf] %vm1658, %v1617
      %1683 = vst.msk [vmem:[%s208 + $0x60] sm:$0xf] %vm1658, %v1618
      %1684 = vst.msk [vmem:[%s208 + $0x64] sm:$0xf] %vm1658, %v1619
      %1685 = vst.msk [vmem:[%s208 + $0x68] sm:$0xf] %vm1658, %v1620
      %1686 = vst.msk [vmem:[%s208 + $0x6c] sm:$0xf] %vm1658, %v1621
      %1687 = vst.msk [vmem:[%s208 + $0x70] sm:$0xf] %vm1658, %v1622
      %1688 = vst.msk [vmem:[%s208 + $0x74] sm:$0xf] %vm1658, %v1623
      %1689 = vst.msk [vmem:[%s208 + $0x78] sm:$0xf] %vm1658, %v1624
      %1690 = vst.msk [vmem:[%s208 + $0x7c] sm:$0xf] %vm1658, %v1625
      %v1691 = vsel %vm758, %v1498, 0.0
      %v1692 = vsel %vm758, %v1499, 0.0
      %v1693 = vadd.f32 %v1691, %v1692
      %v1694 = vsel %vm758, %v1500, 0.0
      %v1695 = vadd.f32 %v1693, %v1694
      %v1696 = vsel %vm758, %v1501, 0.0
      %v1697 = vadd.f32 %v1695, %v1696
      %v1698 = vsel %vm758, %v1502, 0.0
      %v1699 = vadd.f32 %v1697, %v1698
      %v1700 = vsel %vm758, %v1503, 0.0
      %v1701 = vadd.f32 %v1699, %v1700
      %v1702 = vsel %vm758, %v1504, 0.0
      %v1703 = vadd.f32 %v1701, %v1702
      %v1704 = vsel %vm758, %v1505, 0.0
      %v1705 = vadd.f32 %v1703, %v1704
      %v1706 = vsel %vm758, %v1506, 0.0
      %v1707 = vadd.f32 %v1705, %v1706
      %v1708 = vsel %vm758, %v1507, 0.0
      %v1709 = vadd.f32 %v1707, %v1708
      %v1710 = vsel %vm758, %v1508, 0.0
      %v1711 = vadd.f32 %v1709, %v1710
      %v1712 = vsel %vm758, %v1509, 0.0
      %v1713 = vadd.f32 %v1711, %v1712
      %v1714 = vsel %vm758, %v1510, 0.0
      %v1715 = vadd.f32 %v1713, %v1714
      %v1716 = vsel %vm758, %v1511, 0.0
      %v1717 = vadd.f32 %v1715, %v1716
      %v1718 = vsel %vm758, %v1512, 0.0
      %v1719 = vadd.f32 %v1717, %v1718
      %v1720 = vsel %vm758, %v1513, 0.0
      %v1721 = vadd.f32 %v1719, %v1720
      %v1722 = vsel %vm758, %v1514, 0.0
      %v1723 = vadd.f32 %v1721, %v1722
      %v1724 = vsel %vm758, %v1515, 0.0
      %v1725 = vadd.f32 %v1723, %v1724
      %v1726 = vsel %vm758, %v1516, 0.0
      %v1727 = vadd.f32 %v1725, %v1726
      %v1728 = vsel %vm758, %v1517, 0.0
      %v1729 = vadd.f32 %v1727, %v1728
      %v1730 = vsel %vm758, %v1518, 0.0
      %v1731 = vadd.f32 %v1729, %v1730
      %v1732 = vsel %vm758, %v1519, 0.0
      %v1733 = vadd.f32 %v1731, %v1732
      %v1734 = vsel %vm758, %v1520, 0.0
      %v1735 = vadd.f32 %v1733, %v1734
      %v1736 = vsel %vm758, %v1521, 0.0
      %v1737 = vadd.f32 %v1735, %v1736
      %v1738 = vsel %vm758, %v1522, 0.0
      %v1739 = vadd.f32 %v1737, %v1738
      %v1740 = vsel %vm758, %v1523, 0.0
      %v1741 = vadd.f32 %v1739, %v1740
      %v1742 = vsel %vm758, %v1524, 0.0
      %v1743 = vadd.f32 %v1741, %v1742
      %v1744 = vsel %vm758, %v1525, 0.0
      %v1745 = vadd.f32 %v1743, %v1744
      %v1746 = vsel %vm758, %v1526, 0.0
      %v1747 = vadd.f32 %v1745, %v1746
      %v1748 = vsel %vm758, %v1527, 0.0
      %v1749 = vadd.f32 %v1747, %v1748
      %v1750 = vsel %vm758, %v1528, 0.0
      %v1751 = vadd.f32 %v1749, %v1750
      %v1752 = vsel %vm758, %v1529, 0.0
      %v1753 = vadd.f32 %v1751, %v1752
      %v1754 = vrot.slane %v1753, 4
      %v1755 = vadd.f32 %v1753, %v1754
      %v1756 = vrot.slane %v1755, 2
      %v1757 = vadd.f32 %v1755, %v1756
      %v1758 = vrot.slane %v1757, 1
      %v1759 = vadd.f32 %v1757, %v1758
      %vm1760 = vcmask 253952
      %1761 = vst.msk [vmem:[%s211] sm:$0x1] %vm1760, %v1759
      %v1762 = vmul.f32 %v1498, %v1498
      %v1763 = vmul.f32 %v1499, %v1499
      %v1764 = vmul.f32 %v1500, %v1500
      %v1765 = vmul.f32 %v1501, %v1501
      %v1766 = vmul.f32 %v1502, %v1502
      %v1767 = vmul.f32 %v1503, %v1503
      %v1768 = vmul.f32 %v1504, %v1504
      %v1769 = vmul.f32 %v1505, %v1505
      %v1770 = vmul.f32 %v1506, %v1506
      %v1771 = vmul.f32 %v1507, %v1507
      %v1772 = vmul.f32 %v1508, %v1508
      %v1773 = vmul.f32 %v1509, %v1509
      %v1774 = vmul.f32 %v1510, %v1510
      %v1775 = vmul.f32 %v1511, %v1511
      %v1776 = vmul.f32 %v1512, %v1512
      %v1777 = vmul.f32 %v1513, %v1513
      %v1778 = vmul.f32 %v1514, %v1514
      %v1779 = vmul.f32 %v1515, %v1515
      %v1780 = vmul.f32 %v1516, %v1516
      %v1781 = vmul.f32 %v1517, %v1517
      %v1782 = vmul.f32 %v1518, %v1518
      %v1783 = vmul.f32 %v1519, %v1519
      %v1784 = vmul.f32 %v1520, %v1520
      %v1785 = vmul.f32 %v1521, %v1521
      %v1786 = vmul.f32 %v1522, %v1522
      %v1787 = vmul.f32 %v1523, %v1523
      %v1788 = vmul.f32 %v1524, %v1524
      %v1789 = vmul.f32 %v1525, %v1525
      %v1790 = vmul.f32 %v1526, %v1526
      %v1791 = vmul.f32 %v1527, %v1527
      %v1792 = vmul.f32 %v1528, %v1528
      %v1793 = vmul.f32 %v1529, %v1529
      %v1794 = vsel %vm758, %v1762, 0.0
      %v1795 = vsel %vm758, %v1763, 0.0
      %v1796 = vadd.f32 %v1794, %v1795
      %v1797 = vsel %vm758, %v1764, 0.0
      %v1798 = vadd.f32 %v1796, %v1797
      %v1799 = vsel %vm758, %v1765, 0.0
      %v1800 = vadd.f32 %v1798, %v1799
      %v1801 = vsel %vm758, %v1766, 0.0
      %v1802 = vadd.f32 %v1800, %v1801
      %v1803 = vsel %vm758, %v1767, 0.0
      %v1804 = vadd.f32 %v1802, %v1803
      %v1805 = vsel %vm758, %v1768, 0.0
      %v1806 = vadd.f32 %v1804, %v1805
      %v1807 = vsel %vm758, %v1769, 0.0
      %v1808 = vadd.f32 %v1806, %v1807
      %v1809 = vsel %vm758, %v1770, 0.0
      %v1810 = vadd.f32 %v1808, %v1809
      %v1811 = vsel %vm758, %v1771, 0.0
      %v1812 = vadd.f32 %v1810, %v1811
      %v1813 = vsel %vm758, %v1772, 0.0
      %v1814 = vadd.f32 %v1812, %v1813
      %v1815 = vsel %vm758, %v1773, 0.0
      %v1816 = vadd.f32 %v1814, %v1815
      %v1817 = vsel %vm758, %v1774, 0.0
      %v1818 = vadd.f32 %v1816, %v1817
      %v1819 = vsel %vm758, %v1775, 0.0
      %v1820 = vadd.f32 %v1818, %v1819
      %v1821 = vsel %vm758, %v1776, 0.0
      %v1822 = vadd.f32 %v1820, %v1821
      %v1823 = vsel %vm758, %v1777, 0.0
      %v1824 = vadd.f32 %v1822, %v1823
      %v1825 = vsel %vm758, %v1778, 0.0
      %v1826 = vadd.f32 %v1824, %v1825
      %v1827 = vsel %vm758, %v1779, 0.0
      %v1828 = vadd.f32 %v1826, %v1827
      %v1829 = vsel %vm758, %v1780, 0.0
      %v1830 = vadd.f32 %v1828, %v1829
      %v1831 = vsel %vm758, %v1781, 0.0
      %v1832 = vadd.f32 %v1830, %v1831
      %v1833 = vsel %vm758, %v1782, 0.0
      %v1834 = vadd.f32 %v1832, %v1833
      %v1835 = vsel %vm758, %v1783, 0.0
      %v1836 = vadd.f32 %v1834, %v1835
      %v1837 = vsel %vm758, %v1784, 0.0
      %v1838 = vadd.f32 %v1836, %v1837
      %v1839 = vsel %vm758, %v1785, 0.0
      %v1840 = vadd.f32 %v1838, %v1839
      %v1841 = vsel %vm758, %v1786, 0.0
      %v1842 = vadd.f32 %v1840, %v1841
      %v1843 = vsel %vm758, %v1787, 0.0
      %v1844 = vadd.f32 %v1842, %v1843
      %v1845 = vsel %vm758, %v1788, 0.0
      %v1846 = vadd.f32 %v1844, %v1845
      %v1847 = vsel %vm758, %v1789, 0.0
      %v1848 = vadd.f32 %v1846, %v1847
      %v1849 = vsel %vm758, %v1790, 0.0
      %v1850 = vadd.f32 %v1848, %v1849
      %v1851 = vsel %vm758, %v1791, 0.0
      %v1852 = vadd.f32 %v1850, %v1851
      %v1853 = vsel %vm758, %v1792, 0.0
      %v1854 = vadd.f32 %v1852, %v1853
      %v1855 = vsel %vm758, %v1793, 0.0
      %v1856 = vadd.f32 %v1854, %v1855
      %v1857 = vrot.slane %v1856, 4
      %v1858 = vadd.f32 %v1856, %v1857
      %v1859 = vrot.slane %v1858, 2
      %v1860 = vadd.f32 %v1858, %v1859
      %v1861 = vrot.slane %v1860, 1
      %v1862 = vadd.f32 %v1860, %v1861
      %1863 = vst.msk [vmem:[%s214] sm:$0x1] %vm1760, %v1862
      %p1864 = scmp.lt.s32.totalorder %s16, 1
      %s1865 = scalar_select %p1864, %s16, 1
      %s1866 = smul.addr %s1865, 32
      %s1867 = smul.addr %s1866, 4
      %s1868 = scalar_lea.vmem %s2, %s1867
      %p1869 = scmp.lt.s32.totalorder %s16, 1
      %s1870 = scalar_select %p1869, %s16, 1
      %s1871 = scalar_lea.vmem %s3, %s1870
      %p1872 = scmp.lt.s32.totalorder %s16, 1
      %s1873 = scalar_select %p1872, %s16, 1
      %s1874 = scalar_lea.vmem %s4, %s1873
      // Predicated region
      $region29: #{_lambda_.11} parent=27 // pred_check
        %p1875 = pneg %p81
      $region30: #{_lambda_.11} parent=27 // pred_check_branch
        %1877 = sbr.rel (%p1875) target = $region32
      $region31: #{_lambda_.11} parent=27 // pred_region
        _
      $region32: #{_lambda_.11} parent=27 // pred_fallthru
        _
      // Predicated region
      $region33: #{_lambda_.11} parent=27 // pred_check
        %p1878 = pneg %p107
      $region34: #{_lambda_.11} parent=27 // pred_check_branch
        %1880 = sbr.rel (%p1878) target = $region36
      $region35: #{_lambda_.11} parent=27 // pred_region
        _
      $region36: #{_lambda_.11} parent=27 // pred_fallthru
        _
      // Predicated region
      $region37: #{_lambda_.11} parent=27 // pred_check
        %p1881 = pneg %p133
      $region38: #{_lambda_.11} parent=27 // pred_check_branch
        %1883 = sbr.rel (%p1881) target = $region40
      $region39: #{_lambda_.11} parent=27 // pred_region
        _
      $region40: #{_lambda_.11} parent=27 // pred_fallthru
        _
    $region28: #{_lambda_.11} parent=5 // pred_fallthru
      _
    %p1884 = scmp.le.s32.totalorder 2, %s11
    // Predicated region
    $region41: #{_lambda_.11} parent=5 // pred_check
      %p1885 = pneg %p1884
    $region42: #{_lambda_.11} parent=5 // pred_check_branch
      %1887 = sbr.rel (%p1885) target = $region44
    $region43: #{_lambda_.11} parent=5 // pred_region
      %s1888 = ssub.s32 %s11, 2
      // Predicated region
      $region45: #{_lambda_.11} parent=43 // pred_check
        %p1889 = pneg %p87
      $region46: #{_lambda_.11} parent=43 // pred_check_branch
        %1891 = sbr.rel (%p1889) target = $region48
      $region47: #{_lambda_.11} parent=43 // pred_region
        %p1892 = scmp.lt.s32.totalorder %s17, 1
        %s1893 = scalar_select %p1892, %s17, 1
        %s1894 = smul.addr %s1893, 32
        %s1895 = smul.addr %s1894, 4
        %s1896 = scalar_lea.vmem %s2, %s1895
      $region48: #{_lambda_.11} parent=43 // pred_fallthru
        _
      // Predicated region
      $region49: #{_lambda_.11} parent=43 // pred_check
        %p1897 = pneg %p113
      $region50: #{_lambda_.11} parent=43 // pred_check_branch
        %1899 = sbr.rel (%p1897) target = $region52
      $region51: #{_lambda_.11} parent=43 // pred_region
        %p1900 = scmp.lt.s32.totalorder %s17, 1
        %s1901 = scalar_select %p1900, %s17, 1
        %s1902 = scalar_lea.vmem %s3, %s1901
      $region52: #{_lambda_.11} parent=43 // pred_fallthru
        _
      // Predicated region
      $region53: #{_lambda_.11} parent=43 // pred_check
        %p1903 = pneg %p139
      $region54: #{_lambda_.11} parent=43 // pred_check_branch
        %1905 = sbr.rel (%p1903) target = $region56
      $region55: #{_lambda_.11} parent=43 // pred_region
        %p1906 = scmp.lt.s32.totalorder %s17, 1
        %s1907 = scalar_select %p1906, %s17, 1
        %s1908 = scalar_lea.vmem %s4, %s1907
      $region56: #{_lambda_.11} parent=43 // pred_fallthru
        _
    $region44: #{_lambda_.11} parent=5 // pred_fallthru
      _
  $region6: #{_lambda_.11} parent=0 // loop_footer
    %s15 = sadd.s32 1, %s11
  $region7: #{_lambda_.11} parent=0 // loop_footer_branch
    %10 = sbr.rel target = $region3
  $region8: #{_lambda_.11} parent=0 // loop_exit
    _

// kernel: _lambda_.14
$region0: #{_lambda_.14}
  #allocation0 [shape = 'u32[]', space=smem, size = 0x4, offset = 0x4, fixed_abs, tag = 'smem constant byte address 0x4 - core index']
  #allocation1 [shape = 'u32[144,128]{1,0:T(1,128)}', space=vmem, size = 0x12000, scoped, tag = 'internal scratch']
  %s0 = inlined_call_operand.vmem [shape: bf16[2048,32], index: 0, kind: input, shape index: {}]
  %s1 = inlined_call_operand.vmem [shape: bf16[32,5], index: 1, kind: input, shape index: {}]
  %s2 = inlined_call_operand.vmem [shape: f32[1,5], index: 2, kind: input, shape index: {}]
  %s3 = inlined_call_operand.vmem [shape: f32[2048,5], index: 3, kind: output, shape index: {}]
  %s4 = sld [smem:[#allocation0]]
  $region45: #{_lambda_.14} parent=0
    _
  %s6 = ssub.s32 1, %s4
  %s7 = scalar_select 0, %s6, %s4
  loop: start=0, step=1, limit=4
  $region2: #{_lambda_.14} parent=0 // loop_pre_header
    _
  $region3: #{_lambda_.14} parent=0 // loop_header
    %s9 = sphi 0, %s13
    %p10 = scmp.ge.s32.totalorder %s9, 4
    %s19 = sphi 0, %s21
    %s22 = sphi 0, %s19
    %s23 = sphi 0, %s22
    %s39 = sphi 0, %s23
    %s43 = sphi 0, %s43
    %s45 = sphi 0, %s43
    %s46 = sphi 0, %s45
    %s60 = sphi 0, %s46
    %s64 = sphi 0, %s64
    %s66 = sphi 0, %s64
    %s67 = sphi 0, %s66
    %s81 = sphi 0, %s67
    %s87 = sphi 0, %s89
    %s90 = sphi 0, %s87
    %s91 = sphi 0, %s90
    %s107 = sphi 0, %s91
  $region4: #{_lambda_.14} parent=0 // loop_header_branch
    %12 = sbr.rel (%p10) target = $region8
  $region5: #{_lambda_.14} parent=0 // loop_body
    %s14 = ssub.s32 %s9, 1
    %s15 = ssub.s32 %s9, 2
    %s16 = sadd.s32 %s9, 1
    %s17 = ssub.s32 %s9, %s16
    %p18 = scmp.eq.s32.totalorder %s17, 0
    %s20 = sadd.s32 %s19, 1
    %s21 = scalar_select %p18, %s19, %s20
    %p24 = pneg %p18
    %p25 = scmp.eq.s32.totalorder %s9, 1
    %p26 = por %p24, %p25
    %p27 = scmp.ne.s32.totalorder %s19, %s22
    %p28 = scmp.eq.s32.totalorder %s9, 0
    %p29 = por %p27, %p28
    %p30 = scmp.ne.s32.totalorder %s19, %s22
    %p31 = scmp.eq.s32.totalorder %s14, 1
    %p32 = por %p30, %p31
    %p33 = scmp.ne.s32.totalorder %s22, %s23
    %p34 = scmp.eq.s32.totalorder %s14, 0
    %p35 = por %p33, %p34
    %p36 = scmp.ne.s32.totalorder %s22, %s23
    %p37 = scmp.eq.s32.totalorder %s15, 1
    %p38 = por %p36, %p37
    %p40 = scmp.ne.s32.totalorder %s23, %s39
    %p41 = scmp.eq.s32.totalorder %s15, 0
    %p42 = por %p40, %p41
    %s44 = sadd.s32 %s43, 1
    %p47 = scmp.eq.s32.totalorder %s9, 1
    %p48 = scmp.ne.s32.totalorder %s43, %s45
    %p49 = scmp.eq.s32.totalorder %s9, 0
    %p50 = por %p48, %p49
    %p51 = scmp.ne.s32.totalorder %s43, %s45
    %p52 = scmp.eq.s32.totalorder %s14, 1
    %p53 = por %p51, %p52
    %p54 = scmp.ne.s32.totalorder %s45, %s46
    %p55 = scmp.eq.s32.totalorder %s14, 0
    %p56 = por %p54, %p55
    %p57 = scmp.ne.s32.totalorder %s45, %s46
    %p58 = scmp.eq.s32.totalorder %s15, 1
    %p59 = por %p57, %p58
    %p61 = scmp.ne.s32.totalorder %s46, %s60
    %p62 = scmp.eq.s32.totalorder %s15, 0
    %p63 = por %p61, %p62
    %s65 = sadd.s32 %s64, 1
    %p68 = scmp.eq.s32.totalorder %s9, 1
    %p69 = scmp.ne.s32.totalorder %s64, %s66
    %p70 = scmp.eq.s32.totalorder %s9, 0
    %p71 = por %p69, %p70
    %p72 = scmp.ne.s32.totalorder %s64, %s66
    %p73 = scmp.eq.s32.totalorder %s14, 1
    %p74 = por %p72, %p73
    %p75 = scmp.ne.s32.totalorder %s66, %s67
    %p76 = scmp.eq.s32.totalorder %s14, 0
    %p77 = por %p75, %p76
    %p78 = scmp.ne.s32.totalorder %s66, %s67
    %p79 = scmp.eq.s32.totalorder %s15, 1
    %p80 = por %p78, %p79
    %p82 = scmp.ne.s32.totalorder %s67, %s81
    %p83 = scmp.eq.s32.totalorder %s15, 0
    %p84 = por %p82, %p83
    %s85 = ssub.s32 %s9, %s16
    %p86 = scmp.eq.s32.totalorder %s85, 0
    %s88 = sadd.s32 %s87, 1
    %s89 = scalar_select %p86, %s87, %s88
    %p92 = pneg %p86
    %p93 = scmp.eq.s32.totalorder %s9, 1
    %p94 = por %p92, %p93
    %p95 = scmp.ne.s32.totalorder %s87, %s90
    %p96 = scmp.eq.s32.totalorder %s9, 0
    %p97 = por %p95, %p96
    %p98 = scmp.ne.s32.totalorder %s87, %s90
    %p99 = scmp.eq.s32.totalorder %s14, 1
    %p100 = por %p98, %p99
    %p101 = scmp.ne.s32.totalorder %s90, %s91
    %p102 = scmp.eq.s32.totalorder %s14, 0
    %p103 = por %p101, %p102
    %p104 = scmp.ne.s32.totalorder %s90, %s91
    %p105 = scmp.eq.s32.totalorder %s15, 1
    %p106 = por %p104, %p105
    %p108 = scmp.ne.s32.totalorder %s91, %s107
    %p109 = scmp.eq.s32.totalorder %s15, 0
    %p110 = por %p108, %p109
    %p111 = scmp.le.s32.totalorder 1, %s9
    %p112 = scmp.lt.s32.totalorder %s9, 3
    %p113 = pnand %p111, %p112
    %p114 = pneg %p113
    // Predicated region
    $region9: #{_lambda_.14} parent=5 // pred_check
      _
    $region10: #{_lambda_.14} parent=5 // pred_check_branch
      %116 = sbr.rel (%p113) target = $region12
    $region11: #{_lambda_.14} parent=5 // pred_region
      %s117 = ssub.s32 %s9, 1
      // Predicated region
      $region13: #{_lambda_.14} parent=11 // pred_check
        %p118 = pneg %p56
      $region14: #{_lambda_.14} parent=11 // pred_check_branch
        %120 = sbr.rel (%p118) target = $region16
      $region15: #{_lambda_.14} parent=11 // pred_region
        _
      $region16: #{_lambda_.14} parent=11 // pred_fallthru
        _
      // Predicated region
      $region17: #{_lambda_.14} parent=11 // pred_check
        %p121 = pneg %p77
      $region18: #{_lambda_.14} parent=11 // pred_check_branch
        %123 = sbr.rel (%p121) target = $region20
      $region19: #{_lambda_.14} parent=11 // pred_region
        _
      $region20: #{_lambda_.14} parent=11 // pred_fallthru
        _
    $region12: #{_lambda_.14} parent=5 // pred_fallthru
      _
    %p124 = scmp.lt.s32.totalorder %s9, 2
    // Predicated region
    $region21: #{_lambda_.14} parent=5 // pred_check
      %p125 = pneg %p124
    $region22: #{_lambda_.14} parent=5 // pred_check_branch
      %127 = sbr.rel (%p125) target = $region24
    $region23: #{_lambda_.14} parent=5 // pred_region
      // Predicated region
      $region25: #{_lambda_.14} parent=23 // pred_check
        %p128 = pneg %p29
      $region26: #{_lambda_.14} parent=23 // pred_check_branch
        %130 = sbr.rel (%p128) target = $region28
      $region27: #{_lambda_.14} parent=23 // pred_region
        %s131 = smul.u32 128, %s9
        %p132 = scmp.lt.s32.totalorder %s131, 255
        %s133 = scalar_select %p132, %s131, 255
        %s134 = smul.addr %s133, 4
        %s135 = scalar_lea.vmem %s0, %s134
        %s136 = smul.u32 128, %s9
      $region28: #{_lambda_.14} parent=23 // pred_fallthru
        _
    $region24: #{_lambda_.14} parent=5 // pred_fallthru
      _
    %p137 = scmp.le.s32.totalorder 1, %s9
    %p138 = scmp.lt.s32.totalorder %s9, 3
    %p139 = pnand %p137, %p138
    %p140 = pneg %p139
    // Predicated region
    $region29: #{_lambda_.14} parent=5 // pred_check
      _
    $region30: #{_lambda_.14} parent=5 // pred_check_branch
      %142 = sbr.rel (%p139) target = $region32
    $region31: #{_lambda_.14} parent=5 // pred_region
      %s143 = ssub.s32 %s9, 1
      %s144 = smul.u32 128, %s14
      %p145 = scmp.lt.s32.totalorder %s144, 255
      %s146 = scalar_select %p145, %s144, 255
      %s147 = smul.addr %s146, 4
      %s148 = scalar_lea.vmem %s0, %s147
      %p149 = pneg %p35
      %p150 = pneg %p32
      %p151 = pneg %p56
      %p152 = pneg %p53
      %p153 = pneg %p77
      %p154 = pneg %p74
      %p155 = pneg %p103
      %p156 = pneg %p100
      %s157 = smul.u32 128, %s14
      %p158 = scmp.lt.s32.totalorder %s157, 255
      %s159 = scalar_select %p158, %s157, 255
      %s160 = smul.addr %s159, 8
      %s161 = scalar_lea.vmem %s3, %s160
      %s162 = smul.u32 128, %s14
      %p163 = scmp.lt.s32.totalorder %s162, 255
      %s164 = scalar_select %p163, %s162, 255
      %s165 = smul.addr %s164, 4
      %s166 = scalar_lea.vmem %s0, %s165
      %s167 = smul.u32 128, %s14
      %s168 = smul.u32 128, %s14
      %p169 = scmp.lt.s32.totalorder %s168, 255
      %s170 = scalar_select %p169, %s168, 255
      %s171 = smul.addr %s170, 8
      %s172 = scalar_lea.vmem %s3, %s171
      %s173 = smul.u32 128, %s14
      %v175 = vld [vmem:[%s166] sm:$0xf]
      %v176 = vld [vmem:[%s166 + $0x4] sm:$0xf]
      %v177 = vld [vmem:[%s166 + $0x8] sm:$0xf]
      %v178 = vld [vmem:[%s166 + $0xc] sm:$0xf]
      %v179 = vld [vmem:[%s166 + $0x10] sm:$0xf]
      %v180 = vld [vmem:[%s166 + $0x14] sm:$0xf]
      %v181 = vld [vmem:[%s166 + $0x18] sm:$0xf]
      %v182 = vld [vmem:[%s166 + $0x1c] sm:$0xf]
      %v183 = vld [vmem:[%s166 + $0x20] sm:$0xf]
      %v184 = vld [vmem:[%s166 + $0x24] sm:$0xf]
      %v185 = vld [vmem:[%s166 + $0x28] sm:$0xf]
      %v186 = vld [vmem:[%s166 + $0x2c] sm:$0xf]
      %v187 = vld [vmem:[%s166 + $0x30] sm:$0xf]
      %v188 = vld [vmem:[%s166 + $0x34] sm:$0xf]
      %v189 = vld [vmem:[%s166 + $0x38] sm:$0xf]
      %v190 = vld [vmem:[%s166 + $0x3c] sm:$0xf]
      %v191 = vld [vmem:[%s166 + $0x40] sm:$0xf]
      %v192 = vld [vmem:[%s166 + $0x44] sm:$0xf]
      %v193 = vld [vmem:[%s166 + $0x48] sm:$0xf]
      %v194 = vld [vmem:[%s166 + $0x4c] sm:$0xf]
      %v195 = vld [vmem:[%s166 + $0x50] sm:$0xf]
      %v196 = vld [vmem:[%s166 + $0x54] sm:$0xf]
      %v197 = vld [vmem:[%s166 + $0x58] sm:$0xf]
      %v198 = vld [vmem:[%s166 + $0x5c] sm:$0xf]
      %v199 = vld [vmem:[%s166 + $0x60] sm:$0xf]
      %v200 = vld [vmem:[%s166 + $0x64] sm:$0xf]
      %v201 = vld [vmem:[%s166 + $0x68] sm:$0xf]
      %v202 = vld [vmem:[%s166 + $0x6c] sm:$0xf]
      %v203 = vld [vmem:[%s166 + $0x70] sm:$0xf]
      %v204 = vld [vmem:[%s166 + $0x74] sm:$0xf]
      %v205 = vld [vmem:[%s166 + $0x78] sm:$0xf]
      %v206 = vld [vmem:[%s166 + $0x7c] sm:$0xf]
      %v207 = vld [vmem:[%s166 + $0x80] sm:$0xf]
      %v208 = vld [vmem:[%s166 + $0x84] sm:$0xf]
      %v209 = vld [vmem:[%s166 + $0x88] sm:$0xf]
      %v210 = vld [vmem:[%s166 + $0x8c] sm:$0xf]
      %v211 = vld [vmem:[%s166 + $0x90] sm:$0xf]
      %v212 = vld [vmem:[%s166 + $0x94] sm:$0xf]
      %v213 = vld [vmem:[%s166 + $0x98] sm:$0xf]
      %v214 = vld [vmem:[%s166 + $0x9c] sm:$0xf]
      %v215 = vld [vmem:[%s166 + $0xa0] sm:$0xf]
      %v216 = vld [vmem:[%s166 + $0xa4] sm:$0xf]
      %v217 = vld [vmem:[%s166 + $0xa8] sm:$0xf]
      %v218 = vld [vmem:[%s166 + $0xac] sm:$0xf]
      %v219 = vld [vmem:[%s166 + $0xb0] sm:$0xf]
      %v220 = vld [vmem:[%s166 + $0xb4] sm:$0xf]
      %v221 = vld [vmem:[%s166 + $0xb8] sm:$0xf]
      %v222 = vld [vmem:[%s166 + $0xbc] sm:$0xf]
      %v223 = vld [vmem:[%s166 + $0xc0] sm:$0xf]
      %v224 = vld [vmem:[%s166 + $0xc4] sm:$0xf]
      %v225 = vld [vmem:[%s166 + $0xc8] sm:$0xf]
      %v226 = vld [vmem:[%s166 + $0xcc] sm:$0xf]
      %v227 = vld [vmem:[%s166 + $0xd0] sm:$0xf]
      %v228 = vld [vmem:[%s166 + $0xd4] sm:$0xf]
      %v229 = vld [vmem:[%s166 + $0xd8] sm:$0xf]
      %v230 = vld [vmem:[%s166 + $0xdc] sm:$0xf]
      %v231 = vld [vmem:[%s166 + $0xe0] sm:$0xf]
      %v232 = vld [vmem:[%s166 + $0xe4] sm:$0xf]
      %v233 = vld [vmem:[%s166 + $0xe8] sm:$0xf]
      %v234 = vld [vmem:[%s166 + $0xec] sm:$0xf]
      %v235 = vld [vmem:[%s166 + $0xf0] sm:$0xf]
      %v236 = vld [vmem:[%s166 + $0xf4] sm:$0xf]
      %v237 = vld [vmem:[%s166 + $0xf8] sm:$0xf]
      %v238 = vld [vmem:[%s166 + $0xfc] sm:$0xf]
      %v239 = vld [vmem:[%s166 + $0x100] sm:$0xf]
      %v240 = vld [vmem:[%s166 + $0x104] sm:$0xf]
      %v241 = vld [vmem:[%s166 + $0x108] sm:$0xf]
      %v242 = vld [vmem:[%s166 + $0x10c] sm:$0xf]
      %v243 = vld [vmem:[%s166 + $0x110] sm:$0xf]
      %v244 = vld [vmem:[%s166 + $0x114] sm:$0xf]
      %v245 = vld [vmem:[%s166 + $0x118] sm:$0xf]
      %v246 = vld [vmem:[%s166 + $0x11c] sm:$0xf]
      %v247 = vld [vmem:[%s166 + $0x120] sm:$0xf]
      %v248 = vld [vmem:[%s166 + $0x124] sm:$0xf]
      %v249 = vld [vmem:[%s166 + $0x128] sm:$0xf]
      %v250 = vld [vmem:[%s166 + $0x12c] sm:$0xf]
      %v251 = vld [vmem:[%s166 + $0x130] sm:$0xf]
      %v252 = vld [vmem:[%s166 + $0x134] sm:$0xf]
      %v253 = vld [vmem:[%s166 + $0x138] sm:$0xf]
      %v254 = vld [vmem:[%s166 + $0x13c] sm:$0xf]
      %v255 = vld [vmem:[%s166 + $0x140] sm:$0xf]
      %v256 = vld [vmem:[%s166 + $0x144] sm:$0xf]
      %v257 = vld [vmem:[%s166 + $0x148] sm:$0xf]
      %v258 = vld [vmem:[%s166 + $0x14c] sm:$0xf]
      %v259 = vld [vmem:[%s166 + $0x150] sm:$0xf]
      %v260 = vld [vmem:[%s166 + $0x154] sm:$0xf]
      %v261 = vld [vmem:[%s166 + $0x158] sm:$0xf]
      %v262 = vld [vmem:[%s166 + $0x15c] sm:$0xf]
      %v263 = vld [vmem:[%s166 + $0x160] sm:$0xf]
      %v264 = vld [vmem:[%s166 + $0x164] sm:$0xf]
      %v265 = vld [vmem:[%s166 + $0x168] sm:$0xf]
      %v266 = vld [vmem:[%s166 + $0x16c] sm:$0xf]
      %v267 = vld [vmem:[%s166 + $0x170] sm:$0xf]
      %v268 = vld [vmem:[%s166 + $0x174] sm:$0xf]
      %v269 = vld [vmem:[%s166 + $0x178] sm:$0xf]
      %v270 = vld [vmem:[%s166 + $0x17c] sm:$0xf]
      %v271 = vld [vmem:[%s166 + $0x180] sm:$0xf]
      %v272 = vld [vmem:[%s166 + $0x184] sm:$0xf]
      %v273 = vld [vmem:[%s166 + $0x188] sm:$0xf]
      %v274 = vld [vmem:[%s166 + $0x18c] sm:$0xf]
      %v275 = vld [vmem:[%s166 + $0x190] sm:$0xf]
      %v276 = vld [vmem:[%s166 + $0x194] sm:$0xf]
      %v277 = vld [vmem:[%s166 + $0x198] sm:$0xf]
      %v278 = vld [vmem:[%s166 + $0x19c] sm:$0xf]
      %v279 = vld [vmem:[%s166 + $0x1a0] sm:$0xf]
      %v280 = vld [vmem:[%s166 + $0x1a4] sm:$0xf]
      %v281 = vld [vmem:[%s166 + $0x1a8] sm:$0xf]
      %v282 = vld [vmem:[%s166 + $0x1ac] sm:$0xf]
      %v283 = vld [vmem:[%s166 + $0x1b0] sm:$0xf]
      %v284 = vld [vmem:[%s166 + $0x1b4] sm:$0xf]
      %v285 = vld [vmem:[%s166 + $0x1b8] sm:$0xf]
      %v286 = vld [vmem:[%s166 + $0x1bc] sm:$0xf]
      %v287 = vld [vmem:[%s166 + $0x1c0] sm:$0xf]
      %v288 = vld [vmem:[%s166 + $0x1c4] sm:$0xf]
      %v289 = vld [vmem:[%s166 + $0x1c8] sm:$0xf]
      %v290 = vld [vmem:[%s166 + $0x1cc] sm:$0xf]
      %v291 = vld [vmem:[%s166 + $0x1d0] sm:$0xf]
      %v292 = vld [vmem:[%s166 + $0x1d4] sm:$0xf]
      %v293 = vld [vmem:[%s166 + $0x1d8] sm:$0xf]
      %v294 = vld [vmem:[%s166 + $0x1dc] sm:$0xf]
      %v295 = vld [vmem:[%s166 + $0x1e0] sm:$0xf]
      %v296 = vld [vmem:[%s166 + $0x1e4] sm:$0xf]
      %v297 = vld [vmem:[%s166 + $0x1e8] sm:$0xf]
      %v298 = vld [vmem:[%s166 + $0x1ec] sm:$0xf]
      %v299 = vld [vmem:[%s166 + $0x1f0] sm:$0xf]
      %v300 = vld [vmem:[%s166 + $0x1f4] sm:$0xf]
      %v301 = vld [vmem:[%s166 + $0x1f8] sm:$0xf]
      %v302 = vld [vmem:[%s166 + $0x1fc] sm:$0xf]
      %v303 = vld [vmem:[%s1] sm:$0xf]
      %v304 = vld [vmem:[%s1 + $0x4] sm:$0xf]
      %v305 = vld [vmem:[%s1 + $0x8] sm:$0xf]
      %v306 = vld [vmem:[%s1 + $0xc] sm:$0xf]
      %v307 = vld [vmem:[%s2] sm:$0x1]
      %v309 = vlaneseq
      %v310 = vshrl.u32 %v309, 7
      %v311 = vsub.s32 0, %v310
      %v312 = vrot.slane %v307, %v311
      %v442 = vunpack.c.l.b16 %v175
      %v443 = vunpack.c.l.b16 %v176
      %v444 = vunpack.c.l.b16 %v177
      %v445 = vunpack.c.l.b16 %v178
      %v446 = vunpack.c.l.b16 %v179
      %v447 = vunpack.c.l.b16 %v180
      %v448 = vunpack.c.l.b16 %v181
      %v449 = vunpack.c.l.b16 %v182
      %v450 = vunpack.c.l.b16 %v183
      %v451 = vunpack.c.l.b16 %v184
      %v452 = vunpack.c.l.b16 %v185
      %v453 = vunpack.c.l.b16 %v186
      %v454 = vunpack.c.l.b16 %v187
      %v455 = vunpack.c.l.b16 %v188
      %v456 = vunpack.c.l.b16 %v189
      %v457 = vunpack.c.l.b16 %v190
      %v458 = vunpack.c.l.b16 %v191
      %v459 = vunpack.c.l.b16 %v192
      %v460 = vunpack.c.l.b16 %v193
      %v461 = vunpack.c.l.b16 %v194
      %v462 = vunpack.c.l.b16 %v195
      %v463 = vunpack.c.l.b16 %v196
      %v464 = vunpack.c.l.b16 %v197
      %v465 = vunpack.c.l.b16 %v198
      %v466 = vunpack.c.l.b16 %v199
      %v467 = vunpack.c.l.b16 %v200
      %v468 = vunpack.c.l.b16 %v201
      %v469 = vunpack.c.l.b16 %v202
      %v470 = vunpack.c.l.b16 %v203
      %v471 = vunpack.c.l.b16 %v204
      %v472 = vunpack.c.l.b16 %v205
      %v473 = vunpack.c.l.b16 %v206
      %v474 = vunpack.c.l.b16 %v207
      %v475 = vunpack.c.l.b16 %v208
      %v476 = vunpack.c.l.b16 %v209
      %v477 = vunpack.c.l.b16 %v210
      %v478 = vunpack.c.l.b16 %v211
      %v479 = vunpack.c.l.b16 %v212
      %v480 = vunpack.c.l.b16 %v213
      %v481 = vunpack.c.l.b16 %v214
      %v482 = vunpack.c.l.b16 %v215
      %v483 = vunpack.c.l.b16 %v216
      %v484 = vunpack.c.l.b16 %v217
      %v485 = vunpack.c.l.b16 %v218
      %v486 = vunpack.c.l.b16 %v219
      %v487 = vunpack.c.l.b16 %v220
      %v488 = vunpack.c.l.b16 %v221
      %v489 = vunpack.c.l.b16 %v222
      %v490 = vunpack.c.l.b16 %v223
      %v491 = vunpack.c.l.b16 %v224
      %v492 = vunpack.c.l.b16 %v225
      %v493 = vunpack.c.l.b16 %v226
      %v494 = vunpack.c.l.b16 %v227
      %v495 = vunpack.c.l.b16 %v228
      %v496 = vunpack.c.l.b16 %v229
      %v497 = vunpack.c.l.b16 %v230
      %v498 = vunpack.c.l.b16 %v231
      %v499 = vunpack.c.l.b16 %v232
      %v500 = vunpack.c.l.b16 %v233
      %v501 = vunpack.c.l.b16 %v234
      %v502 = vunpack.c.l.b16 %v235
      %v503 = vunpack.c.l.b16 %v236
      %v504 = vunpack.c.l.b16 %v237
      %v505 = vunpack.c.l.b16 %v238
      %v506 = vunpack.c.l.b16 %v239
      %v507 = vunpack.c.l.b16 %v240
      %v508 = vunpack.c.l.b16 %v241
      %v509 = vunpack.c.l.b16 %v242
      %v510 = vunpack.c.l.b16 %v243
      %v511 = vunpack.c.l.b16 %v244
      %v512 = vunpack.c.l.b16 %v245
      %v513 = vunpack.c.l.b16 %v246
      %v514 = vunpack.c.l.b16 %v247
      %v515 = vunpack.c.l.b16 %v248
      %v516 = vunpack.c.l.b16 %v249
      %v517 = vunpack.c.l.b16 %v250
      %v518 = vunpack.c.l.b16 %v251
      %v519 = vunpack.c.l.b16 %v252
      %v520 = vunpack.c.l.b16 %v253
      %v521 = vunpack.c.l.b16 %v254
      %v522 = vunpack.c.l.b16 %v255
      %v523 = vunpack.c.l.b16 %v256
      %v524 = vunpack.c.l.b16 %v257
      %v525 = vunpack.c.l.b16 %v258
      %v526 = vunpack.c.l.b16 %v259
      %v527 = vunpack.c.l.b16 %v260
      %v528 = vunpack.c.l.b16 %v261
      %v529 = vunpack.c.l.b16 %v262
      %v530 = vunpack.c.l.b16 %v263
      %v531 = vunpack.c.l.b16 %v264
      %v532 = vunpack.c.l.b16 %v265
      %v533 = vunpack.c.l.b16 %v266
      %v534 = vunpack.c.l.b16 %v267
      %v535 = vunpack.c.l.b16 %v268
      %v536 = vunpack.c.l.b16 %v269
      %v537 = vunpack.c.l.b16 %v270
      %v538 = vunpack.c.l.b16 %v271
      %v539 = vunpack.c.l.b16 %v272
      %v540 = vunpack.c.l.b16 %v273
      %v541 = vunpack.c.l.b16 %v274
      %v542 = vunpack.c.l.b16 %v275
      %v543 = vunpack.c.l.b16 %v276
      %v544 = vunpack.c.l.b16 %v277
      %v545 = vunpack.c.l.b16 %v278
      %v546 = vunpack.c.l.b16 %v279
      %v547 = vunpack.c.l.b16 %v280
      %v548 = vunpack.c.l.b16 %v281
      %v549 = vunpack.c.l.b16 %v282
      %v550 = vunpack.c.l.b16 %v283
      %v551 = vunpack.c.l.b16 %v284
      %v552 = vunpack.c.l.b16 %v285
      %v553 = vunpack.c.l.b16 %v286
      %v554 = vunpack.c.l.b16 %v287
      %v555 = vunpack.c.l.b16 %v288
      %v556 = vunpack.c.l.b16 %v289
      %v557 = vunpack.c.l.b16 %v290
      %v558 = vunpack.c.l.b16 %v291
      %v559 = vunpack.c.l.b16 %v292
      %v560 = vunpack.c.l.b16 %v293
      %v561 = vunpack.c.l.b16 %v294
      %v562 = vunpack.c.l.b16 %v295
      %v563 = vunpack.c.l.b16 %v296
      %v564 = vunpack.c.l.b16 %v297
      %v565 = vunpack.c.l.b16 %v298
      %v566 = vunpack.c.l.b16 %v299
      %v567 = vunpack.c.l.b16 %v300
      %v568 = vunpack.c.l.b16 %v301
      %v569 = vunpack.c.l.b16 %v302
      %v570 = vpack.c.b16 %v443, %v442
      %v571 = vpack.c.b16 %v445, %v444
      %v572 = vpack.c.b16 %v447, %v446
      %v573 = vpack.c.b16 %v449, %v448
      %v574 = vpack.c.b16 %v451, %v450
      %v575 = vpack.c.b16 %v453, %v452
      %v576 = vpack.c.b16 %v455, %v454
      %v577 = vpack.c.b16 %v457, %v456
      %v578 = vpack.c.b16 %v459, %v458
      %v579 = vpack.c.b16 %v461, %v460
      %v580 = vpack.c.b16 %v463, %v462
      %v581 = vpack.c.b16 %v465, %v464
      %v582 = vpack.c.b16 %v467, %v466
      %v583 = vpack.c.b16 %v469, %v468
      %v584 = vpack.c.b16 %v471, %v470
      %v585 = vpack.c.b16 %v473, %v472
      %v586 = vpack.c.b16 %v475, %v474
      %v587 = vpack.c.b16 %v477, %v476
      %v588 = vpack.c.b16 %v479, %v478
      %v589 = vpack.c.b16 %v481, %v480
      %v590 = vpack.c.b16 %v483, %v482
      %v591 = vpack.c.b16 %v485, %v484
      %v592 = vpack.c.b16 %v487, %v486
      %v593 = vpack.c.b16 %v489, %v488
      %v594 = vpack.c.b16 %v491, %v490
      %v595 = vpack.c.b16 %v493, %v492
      %v596 = vpack.c.b16 %v495, %v494
      %v597 = vpack.c.b16 %v497, %v496
      %v598 = vpack.c.b16 %v499, %v498
      %v599 = vpack.c.b16 %v501, %v500
      %v600 = vpack.c.b16 %v503, %v502
      %v601 = vpack.c.b16 %v505, %v504
      %v602 = vpack.c.b16 %v507, %v506
      %v603 = vpack.c.b16 %v509, %v508
      %v604 = vpack.c.b16 %v511, %v510
      %v605 = vpack.c.b16 %v513, %v512
      %v606 = vpack.c.b16 %v515, %v514
      %v607 = vpack.c.b16 %v517, %v516
      %v608 = vpack.c.b16 %v519, %v518
      %v609 = vpack.c.b16 %v521, %v520
      %v610 = vpack.c.b16 %v523, %v522
      %v611 = vpack.c.b16 %v525, %v524
      %v612 = vpack.c.b16 %v527, %v526
      %v613 = vpack.c.b16 %v529, %v528
      %v614 = vpack.c.b16 %v531, %v530
      %v615 = vpack.c.b16 %v533, %v532
      %v616 = vpack.c.b16 %v535, %v534
      %v617 = vpack.c.b16 %v537, %v536
      %v618 = vpack.c.b16 %v539, %v538
      %v619 = vpack.c.b16 %v541, %v540
      %v620 = vpack.c.b16 %v543, %v542
      %v621 = vpack.c.b16 %v545, %v544
      %v622 = vpack.c.b16 %v547, %v546
      %v623 = vpack.c.b16 %v549, %v548
      %v624 = vpack.c.b16 %v551, %v550
      %v625 = vpack.c.b16 %v553, %v552
      %v626 = vpack.c.b16 %v555, %v554
      %v627 = vpack.c.b16 %v557, %v556
      %v628 = vpack.c.b16 %v559, %v558
      %v629 = vpack.c.b16 %v561, %v560
      %v630 = vpack.c.b16 %v563, %v562
      %v631 = vpack.c.b16 %v565, %v564
      %v632 = vpack.c.b16 %v567, %v566
      %v633 = vpack.c.b16 %v569, %v568
      %v638 = vunpack.c.l.b16 %v303
      %v639 = vunpack.c.l.b16 %v304
      %v640 = vunpack.c.l.b16 %v305
      %v641 = vunpack.c.l.b16 %v306
      %v642 = vpack.c.b16 %v639, %v638
      %v643 = vpack.c.b16 %v641, %v640
      %vm646 = vcmask 261120
      %v648 = vsel %vm646, %v570, 0
      %v651 = vsel %vm646, %v571, 0
      %v654 = vsel %vm646, %v572, 0
      %v657 = vsel %vm646, %v573, 0
      %v660 = vsel %vm646, %v574, 0
      %v663 = vsel %vm646, %v575, 0
      %v666 = vsel %vm646, %v576, 0
      %v669 = vsel %vm646, %v577, 0
      %v672 = vsel %vm646, %v578, 0
      %v675 = vsel %vm646, %v579, 0
      %v678 = vsel %vm646, %v580, 0
      %v681 = vsel %vm646, %v581, 0
      %v684 = vsel %vm646, %v582, 0
      %v687 = vsel %vm646, %v583, 0
      %v690 = vsel %vm646, %v584, 0
      %v693 = vsel %vm646, %v585, 0
      %v696 = vsel %vm646, %v586, 0
      %v699 = vsel %vm646, %v587, 0
      %v702 = vsel %vm646, %v588, 0
      %v705 = vsel %vm646, %v589, 0
      %v708 = vsel %vm646, %v590, 0
      %v711 = vsel %vm646, %v591, 0
      %v714 = vsel %vm646, %v592, 0
      %v717 = vsel %vm646, %v593, 0
      %v720 = vsel %vm646, %v594, 0
      %v723 = vsel %vm646, %v595, 0
      %v726 = vsel %vm646, %v596, 0
      %v729 = vsel %vm646, %v597, 0
      %v732 = vsel %vm646, %v598, 0
      %v735 = vsel %vm646, %v599, 0
      %v738 = vsel %vm646, %v600, 0
      %v741 = vsel %vm646, %v601, 0
      %v744 = vsel %vm646, %v602, 0
      %v747 = vsel %vm646, %v603, 0
      %v750 = vsel %vm646, %v604, 0
      %v753 = vsel %vm646, %v605, 0
      %v756 = vsel %vm646, %v606, 0
      %v759 = vsel %vm646, %v607, 0
      %v762 = vsel %vm646, %v608, 0
      %v765 = vsel %vm646, %v609, 0
      %v768 = vsel %vm646, %v610, 0
      %v771 = vsel %vm646, %v611, 0
      %v774 = vsel %vm646, %v612, 0
      %v777 = vsel %vm646, %v613, 0
      %v780 = vsel %vm646, %v614, 0
      %v783 = vsel %vm646, %v615, 0
      %v786 = vsel %vm646, %v616, 0
      %v789 = vsel %vm646, %v617, 0
      %v792 = vsel %vm646, %v618, 0
      %v795 = vsel %vm646, %v619, 0
      %v798 = vsel %vm646, %v620, 0
      %v801 = vsel %vm646, %v621, 0
      %v804 = vsel %vm646, %v622, 0
      %v807 = vsel %vm646, %v623, 0
      %v810 = vsel %vm646, %v624, 0
      %v813 = vsel %vm646, %v625, 0
      %v816 = vsel %vm646, %v626, 0
      %v819 = vsel %vm646, %v627, 0
      %v822 = vsel %vm646, %v628, 0
      %v825 = vsel %vm646, %v629, 0
      %v828 = vsel %vm646, %v630, 0
      %v831 = vsel %vm646, %v631, 0
      %v834 = vsel %vm646, %v632, 0
      %v837 = vsel %vm646, %v633, 0
      %839 = vmatprep.subr.bf16.mxu0 0
      %840 = vmatpush1.bf16.msra.mxu0 %v642
      %841 = vmatprep.subr.bf16.mxu0 0
      %842 = vmatpush1.bf16.msra.mxu0 %v643
      %843 = vmatprep.subr.bf16.mxu0 0
      %844 = vmatpush1.bf16.msra.mxu0 0
      %845 = vmatprep.subr.bf16.mxu0 0
      %846 = vmatpush1.bf16.msra.mxu0 0
      %847 = vmatprep.subr.bf16.mxu0 0
      %848 = vmatpush1.bf16.msra.mxu0 0
      %849 = vmatprep.subr.bf16.mxu0 0
      %850 = vmatpush1.bf16.msra.mxu0 0
      %851 = vmatprep.subr.bf16.mxu0 0
      %852 = vmatpush1.bf16.msra.mxu0 0
      %853 = vmatprep.subr.bf16.mxu0 0
      %854 = vmatpush1.bf16.msra.mxu0 0
      %855 = vmatprep.subr.bf16.mxu0 0
      %856 = vmatpush1.bf16.msra.mxu0 0
      %857 = vmatprep.subr.bf16.mxu0 0
      %858 = vmatpush1.bf16.msra.mxu0 0
      %859 = vmatprep.subr.bf16.mxu0 0
      %860 = vmatpush1.bf16.msra.mxu0 0
      %861 = vmatprep.subr.bf16.mxu0 0
      %862 = vmatpush1.bf16.msra.mxu0 0
      %863 = vmatprep.subr.bf16.mxu0 0
      %864 = vmatpush1.bf16.msra.mxu0 0
      %865 = vmatprep.subr.bf16.mxu0 0
      %866 = vmatpush1.bf16.msra.mxu0 0
      %867 = vmatprep.subr.bf16.mxu0 0
      %868 = vmatpush1.bf16.msra.mxu0 0
      %869 = vmatprep.subr.bf16.mxu0 0
      %870 = vmatpush1.bf16.msra.mxu0 0
      %871 = vmatprep.mubr.bf16.mxu0 0
      %872 = vmatmul.mubr.bf16.gmra.mrb[0].mxu0 %v648
      %v873 = vpop.f32.mrb[0].mxu0
      %v874 = vadd.f32 %v312, %v873
      %v875 = vpop.f32.mrb[0].mxu0
      %v876 = vpop.f32.mrb[0].mxu0
      %v877 = vadd.f32 %v312, %v876
      %v878 = vpop.f32.mrb[0].mxu0
      %879 = vmatprep.mubr.bf16.mxu0 0
      %880 = vmatmul.mubr.bf16.gmra.mrb[0].mxu0 %v651
      %v881 = vpop.f32.mrb[0].mxu0
      %v882 = vadd.f32 %v312, %v881
      %v883 = vpop.f32.mrb[0].mxu0
      %v884 = vpop.f32.mrb[0].mxu0
      %v885 = vadd.f32 %v312, %v884
      %v886 = vpop.f32.mrb[0].mxu0
      %887 = vmatprep.mubr.bf16.mxu0 0
      %888 = vmatmul.mubr.bf16.gmra.mrb[0].mxu0 %v654
      %v889 = vpop.f32.mrb[0].mxu0
      %v890 = vadd.f32 %v312, %v889
      %v891 = vpop.f32.mrb[0].mxu0
      %v892 = vpop.f32.mrb[0].mxu0
      %v893 = vadd.f32 %v312, %v892
      %v894 = vpop.f32.mrb[0].mxu0
      %895 = vmatprep.mubr.bf16.mxu0 0
      %896 = vmatmul.mubr.bf16.gmra.mrb[0].mxu0 %v657
      %v897 = vpop.f32.mrb[0].mxu0
      %v898 = vadd.f32 %v312, %v897
      %v899 = vpop.f32.mrb[0].mxu0
      %v900 = vpop.f32.mrb[0].mxu0
      %v901 = vadd.f32 %v312, %v900
      %v902 = vpop.f32.mrb[0].mxu0
      %903 = vmatprep.mubr.bf16.mxu0 0
      %904 = vmatmul.mubr.bf16.gmra.mrb[0].mxu0 %v660
      %v905 = vpop.f32.mrb[0].mxu0
      %v906 = vadd.f32 %v312, %v905
      %v907 = vpop.f32.mrb[0].mxu0
      %v908 = vpop.f32.mrb[0].mxu0
      %v909 = vadd.f32 %v312, %v908
      %v910 = vpop.f32.mrb[0].mxu0
      %911 = vmatprep.mubr.bf16.mxu0 0
      %912 = vmatmul.mubr.bf16.gmra.mrb[0].mxu0 %v663
      %v913 = vpop.f32.mrb[0].mxu0
      %v914 = vadd.f32 %v312, %v913
      %v915 = vpop.f32.mrb[0].mxu0
      %v916 = vpop.f32.mrb[0].mxu0
      %v917 = vadd.f32 %v312, %v916
      %v918 = vpop.f32.mrb[0].mxu0
      %919 = vmatprep.mubr.bf16.mxu0 0
      %920 = vmatmul.mubr.bf16.gmra.mrb[0].mxu0 %v666
      %v921 = vpop.f32.mrb[0].mxu0
      %v922 = vadd.f32 %v312, %v921
      %v923 = vpop.f32.mrb[0].mxu0
      %v924 = vpop.f32.mrb[0].mxu0
      %v925 = vadd.f32 %v312, %v924
      %v926 = vpop.f32.mrb[0].mxu0
      %927 = vmatprep.mubr.bf16.mxu0 0
      %928 = vmatmul.mubr.bf16.gmra.mrb[0].mxu0 %v669
      %v929 = vpop.f32.mrb[0].mxu0
      %v930 = vadd.f32 %v312, %v929
      %v931 = vpop.f32.mrb[0].mxu0
      %v932 = vpop.f32.mrb[0].mxu0
      %v933 = vadd.f32 %v312, %v932
      %v934 = vpop.f32.mrb[0].mxu0
      %935 = vmatprep.mubr.bf16.mxu0 0
      %936 = vmatmul.mubr.bf16.gmra.mrb[0].mxu0 %v672
      %v937 = vpop.f32.mrb[0].mxu0
      %v938 = vadd.f32 %v312, %v937
      %v939 = vpop.f32.mrb[0].mxu0
      %v940 = vpop.f32.mrb[0].mxu0
      %v941 = vadd.f32 %v312, %v940
      %v942 = vpop.f32.mrb[0].mxu0
      %943 = vmatprep.mubr.bf16.mxu0 0
      %944 = vmatmul.mubr.bf16.gmra.mrb[0].mxu0 %v675
      %v945 = vpop.f32.mrb[0].mxu0
      %v946 = vadd.f32 %v312, %v945
      %v947 = vpop.f32.mrb[0].mxu0
      %v948 = vpop.f32.mrb[0].mxu0
      %v949 = vadd.f32 %v312, %v948
      %v950 = vpop.f32.mrb[0].mxu0
      %951 = vmatprep.mubr.bf16.mxu0 0
      %952 = vmatmul.mubr.bf16.gmra.mrb[0].mxu0 %v678
      %v953 = vpop.f32.mrb[0].mxu0
      %v954 = vadd.f32 %v312, %v953
      %v955 = vpop.f32.mrb[0].mxu0
      %v956 = vpop.f32.mrb[0].mxu0
      %v957 = vadd.f32 %v312, %v956
      %v958 = vpop.f32.mrb[0].mxu0
      %959 = vmatprep.mubr.bf16.mxu0 0
      %960 = vmatmul.mubr.bf16.gmra.mrb[0].mxu0 %v681
      %v961 = vpop.f32.mrb[0].mxu0
      %v962 = vadd.f32 %v312, %v961
      %v963 = vpop.f32.mrb[0].mxu0
      %v964 = vpop.f32.mrb[0].mxu0
      %v965 = vadd.f32 %v312, %v964
      %v966 = vpop.f32.mrb[0].mxu0
      %967 = vmatprep.mubr.bf16.mxu0 0
      %968 = vmatmul.mubr.bf16.gmra.mrb[0].mxu0 %v684
      %v969 = vpop.f32.mrb[0].mxu0
      %v970 = vadd.f32 %v312, %v969
      %v971 = vpop.f32.mrb[0].mxu0
      %v972 = vpop.f32.mrb[0].mxu0
      %v973 = vadd.f32 %v312, %v972
      %v974 = vpop.f32.mrb[0].mxu0
      %975 = vmatprep.mubr.bf16.mxu0 0
      %976 = vmatmul.mubr.bf16.gmra.mrb[0].mxu0 %v687
      %v977 = vpop.f32.mrb[0].mxu0
      %v978 = vadd.f32 %v312, %v977
      %v979 = vpop.f32.mrb[0].mxu0
      %v980 = vpop.f32.mrb[0].mxu0
      %v981 = vadd.f32 %v312, %v980
      %v982 = vpop.f32.mrb[0].mxu0
      %983 = vmatprep.mubr.bf16.mxu0 0
      %984 = vmatmul.mubr.bf16.gmra.mrb[0].mxu0 %v690
      %v985 = vpop.f32.mrb[0].mxu0
      %v986 = vadd.f32 %v312, %v985
      %v987 = vpop.f32.mrb[0].mxu0
      %v988 = vpop.f32.mrb[0].mxu0
      %v989 = vadd.f32 %v312, %v988
      %v990 = vpop.f32.mrb[0].mxu0
      %991 = vmatprep.mubr.bf16.mxu0 0
      %992 = vmatmul.mubr.bf16.gmra.mrb[0].mxu0 %v693
      %v993 = vpop.f32.mrb[0].mxu0
      %v994 = vadd.f32 %v312, %v993
      %v995 = vpop.f32.mrb[0].mxu0
      %v996 = vpop.f32.mrb[0].mxu0
      %v997 = vadd.f32 %v312, %v996
      %v998 = vpop.f32.mrb[0].mxu0
      %999 = vmatprep.mubr.bf16.mxu0 0
      %1000 = vmatmul.mubr.bf16.gmra.mrb[0].mxu0 %v696
      %v1001 = vpop.f32.mrb[0].mxu0
      %v1002 = vadd.f32 %v312, %v1001
      %v1003 = vpop.f32.mrb[0].mxu0
      %v1004 = vpop.f32.mrb[0].mxu0
      %v1005 = vadd.f32 %v312, %v1004
      %v1006 = vpop.f32.mrb[0].mxu0
      %1007 = vmatprep.mubr.bf16.mxu0 0
      %1008 = vmatmul.mubr.bf16.gmra.mrb[0].mxu0 %v699
      %v1009 = vpop.f32.mrb[0].mxu0
      %v1010 = vadd.f32 %v312, %v1009
      %v1011 = vpop.f32.mrb[0].mxu0
      %v1012 = vpop.f32.mrb[0].mxu0
      %v1013 = vadd.f32 %v312, %v1012
      %v1014 = vpop.f32.mrb[0].mxu0
      %1015 = vmatprep.mubr.bf16.mxu0 0
      %1016 = vmatmul.mubr.bf16.gmra.mrb[0].mxu0 %v702
      %v1017 = vpop.f32.mrb[0].mxu0
      %v1018 = vadd.f32 %v312, %v1017
      %v1019 = vpop.f32.mrb[0].mxu0
      %v1020 = vpop.f32.mrb[0].mxu0
      %v1021 = vadd.f32 %v312, %v1020
      %v1022 = vpop.f32.mrb[0].mxu0
      %1023 = vmatprep.mubr.bf16.mxu0 0
      %1024 = vmatmul.mubr.bf16.gmra.mrb[0].mxu0 %v705
      %v1025 = vpop.f32.mrb[0].mxu0
      %v1026 = vadd.f32 %v312, %v1025
      %v1027 = vpop.f32.mrb[0].mxu0
      %v1028 = vpop.f32.mrb[0].mxu0
      %v1029 = vadd.f32 %v312, %v1028
      %v1030 = vpop.f32.mrb[0].mxu0
      %1031 = vmatprep.mubr.bf16.mxu0 0
      %1032 = vmatmul.mubr.bf16.gmra.mrb[0].mxu0 %v708
      %v1033 = vpop.f32.mrb[0].mxu0
      %v1034 = vadd.f32 %v312, %v1033
      %v1035 = vpop.f32.mrb[0].mxu0
      %v1036 = vpop.f32.mrb[0].mxu0
      %v1037 = vadd.f32 %v312, %v1036
      %v1038 = vpop.f32.mrb[0].mxu0
      %1039 = vmatprep.mubr.bf16.mxu0 0
      %1040 = vmatmul.mubr.bf16.gmra.mrb[0].mxu0 %v711
      %v1041 = vpop.f32.mrb[0].mxu0
      %v1042 = vadd.f32 %v312, %v1041
      %v1043 = vpop.f32.mrb[0].mxu0
      %v1044 = vpop.f32.mrb[0].mxu0
      %v1045 = vadd.f32 %v312, %v1044
      %v1046 = vpop.f32.mrb[0].mxu0
      %1047 = vmatprep.mubr.bf16.mxu0 0
      %1048 = vmatmul.mubr.bf16.gmra.mrb[0].mxu0 %v714
      %v1049 = vpop.f32.mrb[0].mxu0
      %v1050 = vadd.f32 %v312, %v1049
      %v1051 = vpop.f32.mrb[0].mxu0
      %v1052 = vpop.f32.mrb[0].mxu0
      %v1053 = vadd.f32 %v312, %v1052
      %v1054 = vpop.f32.mrb[0].mxu0
      %1055 = vmatprep.mubr.bf16.mxu0 0
      %1056 = vmatmul.mubr.bf16.gmra.mrb[0].mxu0 %v717
      %v1057 = vpop.f32.mrb[0].mxu0
      %v1058 = vadd.f32 %v312, %v1057
      %v1059 = vpop.f32.mrb[0].mxu0
      %v1060 = vpop.f32.mrb[0].mxu0
      %v1061 = vadd.f32 %v312, %v1060
      %v1062 = vpop.f32.mrb[0].mxu0
      %1063 = vmatprep.mubr.bf16.mxu0 0
      %1064 = vmatmul.mubr.bf16.gmra.mrb[0].mxu0 %v720
      %v1065 = vpop.f32.mrb[0].mxu0
      %v1066 = vadd.f32 %v312, %v1065
      %v1067 = vpop.f32.mrb[0].mxu0
      %v1068 = vpop.f32.mrb[0].mxu0
      %v1069 = vadd.f32 %v312, %v1068
      %v1070 = vpop.f32.mrb[0].mxu0
      %1071 = vmatprep.mubr.bf16.mxu0 0
      %1072 = vmatmul.mubr.bf16.gmra.mrb[0].mxu0 %v723
      %v1073 = vpop.f32.mrb[0].mxu0
      %v1074 = vadd.f32 %v312, %v1073
      %v1075 = vpop.f32.mrb[0].mxu0
      %v1076 = vpop.f32.mrb[0].mxu0
      %v1077 = vadd.f32 %v312, %v1076
      %v1078 = vpop.f32.mrb[0].mxu0
      %1079 = vmatprep.mubr.bf16.mxu0 0
      %1080 = vmatmul.mubr.bf16.gmra.mrb[0].mxu0 %v726
      %v1081 = vpop.f32.mrb[0].mxu0
      %v1082 = vadd.f32 %v312, %v1081
      %v1083 = vpop.f32.mrb[0].mxu0
      %v1084 = vpop.f32.mrb[0].mxu0
      %v1085 = vadd.f32 %v312, %v1084
      %v1086 = vpop.f32.mrb[0].mxu0
      %1087 = vmatprep.mubr.bf16.mxu0 0
      %1088 = vmatmul.mubr.bf16.gmra.mrb[0].mxu0 %v729
      %v1089 = vpop.f32.mrb[0].mxu0
      %v1090 = vadd.f32 %v312, %v1089
      %v1091 = vpop.f32.mrb[0].mxu0
      %v1092 = vpop.f32.mrb[0].mxu0
      %v1093 = vadd.f32 %v312, %v1092
      %v1094 = vpop.f32.mrb[0].mxu0
      %1095 = vmatprep.mubr.bf16.mxu0 0
      %1096 = vmatmul.mubr.bf16.gmra.mrb[0].mxu0 %v732
      %v1097 = vpop.f32.mrb[0].mxu0
      %v1098 = vadd.f32 %v312, %v1097
      %v1099 = vpop.f32.mrb[0].mxu0
      %v1100 = vpop.f32.mrb[0].mxu0
      %v1101 = vadd.f32 %v312, %v1100
      %v1102 = vpop.f32.mrb[0].mxu0
      %1103 = vmatprep.mubr.bf16.mxu0 0
      %1104 = vmatmul.mubr.bf16.gmra.mrb[0].mxu0 %v735
      %v1105 = vpop.f32.mrb[0].mxu0
      %v1106 = vadd.f32 %v312, %v1105
      %v1107 = vpop.f32.mrb[0].mxu0
      %v1108 = vpop.f32.mrb[0].mxu0
      %v1109 = vadd.f32 %v312, %v1108
      %v1110 = vpop.f32.mrb[0].mxu0
      %1111 = vmatprep.mubr.bf16.mxu0 0
      %1112 = vmatmul.mubr.bf16.gmra.mrb[0].mxu0 %v738
      %v1113 = vpop.f32.mrb[0].mxu0
      %v1114 = vadd.f32 %v312, %v1113
      %v1115 = vpop.f32.mrb[0].mxu0
      %v1116 = vpop.f32.mrb[0].mxu0
      %v1117 = vadd.f32 %v312, %v1116
      %v1118 = vpop.f32.mrb[0].mxu0
      %1119 = vmatprep.mubr.bf16.mxu0 0
      %1120 = vmatmul.mubr.bf16.gmra.mrb[0].mxu0 %v741
      %v1121 = vpop.f32.mrb[0].mxu0
      %v1122 = vadd.f32 %v312, %v1121
      %v1123 = vpop.f32.mrb[0].mxu0
      %v1124 = vpop.f32.mrb[0].mxu0
      %v1125 = vadd.f32 %v312, %v1124
      %v1126 = vpop.f32.mrb[0].mxu0
      %1127 = vmatprep.mubr.bf16.mxu0 0
      %1128 = vmatmul.mubr.bf16.gmra.mrb[0].mxu0 %v744
      %v1129 = vpop.f32.mrb[0].mxu0
      %v1130 = vadd.f32 %v312, %v1129
      %v1131 = vpop.f32.mrb[0].mxu0
      %v1132 = vpop.f32.mrb[0].mxu0
      %v1133 = vadd.f32 %v312, %v1132
      %v1134 = vpop.f32.mrb[0].mxu0
      %1135 = vmatprep.mubr.bf16.mxu0 0
      %1136 = vmatmul.mubr.bf16.gmra.mrb[0].mxu0 %v747
      %v1137 = vpop.f32.mrb[0].mxu0
      %v1138 = vadd.f32 %v312, %v1137
      %v1139 = vpop.f32.mrb[0].mxu0
      %v1140 = vpop.f32.mrb[0].mxu0
      %v1141 = vadd.f32 %v312, %v1140
      %v1142 = vpop.f32.mrb[0].mxu0
      %1143 = vmatprep.mubr.bf16.mxu0 0
      %1144 = vmatmul.mubr.bf16.gmra.mrb[0].mxu0 %v750
      %v1145 = vpop.f32.mrb[0].mxu0
      %v1146 = vadd.f32 %v312, %v1145
      %v1147 = vpop.f32.mrb[0].mxu0
      %v1148 = vpop.f32.mrb[0].mxu0
      %v1149 = vadd.f32 %v312, %v1148
      %v1150 = vpop.f32.mrb[0].mxu0
      %1151 = vmatprep.mubr.bf16.mxu0 0
      %1152 = vmatmul.mubr.bf16.gmra.mrb[0].mxu0 %v753
      %v1153 = vpop.f32.mrb[0].mxu0
      %v1154 = vadd.f32 %v312, %v1153
      %v1155 = vpop.f32.mrb[0].mxu0
      %v1156 = vpop.f32.mrb[0].mxu0
      %v1157 = vadd.f32 %v312, %v1156
      %v1158 = vpop.f32.mrb[0].mxu0
      %1159 = vmatprep.mubr.bf16.mxu0 0
      %1160 = vmatmul.mubr.bf16.gmra.mrb[0].mxu0 %v756
      %v1161 = vpop.f32.mrb[0].mxu0
      %v1162 = vadd.f32 %v312, %v1161
      %v1163 = vpop.f32.mrb[0].mxu0
      %v1164 = vpop.f32.mrb[0].mxu0
      %v1165 = vadd.f32 %v312, %v1164
      %v1166 = vpop.f32.mrb[0].mxu0
      %1167 = vmatprep.mubr.bf16.mxu0 0
      %1168 = vmatmul.mubr.bf16.gmra.mrb[0].mxu0 %v759
      %v1169 = vpop.f32.mrb[0].mxu0
      %v1170 = vadd.f32 %v312, %v1169
      %v1171 = vpop.f32.mrb[0].mxu0
      %v1172 = vpop.f32.mrb[0].mxu0
      %v1173 = vadd.f32 %v312, %v1172
      %v1174 = vpop.f32.mrb[0].mxu0
      %1175 = vmatprep.mubr.bf16.mxu0 0
      %1176 = vmatmul.mubr.bf16.gmra.mrb[0].mxu0 %v762
      %v1177 = vpop.f32.mrb[0].mxu0
      %v1178 = vadd.f32 %v312, %v1177
      %v1179 = vpop.f32.mrb[0].mxu0
      %v1180 = vpop.f32.mrb[0].mxu0
      %v1181 = vadd.f32 %v312, %v1180
      %v1182 = vpop.f32.mrb[0].mxu0
      %1183 = vmatprep.mubr.bf16.mxu0 0
      %1184 = vmatmul.mubr.bf16.gmra.mrb[0].mxu0 %v765
      %v1185 = vpop.f32.mrb[0].mxu0
      %v1186 = vadd.f32 %v312, %v1185
      %v1187 = vpop.f32.mrb[0].mxu0
      %v1188 = vpop.f32.mrb[0].mxu0
      %v1189 = vadd.f32 %v312, %v1188
      %v1190 = vpop.f32.mrb[0].mxu0
      %1191 = vmatprep.mubr.bf16.mxu0 0
      %1192 = vmatmul.mubr.bf16.gmra.mrb[0].mxu0 %v768
      %v1193 = vpop.f32.mrb[0].mxu0
      %v1194 = vadd.f32 %v312, %v1193
      %v1195 = vpop.f32.mrb[0].mxu0
      %v1196 = vpop.f32.mrb[0].mxu0
      %v1197 = vadd.f32 %v312, %v1196
      %v1198 = vpop.f32.mrb[0].mxu0
      %1199 = vmatprep.mubr.bf16.mxu0 0
      %1200 = vmatmul.mubr.bf16.gmra.mrb[0].mxu0 %v771
      %v1201 = vpop.f32.mrb[0].mxu0
      %v1202 = vadd.f32 %v312, %v1201
      %v1203 = vpop.f32.mrb[0].mxu0
      %v1204 = vpop.f32.mrb[0].mxu0
      %v1205 = vadd.f32 %v312, %v1204
      %v1206 = vpop.f32.mrb[0].mxu0
      %1207 = vmatprep.mubr.bf16.mxu0 0
      %1208 = vmatmul.mubr.bf16.gmra.mrb[0].mxu0 %v774
      %v1209 = vpop.f32.mrb[0].mxu0
      %v1210 = vadd.f32 %v312, %v1209
      %v1211 = vpop.f32.mrb[0].mxu0
      %v1212 = vpop.f32.mrb[0].mxu0
      %v1213 = vadd.f32 %v312, %v1212
      %v1214 = vpop.f32.mrb[0].mxu0
      %1215 = vmatprep.mubr.bf16.mxu0 0
      %1216 = vmatmul.mubr.bf16.gmra.mrb[0].mxu0 %v777
      %v1217 = vpop.f32.mrb[0].mxu0
      %v1218 = vadd.f32 %v312, %v1217
      %v1219 = vpop.f32.mrb[0].mxu0
      %v1220 = vpop.f32.mrb[0].mxu0
      %v1221 = vadd.f32 %v312, %v1220
      %v1222 = vpop.f32.mrb[0].mxu0
      %1223 = vmatprep.mubr.bf16.mxu0 0
      %1224 = vmatmul.mubr.bf16.gmra.mrb[0].mxu0 %v780
      %v1225 = vpop.f32.mrb[0].mxu0
      %v1226 = vadd.f32 %v312, %v1225
      %v1227 = vpop.f32.mrb[0].mxu0
      %v1228 = vpop.f32.mrb[0].mxu0
      %v1229 = vadd.f32 %v312, %v1228
      %v1230 = vpop.f32.mrb[0].mxu0
      %1231 = vmatprep.mubr.bf16.mxu0 0
      %1232 = vmatmul.mubr.bf16.gmra.mrb[0].mxu0 %v783
      %v1233 = vpop.f32.mrb[0].mxu0
      %v1234 = vadd.f32 %v312, %v1233
      %v1235 = vpop.f32.mrb[0].mxu0
      %v1236 = vpop.f32.mrb[0].mxu0
      %v1237 = vadd.f32 %v312, %v1236
      %v1238 = vpop.f32.mrb[0].mxu0
      %1239 = vmatprep.mubr.bf16.mxu0 0
      %1240 = vmatmul.mubr.bf16.gmra.mrb[0].mxu0 %v786
      %v1241 = vpop.f32.mrb[0].mxu0
      %v1242 = vadd.f32 %v312, %v1241
      %v1243 = vpop.f32.mrb[0].mxu0
      %v1244 = vpop.f32.mrb[0].mxu0
      %v1245 = vadd.f32 %v312, %v1244
      %v1246 = vpop.f32.mrb[0].mxu0
      %1247 = vmatprep.mubr.bf16.mxu0 0
      %1248 = vmatmul.mubr.bf16.gmra.mrb[0].mxu0 %v789
      %v1249 = vpop.f32.mrb[0].mxu0
      %v1250 = vadd.f32 %v312, %v1249
      %v1251 = vpop.f32.mrb[0].mxu0
      %v1252 = vpop.f32.mrb[0].mxu0
      %v1253 = vadd.f32 %v312, %v1252
      %v1254 = vpop.f32.mrb[0].mxu0
      %1255 = vmatprep.mubr.bf16.mxu0 0
      %1256 = vmatmul.mubr.bf16.gmra.mrb[0].mxu0 %v792
      %v1257 = vpop.f32.mrb[0].mxu0
      %v1258 = vadd.f32 %v312, %v1257
      %v1259 = vpop.f32.mrb[0].mxu0
      %v1260 = vpop.f32.mrb[0].mxu0
      %v1261 = vadd.f32 %v312, %v1260
      %v1262 = vpop.f32.mrb[0].mxu0
      %1263 = vmatprep.mubr.bf16.mxu0 0
      %1264 = vmatmul.mubr.bf16.gmra.mrb[0].mxu0 %v795
      %v1265 = vpop.f32.mrb[0].mxu0
      %v1266 = vadd.f32 %v312, %v1265
      %v1267 = vpop.f32.mrb[0].mxu0
      %v1268 = vpop.f32.mrb[0].mxu0
      %v1269 = vadd.f32 %v312, %v1268
      %v1270 = vpop.f32.mrb[0].mxu0
      %1271 = vmatprep.mubr.bf16.mxu0 0
      %1272 = vmatmul.mubr.bf16.gmra.mrb[0].mxu0 %v798
      %v1273 = vpop.f32.mrb[0].mxu0
      %v1274 = vadd.f32 %v312, %v1273
      %v1275 = vpop.f32.mrb[0].mxu0
      %v1276 = vpop.f32.mrb[0].mxu0
      %v1277 = vadd.f32 %v312, %v1276
      %v1278 = vpop.f32.mrb[0].mxu0
      %1279 = vmatprep.mubr.bf16.mxu0 0
      %1280 = vmatmul.mubr.bf16.gmra.mrb[0].mxu0 %v801
      %v1281 = vpop.f32.mrb[0].mxu0
      %v1282 = vadd.f32 %v312, %v1281
      %v1283 = vpop.f32.mrb[0].mxu0
      %v1284 = vpop.f32.mrb[0].mxu0
      %v1285 = vadd.f32 %v312, %v1284
      %v1286 = vpop.f32.mrb[0].mxu0
      %1287 = vmatprep.mubr.bf16.mxu0 0
      %1288 = vmatmul.mubr.bf16.gmra.mrb[0].mxu0 %v804
      %v1289 = vpop.f32.mrb[0].mxu0
      %v1290 = vadd.f32 %v312, %v1289
      %v1291 = vpop.f32.mrb[0].mxu0
      %v1292 = vpop.f32.mrb[0].mxu0
      %v1293 = vadd.f32 %v312, %v1292
      %v1294 = vpop.f32.mrb[0].mxu0
      %1295 = vmatprep.mubr.bf16.mxu0 0
      %1296 = vmatmul.mubr.bf16.gmra.mrb[0].mxu0 %v807
      %v1297 = vpop.f32.mrb[0].mxu0
      %v1298 = vadd.f32 %v312, %v1297
      %v1299 = vpop.f32.mrb[0].mxu0
      %v1300 = vpop.f32.mrb[0].mxu0
      %v1301 = vadd.f32 %v312, %v1300
      %v1302 = vpop.f32.mrb[0].mxu0
      %1303 = vmatprep.mubr.bf16.mxu0 0
      %1304 = vmatmul.mubr.bf16.gmra.mrb[0].mxu0 %v810
      %v1305 = vpop.f32.mrb[0].mxu0
      %v1306 = vadd.f32 %v312, %v1305
      %v1307 = vpop.f32.mrb[0].mxu0
      %v1308 = vpop.f32.mrb[0].mxu0
      %v1309 = vadd.f32 %v312, %v1308
      %v1310 = vpop.f32.mrb[0].mxu0
      %1311 = vmatprep.mubr.bf16.mxu0 0
      %1312 = vmatmul.mubr.bf16.gmra.mrb[0].mxu0 %v813
      %v1313 = vpop.f32.mrb[0].mxu0
      %v1314 = vadd.f32 %v312, %v1313
      %v1315 = vpop.f32.mrb[0].mxu0
      %v1316 = vpop.f32.mrb[0].mxu0
      %v1317 = vadd.f32 %v312, %v1316
      %v1318 = vpop.f32.mrb[0].mxu0
      %1319 = vmatprep.mubr.bf16.mxu0 0
      %1320 = vmatmul.mubr.bf16.gmra.mrb[0].mxu0 %v816
      %v1321 = vpop.f32.mrb[0].mxu0
      %v1322 = vadd.f32 %v312, %v1321
      %v1323 = vpop.f32.mrb[0].mxu0
      %v1324 = vpop.f32.mrb[0].mxu0
      %v1325 = vadd.f32 %v312, %v1324
      %v1326 = vpop.f32.mrb[0].mxu0
      %1327 = vmatprep.mubr.bf16.mxu0 0
      %1328 = vmatmul.mubr.bf16.gmra.mrb[0].mxu0 %v819
      %v1329 = vpop.f32.mrb[0].mxu0
      %v1330 = vadd.f32 %v312, %v1329
      %v1331 = vpop.f32.mrb[0].mxu0
      %v1332 = vpop.f32.mrb[0].mxu0
      %v1333 = vadd.f32 %v312, %v1332
      %v1334 = vpop.f32.mrb[0].mxu0
      %1335 = vmatprep.mubr.bf16.mxu0 0
      %1336 = vmatmul.mubr.bf16.gmra.mrb[0].mxu0 %v822
      %v1337 = vpop.f32.mrb[0].mxu0
      %v1338 = vadd.f32 %v312, %v1337
      %v1339 = vpop.f32.mrb[0].mxu0
      %v1340 = vpop.f32.mrb[0].mxu0
      %v1341 = vadd.f32 %v312, %v1340
      %v1342 = vpop.f32.mrb[0].mxu0
      %1343 = vmatprep.mubr.bf16.mxu0 0
      %1344 = vmatmul.mubr.bf16.gmra.mrb[0].mxu0 %v825
      %v1345 = vpop.f32.mrb[0].mxu0
      %v1346 = vadd.f32 %v312, %v1345
      %v1347 = vpop.f32.mrb[0].mxu0
      %v1348 = vpop.f32.mrb[0].mxu0
      %v1349 = vadd.f32 %v312, %v1348
      %v1350 = vpop.f32.mrb[0].mxu0
      %1351 = vmatprep.mubr.bf16.mxu0 0
      %1352 = vmatmul.mubr.bf16.gmra.mrb[0].mxu0 %v828
      %v1353 = vpop.f32.mrb[0].mxu0
      %v1354 = vadd.f32 %v312, %v1353
      %v1355 = vpop.f32.mrb[0].mxu0
      %v1356 = vpop.f32.mrb[0].mxu0
      %v1357 = vadd.f32 %v312, %v1356
      %v1358 = vpop.f32.mrb[0].mxu0
      %1359 = vmatprep.mubr.bf16.mxu0 0
      %1360 = vmatmul.mubr.bf16.gmra.mrb[0].mxu0 %v831
      %v1361 = vpop.f32.mrb[0].mxu0
      %v1362 = vadd.f32 %v312, %v1361
      %v1363 = vpop.f32.mrb[0].mxu0
      %v1364 = vpop.f32.mrb[0].mxu0
      %v1365 = vadd.f32 %v312, %v1364
      %v1366 = vpop.f32.mrb[0].mxu0
      %1367 = vmatprep.mubr.bf16.mxu0 0
      %1368 = vmatmul.mubr.bf16.gmra.mrb[0].mxu0 %v834
      %v1369 = vpop.f32.mrb[0].mxu0
      %v1370 = vadd.f32 %v312, %v1369
      %v1371 = vpop.f32.mrb[0].mxu0
      %v1372 = vpop.f32.mrb[0].mxu0
      %v1373 = vadd.f32 %v312, %v1372
      %v1374 = vpop.f32.mrb[0].mxu0
      %1375 = vmatprep.mubr.bf16.mxu0 0
      %1376 = vmatmul.mubr.bf16.gmra.mrb[0].mxu0 %v837
      %v1377 = vpop.f32.mrb[0].mxu0
      %v1378 = vadd.f32 %v312, %v1377
      %v1379 = vpop.f32.mrb[0].mxu0
      %v1380 = vpop.f32.mrb[0].mxu0
      %v1381 = vadd.f32 %v312, %v1380
      %v1382 = vpop.f32.mrb[0].mxu0
      %1383 = vdwg.mxu0
      %vm1384 = vcmask 39936
      %1385 = vst.msk [vmem:[%s172] sm:$0xff] %vm1384, %v874
      %1386 = vst.msk [vmem:[%s172 + $0x8] sm:$0xff] %vm1384, %v877
      %1387 = vst.msk [vmem:[%s172 + $0x10] sm:$0xff] %vm1384, %v882
      %1388 = vst.msk [vmem:[%s172 + $0x18] sm:$0xff] %vm1384, %v885
      %1389 = vst.msk [vmem:[%s172 + $0x20] sm:$0xff] %vm1384, %v890
      %1390 = vst.msk [vmem:[%s172 + $0x28] sm:$0xff] %vm1384, %v893
      %1391 = vst.msk [vmem:[%s172 + $0x30] sm:$0xff] %vm1384, %v898
      %1392 = vst.msk [vmem:[%s172 + $0x38] sm:$0xff] %vm1384, %v901
      %1393 = vst.msk [vmem:[%s172 + $0x40] sm:$0xff] %vm1384, %v906
      %1394 = vst.msk [vmem:[%s172 + $0x48] sm:$0xff] %vm1384, %v909
      %1395 = vst.msk [vmem:[%s172 + $0x50] sm:$0xff] %vm1384, %v914
      %1396 = vst.msk [vmem:[%s172 + $0x58] sm:$0xff] %vm1384, %v917
      %1397 = vst.msk [vmem:[%s172 + $0x60] sm:$0xff] %vm1384, %v922
      %1398 = vst.msk [vmem:[%s172 + $0x68] sm:$0xff] %vm1384, %v925
      %1399 = vst.msk [vmem:[%s172 + $0x70] sm:$0xff] %vm1384, %v930
      %1400 = vst.msk [vmem:[%s172 + $0x78] sm:$0xff] %vm1384, %v933
      %1401 = vst.msk [vmem:[%s172 + $0x80] sm:$0xff] %vm1384, %v938
      %1402 = vst.msk [vmem:[%s172 + $0x88] sm:$0xff] %vm1384, %v941
      %1403 = vst.msk [vmem:[%s172 + $0x90] sm:$0xff] %vm1384, %v946
      %1404 = vst.msk [vmem:[%s172 + $0x98] sm:$0xff] %vm1384, %v949
      %1405 = vst.msk [vmem:[%s172 + $0xa0] sm:$0xff] %vm1384, %v954
      %1406 = vst.msk [vmem:[%s172 + $0xa8] sm:$0xff] %vm1384, %v957
      %1407 = vst.msk [vmem:[%s172 + $0xb0] sm:$0xff] %vm1384, %v962
      %1408 = vst.msk [vmem:[%s172 + $0xb8] sm:$0xff] %vm1384, %v965
      %1409 = vst.msk [vmem:[%s172 + $0xc0] sm:$0xff] %vm1384, %v970
      %1410 = vst.msk [vmem:[%s172 + $0xc8] sm:$0xff] %vm1384, %v973
      %1411 = vst.msk [vmem:[%s172 + $0xd0] sm:$0xff] %vm1384, %v978
      %1412 = vst.msk [vmem:[%s172 + $0xd8] sm:$0xff] %vm1384, %v981
      %1413 = vst.msk [vmem:[%s172 + $0xe0] sm:$0xff] %vm1384, %v986
      %1414 = vst.msk [vmem:[%s172 + $0xe8] sm:$0xff] %vm1384, %v989
      %1415 = vst.msk [vmem:[%s172 + $0xf0] sm:$0xff] %vm1384, %v994
      %1416 = vst.msk [vmem:[%s172 + $0xf8] sm:$0xff] %vm1384, %v997
      %1417 = vst.msk [vmem:[%s172 + $0x100] sm:$0xff] %vm1384, %v1002
      %1418 = vst.msk [vmem:[%s172 + $0x108] sm:$0xff] %vm1384, %v1005
      %1419 = vst.msk [vmem:[%s172 + $0x110] sm:$0xff] %vm1384, %v1010
      %1420 = vst.msk [vmem:[%s172 + $0x118] sm:$0xff] %vm1384, %v1013
      %1421 = vst.msk [vmem:[%s172 + $0x120] sm:$0xff] %vm1384, %v1018
      %1422 = vst.msk [vmem:[%s172 + $0x128] sm:$0xff] %vm1384, %v1021
      %1423 = vst.msk [vmem:[%s172 + $0x130] sm:$0xff] %vm1384, %v1026
      %1424 = vst.msk [vmem:[%s172 + $0x138] sm:$0xff] %vm1384, %v1029
      %1425 = vst.msk [vmem:[%s172 + $0x140] sm:$0xff] %vm1384, %v1034
      %1426 = vst.msk [vmem:[%s172 + $0x148] sm:$0xff] %vm1384, %v1037
      %1427 = vst.msk [vmem:[%s172 + $0x150] sm:$0xff] %vm1384, %v1042
      %1428 = vst.msk [vmem:[%s172 + $0x158] sm:$0xff] %vm1384, %v1045
      %1429 = vst.msk [vmem:[%s172 + $0x160] sm:$0xff] %vm1384, %v1050
      %1430 = vst.msk [vmem:[%s172 + $0x168] sm:$0xff] %vm1384, %v1053
      %1431 = vst.msk [vmem:[%s172 + $0x170] sm:$0xff] %vm1384, %v1058
      %1432 = vst.msk [vmem:[%s172 + $0x178] sm:$0xff] %vm1384, %v1061
      %1433 = vst.msk [vmem:[%s172 + $0x180] sm:$0xff] %vm1384, %v1066
      %1434 = vst.msk [vmem:[%s172 + $0x188] sm:$0xff] %vm1384, %v1069
      %1435 = vst.msk [vmem:[%s172 + $0x190] sm:$0xff] %vm1384, %v1074
      %1436 = vst.msk [vmem:[%s172 + $0x198] sm:$0xff] %vm1384, %v1077
      %1437 = vst.msk [vmem:[%s172 + $0x1a0] sm:$0xff] %vm1384, %v1082
      %1438 = vst.msk [vmem:[%s172 + $0x1a8] sm:$0xff] %vm1384, %v1085
      %1439 = vst.msk [vmem:[%s172 + $0x1b0] sm:$0xff] %vm1384, %v1090
      %1440 = vst.msk [vmem:[%s172 + $0x1b8] sm:$0xff] %vm1384, %v1093
      %1441 = vst.msk [vmem:[%s172 + $0x1c0] sm:$0xff] %vm1384, %v1098
      %1442 = vst.msk [vmem:[%s172 + $0x1c8] sm:$0xff] %vm1384, %v1101
      %1443 = vst.msk [vmem:[%s172 + $0x1d0] sm:$0xff] %vm1384, %v1106
      %1444 = vst.msk [vmem:[%s172 + $0x1d8] sm:$0xff] %vm1384, %v1109
      %1445 = vst.msk [vmem:[%s172 + $0x1e0] sm:$0xff] %vm1384, %v1114
      %1446 = vst.msk [vmem:[%s172 + $0x1e8] sm:$0xff] %vm1384, %v1117
      %1447 = vst.msk [vmem:[%s172 + $0x1f0] sm:$0xff] %vm1384, %v1122
      %1448 = vst.msk [vmem:[%s172 + $0x1f8] sm:$0xff] %vm1384, %v1125
      %1449 = vst.msk [vmem:[%s172 + $0x200] sm:$0xff] %vm1384, %v1130
      %1450 = vst.msk [vmem:[%s172 + $0x208] sm:$0xff] %vm1384, %v1133
      %1451 = vst.msk [vmem:[%s172 + $0x210] sm:$0xff] %vm1384, %v1138
      %1452 = vst.msk [vmem:[%s172 + $0x218] sm:$0xff] %vm1384, %v1141
      %1453 = vst.msk [vmem:[%s172 + $0x220] sm:$0xff] %vm1384, %v1146
      %1454 = vst.msk [vmem:[%s172 + $0x228] sm:$0xff] %vm1384, %v1149
      %1455 = vst.msk [vmem:[%s172 + $0x230] sm:$0xff] %vm1384, %v1154
      %1456 = vst.msk [vmem:[%s172 + $0x238] sm:$0xff] %vm1384, %v1157
      %1457 = vst.msk [vmem:[%s172 + $0x240] sm:$0xff] %vm1384, %v1162
      %1458 = vst.msk [vmem:[%s172 + $0x248] sm:$0xff] %vm1384, %v1165
      %1459 = vst.msk [vmem:[%s172 + $0x250] sm:$0xff] %vm1384, %v1170
      %1460 = vst.msk [vmem:[%s172 + $0x258] sm:$0xff] %vm1384, %v1173
      %1461 = vst.msk [vmem:[%s172 + $0x260] sm:$0xff] %vm1384, %v1178
      %1462 = vst.msk [vmem:[%s172 + $0x268] sm:$0xff] %vm1384, %v1181
      %1463 = vst.msk [vmem:[%s172 + $0x270] sm:$0xff] %vm1384, %v1186
      %1464 = vst.msk [vmem:[%s172 + $0x278] sm:$0xff] %vm1384, %v1189
      %1465 = vst.msk [vmem:[%s172 + $0x280] sm:$0xff] %vm1384, %v1194
      %1466 = vst.msk [vmem:[%s172 + $0x288] sm:$0xff] %vm1384, %v1197
      %1467 = vst.msk [vmem:[%s172 + $0x290] sm:$0xff] %vm1384, %v1202
      %1468 = vst.msk [vmem:[%s172 + $0x298] sm:$0xff] %vm1384, %v1205
      %1469 = vst.msk [vmem:[%s172 + $0x2a0] sm:$0xff] %vm1384, %v1210
      %1470 = vst.msk [vmem:[%s172 + $0x2a8] sm:$0xff] %vm1384, %v1213
      %1471 = vst.msk [vmem:[%s172 + $0x2b0] sm:$0xff] %vm1384, %v1218
      %1472 = vst.msk [vmem:[%s172 + $0x2b8] sm:$0xff] %vm1384, %v1221
      %1473 = vst.msk [vmem:[%s172 + $0x2c0] sm:$0xff] %vm1384, %v1226
      %1474 = vst.msk [vmem:[%s172 + $0x2c8] sm:$0xff] %vm1384, %v1229
      %1475 = vst.msk [vmem:[%s172 + $0x2d0] sm:$0xff] %vm1384, %v1234
      %1476 = vst.msk [vmem:[%s172 + $0x2d8] sm:$0xff] %vm1384, %v1237
      %1477 = vst.msk [vmem:[%s172 + $0x2e0] sm:$0xff] %vm1384, %v1242
      %1478 = vst.msk [vmem:[%s172 + $0x2e8] sm:$0xff] %vm1384, %v1245
      %1479 = vst.msk [vmem:[%s172 + $0x2f0] sm:$0xff] %vm1384, %v1250
      %1480 = vst.msk [vmem:[%s172 + $0x2f8] sm:$0xff] %vm1384, %v1253
      %1481 = vst.msk [vmem:[%s172 + $0x300] sm:$0xff] %vm1384, %v1258
      %1482 = vst.msk [vmem:[%s172 + $0x308] sm:$0xff] %vm1384, %v1261
      %1483 = vst.msk [vmem:[%s172 + $0x310] sm:$0xff] %vm1384, %v1266
      %1484 = vst.msk [vmem:[%s172 + $0x318] sm:$0xff] %vm1384, %v1269
      %1485 = vst.msk [vmem:[%s172 + $0x320] sm:$0xff] %vm1384, %v1274
      %1486 = vst.msk [vmem:[%s172 + $0x328] sm:$0xff] %vm1384, %v1277
      %1487 = vst.msk [vmem:[%s172 + $0x330] sm:$0xff] %vm1384, %v1282
      %1488 = vst.msk [vmem:[%s172 + $0x338] sm:$0xff] %vm1384, %v1285
      %1489 = vst.msk [vmem:[%s172 + $0x340] sm:$0xff] %vm1384, %v1290
      %1490 = vst.msk [vmem:[%s172 + $0x348] sm:$0xff] %vm1384, %v1293
      %1491 = vst.msk [vmem:[%s172 + $0x350] sm:$0xff] %vm1384, %v1298
      %1492 = vst.msk [vmem:[%s172 + $0x358] sm:$0xff] %vm1384, %v1301
      %1493 = vst.msk [vmem:[%s172 + $0x360] sm:$0xff] %vm1384, %v1306
      %1494 = vst.msk [vmem:[%s172 + $0x368] sm:$0xff] %vm1384, %v1309
      %1495 = vst.msk [vmem:[%s172 + $0x370] sm:$0xff] %vm1384, %v1314
      %1496 = vst.msk [vmem:[%s172 + $0x378] sm:$0xff] %vm1384, %v1317
      %1497 = vst.msk [vmem:[%s172 + $0x380] sm:$0xff] %vm1384, %v1322
      %1498 = vst.msk [vmem:[%s172 + $0x388] sm:$0xff] %vm1384, %v1325
      %1499 = vst.msk [vmem:[%s172 + $0x390] sm:$0xff] %vm1384, %v1330
      %1500 = vst.msk [vmem:[%s172 + $0x398] sm:$0xff] %vm1384, %v1333
      %1501 = vst.msk [vmem:[%s172 + $0x3a0] sm:$0xff] %vm1384, %v1338
      %1502 = vst.msk [vmem:[%s172 + $0x3a8] sm:$0xff] %vm1384, %v1341
      %1503 = vst.msk [vmem:[%s172 + $0x3b0] sm:$0xff] %vm1384, %v1346
      %1504 = vst.msk [vmem:[%s172 + $0x3b8] sm:$0xff] %vm1384, %v1349
      %1505 = vst.msk [vmem:[%s172 + $0x3c0] sm:$0xff] %vm1384, %v1354
      %1506 = vst.msk [vmem:[%s172 + $0x3c8] sm:$0xff] %vm1384, %v1357
      %1507 = vst.msk [vmem:[%s172 + $0x3d0] sm:$0xff] %vm1384, %v1362
      %1508 = vst.msk [vmem:[%s172 + $0x3d8] sm:$0xff] %vm1384, %v1365
      %1509 = vst.msk [vmem:[%s172 + $0x3e0] sm:$0xff] %vm1384, %v1370
      %1510 = vst.msk [vmem:[%s172 + $0x3e8] sm:$0xff] %vm1384, %v1373
      %1511 = vst.msk [vmem:[%s172 + $0x3f0] sm:$0xff] %vm1384, %v1378
      %1512 = vst.msk [vmem:[%s172 + $0x3f8] sm:$0xff] %vm1384, %v1381
      %s1513 = smul.u32 128, %s14
      %p1514 = scmp.lt.s32.totalorder %s1513, 255
      %s1515 = scalar_select %p1514, %s1513, 255
      %s1516 = smul.addr %s1515, 8
      %s1517 = scalar_lea.vmem %s3, %s1516
      // Predicated region
      $region33: #{_lambda_.14} parent=31 // pred_check
        %p1518 = pneg %p100
      $region34: #{_lambda_.14} parent=31 // pred_check_branch
        %1520 = sbr.rel (%p1518) target = $region36
      $region35: #{_lambda_.14} parent=31 // pred_region
        %s1521 = smul.u32 128, %s14
      $region36: #{_lambda_.14} parent=31 // pred_fallthru
        _
    $region32: #{_lambda_.14} parent=5 // pred_fallthru
      _
    %p1522 = scmp.le.s32.totalorder 2, %s9
    // Predicated region
    $region37: #{_lambda_.14} parent=5 // pred_check
      %p1523 = pneg %p1522
    $region38: #{_lambda_.14} parent=5 // pred_check_branch
      %1525 = sbr.rel (%p1523) target = $region40
    $region39: #{_lambda_.14} parent=5 // pred_region
      %s1526 = ssub.s32 %s9, 2
      // Predicated region
      $region41: #{_lambda_.14} parent=39 // pred_check
        %p1527 = pneg %p106
      $region42: #{_lambda_.14} parent=39 // pred_check_branch
        %1529 = sbr.rel (%p1527) target = $region44
      $region43: #{_lambda_.14} parent=39 // pred_region
        %s1530 = smul.u32 128, %s15
        %p1531 = scmp.lt.s32.totalorder %s1530, 255
        %s1532 = scalar_select %p1531, %s1530, 255
        %s1533 = smul.addr %s1532, 8
        %s1534 = scalar_lea.vmem %s3, %s1533
      $region44: #{_lambda_.14} parent=39 // pred_fallthru
        _
    $region40: #{_lambda_.14} parent=5 // pred_fallthru
      _
  $region6: #{_lambda_.14} parent=0 // loop_footer
    %s13 = sadd.s32 1, %s9
  $region7: #{_lambda_.14} parent=0 // loop_footer_branch
    %8 = sbr.rel target = $region3
  $region8: #{_lambda_.14} parent=0 // loop_exit
    _

// kernel: _lambda_.15
$region0: #{_lambda_.15}
  #allocation0 [shape = 'u32[]', space=smem, size = 0x4, offset = 0x4, fixed_abs, tag = 'smem constant byte address 0x4 - core index']
  #allocation1 [shape = 'u32[144,128]{1,0:T(1,128)}', space=vmem, size = 0x12000, scoped, tag = 'internal scratch']
  %s0 = inlined_call_operand.vmem [shape: f32[2,5,32,32], index: 0, kind: input, shape index: {}]
  %s1 = inlined_call_operand.vmem [shape: f32[40,32], index: 1, kind: input, shape index: {}]
  %s2 = inlined_call_operand.vmem [shape: f32[32,40], index: 2, kind: input, shape index: {}]
  %s3 = inlined_call_operand.hbm [shape: f32[2,5,40,40], index: 3, kind: output, shape index: {}]
  %s4 = sld [smem:[#allocation0]]
  $region45: #{_lambda_.15} parent=0
    _
  %s6 = ssub.s32 1, %s4
  %s7 = scalar_select 0, %s6, %s4
  $region1: #{_lambda_.15} parent=0
    #allocation2 [shape = 'u8[204800]{0}', space=vmem, size = 0x32000, scoped, tag = 'output window, operand 0']
    #allocation3 [shape = 's32[2]{0}', space=sflag, size = 0x8, scoped, tag = 'scoped memory for _lambda_.15']
    %8 = vsyncpa [#allocation3], 0
    %s9 = scalar_lea.sflag [#allocation3], 1
    %10 = vsyncpa %s9, 0
    loop: start=0, step=1, limit=4
    $region2: #{_lambda_.15} parent=1 // loop_pre_header
      _
    $region3: #{_lambda_.15} parent=1 // loop_header
      %s12 = sphi 0, %s16
      %p13 = scmp.ge.s32.totalorder %s12, 4
      %s22 = sphi 0, %s24
      %s25 = sphi 0, %s22
      %s26 = sphi 0, %s25
      %s42 = sphi 0, %s26
      %s46 = sphi 0, %s46
      %s48 = sphi 0, %s46
      %s49 = sphi 0, %s48
      %s63 = sphi 0, %s49
      %s67 = sphi 0, %s67
      %s69 = sphi 0, %s67
      %s70 = sphi 0, %s69
      %s84 = sphi 0, %s70
      %s90 = sphi 0, %s92
      %s93 = sphi 0, %s90
      %s94 = sphi 0, %s93
      %s110 = sphi 0, %s94
    $region4: #{_lambda_.15} parent=1 // loop_header_branch
      %15 = sbr.rel (%p13) target = $region8
    $region5: #{_lambda_.15} parent=1 // loop_body
      %s17 = ssub.s32 %s12, 1
      %s18 = ssub.s32 %s12, 2
      %s19 = sadd.s32 %s12, 1
      %s20 = ssub.s32 %s12, %s19
      %p21 = scmp.eq.s32.totalorder %s20, 0
      %s23 = sadd.s32 %s22, 1
      %s24 = scalar_select %p21, %s22, %s23
      %p27 = pneg %p21
      %p28 = scmp.eq.s32.totalorder %s12, 1
      %p29 = por %p27, %p28
      %p30 = scmp.ne.s32.totalorder %s22, %s25
      %p31 = scmp.eq.s32.totalorder %s12, 0
      %p32 = por %p30, %p31
      %p33 = scmp.ne.s32.totalorder %s22, %s25
      %p34 = scmp.eq.s32.totalorder %s17, 1
      %p35 = por %p33, %p34
      %p36 = scmp.ne.s32.totalorder %s25, %s26
      %p37 = scmp.eq.s32.totalorder %s17, 0
      %p38 = por %p36, %p37
      %p39 = scmp.ne.s32.totalorder %s25, %s26
      %p40 = scmp.eq.s32.totalorder %s18, 1
      %p41 = por %p39, %p40
      %p43 = scmp.ne.s32.totalorder %s26, %s42
      %p44 = scmp.eq.s32.totalorder %s18, 0
      %p45 = por %p43, %p44
      %s47 = sadd.s32 %s46, 1
      %p50 = scmp.eq.s32.totalorder %s12, 1
      %p51 = scmp.ne.s32.totalorder %s46, %s48
      %p52 = scmp.eq.s32.totalorder %s12, 0
      %p53 = por %p51, %p52
      %p54 = scmp.ne.s32.totalorder %s46, %s48
      %p55 = scmp.eq.s32.totalorder %s17, 1
      %p56 = por %p54, %p55
      %p57 = scmp.ne.s32.totalorder %s48, %s49
      %p58 = scmp.eq.s32.totalorder %s17, 0
      %p59 = por %p57, %p58
      %p60 = scmp.ne.s32.totalorder %s48, %s49
      %p61 = scmp.eq.s32.totalorder %s18, 1
      %p62 = por %p60, %p61
      %p64 = scmp.ne.s32.totalorder %s49, %s63
      %p65 = scmp.eq.s32.totalorder %s18, 0
      %p66 = por %p64, %p65
      %s68 = sadd.s32 %s67, 1
      %p71 = scmp.eq.s32.totalorder %s12, 1
      %p72 = scmp.ne.s32.totalorder %s67, %s69
      %p73 = scmp.eq.s32.totalorder %s12, 0
      %p74 = por %p72, %p73
      %p75 = scmp.ne.s32.totalorder %s67, %s69
      %p76 = scmp.eq.s32.totalorder %s17, 1
      %p77 = por %p75, %p76
      %p78 = scmp.ne.s32.totalorder %s69, %s70
      %p79 = scmp.eq.s32.totalorder %s17, 0
      %p80 = por %p78, %p79
      %p81 = scmp.ne.s32.totalorder %s69, %s70
      %p82 = scmp.eq.s32.totalorder %s18, 1
      %p83 = por %p81, %p82
      %p85 = scmp.ne.s32.totalorder %s70, %s84
      %p86 = scmp.eq.s32.totalorder %s18, 0
      %p87 = por %p85, %p86
      %s88 = ssub.s32 %s12, %s19
      %p89 = scmp.eq.s32.totalorder %s88, 0
      %s91 = sadd.s32 %s90, 1
      %s92 = scalar_select %p89, %s90, %s91
      %p95 = pneg %p89
      %p96 = scmp.eq.s32.totalorder %s12, 1
      %p97 = por %p95, %p96
      %p98 = scmp.ne.s32.totalorder %s90, %s93
      %p99 = scmp.eq.s32.totalorder %s12, 0
      %p100 = por %p98, %p99
      %p101 = scmp.ne.s32.totalorder %s90, %s93
      %p102 = scmp.eq.s32.totalorder %s17, 1
      %p103 = por %p101, %p102
      %p104 = scmp.ne.s32.totalorder %s93, %s94
      %p105 = scmp.eq.s32.totalorder %s17, 0
      %p106 = por %p104, %p105
      %p107 = scmp.ne.s32.totalorder %s93, %s94
      %p108 = scmp.eq.s32.totalorder %s18, 1
      %p109 = por %p107, %p108
      %p111 = scmp.ne.s32.totalorder %s94, %s110
      %p112 = scmp.eq.s32.totalorder %s18, 0
      %p113 = por %p111, %p112
      %p114 = scmp.le.s32.totalorder 1, %s12
      %p115 = scmp.lt.s32.totalorder %s12, 3
      %p116 = pnand %p114, %p115
      %p117 = pneg %p116
      // Predicated region
      $region9: #{_lambda_.15} parent=5 // pred_check
        _
      $region10: #{_lambda_.15} parent=5 // pred_check_branch
        %119 = sbr.rel (%p116) target = $region12
      $region11: #{_lambda_.15} parent=5 // pred_region
        %s120 = ssub.s32 %s12, 1
        // Predicated region
        $region13: #{_lambda_.15} parent=11 // pred_check
          %p121 = pneg %p59
        $region14: #{_lambda_.15} parent=11 // pred_check_branch
          %123 = sbr.rel (%p121) target = $region16
        $region15: #{_lambda_.15} parent=11 // pred_region
          _
        $region16: #{_lambda_.15} parent=11 // pred_fallthru
          _
        // Predicated region
        $region17: #{_lambda_.15} parent=11 // pred_check
          %p124 = pneg %p80
        $region18: #{_lambda_.15} parent=11 // pred_check_branch
          %126 = sbr.rel (%p124) target = $region20
        $region19: #{_lambda_.15} parent=11 // pred_region
          _
        $region20: #{_lambda_.15} parent=11 // pred_fallthru
          _
      $region12: #{_lambda_.15} parent=5 // pred_fallthru
        _
      %p127 = scmp.lt.s32.totalorder %s12, 2
      // Predicated region
      $region21: #{_lambda_.15} parent=5 // pred_check
        %p128 = pneg %p127
      $region22: #{_lambda_.15} parent=5 // pred_check_branch
        %130 = sbr.rel (%p128) target = $region24
      $region23: #{_lambda_.15} parent=5 // pred_region
        // Predicated region
        $region25: #{_lambda_.15} parent=23 // pred_check
          %p131 = pneg %p32
        $region26: #{_lambda_.15} parent=23 // pred_check_branch
          %133 = sbr.rel (%p131) target = $region28
        $region27: #{_lambda_.15} parent=23 // pred_region
          %p134 = scmp.lt.s32.totalorder %s12, 1
          %s135 = scalar_select %p134, %s12, 1
          %s136 = smul.addr %s135, 20
          %s137 = smul.addr %s136, 8
          %s138 = scalar_lea.vmem %s0, %s137
        $region28: #{_lambda_.15} parent=23 // pred_fallthru
          _
      $region24: #{_lambda_.15} parent=5 // pred_fallthru
        _
      %p139 = scmp.le.s32.totalorder 1, %s12
      %p140 = scmp.lt.s32.totalorder %s12, 3
      %p141 = pnand %p139, %p140
      %p142 = pneg %p141
      // Predicated region
      $region29: #{_lambda_.15} parent=5 // pred_check
        _
      $region30: #{_lambda_.15} parent=5 // pred_check_branch
        %144 = sbr.rel (%p141) target = $region32
      $region31: #{_lambda_.15} parent=5 // pred_region
        %s145 = ssub.s32 %s12, 1
        %p146 = scmp.lt.s32.totalorder %s17, 1
        %s147 = scalar_select %p146, %s17, 1
        %s148 = smul.addr %s147, 20
        %s149 = smul.addr %s148, 8
        %s150 = scalar_lea.vmem %s0, %s149
        %p151 = pneg %p38
        %p152 = pneg %p35
        %p153 = pneg %p59
        %p154 = pneg %p56
        %p155 = pneg %p80
        %p156 = pneg %p77
        %p157 = pneg %p106
        %p158 = pneg %p103
        %s159 = sand.u32 %s93, 1
        %s160 = scalar_lea.sflag [#allocation3], %s159
        %s161 = sand.u32 %s93, 1
        %s162 = smul.addr %s161, 200
        %s163 = scalar_lea.vmem [#allocation2], %s162
        %p164 = scmp.lt.s32.totalorder %s17, 1
        %s165 = scalar_select %p164, %s17, 1
        %s166 = smul.addr %s165, 20
        %s167 = smul.addr %s166, 8
        %s168 = scalar_lea.vmem %s0, %s167
        %v169 = vld [vmem:[%s1] sm:$0xff]
        %v170 = vld [vmem:[%s1 + $0x8] sm:$0xff]
        %v171 = vld [vmem:[%s1 + $0x10] sm:$0xff]
        %v172 = vld [vmem:[%s1 + $0x18] sm:$0xff]
        %v173 = vld [vmem:[%s1 + $0x20] sm:$0xff]
        %v174 = vld [vmem:[%s168] sm:$0xff]
        %v175 = vld [vmem:[%s168 + $0x8] sm:$0xff]
        %v176 = vld [vmem:[%s168 + $0x10] sm:$0xff]
        %v177 = vld [vmem:[%s168 + $0x18] sm:$0xff]
        %vm178 = vcmask 261120
        %v180 = vsel %vm178, %v169, 0
        %v183 = vsel %vm178, %v170, 0
        %v186 = vsel %vm178, %v171, 0
        %v189 = vsel %vm178, %v172, 0
        %v192 = vsel %vm178, %v173, 0
        %194 = vmatprep.subr.mxu0 0.0
        %195 = vmatpush1.msra.mxu0 %v174
        %196 = vmatprep.subr.mxu0 0.0
        %197 = vmatpush1.msra.mxu0 %v175
        %198 = vmatprep.subr.mxu0 0.0
        %199 = vmatpush1.msra.mxu0 %v176
        %200 = vmatprep.subr.mxu0 0.0
        %201 = vmatpush1.msra.mxu0 %v177
        %202 = vmatprep.subr.mxu0 0.0
        %203 = vmatpush1.msra.mxu0 0.0
        %204 = vmatprep.subr.mxu0 0.0
        %205 = vmatpush1.msra.mxu0 0.0
        %206 = vmatprep.subr.mxu0 0.0
        %207 = vmatpush1.msra.mxu0 0.0
        %208 = vmatprep.subr.mxu0 0.0
        %209 = vmatpush1.msra.mxu0 0.0
        %210 = vmatprep.subr.mxu0 0.0
        %211 = vmatpush1.msra.mxu0 0.0
        %212 = vmatprep.subr.mxu0 0.0
        %213 = vmatpush1.msra.mxu0 0.0
        %214 = vmatprep.subr.mxu0 0.0
        %215 = vmatpush1.msra.mxu0 0.0
        %216 = vmatprep.subr.mxu0 0.0
        %217 = vmatpush1.msra.mxu0 0.0
        %218 = vmatprep.subr.mxu0 0.0
        %219 = vmatpush1.msra.mxu0 0.0
        %220 = vmatprep.subr.mxu0 0.0
        %221 = vmatpush1.msra.mxu0 0.0
        %222 = vmatprep.subr.mxu0 0.0
        %223 = vmatpush1.msra.mxu0 0.0
        %224 = vmatprep.subr.mxu0 0.0
        %225 = vmatpush1.msra.mxu0 0.0
        %226 = vmatprep.subr.mxu0 0.0
        %227 = vmatpush1.msra.mxu0 0.0
        %228 = vmatprep.subr.mxu0 0.0
        %229 = vmatpush1.msra.mxu0 0.0
        %230 = vmatprep.subr.mxu0 0.0
        %231 = vmatpush1.msra.mxu0 0.0
        %232 = vmatprep.subr.mxu0 0.0
        %233 = vmatpush1.msra.mxu0 0.0
        %234 = vmatprep.subr.mxu0 0.0
        %235 = vmatpush1.msra.mxu0 0.0
        %236 = vmatprep.subr.mxu0 0.0
        %237 = vmatpush1.msra.mxu0 0.0
        %238 = vmatprep.subr.mxu0 0.0
        %239 = vmatpush1.msra.mxu0 0.0
        %240 = vmatprep.subr.mxu0 0.0
        %241 = vmatpush1.msra.mxu0 0.0
        %242 = vmatprep.subr.mxu0 0.0
        %243 = vmatpush1.msra.mxu0 0.0
        %244 = vmatprep.subr.mxu0 0.0
        %245 = vmatpush1.msra.mxu0 0.0
        %246 = vmatprep.subr.mxu0 0.0
        %247 = vmatpush1.msra.mxu0 0.0
        %248 = vmatprep.subr.mxu0 0.0
        %249 = vmatpush1.msra.mxu0 0.0
        %250 = vmatprep.subr.mxu0 0.0
        %251 = vmatpush1.msra.mxu0 0.0
        %252 = vmatprep.subr.mxu0 0.0
        %253 = vmatpush1.msra.mxu0 0.0
        %254 = vmatprep.subr.mxu0 0.0
        %255 = vmatpush1.msra.mxu0 0.0
        %256 = vmatprep.subr.mxu0 0.0
        %257 = vmatpush1.msra.mxu0 0.0
        %258 = vmatprep.mubr.f32.mxu0 0.0
        %259 = vmatmul.mubr.f32.gmra.mrb[0].mxu0 %v180
        %v260 = vpop.f32.mrb[0].mxu0
        %v261 = vadd.f32 0.0, %v260
        %v262 = vpop.f32.mrb[0].mxu0
        %263 = vmatprep.mubr.f32.mxu0 0.0
        %264 = vmatmul.mubr.f32.gmra.mrb[0].mxu0 %v183
        %v265 = vpop.f32.mrb[0].mxu0
        %v266 = vadd.f32 0.0, %v265
        %v267 = vpop.f32.mrb[0].mxu0
        %268 = vmatprep.mubr.f32.mxu0 0.0
        %269 = vmatmul.mubr.f32.gmra.mrb[0].mxu0 %v186
        %v270 = vpop.f32.mrb[0].mxu0
        %v271 = vadd.f32 0.0, %v270
        %v272 = vpop.f32.mrb[0].mxu0
        %273 = vmatprep.mubr.f32.mxu0 0.0
        %274 = vmatmul.mubr.f32.gmra.mrb[0].mxu0 %v189
        %v275 = vpop.f32.mrb[0].mxu0
        %v276 = vadd.f32 0.0, %v275
        %v277 = vpop.f32.mrb[0].mxu0
        %278 = vmatprep.mubr.f32.mxu0 0.0
        %279 = vmatmul.mubr.f32.gmra.mrb[0].mxu0 %v192
        %v280 = vpop.f32.mrb[0].mxu0
        %v281 = vadd.f32 0.0, %v280
        %v282 = vpop.f32.mrb[0].mxu0
        %283 = vdwg.mxu0
        %v284 = vld [vmem:[%s2] sm:$0xff]
        %v285 = vld [vmem:[%s2 + $0x8] sm:$0xff]
        %v286 = vld [vmem:[%s2 + $0x10] sm:$0xff]
        %v287 = vld [vmem:[%s2 + $0x18] sm:$0xff]
        %v289 = vsel %vm178, %v261, 0
        %v292 = vsel %vm178, %v266, 0
        %v295 = vsel %vm178, %v271, 0
        %v298 = vsel %vm178, %v276, 0
        %v301 = vsel %vm178, %v281, 0
        %303 = vmatprep.subr.mxu0 0.0
        %304 = vmatpush1.msra.mxu0 %v284
        %305 = vmatprep.subr.mxu0 0.0
        %306 = vmatpush1.msra.mxu0 %v285
        %307 = vmatprep.subr.mxu0 0.0
        %308 = vmatpush1.msra.mxu0 %v286
        %309 = vmatprep.subr.mxu0 0.0
        %310 = vmatpush1.msra.mxu0 %v287
        %311 = vmatprep.subr.mxu0 0.0
        %312 = vmatpush1.msra.mxu0 0.0
        %313 = vmatprep.subr.mxu0 0.0
        %314 = vmatpush1.msra.mxu0 0.0
        %315 = vmatprep.subr.mxu0 0.0
        %316 = vmatpush1.msra.mxu0 0.0
        %317 = vmatprep.subr.mxu0 0.0
        %318 = vmatpush1.msra.mxu0 0.0
        %319 = vmatprep.subr.mxu0 0.0
        %320 = vmatpush1.msra.mxu0 0.0
        %321 = vmatprep.subr.mxu0 0.0
        %322 = vmatpush1.msra.mxu0 0.0
        %323 = vmatprep.subr.mxu0 0.0
        %324 = vmatpush1.msra.mxu0 0.0
        %325 = vmatprep.subr.mxu0 0.0
        %326 = vmatpush1.msra.mxu0 0.0
        %327 = vmatprep.subr.mxu0 0.0
        %328 = vmatpush1.msra.mxu0 0.0
        %329 = vmatprep.subr.mxu0 0.0
        %330 = vmatpush1.msra.mxu0 0.0
        %331 = vmatprep.subr.mxu0 0.0
        %332 = vmatpush1.msra.mxu0 0.0
        %333 = vmatprep.subr.mxu0 0.0
        %334 = vmatpush1.msra.mxu0 0.0
        %335 = vmatprep.subr.mxu0 0.0
        %336 = vmatpush1.msra.mxu0 0.0
        %337 = vmatprep.subr.mxu0 0.0
        %338 = vmatpush1.msra.mxu0 0.0
        %339 = vmatprep.subr.mxu0 0.0
        %340 = vmatpush1.msra.mxu0 0.0
        %341 = vmatprep.subr.mxu0 0.0
        %342 = vmatpush1.msra.mxu0 0.0
        %343 = vmatprep.subr.mxu0 0.0
        %344 = vmatpush1.msra.mxu0 0.0
        %345 = vmatprep.subr.mxu0 0.0
        %346 = vmatpush1.msra.mxu0 0.0
        %347 = vmatprep.subr.mxu0 0.0
        %348 = vmatpush1.msra.mxu0 0.0
        %349 = vmatprep.subr.mxu0 0.0
        %350 = vmatpush1.msra.mxu0 0.0
        %351 = vmatprep.subr.mxu0 0.0
        %352 = vmatpush1.msra.mxu0 0.0
        %353 = vmatprep.subr.mxu0 0.0
        %354 = vmatpush1.msra.mxu0 0.0
        %355 = vmatprep.subr.mxu0 0.0
        %356 = vmatpush1.msra.mxu0 0.0
        %357 = vmatprep.subr.mxu0 0.0
        %358 = vmatpush1.msra.mxu0 0.0
        %359 = vmatprep.subr.mxu0 0.0
        %360 = vmatpush1.msra.mxu0 0.0
        %361 = vmatprep.subr.mxu0 0.0
        %362 = vmatpush1.msra.mxu0 0.0
        %363 = vmatprep.subr.mxu0 0.0
        %364 = vmatpush1.msra.mxu0 0.0
        %365 = vmatprep.subr.mxu0 0.0
        %366 = vmatpush1.msra.mxu0 0.0
        %367 = vmatprep.mubr.f32.mxu0 0.0
        %368 = vmatmul.mubr.f32.gmra.mrb[0].mxu0 %v289
        %v369 = vpop.f32.mrb[0].mxu0
        %v370 = vadd.f32 0.0, %v369
        %v371 = vpop.f32.mrb[0].mxu0
        %372 = vmatprep.mubr.f32.mxu0 0.0
        %373 = vmatmul.mubr.f32.gmra.mrb[0].mxu0 %v292
        %v374 = vpop.f32.mrb[0].mxu0
        %v375 = vadd.f32 0.0, %v374
        %v376 = vpop.f32.mrb[0].mxu0
        %377 = vmatprep.mubr.f32.mxu0 0.0
        %378 = vmatmul.mubr.f32.gmra.mrb[0].mxu0 %v295
        %v379 = vpop.f32.mrb[0].mxu0
        %v380 = vadd.f32 0.0, %v379
        %v381 = vpop.f32.mrb[0].mxu0
        %382 = vmatprep.mubr.f32.mxu0 0.0
        %383 = vmatmul.mubr.f32.gmra.mrb[0].mxu0 %v298
        %v384 = vpop.f32.mrb[0].mxu0
        %v385 = vadd.f32 0.0, %v384
        %v386 = vpop.f32.mrb[0].mxu0
        %387 = vmatprep.mubr.f32.mxu0 0.0
        %388 = vmatmul.mubr.f32.gmra.mrb[0].mxu0 %v301
        %v389 = vpop.f32.mrb[0].mxu0
        %v390 = vadd.f32 0.0, %v389
        %v391 = vpop.f32.mrb[0].mxu0
        %392 = vdwg.mxu0
        %vm393 = vcmask 326656
        %394 = vst.msk [vmem:[%s163] sm:$0xff] %vm393, %v370
        %395 = vst.msk [vmem:[%s163 + $0x8] sm:$0xff] %vm393, %v375
        %396 = vst.msk [vmem:[%s163 + $0x10] sm:$0xff] %vm393, %v380
        %397 = vst.msk [vmem:[%s163 + $0x18] sm:$0xff] %vm393, %v385
        %398 = vst.msk [vmem:[%s163 + $0x20] sm:$0xff] %vm393, %v390
        %v399 = vld [vmem:[%s1] sm:$0xff]
        %v400 = vld [vmem:[%s1 + $0x8] sm:$0xff]
        %v401 = vld [vmem:[%s1 + $0x10] sm:$0xff]
        %v402 = vld [vmem:[%s1 + $0x18] sm:$0xff]
        %v403 = vld [vmem:[%s1 + $0x20] sm:$0xff]
        %s404 = scalar_lea.vmem %s168, 32
        %v405 = vld [vmem:[%s404] sm:$0xff]
        %v406 = vld [vmem:[%s404 + $0x8] sm:$0xff]
        %v407 = vld [vmem:[%s404 + $0x10] sm:$0xff]
        %v408 = vld [vmem:[%s404 + $0x18] sm:$0xff]
        %v410 = vsel %vm178, %v399, 0
        %v413 = vsel %vm178, %v400, 0
        %v416 = vsel %vm178, %v401, 0
        %v419 = vsel %vm178, %v402, 0
        %v422 = vsel %vm178, %v403, 0
        %424 = vmatprep.subr.mxu0 0.0
        %425 = vmatpush1.msra.mxu0 %v405
        %426 = vmatprep.subr.mxu0 0.0
        %427 = vmatpush1.msra.mxu0 %v406
        %428 = vmatprep.subr.mxu0 0.0
        %429 = vmatpush1.msra.mxu0 %v407
        %430 = vmatprep.subr.mxu0 0.0
        %431 = vmatpush1.msra.mxu0 %v408
        %432 = vmatprep.subr.mxu0 0.0
        %433 = vmatpush1.msra.mxu0 0.0
        %434 = vmatprep.subr.mxu0 0.0
        %435 = vmatpush1.msra.mxu0 0.0
        %436 = vmatprep.subr.mxu0 0.0
        %437 = vmatpush1.msra.mxu0 0.0
        %438 = vmatprep.subr.mxu0 0.0
        %439 = vmatpush1.msra.mxu0 0.0
        %440 = vmatprep.subr.mxu0 0.0
        %441 = vmatpush1.msra.mxu0 0.0
        %442 = vmatprep.subr.mxu0 0.0
        %443 = vmatpush1.msra.mxu0 0.0
        %444 = vmatprep.subr.mxu0 0.0
        %445 = vmatpush1.msra.mxu0 0.0
        %446 = vmatprep.subr.mxu0 0.0
        %447 = vmatpush1.msra.mxu0 0.0
        %448 = vmatprep.subr.mxu0 0.0
        %449 = vmatpush1.msra.mxu0 0.0
        %450 = vmatprep.subr.mxu0 0.0
        %451 = vmatpush1.msra.mxu0 0.0
        %452 = vmatprep.subr.mxu0 0.0
        %453 = vmatpush1.msra.mxu0 0.0
        %454 = vmatprep.subr.mxu0 0.0
        %455 = vmatpush1.msra.mxu0 0.0
        %456 = vmatprep.subr.mxu0 0.0
        %457 = vmatpush1.msra.mxu0 0.0
        %458 = vmatprep.subr.mxu0 0.0
        %459 = vmatpush1.msra.mxu0 0.0
        %460 = vmatprep.subr.mxu0 0.0
        %461 = vmatpush1.msra.mxu0 0.0
        %462 = vmatprep.subr.mxu0 0.0
        %463 = vmatpush1.msra.mxu0 0.0
        %464 = vmatprep.subr.mxu0 0.0
        %465 = vmatpush1.msra.mxu0 0.0
        %466 = vmatprep.subr.mxu0 0.0
        %467 = vmatpush1.msra.mxu0 0.0
        %468 = vmatprep.subr.mxu0 0.0
        %469 = vmatpush1.msra.mxu0 0.0
        %470 = vmatprep.subr.mxu0 0.0
        %471 = vmatpush1.msra.mxu0 0.0
        %472 = vmatprep.subr.mxu0 0.0
        %473 = vmatpush1.msra.mxu0 0.0
        %474 = vmatprep.subr.mxu0 0.0
        %475 = vmatpush1.msra.mxu0 0.0
        %476 = vmatprep.subr.mxu0 0.0
        %477 = vmatpush1.msra.mxu0 0.0
        %478 = vmatprep.subr.mxu0 0.0
        %479 = vmatpush1.msra.mxu0 0.0
        %480 = vmatprep.subr.mxu0 0.0
        %481 = vmatpush1.msra.mxu0 0.0
        %482 = vmatprep.subr.mxu0 0.0
        %483 = vmatpush1.msra.mxu0 0.0
        %484 = vmatprep.subr.mxu0 0.0
        %485 = vmatpush1.msra.mxu0 0.0
        %486 = vmatprep.subr.mxu0 0.0
        %487 = vmatpush1.msra.mxu0 0.0
        %488 = vmatprep.mubr.f32.mxu0 0.0
        %489 = vmatmul.mubr.f32.gmra.mrb[0].mxu0 %v410
        %v490 = vpop.f32.mrb[0].mxu0
        %v491 = vadd.f32 0.0, %v490
        %v492 = vpop.f32.mrb[0].mxu0
        %493 = vmatprep.mubr.f32.mxu0 0.0
        %494 = vmatmul.mubr.f32.gmra.mrb[0].mxu0 %v413
        %v495 = vpop.f32.mrb[0].mxu0
        %v496 = vadd.f32 0.0, %v495
        %v497 = vpop.f32.mrb[0].mxu0
        %498 = vmatprep.mubr.f32.mxu0 0.0
        %499 = vmatmul.mubr.f32.gmra.mrb[0].mxu0 %v416
        %v500 = vpop.f32.mrb[0].mxu0
        %v501 = vadd.f32 0.0, %v500
        %v502 = vpop.f32.mrb[0].mxu0
        %503 = vmatprep.mubr.f32.mxu0 0.0
        %504 = vmatmul.mubr.f32.gmra.mrb[0].mxu0 %v419
        %v505 = vpop.f32.mrb[0].mxu0
        %v506 = vadd.f32 0.0, %v505
        %v507 = vpop.f32.mrb[0].mxu0
        %508 = vmatprep.mubr.f32.mxu0 0.0
        %509 = vmatmul.mubr.f32.gmra.mrb[0].mxu0 %v422
        %v510 = vpop.f32.mrb[0].mxu0
        %v511 = vadd.f32 0.0, %v510
        %v512 = vpop.f32.mrb[0].mxu0
        %513 = vdwg.mxu0
        %v514 = vld [vmem:[%s2] sm:$0xff]
        %v515 = vld [vmem:[%s2 + $0x8] sm:$0xff]
        %v516 = vld [vmem:[%s2 + $0x10] sm:$0xff]
        %v517 = vld [vmem:[%s2 + $0x18] sm:$0xff]
        %v519 = vsel %vm178, %v491, 0
        %v522 = vsel %vm178, %v496, 0
        %v525 = vsel %vm178, %v501, 0
        %v528 = vsel %vm178, %v506, 0
        %v531 = vsel %vm178, %v511, 0
        %533 = vmatprep.subr.mxu0 0.0
        %534 = vmatpush1.msra.mxu0 %v514
        %535 = vmatprep.subr.mxu0 0.0
        %536 = vmatpush1.msra.mxu0 %v515
        %537 = vmatprep.subr.mxu0 0.0
        %538 = vmatpush1.msra.mxu0 %v516
        %539 = vmatprep.subr.mxu0 0.0
        %540 = vmatpush1.msra.mxu0 %v517
        %541 = vmatprep.subr.mxu0 0.0
        %542 = vmatpush1.msra.mxu0 0.0
        %543 = vmatprep.subr.mxu0 0.0
        %544 = vmatpush1.msra.mxu0 0.0
        %545 = vmatprep.subr.mxu0 0.0
        %546 = vmatpush1.msra.mxu0 0.0
        %547 = vmatprep.subr.mxu0 0.0
        %548 = vmatpush1.msra.mxu0 0.0
        %549 = vmatprep.subr.mxu0 0.0
        %550 = vmatpush1.msra.mxu0 0.0
        %551 = vmatprep.subr.mxu0 0.0
        %552 = vmatpush1.msra.mxu0 0.0
        %553 = vmatprep.subr.mxu0 0.0
        %554 = vmatpush1.msra.mxu0 0.0
        %555 = vmatprep.subr.mxu0 0.0
        %556 = vmatpush1.msra.mxu0 0.0
        %557 = vmatprep.subr.mxu0 0.0
        %558 = vmatpush1.msra.mxu0 0.0
        %559 = vmatprep.subr.mxu0 0.0
        %560 = vmatpush1.msra.mxu0 0.0
        %561 = vmatprep.subr.mxu0 0.0
        %562 = vmatpush1.msra.mxu0 0.0
        %563 = vmatprep.subr.mxu0 0.0
        %564 = vmatpush1.msra.mxu0 0.0
        %565 = vmatprep.subr.mxu0 0.0
        %566 = vmatpush1.msra.mxu0 0.0
        %567 = vmatprep.subr.mxu0 0.0
        %568 = vmatpush1.msra.mxu0 0.0
        %569 = vmatprep.subr.mxu0 0.0
        %570 = vmatpush1.msra.mxu0 0.0
        %571 = vmatprep.subr.mxu0 0.0
        %572 = vmatpush1.msra.mxu0 0.0
        %573 = vmatprep.subr.mxu0 0.0
        %574 = vmatpush1.msra.mxu0 0.0
        %575 = vmatprep.subr.mxu0 0.0
        %576 = vmatpush1.msra.mxu0 0.0
        %577 = vmatprep.subr.mxu0 0.0
        %578 = vmatpush1.msra.mxu0 0.0
        %579 = vmatprep.subr.mxu0 0.0
        %580 = vmatpush1.msra.mxu0 0.0
        %581 = vmatprep.subr.mxu0 0.0
        %582 = vmatpush1.msra.mxu0 0.0
        %583 = vmatprep.subr.mxu0 0.0
        %584 = vmatpush1.msra.mxu0 0.0
        %585 = vmatprep.subr.mxu0 0.0
        %586 = vmatpush1.msra.mxu0 0.0
        %587 = vmatprep.subr.mxu0 0.0
        %588 = vmatpush1.msra.mxu0 0.0
        %589 = vmatprep.subr.mxu0 0.0
        %590 = vmatpush1.msra.mxu0 0.0
        %591 = vmatprep.subr.mxu0 0.0
        %592 = vmatpush1.msra.mxu0 0.0
        %593 = vmatprep.subr.mxu0 0.0
        %594 = vmatpush1.msra.mxu0 0.0
        %595 = vmatprep.subr.mxu0 0.0
        %596 = vmatpush1.msra.mxu0 0.0
        %597 = vmatprep.mubr.f32.mxu0 0.0
        %598 = vmatmul.mubr.f32.gmra.mrb[0].mxu0 %v519
        %v599 = vpop.f32.mrb[0].mxu0
        %v600 = vadd.f32 0.0, %v599
        %v601 = vpop.f32.mrb[0].mxu0
        %602 = vmatprep.mubr.f32.mxu0 0.0
        %603 = vmatmul.mubr.f32.gmra.mrb[0].mxu0 %v522
        %v604 = vpop.f32.mrb[0].mxu0
        %v605 = vadd.f32 0.0, %v604
        %v606 = vpop.f32.mrb[0].mxu0
        %607 = vmatprep.mubr.f32.mxu0 0.0
        %608 = vmatmul.mubr.f32.gmra.mrb[0].mxu0 %v525
        %v609 = vpop.f32.mrb[0].mxu0
        %v610 = vadd.f32 0.0, %v609
        %v611 = vpop.f32.mrb[0].mxu0
        %612 = vmatprep.mubr.f32.mxu0 0.0
        %613 = vmatmul.mubr.f32.gmra.mrb[0].mxu0 %v528
        %v614 = vpop.f32.mrb[0].mxu0
        %v615 = vadd.f32 0.0, %v614
        %v616 = vpop.f32.mrb[0].mxu0
        %617 = vmatprep.mubr.f32.mxu0 0.0
        %618 = vmatmul.mubr.f32.gmra.mrb[0].mxu0 %v531
        %v619 = vpop.f32.mrb[0].mxu0
        %v620 = vadd.f32 0.0, %v619
        %v621 = vpop.f32.mrb[0].mxu0
        %622 = vdwg.mxu0
        %s623 = scalar_lea.vmem %s163, 40 [#allocation2]
        %624 = vst.msk [vmem:[%s623] sm:$0xff] %vm393, %v600
        %625 = vst.msk [vmem:[%s623 + $0x8] sm:$0xff] %vm393, %v605
        %626 = vst.msk [vmem:[%s623 + $0x10] sm:$0xff] %vm393, %v610
        %627 = vst.msk [vmem:[%s623 + $0x18] sm:$0xff] %vm393, %v615
        %628 = vst.msk [vmem:[%s623 + $0x20] sm:$0xff] %vm393, %v620
        %v629 = vld [vmem:[%s1] sm:$0xff]
        %v630 = vld [vmem:[%s1 + $0x8] sm:$0xff]
        %v631 = vld [vmem:[%s1 + $0x10] sm:$0xff]
        %v632 = vld [vmem:[%s1 + $0x18] sm:$0xff]
        %v633 = vld [vmem:[%s1 + $0x20] sm:$0xff]
        %s634 = scalar_lea.vmem %s168, 64
        %v635 = vld [vmem:[%s634] sm:$0xff]
        %v636 = vld [vmem:[%s634 + $0x8] sm:$0xff]
        %v637 = vld [vmem:[%s634 + $0x10] sm:$0xff]
        %v638 = vld [vmem:[%s634 + $0x18] sm:$0xff]
        %v640 = vsel %vm178, %v629, 0
        %v643 = vsel %vm178, %v630, 0
        %v646 = vsel %vm178, %v631, 0
        %v649 = vsel %vm178, %v632, 0
        %v652 = vsel %vm178, %v633, 0
        %654 = vmatprep.subr.mxu0 0.0
        %655 = vmatpush1.msra.mxu0 %v635
        %656 = vmatprep.subr.mxu0 0.0
        %657 = vmatpush1.msra.mxu0 %v636
        %658 = vmatprep.subr.mxu0 0.0
        %659 = vmatpush1.msra.mxu0 %v637
        %660 = vmatprep.subr.mxu0 0.0
        %661 = vmatpush1.msra.mxu0 %v638
        %662 = vmatprep.subr.mxu0 0.0
        %663 = vmatpush1.msra.mxu0 0.0
        %664 = vmatprep.subr.mxu0 0.0
        %665 = vmatpush1.msra.mxu0 0.0
        %666 = vmatprep.subr.mxu0 0.0
        %667 = vmatpush1.msra.mxu0 0.0
        %668 = vmatprep.subr.mxu0 0.0
        %669 = vmatpush1.msra.mxu0 0.0
        %670 = vmatprep.subr.mxu0 0.0
        %671 = vmatpush1.msra.mxu0 0.0
        %672 = vmatprep.subr.mxu0 0.0
        %673 = vmatpush1.msra.mxu0 0.0
        %674 = vmatprep.subr.mxu0 0.0
        %675 = vmatpush1.msra.mxu0 0.0
        %676 = vmatprep.subr.mxu0 0.0
        %677 = vmatpush1.msra.mxu0 0.0
        %678 = vmatprep.subr.mxu0 0.0
        %679 = vmatpush1.msra.mxu0 0.0
        %680 = vmatprep.subr.mxu0 0.0
        %681 = vmatpush1.msra.mxu0 0.0
        %682 = vmatprep.subr.mxu0 0.0
        %683 = vmatpush1.msra.mxu0 0.0
        %684 = vmatprep.subr.mxu0 0.0
        %685 = vmatpush1.msra.mxu0 0.0
        %686 = vmatprep.subr.mxu0 0.0
        %687 = vmatpush1.msra.mxu0 0.0
        %688 = vmatprep.subr.mxu0 0.0
        %689 = vmatpush1.msra.mxu0 0.0
        %690 = vmatprep.subr.mxu0 0.0
        %691 = vmatpush1.msra.mxu0 0.0
        %692 = vmatprep.subr.mxu0 0.0
        %693 = vmatpush1.msra.mxu0 0.0
        %694 = vmatprep.subr.mxu0 0.0
        %695 = vmatpush1.msra.mxu0 0.0
        %696 = vmatprep.subr.mxu0 0.0
        %697 = vmatpush1.msra.mxu0 0.0
        %698 = vmatprep.subr.mxu0 0.0
        %699 = vmatpush1.msra.mxu0 0.0
        %700 = vmatprep.subr.mxu0 0.0
        %701 = vmatpush1.msra.mxu0 0.0
        %702 = vmatprep.subr.mxu0 0.0
        %703 = vmatpush1.msra.mxu0 0.0
        %704 = vmatprep.subr.mxu0 0.0
        %705 = vmatpush1.msra.mxu0 0.0
        %706 = vmatprep.subr.mxu0 0.0
        %707 = vmatpush1.msra.mxu0 0.0
        %708 = vmatprep.subr.mxu0 0.0
        %709 = vmatpush1.msra.mxu0 0.0
        %710 = vmatprep.subr.mxu0 0.0
        %711 = vmatpush1.msra.mxu0 0.0
        %712 = vmatprep.subr.mxu0 0.0
        %713 = vmatpush1.msra.mxu0 0.0
        %714 = vmatprep.subr.mxu0 0.0
        %715 = vmatpush1.msra.mxu0 0.0
        %716 = vmatprep.subr.mxu0 0.0
        %717 = vmatpush1.msra.mxu0 0.0
        %718 = vmatprep.mubr.f32.mxu0 0.0
        %719 = vmatmul.mubr.f32.gmra.mrb[0].mxu0 %v640
        %v720 = vpop.f32.mrb[0].mxu0
        %v721 = vadd.f32 0.0, %v720
        %v722 = vpop.f32.mrb[0].mxu0
        %723 = vmatprep.mubr.f32.mxu0 0.0
        %724 = vmatmul.mubr.f32.gmra.mrb[0].mxu0 %v643
        %v725 = vpop.f32.mrb[0].mxu0
        %v726 = vadd.f32 0.0, %v725
        %v727 = vpop.f32.mrb[0].mxu0
        %728 = vmatprep.mubr.f32.mxu0 0.0
        %729 = vmatmul.mubr.f32.gmra.mrb[0].mxu0 %v646
        %v730 = vpop.f32.mrb[0].mxu0
        %v731 = vadd.f32 0.0, %v730
        %v732 = vpop.f32.mrb[0].mxu0
        %733 = vmatprep.mubr.f32.mxu0 0.0
        %734 = vmatmul.mubr.f32.gmra.mrb[0].mxu0 %v649
        %v735 = vpop.f32.mrb[0].mxu0
        %v736 = vadd.f32 0.0, %v735
        %v737 = vpop.f32.mrb[0].mxu0
        %738 = vmatprep.mubr.f32.mxu0 0.0
        %739 = vmatmul.mubr.f32.gmra.mrb[0].mxu0 %v652
        %v740 = vpop.f32.mrb[0].mxu0
        %v741 = vadd.f32 0.0, %v740
        %v742 = vpop.f32.mrb[0].mxu0
        %743 = vdwg.mxu0
        %v744 = vld [vmem:[%s2] sm:$0xff]
        %v745 = vld [vmem:[%s2 + $0x8] sm:$0xff]
        %v746 = vld [vmem:[%s2 + $0x10] sm:$0xff]
        %v747 = vld [vmem:[%s2 + $0x18] sm:$0xff]
        %v749 = vsel %vm178, %v721, 0
        %v752 = vsel %vm178, %v726, 0
        %v755 = vsel %vm178, %v731, 0
        %v758 = vsel %vm178, %v736, 0
        %v761 = vsel %vm178, %v741, 0
        %763 = vmatprep.subr.mxu0 0.0
        %764 = vmatpush1.msra.mxu0 %v744
        %765 = vmatprep.subr.mxu0 0.0
        %766 = vmatpush1.msra.mxu0 %v745
        %767 = vmatprep.subr.mxu0 0.0
        %768 = vmatpush1.msra.mxu0 %v746
        %769 = vmatprep.subr.mxu0 0.0
        %770 = vmatpush1.msra.mxu0 %v747
        %771 = vmatprep.subr.mxu0 0.0
        %772 = vmatpush1.msra.mxu0 0.0
        %773 = vmatprep.subr.mxu0 0.0
        %774 = vmatpush1.msra.mxu0 0.0
        %775 = vmatprep.subr.mxu0 0.0
        %776 = vmatpush1.msra.mxu0 0.0
        %777 = vmatprep.subr.mxu0 0.0
        %778 = vmatpush1.msra.mxu0 0.0
        %779 = vmatprep.subr.mxu0 0.0
        %780 = vmatpush1.msra.mxu0 0.0
        %781 = vmatprep.subr.mxu0 0.0
        %782 = vmatpush1.msra.mxu0 0.0
        %783 = vmatprep.subr.mxu0 0.0
        %784 = vmatpush1.msra.mxu0 0.0
        %785 = vmatprep.subr.mxu0 0.0
        %786 = vmatpush1.msra.mxu0 0.0
        %787 = vmatprep.subr.mxu0 0.0
        %788 = vmatpush1.msra.mxu0 0.0
        %789 = vmatprep.subr.mxu0 0.0
        %790 = vmatpush1.msra.mxu0 0.0
        %791 = vmatprep.subr.mxu0 0.0
        %792 = vmatpush1.msra.mxu0 0.0
        %793 = vmatprep.subr.mxu0 0.0
        %794 = vmatpush1.msra.mxu0 0.0
        %795 = vmatprep.subr.mxu0 0.0
        %796 = vmatpush1.msra.mxu0 0.0
        %797 = vmatprep.subr.mxu0 0.0
        %798 = vmatpush1.msra.mxu0 0.0
        %799 = vmatprep.subr.mxu0 0.0
        %800 = vmatpush1.msra.mxu0 0.0
        %801 = vmatprep.subr.mxu0 0.0
        %802 = vmatpush1.msra.mxu0 0.0
        %803 = vmatprep.subr.mxu0 0.0
        %804 = vmatpush1.msra.mxu0 0.0
        %805 = vmatprep.subr.mxu0 0.0
        %806 = vmatpush1.msra.mxu0 0.0
        %807 = vmatprep.subr.mxu0 0.0
        %808 = vmatpush1.msra.mxu0 0.0
        %809 = vmatprep.subr.mxu0 0.0
        %810 = vmatpush1.msra.mxu0 0.0
        %811 = vmatprep.subr.mxu0 0.0
        %812 = vmatpush1.msra.mxu0 0.0
        %813 = vmatprep.subr.mxu0 0.0
        %814 = vmatpush1.msra.mxu0 0.0
        %815 = vmatprep.subr.mxu0 0.0
        %816 = vmatpush1.msra.mxu0 0.0
        %817 = vmatprep.subr.mxu0 0.0
        %818 = vmatpush1.msra.mxu0 0.0
        %819 = vmatprep.subr.mxu0 0.0
        %820 = vmatpush1.msra.mxu0 0.0
        %821 = vmatprep.subr.mxu0 0.0
        %822 = vmatpush1.msra.mxu0 0.0
        %823 = vmatprep.subr.mxu0 0.0
        %824 = vmatpush1.msra.mxu0 0.0
        %825 = vmatprep.subr.mxu0 0.0
        %826 = vmatpush1.msra.mxu0 0.0
        %827 = vmatprep.mubr.f32.mxu0 0.0
        %828 = vmatmul.mubr.f32.gmra.mrb[0].mxu0 %v749
        %v829 = vpop.f32.mrb[0].mxu0
        %v830 = vadd.f32 0.0, %v829
        %v831 = vpop.f32.mrb[0].mxu0
        %832 = vmatprep.mubr.f32.mxu0 0.0
        %833 = vmatmul.mubr.f32.gmra.mrb[0].mxu0 %v752
        %v834 = vpop.f32.mrb[0].mxu0
        %v835 = vadd.f32 0.0, %v834
        %v836 = vpop.f32.mrb[0].mxu0
        %837 = vmatprep.mubr.f32.mxu0 0.0
        %838 = vmatmul.mubr.f32.gmra.mrb[0].mxu0 %v755
        %v839 = vpop.f32.mrb[0].mxu0
        %v840 = vadd.f32 0.0, %v839
        %v841 = vpop.f32.mrb[0].mxu0
        %842 = vmatprep.mubr.f32.mxu0 0.0
        %843 = vmatmul.mubr.f32.gmra.mrb[0].mxu0 %v758
        %v844 = vpop.f32.mrb[0].mxu0
        %v845 = vadd.f32 0.0, %v844
        %v846 = vpop.f32.mrb[0].mxu0
        %847 = vmatprep.mubr.f32.mxu0 0.0
        %848 = vmatmul.mubr.f32.gmra.mrb[0].mxu0 %v761
        %v849 = vpop.f32.mrb[0].mxu0
        %v850 = vadd.f32 0.0, %v849
        %v851 = vpop.f32.mrb[0].mxu0
        %852 = vdwg.mxu0
        %s853 = scalar_lea.vmem %s163, 80 [#allocation2]
        %854 = vst.msk [vmem:[%s853] sm:$0xff] %vm393, %v830
        %855 = vst.msk [vmem:[%s853 + $0x8] sm:$0xff] %vm393, %v835
        %856 = vst.msk [vmem:[%s853 + $0x10] sm:$0xff] %vm393, %v840
        %857 = vst.msk [vmem:[%s853 + $0x18] sm:$0xff] %vm393, %v845
        %858 = vst.msk [vmem:[%s853 + $0x20] sm:$0xff] %vm393, %v850
        %v859 = vld [vmem:[%s1] sm:$0xff]
        %v860 = vld [vmem:[%s1 + $0x8] sm:$0xff]
        %v861 = vld [vmem:[%s1 + $0x10] sm:$0xff]
        %v862 = vld [vmem:[%s1 + $0x18] sm:$0xff]
        %v863 = vld [vmem:[%s1 + $0x20] sm:$0xff]
        %s864 = scalar_lea.vmem %s168, 96
        %v865 = vld [vmem:[%s864] sm:$0xff]
        %v866 = vld [vmem:[%s864 + $0x8] sm:$0xff]
        %v867 = vld [vmem:[%s864 + $0x10] sm:$0xff]
        %v868 = vld [vmem:[%s864 + $0x18] sm:$0xff]
        %v870 = vsel %vm178, %v859, 0
        %v873 = vsel %vm178, %v860, 0
        %v876 = vsel %vm178, %v861, 0
        %v879 = vsel %vm178, %v862, 0
        %v882 = vsel %vm178, %v863, 0
        %884 = vmatprep.subr.mxu0 0.0
        %885 = vmatpush1.msra.mxu0 %v865
        %886 = vmatprep.subr.mxu0 0.0
        %887 = vmatpush1.msra.mxu0 %v866
        %888 = vmatprep.subr.mxu0 0.0
        %889 = vmatpush1.msra.mxu0 %v867
        %890 = vmatprep.subr.mxu0 0.0
        %891 = vmatpush1.msra.mxu0 %v868
        %892 = vmatprep.subr.mxu0 0.0
        %893 = vmatpush1.msra.mxu0 0.0
        %894 = vmatprep.subr.mxu0 0.0
        %895 = vmatpush1.msra.mxu0 0.0
        %896 = vmatprep.subr.mxu0 0.0
        %897 = vmatpush1.msra.mxu0 0.0
        %898 = vmatprep.subr.mxu0 0.0
        %899 = vmatpush1.msra.mxu0 0.0
        %900 = vmatprep.subr.mxu0 0.0
        %901 = vmatpush1.msra.mxu0 0.0
        %902 = vmatprep.subr.mxu0 0.0
        %903 = vmatpush1.msra.mxu0 0.0
        %904 = vmatprep.subr.mxu0 0.0
        %905 = vmatpush1.msra.mxu0 0.0
        %906 = vmatprep.subr.mxu0 0.0
        %907 = vmatpush1.msra.mxu0 0.0
        %908 = vmatprep.subr.mxu0 0.0
        %909 = vmatpush1.msra.mxu0 0.0
        %910 = vmatprep.subr.mxu0 0.0
        %911 = vmatpush1.msra.mxu0 0.0
        %912 = vmatprep.subr.mxu0 0.0
        %913 = vmatpush1.msra.mxu0 0.0
        %914 = vmatprep.subr.mxu0 0.0
        %915 = vmatpush1.msra.mxu0 0.0
        %916 = vmatprep.subr.mxu0 0.0
        %917 = vmatpush1.msra.mxu0 0.0
        %918 = vmatprep.subr.mxu0 0.0
        %919 = vmatpush1.msra.mxu0 0.0
        %920 = vmatprep.subr.mxu0 0.0
        %921 = vmatpush1.msra.mxu0 0.0
        %922 = vmatprep.subr.mxu0 0.0
        %923 = vmatpush1.msra.mxu0 0.0
        %924 = vmatprep.subr.mxu0 0.0
        %925 = vmatpush1.msra.mxu0 0.0
        %926 = vmatprep.subr.mxu0 0.0
        %927 = vmatpush1.msra.mxu0 0.0
        %928 = vmatprep.subr.mxu0 0.0
        %929 = vmatpush1.msra.mxu0 0.0
        %930 = vmatprep.subr.mxu0 0.0
        %931 = vmatpush1.msra.mxu0 0.0
        %932 = vmatprep.subr.mxu0 0.0
        %933 = vmatpush1.msra.mxu0 0.0
        %934 = vmatprep.subr.mxu0 0.0
        %935 = vmatpush1.msra.mxu0 0.0
        %936 = vmatprep.subr.mxu0 0.0
        %937 = vmatpush1.msra.mxu0 0.0
        %938 = vmatprep.subr.mxu0 0.0
        %939 = vmatpush1.msra.mxu0 0.0
        %940 = vmatprep.subr.mxu0 0.0
        %941 = vmatpush1.msra.mxu0 0.0
        %942 = vmatprep.subr.mxu0 0.0
        %943 = vmatpush1.msra.mxu0 0.0
        %944 = vmatprep.subr.mxu0 0.0
        %945 = vmatpush1.msra.mxu0 0.0
        %946 = vmatprep.subr.mxu0 0.0
        %947 = vmatpush1.msra.mxu0 0.0
        %948 = vmatprep.mubr.f32.mxu0 0.0
        %949 = vmatmul.mubr.f32.gmra.mrb[0].mxu0 %v870
        %v950 = vpop.f32.mrb[0].mxu0
        %v951 = vadd.f32 0.0, %v950
        %v952 = vpop.f32.mrb[0].mxu0
        %953 = vmatprep.mubr.f32.mxu0 0.0
        %954 = vmatmul.mubr.f32.gmra.mrb[0].mxu0 %v873
        %v955 = vpop.f32.mrb[0].mxu0
        %v956 = vadd.f32 0.0, %v955
        %v957 = vpop.f32.mrb[0].mxu0
        %958 = vmatprep.mubr.f32.mxu0 0.0
        %959 = vmatmul.mubr.f32.gmra.mrb[0].mxu0 %v876
        %v960 = vpop.f32.mrb[0].mxu0
        %v961 = vadd.f32 0.0, %v960
        %v962 = vpop.f32.mrb[0].mxu0
        %963 = vmatprep.mubr.f32.mxu0 0.0
        %964 = vmatmul.mubr.f32.gmra.mrb[0].mxu0 %v879
        %v965 = vpop.f32.mrb[0].mxu0
        %v966 = vadd.f32 0.0, %v965
        %v967 = vpop.f32.mrb[0].mxu0
        %968 = vmatprep.mubr.f32.mxu0 0.0
        %969 = vmatmul.mubr.f32.gmra.mrb[0].mxu0 %v882
        %v970 = vpop.f32.mrb[0].mxu0
        %v971 = vadd.f32 0.0, %v970
        %v972 = vpop.f32.mrb[0].mxu0
        %973 = vdwg.mxu0
        %v974 = vld [vmem:[%s2] sm:$0xff]
        %v975 = vld [vmem:[%s2 + $0x8] sm:$0xff]
        %v976 = vld [vmem:[%s2 + $0x10] sm:$0xff]
        %v977 = vld [vmem:[%s2 + $0x18] sm:$0xff]
        %v979 = vsel %vm178, %v951, 0
        %v982 = vsel %vm178, %v956, 0
        %v985 = vsel %vm178, %v961, 0
        %v988 = vsel %vm178, %v966, 0
        %v991 = vsel %vm178, %v971, 0
        %993 = vmatprep.subr.mxu0 0.0
        %994 = vmatpush1.msra.mxu0 %v974
        %995 = vmatprep.subr.mxu0 0.0
        %996 = vmatpush1.msra.mxu0 %v975
        %997 = vmatprep.subr.mxu0 0.0
        %998 = vmatpush1.msra.mxu0 %v976
        %999 = vmatprep.subr.mxu0 0.0
        %1000 = vmatpush1.msra.mxu0 %v977
        %1001 = vmatprep.subr.mxu0 0.0
        %1002 = vmatpush1.msra.mxu0 0.0
        %1003 = vmatprep.subr.mxu0 0.0
        %1004 = vmatpush1.msra.mxu0 0.0
        %1005 = vmatprep.subr.mxu0 0.0
        %1006 = vmatpush1.msra.mxu0 0.0
        %1007 = vmatprep.subr.mxu0 0.0
        %1008 = vmatpush1.msra.mxu0 0.0
        %1009 = vmatprep.subr.mxu0 0.0
        %1010 = vmatpush1.msra.mxu0 0.0
        %1011 = vmatprep.subr.mxu0 0.0
        %1012 = vmatpush1.msra.mxu0 0.0
        %1013 = vmatprep.subr.mxu0 0.0
        %1014 = vmatpush1.msra.mxu0 0.0
        %1015 = vmatprep.subr.mxu0 0.0
        %1016 = vmatpush1.msra.mxu0 0.0
        %1017 = vmatprep.subr.mxu0 0.0
        %1018 = vmatpush1.msra.mxu0 0.0
        %1019 = vmatprep.subr.mxu0 0.0
        %1020 = vmatpush1.msra.mxu0 0.0
        %1021 = vmatprep.subr.mxu0 0.0
        %1022 = vmatpush1.msra.mxu0 0.0
        %1023 = vmatprep.subr.mxu0 0.0
        %1024 = vmatpush1.msra.mxu0 0.0
        %1025 = vmatprep.subr.mxu0 0.0
        %1026 = vmatpush1.msra.mxu0 0.0
        %1027 = vmatprep.subr.mxu0 0.0
        %1028 = vmatpush1.msra.mxu0 0.0
        %1029 = vmatprep.subr.mxu0 0.0
        %1030 = vmatpush1.msra.mxu0 0.0
        %1031 = vmatprep.subr.mxu0 0.0
        %1032 = vmatpush1.msra.mxu0 0.0
        %1033 = vmatprep.subr.mxu0 0.0
        %1034 = vmatpush1.msra.mxu0 0.0
        %1035 = vmatprep.subr.mxu0 0.0
        %1036 = vmatpush1.msra.mxu0 0.0
        %1037 = vmatprep.subr.mxu0 0.0
        %1038 = vmatpush1.msra.mxu0 0.0
        %1039 = vmatprep.subr.mxu0 0.0
        %1040 = vmatpush1.msra.mxu0 0.0
        %1041 = vmatprep.subr.mxu0 0.0
        %1042 = vmatpush1.msra.mxu0 0.0
        %1043 = vmatprep.subr.mxu0 0.0
        %1044 = vmatpush1.msra.mxu0 0.0
        %1045 = vmatprep.subr.mxu0 0.0
        %1046 = vmatpush1.msra.mxu0 0.0
        %1047 = vmatprep.subr.mxu0 0.0
        %1048 = vmatpush1.msra.mxu0 0.0
        %1049 = vmatprep.subr.mxu0 0.0
        %1050 = vmatpush1.msra.mxu0 0.0
        %1051 = vmatprep.subr.mxu0 0.0
        %1052 = vmatpush1.msra.mxu0 0.0
        %1053 = vmatprep.subr.mxu0 0.0
        %1054 = vmatpush1.msra.mxu0 0.0
        %1055 = vmatprep.subr.mxu0 0.0
        %1056 = vmatpush1.msra.mxu0 0.0
        %1057 = vmatprep.mubr.f32.mxu0 0.0
        %1058 = vmatmul.mubr.f32.gmra.mrb[0].mxu0 %v979
        %v1059 = vpop.f32.mrb[0].mxu0
        %v1060 = vadd.f32 0.0, %v1059
        %v1061 = vpop.f32.mrb[0].mxu0
        %1062 = vmatprep.mubr.f32.mxu0 0.0
        %1063 = vmatmul.mubr.f32.gmra.mrb[0].mxu0 %v982
        %v1064 = vpop.f32.mrb[0].mxu0
        %v1065 = vadd.f32 0.0, %v1064
        %v1066 = vpop.f32.mrb[0].mxu0
        %1067 = vmatprep.mubr.f32.mxu0 0.0
        %1068 = vmatmul.mubr.f32.gmra.mrb[0].mxu0 %v985
        %v1069 = vpop.f32.mrb[0].mxu0
        %v1070 = vadd.f32 0.0, %v1069
        %v1071 = vpop.f32.mrb[0].mxu0
        %1072 = vmatprep.mubr.f32.mxu0 0.0
        %1073 = vmatmul.mubr.f32.gmra.mrb[0].mxu0 %v988
        %v1074 = vpop.f32.mrb[0].mxu0
        %v1075 = vadd.f32 0.0, %v1074
        %v1076 = vpop.f32.mrb[0].mxu0
        %1077 = vmatprep.mubr.f32.mxu0 0.0
        %1078 = vmatmul.mubr.f32.gmra.mrb[0].mxu0 %v991
        %v1079 = vpop.f32.mrb[0].mxu0
        %v1080 = vadd.f32 0.0, %v1079
        %v1081 = vpop.f32.mrb[0].mxu0
        %1082 = vdwg.mxu0
        %s1083 = scalar_lea.vmem %s163, 120 [#allocation2]
        %1084 = vst.msk [vmem:[%s1083] sm:$0xff] %vm393, %v1060
        %1085 = vst.msk [vmem:[%s1083 + $0x8] sm:$0xff] %vm393, %v1065
        %1086 = vst.msk [vmem:[%s1083 + $0x10] sm:$0xff] %vm393, %v1070
        %1087 = vst.msk [vmem:[%s1083 + $0x18] sm:$0xff] %vm393, %v1075
        %1088 = vst.msk [vmem:[%s1083 + $0x20] sm:$0xff] %vm393, %v1080
        %v1089 = vld [vmem:[%s1] sm:$0xff]
        %v1090 = vld [vmem:[%s1 + $0x8] sm:$0xff]
        %v1091 = vld [vmem:[%s1 + $0x10] sm:$0xff]
        %v1092 = vld [vmem:[%s1 + $0x18] sm:$0xff]
        %v1093 = vld [vmem:[%s1 + $0x20] sm:$0xff]
        %s1094 = scalar_lea.vmem %s168, 128
        %v1095 = vld [vmem:[%s1094] sm:$0xff]
        %v1096 = vld [vmem:[%s1094 + $0x8] sm:$0xff]
        %v1097 = vld [vmem:[%s1094 + $0x10] sm:$0xff]
        %v1098 = vld [vmem:[%s1094 + $0x18] sm:$0xff]
        %v1100 = vsel %vm178, %v1089, 0
        %v1103 = vsel %vm178, %v1090, 0
        %v1106 = vsel %vm178, %v1091, 0
        %v1109 = vsel %vm178, %v1092, 0
        %v1112 = vsel %vm178, %v1093, 0
        %1114 = vmatprep.subr.mxu0 0.0
        %1115 = vmatpush1.msra.mxu0 %v1095
        %1116 = vmatprep.subr.mxu0 0.0
        %1117 = vmatpush1.msra.mxu0 %v1096
        %1118 = vmatprep.subr.mxu0 0.0
        %1119 = vmatpush1.msra.mxu0 %v1097
        %1120 = vmatprep.subr.mxu0 0.0
        %1121 = vmatpush1.msra.mxu0 %v1098
        %1122 = vmatprep.subr.mxu0 0.0
        %1123 = vmatpush1.msra.mxu0 0.0
        %1124 = vmatprep.subr.mxu0 0.0
        %1125 = vmatpush1.msra.mxu0 0.0
        %1126 = vmatprep.subr.mxu0 0.0
        %1127 = vmatpush1.msra.mxu0 0.0
        %1128 = vmatprep.subr.mxu0 0.0
        %1129 = vmatpush1.msra.mxu0 0.0
        %1130 = vmatprep.subr.mxu0 0.0
        %1131 = vmatpush1.msra.mxu0 0.0
        %1132 = vmatprep.subr.mxu0 0.0
        %1133 = vmatpush1.msra.mxu0 0.0
        %1134 = vmatprep.subr.mxu0 0.0
        %1135 = vmatpush1.msra.mxu0 0.0
        %1136 = vmatprep.subr.mxu0 0.0
        %1137 = vmatpush1.msra.mxu0 0.0
        %1138 = vmatprep.subr.mxu0 0.0
        %1139 = vmatpush1.msra.mxu0 0.0
        %1140 = vmatprep.subr.mxu0 0.0
        %1141 = vmatpush1.msra.mxu0 0.0
        %1142 = vmatprep.subr.mxu0 0.0
        %1143 = vmatpush1.msra.mxu0 0.0
        %1144 = vmatprep.subr.mxu0 0.0
        %1145 = vmatpush1.msra.mxu0 0.0
        %1146 = vmatprep.subr.mxu0 0.0
        %1147 = vmatpush1.msra.mxu0 0.0
        %1148 = vmatprep.subr.mxu0 0.0
        %1149 = vmatpush1.msra.mxu0 0.0
        %1150 = vmatprep.subr.mxu0 0.0
        %1151 = vmatpush1.msra.mxu0 0.0
        %1152 = vmatprep.subr.mxu0 0.0
        %1153 = vmatpush1.msra.mxu0 0.0
        %1154 = vmatprep.subr.mxu0 0.0
        %1155 = vmatpush1.msra.mxu0 0.0
        %1156 = vmatprep.subr.mxu0 0.0
        %1157 = vmatpush1.msra.mxu0 0.0
        %1158 = vmatprep.subr.mxu0 0.0
        %1159 = vmatpush1.msra.mxu0 0.0
        %1160 = vmatprep.subr.mxu0 0.0
        %1161 = vmatpush1.msra.mxu0 0.0
        %1162 = vmatprep.subr.mxu0 0.0
        %1163 = vmatpush1.msra.mxu0 0.0
        %1164 = vmatprep.subr.mxu0 0.0
        %1165 = vmatpush1.msra.mxu0 0.0
        %1166 = vmatprep.subr.mxu0 0.0
        %1167 = vmatpush1.msra.mxu0 0.0
        %1168 = vmatprep.subr.mxu0 0.0
        %1169 = vmatpush1.msra.mxu0 0.0
        %1170 = vmatprep.subr.mxu0 0.0
        %1171 = vmatpush1.msra.mxu0 0.0
        %1172 = vmatprep.subr.mxu0 0.0
        %1173 = vmatpush1.msra.mxu0 0.0
        %1174 = vmatprep.subr.mxu0 0.0
        %1175 = vmatpush1.msra.mxu0 0.0
        %1176 = vmatprep.subr.mxu0 0.0
        %1177 = vmatpush1.msra.mxu0 0.0
        %1178 = vmatprep.mubr.f32.mxu0 0.0
        %1179 = vmatmul.mubr.f32.gmra.mrb[0].mxu0 %v1100
        %v1180 = vpop.f32.mrb[0].mxu0
        %v1181 = vadd.f32 0.0, %v1180
        %v1182 = vpop.f32.mrb[0].mxu0
        %1183 = vmatprep.mubr.f32.mxu0 0.0
        %1184 = vmatmul.mubr.f32.gmra.mrb[0].mxu0 %v1103
        %v1185 = vpop.f32.mrb[0].mxu0
        %v1186 = vadd.f32 0.0, %v1185
        %v1187 = vpop.f32.mrb[0].mxu0
        %1188 = vmatprep.mubr.f32.mxu0 0.0
        %1189 = vmatmul.mubr.f32.gmra.mrb[0].mxu0 %v1106
        %v1190 = vpop.f32.mrb[0].mxu0
        %v1191 = vadd.f32 0.0, %v1190
        %v1192 = vpop.f32.mrb[0].mxu0
        %1193 = vmatprep.mubr.f32.mxu0 0.0
        %1194 = vmatmul.mubr.f32.gmra.mrb[0].mxu0 %v1109
        %v1195 = vpop.f32.mrb[0].mxu0
        %v1196 = vadd.f32 0.0, %v1195
        %v1197 = vpop.f32.mrb[0].mxu0
        %1198 = vmatprep.mubr.f32.mxu0 0.0
        %1199 = vmatmul.mubr.f32.gmra.mrb[0].mxu0 %v1112
        %v1200 = vpop.f32.mrb[0].mxu0
        %v1201 = vadd.f32 0.0, %v1200
        %v1202 = vpop.f32.mrb[0].mxu0
        %1203 = vdwg.mxu0
        %v1204 = vld [vmem:[%s2] sm:$0xff]
        %v1205 = vld [vmem:[%s2 + $0x8] sm:$0xff]
        %v1206 = vld [vmem:[%s2 + $0x10] sm:$0xff]
        %v1207 = vld [vmem:[%s2 + $0x18] sm:$0xff]
        %v1209 = vsel %vm178, %v1181, 0
        %v1212 = vsel %vm178, %v1186, 0
        %v1215 = vsel %vm178, %v1191, 0
        %v1218 = vsel %vm178, %v1196, 0
        %v1221 = vsel %vm178, %v1201, 0
        %1223 = vmatprep.subr.mxu0 0.0
        %1224 = vmatpush1.msra.mxu0 %v1204
        %1225 = vmatprep.subr.mxu0 0.0
        %1226 = vmatpush1.msra.mxu0 %v1205
        %1227 = vmatprep.subr.mxu0 0.0
        %1228 = vmatpush1.msra.mxu0 %v1206
        %1229 = vmatprep.subr.mxu0 0.0
        %1230 = vmatpush1.msra.mxu0 %v1207
        %1231 = vmatprep.subr.mxu0 0.0
        %1232 = vmatpush1.msra.mxu0 0.0
        %1233 = vmatprep.subr.mxu0 0.0
        %1234 = vmatpush1.msra.mxu0 0.0
        %1235 = vmatprep.subr.mxu0 0.0
        %1236 = vmatpush1.msra.mxu0 0.0
        %1237 = vmatprep.subr.mxu0 0.0
        %1238 = vmatpush1.msra.mxu0 0.0
        %1239 = vmatprep.subr.mxu0 0.0
        %1240 = vmatpush1.msra.mxu0 0.0
        %1241 = vmatprep.subr.mxu0 0.0
        %1242 = vmatpush1.msra.mxu0 0.0
        %1243 = vmatprep.subr.mxu0 0.0
        %1244 = vmatpush1.msra.mxu0 0.0
        %1245 = vmatprep.subr.mxu0 0.0
        %1246 = vmatpush1.msra.mxu0 0.0
        %1247 = vmatprep.subr.mxu0 0.0
        %1248 = vmatpush1.msra.mxu0 0.0
        %1249 = vmatprep.subr.mxu0 0.0
        %1250 = vmatpush1.msra.mxu0 0.0
        %1251 = vmatprep.subr.mxu0 0.0
        %1252 = vmatpush1.msra.mxu0 0.0
        %1253 = vmatprep.subr.mxu0 0.0
        %1254 = vmatpush1.msra.mxu0 0.0
        %1255 = vmatprep.subr.mxu0 0.0
        %1256 = vmatpush1.msra.mxu0 0.0
        %1257 = vmatprep.subr.mxu0 0.0
        %1258 = vmatpush1.msra.mxu0 0.0
        %1259 = vmatprep.subr.mxu0 0.0
        %1260 = vmatpush1.msra.mxu0 0.0
        %1261 = vmatprep.subr.mxu0 0.0
        %1262 = vmatpush1.msra.mxu0 0.0
        %1263 = vmatprep.subr.mxu0 0.0
        %1264 = vmatpush1.msra.mxu0 0.0
        %1265 = vmatprep.subr.mxu0 0.0
        %1266 = vmatpush1.msra.mxu0 0.0
        %1267 = vmatprep.subr.mxu0 0.0
        %1268 = vmatpush1.msra.mxu0 0.0
        %1269 = vmatprep.subr.mxu0 0.0
        %1270 = vmatpush1.msra.mxu0 0.0
        %1271 = vmatprep.subr.mxu0 0.0
        %1272 = vmatpush1.msra.mxu0 0.0
        %1273 = vmatprep.subr.mxu0 0.0
        %1274 = vmatpush1.msra.mxu0 0.0
        %1275 = vmatprep.subr.mxu0 0.0
        %1276 = vmatpush1.msra.mxu0 0.0
        %1277 = vmatprep.subr.mxu0 0.0
        %1278 = vmatpush1.msra.mxu0 0.0
        %1279 = vmatprep.subr.mxu0 0.0
        %1280 = vmatpush1.msra.mxu0 0.0
        %1281 = vmatprep.subr.mxu0 0.0
        %1282 = vmatpush1.msra.mxu0 0.0
        %1283 = vmatprep.subr.mxu0 0.0
        %1284 = vmatpush1.msra.mxu0 0.0
        %1285 = vmatprep.subr.mxu0 0.0
        %1286 = vmatpush1.msra.mxu0 0.0
        %1287 = vmatprep.mubr.f32.mxu0 0.0
        %1288 = vmatmul.mubr.f32.gmra.mrb[0].mxu0 %v1209
        %v1289 = vpop.f32.mrb[0].mxu0
        %v1290 = vadd.f32 0.0, %v1289
        %v1291 = vpop.f32.mrb[0].mxu0
        %1292 = vmatprep.mubr.f32.mxu0 0.0
        %1293 = vmatmul.mubr.f32.gmra.mrb[0].mxu0 %v1212
        %v1294 = vpop.f32.mrb[0].mxu0
        %v1295 = vadd.f32 0.0, %v1294
        %v1296 = vpop.f32.mrb[0].mxu0
        %1297 = vmatprep.mubr.f32.mxu0 0.0
        %1298 = vmatmul.mubr.f32.gmra.mrb[0].mxu0 %v1215
        %v1299 = vpop.f32.mrb[0].mxu0
        %v1300 = vadd.f32 0.0, %v1299
        %v1301 = vpop.f32.mrb[0].mxu0
        %1302 = vmatprep.mubr.f32.mxu0 0.0
        %1303 = vmatmul.mubr.f32.gmra.mrb[0].mxu0 %v1218
        %v1304 = vpop.f32.mrb[0].mxu0
        %v1305 = vadd.f32 0.0, %v1304
        %v1306 = vpop.f32.mrb[0].mxu0
        %1307 = vmatprep.mubr.f32.mxu0 0.0
        %1308 = vmatmul.mubr.f32.gmra.mrb[0].mxu0 %v1221
        %v1309 = vpop.f32.mrb[0].mxu0
        %v1310 = vadd.f32 0.0, %v1309
        %v1311 = vpop.f32.mrb[0].mxu0
        %1312 = vdwg.mxu0
        %s1313 = scalar_lea.vmem %s163, 160 [#allocation2]
        %1314 = vst.msk [vmem:[%s1313] sm:$0xff] %vm393, %v1290
        %1315 = vst.msk [vmem:[%s1313 + $0x8] sm:$0xff] %vm393, %v1295
        %1316 = vst.msk [vmem:[%s1313 + $0x10] sm:$0xff] %vm393, %v1300
        %1317 = vst.msk [vmem:[%s1313 + $0x18] sm:$0xff] %vm393, %v1305
        %1318 = vst.msk [vmem:[%s1313 + $0x20] sm:$0xff] %vm393, %v1310
        %s1319 = sand.u32 %s93, 1
        %s1320 = scalar_lea.sflag [#allocation3], %s1319
        %s1321 = sand.u32 %s93, 1
        %s1322 = smul.addr %s1321, 200
        %s1323 = scalar_lea.vmem [#allocation2], %s1322
        // Predicated region
        $region33: #{_lambda_.15} parent=31 // pred_check
          %p1324 = pneg %p103
        $region34: #{_lambda_.15} parent=31 // pred_check_branch
          %1326 = sbr.rel (%p1324) target = $region36
        $region35: #{_lambda_.15} parent=31 // pred_region
          %s1328 = ssub.s32 3200, 3200
          %1329 = vsyncadd %s1320, %s1328
          %s1330 = smul.addr %s17, 25
          %s1331 = smul.addr %s1330, 128
          %s1332 = scalar_lea.hbm %s3, %s1331
          %s1333 = sshll.u32 %s1323, 4
          %s1334 = int_to_ptr.vmem [resolvable:$true] %s1333
          %1339 = dma.vmem_to_hbm [thread:$0]  %s1334, 3200, %s1332, %s1320, 128, 128, 8
        $region36: #{_lambda_.15} parent=31 // pred_fallthru
          _
      $region32: #{_lambda_.15} parent=5 // pred_fallthru
        _
      %p1340 = scmp.le.s32.totalorder 2, %s12
      // Predicated region
      $region37: #{_lambda_.15} parent=5 // pred_check
        %p1341 = pneg %p1340
      $region38: #{_lambda_.15} parent=5 // pred_check_branch
        %1343 = sbr.rel (%p1341) target = $region40
      $region39: #{_lambda_.15} parent=5 // pred_region
        %s1344 = ssub.s32 %s12, 2
        // Predicated region
        $region41: #{_lambda_.15} parent=39 // pred_check
          %p1345 = pneg %p109
        $region42: #{_lambda_.15} parent=39 // pred_check_branch
          %1347 = sbr.rel (%p1345) target = $region44
        $region43: #{_lambda_.15} parent=39 // pred_region
          %s1348 = sand.u32 %s94, 1
          %s1349 = scalar_lea.sflag [#allocation3], %s1348
          %s1350 = sand.u32 %s94, 1
          %s1351 = smul.addr %s1350, 200
          %s1352 = scalar_lea.vmem [#allocation2], %s1351
          %1353 = dma.done %s1349, 3200
        $region44: #{_lambda_.15} parent=39 // pred_fallthru
          _
      $region40: #{_lambda_.15} parent=5 // pred_fallthru
        _
    $region6: #{_lambda_.15} parent=1 // loop_footer
      %s16 = sadd.s32 1, %s12
    $region7: #{_lambda_.15} parent=1 // loop_footer_branch
      %11 = sbr.rel target = $region3
    $region8: #{_lambda_.15} parent=1 // loop_exit
      _
    %1354 = vsyncpa [#allocation3], 1
    %s1355 = scalar_lea.sflag [#allocation3], 1
    %1356 = vsyncpa %s1355, 1

</llo_original>
